<compile_context>
chip_gen: v7x
topology: tpu7x:2x2x1
jax: 0.10.0
libtpu: 0.0.40
codegen_flags: <defaults>
</compile_context>

<pallas_src>
import functools

import numpy as np
import jax
import jax.numpy as jnp
from jax import lax
from jax.experimental import pallas as pl
from jax.experimental.pallas import tpu as pltpu  # noqa: F401

EPS = 1e-5


# ---------------------------------------------------------------- weight prep

def _bn_fold(bn):
    gamma, beta, mean, var = bn
    s = gamma * lax.rsqrt(var + EPS)
    b = beta - mean * s
    return s.astype(jnp.float32), b.astype(jnp.float32)


def _block_diag(w, B):
    """(out, in) 1x1-conv weight -> (B*out, B*in) block-diagonal matrix."""
    out, inp = w.shape
    m = jnp.zeros((B * out, B * inp), jnp.float32)
    for b in range(B):
        m = m.at[b * out:(b + 1) * out, b * inp:(b + 1) * inp].set(
            w.astype(jnp.float32))
    return m


def _tile_col(v, B):
    """(C,) per-channel vector -> (B*C, 1) column with row index b*C + c."""
    return jnp.tile(v.astype(jnp.float32), (B,)).reshape(B * v.shape[0], 1)


def prepare_weights(params, B, H, W, H0, W0, nclasses):
    """Fold BN, build block-diagonal / packed weights. Runs once."""
    HW = H * W
    p = {}

    # ---- AttentionBlock
    s, b = _bn_fold(params['att_bn1']); p['a_s1'] = _tile_col(s, B); p['a_b1'] = _tile_col(b, B)
    p['a_w1'] = _block_diag(params['att_w1'][:, :, 0, 0], B)
    s, b = _bn_fold(params['att_bn2']); p['a_s2'] = _tile_col(s, B); p['a_b2'] = _tile_col(b, B)
    w2 = params['att_w2']                                  # (fatt, fatt, 3, 3)
    p['a_w2'] = jnp.stack([_block_diag(w2[:, :, t // 3, t % 3], B)
                           for t in range(9)], axis=0)      # (9, B*fatt, B*fatt)
    s, b = _bn_fold(params['att_bn3']); p['a_s3'] = _tile_col(s, B); p['a_b3'] = _tile_col(b, B)
    p['a_w3'] = _block_diag(params['att_w3'][:, :, 0, 0], B)

    # validity masks of the 9 taps of the 3x3 / pad=1 conv (per dest pixel)
    masks = np.zeros((9, 1, HW), np.float32)
    for t in range(9):
        oy, ox = t // 3 - 1, t % 3 - 1
        for pix in range(HW):
            y, x = pix // W, pix % W
            if 0 <= y + oy < H and 0 <= x + ox < W:
                masks[t, 0, pix] = 1.0
    p['a_mask'] = jnp.asarray(masks)

    # torch spatial_softmax group matrix (groups = consecutive runs of B rows)
    jj = np.arange(B * nclasses)
    p['gmat'] = jnp.asarray(
        (jj[:, None] // B == jj[None, :] // B).astype(np.float32))

    # ---- ConfidenceBlock
    s, b = _bn_fold(params['conf_bn1']); p['c_s1'] = _tile_col(s, B); p['c_b1'] = _tile_col(b, B)
    p['c_w1'] = _block_diag(params['conf_w1'][:, :, 0, 0], B)
    s, b = _bn_fold(params['conf_bn2']); p['c_s2'] = _tile_col(s, B); p['c_b2'] = _tile_col(b, B)
    p['c_w2'] = _block_diag(params['conf_w2'][:, :, 0, 0], B)

    # ---- SpatialRegularizationBlock (1x1 convs)
    p['f_w1'] = _block_diag(params['fsr_w1'][:, :, 0, 0], B)
    s, b = _bn_fold(params['fsr_bn1']); p['f_s1'] = _tile_col(s, B); p['f_b1'] = _tile_col(b, B)
    p['f_w2'] = _block_diag(params['fsr_w2'][:, :, 0, 0], B)
    s, b = _bn_fold(params['fsr_bn2']); p['f_s2'] = _tile_col(s, B); p['f_b2'] = _tile_col(b, B)

    # ---- 14x14 grouped conv (groups=4, VALID -> 1x1) as one block-diag matmul
    w3 = params['fsr_w3']                                   # (4*fsr, Cg, 14, 14)
    fsr4, Cg = w3.shape[0], w3.shape[1]
    fsr = fsr4 // 4
    wg = jnp.zeros((fsr * HW, fsr4), jnp.float32)
    for g in range(4):
        blk = w3[g * fsr:(g + 1) * fsr].reshape(fsr, Cg * HW).T  # (Cg*HW, fsr)
        wg = wg.at[g * Cg * HW:(g + 1) * Cg * HW,
                   g * fsr:(g + 1) * fsr].set(blk.astype(jnp.float32))
    p['g_w'] = wg
    s, b = _bn_fold(params['fsr_bn3'])
    p['g_s'] = s.reshape(1, fsr4); p['g_b'] = b.reshape(1, fsr4)
    p['fc_w'] = params['fsr_fc_w'].T.astype(jnp.float32)     # (4*fsr, nclasses)
    p['fc_b'] = params['fsr_fc_b'].reshape(1, -1).astype(jnp.float32)

    # ---- main head: AdaptiveAvgPool2d((1,1)) folded into an expanded fc weight
    S0 = H0 * W0
    wm = params['main_fc_w'].T.astype(jnp.float32)           # (C0, nclasses)
    p['m_w'] = jnp.repeat(wm, S0, axis=0) / float(S0)        # (C0*S0, nclasses)
    p['m_b'] = params['main_fc_b'].reshape(1, -1).astype(jnp.float32)
    return p


# ---------------------------------------------------------------- kernels

def _trunk_kernel(x_ref, mask_ref, gmat_ref,
                  a_s1, a_b1, a_w1, a_s2, a_b2, a_w2, a_s3, a_b3, a_w3,
                  c_s1, c_b1, c_w1, c_s2, c_b2, c_w2,
                  f_w1, f_s1, f_b1, f_w2, f_s2, f_b2,
                  f2_ref, sumpool_ref, *, W):
    """Fused AttentionBlock + ConfidenceBlock + softmax/combine + F_sr 1x1 convs.

    Layout: all activations are (B*C, H*W); rows = b*C + c, lanes = pixels.
    """
    f32 = jnp.float32
    HW = x_ref.shape[1]
    mm = lambda a, b: jnp.dot(a, b, preferred_element_type=f32)

    x = x_ref[...]

    # ---- AttentionBlock: relu(bn1) -> 1x1 -> relu(bn2) -> 3x3 -> relu(bn3) -> 1x1
    xa = jnp.maximum(x * a_s1[...] + a_b1[...], 0.0)
    g1 = jnp.maximum(mm(a_w1[...], xa) * a_s2[...] + a_b2[...], 0.0)   # (B*fatt, HW)

    # 3x3 "same" conv via 9 shift-and-mask matmul taps (no im2col, no HBM traffic)
    src = lax.broadcasted_iota(jnp.int32, (HW, HW), 0)   # source pixel q
    dst = lax.broadcasted_iota(jnp.int32, (HW, HW), 1)   # dest pixel p
    acc = jnp.zeros(g1.shape, f32)
    for t in range(9):
        s = (t // 3 - 1) * W + (t % 3 - 1)
        # T[q, p] = 1 iff q == p + s and the tap is inside the image at p
        tmat = jnp.where(src == dst + s, 1.0, 0.0) * mask_ref[t]
        acc = acc + mm(mm(a_w2[t], g1), tmat)
    g2 = jnp.maximum(acc * a_s3[...] + a_b3[...], 0.0)
    h3 = mm(a_w3[...], g2)                                              # (B*ncls, HW)

    # ---- ConfidenceBlock: relu(bn1) -> 1x1 -> relu(bn2) -> 1x1
    xc = jnp.maximum(x * c_s1[...] + c_b1[...], 0.0)
    c1 = jnp.maximum(mm(c_w1[...], xc) * c_s2[...] + c_b2[...], 0.0)
    S = mm(c_w2[...], c1)                                               # (B*ncls, HW)

    # ---- torch spatial_softmax over the (nclasses, B*H*W) view of the NCHW buffer.
    # Row j = b*ncls + c; softmax groups are consecutive runs of B rows.
    # (softmax is shift-invariant, so a global max stabiliser is exact.)
    m = jnp.max(jnp.max(h3, axis=1, keepdims=True), axis=0, keepdims=True)
    E = jnp.exp(h3 - m)
    gsum = jnp.sum(mm(gmat_ref[...], E), axis=1, keepdims=True)         # (B*ncls, 1)
    A = E * pl.reciprocal(gsum, approx=False)

    # ---- U = A * sigmoid(S);  sum_pool = per-(b, class) spatial sum of A*S
    sig = pl.reciprocal(1.0 + jnp.exp(-S), approx=False)
    U = A * sig
    sumpool_ref[...] = jnp.sum(A * S, axis=1, keepdims=True)

    # ---- F_sr 1x1 convs (conv1+bn1+relu, conv2+bn2+relu)
    f1 = jnp.maximum(mm(f_w1[...], U) * f_s1[...] + f_b1[...], 0.0)
    f2_ref[...] = jnp.maximum(mm(f_w2[...], f1) * f_s2[...] + f_b2[...], 0.0)


def _head_kernel(f2_ref, gw_ref, gs_ref, gb_ref, fcw_ref, fcb_ref,
                 x0_ref, mw_ref, mb_ref, final_ref, main_ref):
    """Grouped 14x14 conv (block-diag matmul) + bn3 + relu + fc, plus the main
    head (pool folded into mw) and the final add."""
    f32 = jnp.float32
    g3 = jnp.dot(f2_ref[...], gw_ref[...], preferred_element_type=f32)  # (B, 4*fsr)
    g3 = jnp.maximum(g3 * gs_ref[...] + gb_ref[...], 0.0)
    fsr_logits = jnp.dot(g3, fcw_ref[...], preferred_element_type=f32) + fcb_ref[...]
    main = jnp.dot(x0_ref[...], mw_ref[...], preferred_element_type=f32) + mb_ref[...]
    main_ref[...] = main
    final_ref[...] = main + fsr_logits


# ---------------------------------------------------------------- forward

def srn_forward(prep, feat0, feat1, *, nclasses):
    """Returns (final, sum_pool, main). Module (tasks=('final',)) returns `final`."""
    B, C1, H, W = feat1.shape
    HW = H * W
    _, C0, H0, W0 = feat0.shape

    x = feat1.reshape(B * C1, HW).astype(jnp.float32)        # (B*C1, HW), free reshape
    Bfsr = prep['f_w2'].shape[0]
    fsr = Bfsr // B

    trunk = functools.partial(_trunk_kernel, W=W)
    f2, sumpool = pl.pallas_call(
        trunk,
        out_shape=(jax.ShapeDtypeStruct((Bfsr, HW), jnp.float32),
                   jax.ShapeDtypeStruct((B * nclasses, 1), jnp.float32)),
    )(x, prep['a_mask'], prep['gmat'],
      prep['a_s1'], prep['a_b1'], prep['a_w1'], prep['a_s2'], prep['a_b2'],
      prep['a_w2'], prep['a_s3'], prep['a_b3'], prep['a_w3'],
      prep['c_s1'], prep['c_b1'], prep['c_w1'], prep['c_s2'], prep['c_b2'], prep['c_w2'],
      prep['f_w1'], prep['f_s1'], prep['f_b1'], prep['f_w2'], prep['f_s2'], prep['f_b2'])

    f2mat = f2.reshape(B, fsr * HW)                          # free row-major reshape
    x0 = feat0.reshape(B, C0 * H0 * W0).astype(jnp.float32)

    final, main = pl.pallas_call(
        _head_kernel,
        out_shape=(jax.ShapeDtypeStruct((B, nclasses), jnp.float32),
                   jax.ShapeDtypeStruct((B, nclasses), jnp.float32)),
    )(f2mat, prep['g_w'], prep['g_s'], prep['g_b'], prep['fc_w'], prep['fc_b'],
      x0, prep['m_w'], prep['m_b'])

    sum_pool = sumpool.reshape(B, nclasses)
    return final, sum_pool, main


# ---------------------------------------------------------------- params

def make_params(key, C0, C1, fatt, conf, fsr, nclasses):
    keys = iter(jax.random.split(key, 64))

    def conv_w(shape):  # torch OIHW
        fan_in = shape[1] * shape[2] * shape[3]
        return jax.random.normal(next(keys), shape, jnp.float32) / jnp.sqrt(fan_in)

    def bn(c):
        gamma = 1.0 + 0.1 * jax.random.normal(next(keys), (c,), jnp.float32)
        beta = 0.1 * jax.random.normal(next(keys), (c,), jnp.float32)
        mean = 0.1 * jax.random.normal(next(keys), (c,), jnp.float32)
        var = 0.5 + jax.random.uniform(next(keys), (c,), jnp.float32)
        return (gamma, beta, mean, var)

    p = {}
    p['att_bn1'] = bn(C1);   p['att_w1'] = conv_w((fatt, C1, 1, 1))
    p['att_bn2'] = bn(fatt); p['att_w2'] = conv_w((fatt, fatt, 3, 3))
    p['att_bn3'] = bn(fatt); p['att_w3'] = conv_w((nclasses, fatt, 1, 1))
    p['conf_bn1'] = bn(C1);   p['conf_w1'] = conv_w((conf, C1, 1, 1))
    p['conf_bn2'] = bn(conf); p['conf_w2'] = conv_w((nclasses, conf, 1, 1))
    p['fsr_w1'] = conv_w((fsr, nclasses, 1, 1)); p['fsr_bn1'] = bn(fsr)
    p['fsr_w2'] = conv_w((fsr, fsr, 1, 1));      p['fsr_bn2'] = bn(fsr)
    p['fsr_w3'] = conv_w((fsr * 4, fsr // 4, 14, 14))
    p['fsr_bn3'] = bn(fsr * 4)
    p['fsr_fc_w'] = jax.random.normal(next(keys), (nclasses, fsr * 4), jnp.float32) / jnp.sqrt(fsr * 4)
    p['fsr_fc_b'] = 0.1 * jax.random.normal(next(keys), (nclasses,), jnp.float32)
    p['main_fc_w'] = jax.random.normal(next(keys), (nclasses, C0), jnp.float32) / jnp.sqrt(C0)
    p['main_fc_b'] = 0.1 * jax.random.normal(next(keys), (nclasses,), jnp.float32)
    return p


# ---------------------------------------------------------------- plain-JAX reference

def _conv(x, w, padding='VALID', groups=1):
    return lax.conv_general_dilated(x, w, (1, 1), padding,
                                    dimension_numbers=('NCHW', 'OIHW', 'NCHW'),
                                    feature_group_count=groups)


def _bn(x, bn):
    g, b, m, v = bn
    rs = lax.rsqrt(v + EPS)
    return (x - m[None, :, None, None]) * (rs * g)[None, :, None, None] + b[None, :, None, None]


def reference_forward(params, feat0, feat1, nclasses):
    B, _, H, W = feat1.shape
    pooled = jnp.mean(feat0, axis=(2, 3))
    main = pooled @ params['main_fc_w'].T + params['main_fc_b']
    x = feat1
    a = jnp.maximum(_bn(x, params['att_bn1']), 0.0)
    a = _conv(a, params['att_w1'])
    a = jnp.maximum(_bn(a, params['att_bn2']), 0.0)
    a = _conv(a, params['att_w2'], padding=[(1, 1), (1, 1)])
    a = jnp.maximum(_bn(a, params['att_bn3']), 0.0)
    a = _conv(a, params['att_w3'])
    A = jax.nn.softmax(a.reshape(-1).reshape(nclasses, B * H * W), axis=1)
    A = A.reshape(B, nclasses, H, W)
    c = jnp.maximum(_bn(x, params['conf_bn1']), 0.0)
    c = _conv(c, params['conf_w1'])
    c = jnp.maximum(_bn(c, params['conf_bn2']), 0.0)
    S = _conv(c, params['conf_w2'])
    U = A * jax.nn.sigmoid(S)
    sum_pool = jnp.sum((A * S).reshape(B, nclasses, -1), axis=2)
    f = _conv(U, params['fsr_w1'])
    f = jnp.maximum(_bn(f, params['fsr_bn1']), 0.0)
    f = _conv(f, params['fsr_w2'])
    f = jnp.maximum(_bn(f, params['fsr_bn2']), 0.0)
    f = _conv(f, params['fsr_w3'], groups=4)
    f = jnp.maximum(_bn(f, params['fsr_bn3']), 0.0)
    fsr_logits = f.reshape(B, -1) @ params['fsr_fc_w'].T + params['fsr_fc_b']
    return main + fsr_logits, sum_pool


# ---------------------------------------------------------------- main

if __name__ == "__main__":
    nclasses = 6
    B = 2
    C0, C1 = 32, 64            # encoder_channels = (32, 64)
    H0 = W0 = 8
    H = W = 14                 # fsr conv3 is 14x14 VALID -> spatial must be 14
    fatt, conf, fsr = 32, 48, 32

    key = jax.random.PRNGKey(0)
    kp, k0, k1 = jax.random.split(key, 3)
    params = make_params(kp, C0, C1, fatt, conf, fsr, nclasses)
    feat0 = jax.random.normal(k0, (B, C0, H0, W0), jnp.float32)
    feat1 = jax.random.normal(k1, (B, C1, H, W), jnp.float32)

    # one-time weight preparation (BN folding, block-diag / grouped-conv packing)
    prep = prepare_weights(params, B, H, W, H0, W0, nclasses)

    fwd = jax.jit(functools.partial(srn_forward, nclasses=nclasses))
    final, sum_pool, main = fwd(prep, feat0, feat1)
    final = jax.block_until_ready(final)
    sum_pool = jax.block_until_ready(sum_pool)
    main = jax.block_until_ready(main)

    ref_final, ref_sum_pool = reference_forward(params, feat0, feat1, nclasses)

    assert final.shape == (B, nclasses) and sum_pool.shape == (B, nclasses)
    assert bool(jnp.all(jnp.isfinite(final))) and bool(jnp.all(jnp.isfinite(sum_pool)))
    assert jnp.allclose(final, ref_final, rtol=2e-2, atol=2e-2)
    assert jnp.allclose(sum_pool, ref_sum_pool, rtol=2e-2, atol=2e-2)
    print("KERNEL_OK")
</pallas_src>

<mosaic_0001>
module attributes {stable_mosaic.version = 11 : i64} {
  func.func @_trunk_kernel(%arg0: memref<128x196xf32, #tpu.memory_space<vmem>>, %arg1: memref<9x1x196xf32, #tpu.memory_space<vmem>>, %arg2: memref<12x12xf32, #tpu.memory_space<vmem>>, %arg3: memref<128x1xf32, #tpu.memory_space<vmem>>, %arg4: memref<128x1xf32, #tpu.memory_space<vmem>>, %arg5: memref<64x128xf32, #tpu.memory_space<vmem>>, %arg6: memref<64x1xf32, #tpu.memory_space<vmem>>, %arg7: memref<64x1xf32, #tpu.memory_space<vmem>>, %arg8: memref<9x64x64xf32, #tpu.memory_space<vmem>>, %arg9: memref<64x1xf32, #tpu.memory_space<vmem>>, %arg10: memref<64x1xf32, #tpu.memory_space<vmem>>, %arg11: memref<12x64xf32, #tpu.memory_space<vmem>>, %arg12: memref<128x1xf32, #tpu.memory_space<vmem>>, %arg13: memref<128x1xf32, #tpu.memory_space<vmem>>, %arg14: memref<96x128xf32, #tpu.memory_space<vmem>>, %arg15: memref<96x1xf32, #tpu.memory_space<vmem>>, %arg16: memref<96x1xf32, #tpu.memory_space<vmem>>, %arg17: memref<12x96xf32, #tpu.memory_space<vmem>>, %arg18: memref<64x12xf32, #tpu.memory_space<vmem>>, %arg19: memref<64x1xf32, #tpu.memory_space<vmem>>, %arg20: memref<64x1xf32, #tpu.memory_space<vmem>>, %arg21: memref<64x64xf32, #tpu.memory_space<vmem>>, %arg22: memref<64x1xf32, #tpu.memory_space<vmem>>, %arg23: memref<64x1xf32, #tpu.memory_space<vmem>>, %arg24: memref<64x196xf32, #tpu.memory_space<vmem>>, %arg25: memref<12x1xf32, #tpu.memory_space<vmem>>) attributes {dimension_semantics = [], scalar_prefetch = 0 : i64, scratch_operands = 0 : i64, tpu.core_type = #tpu.core_type<tc>} {
    %c0 = arith.constant 0 : index
    %c0_0 = arith.constant 0 : index
    %0 = vector.load %arg0[%c0, %c0_0] : memref<128x196xf32, #tpu.memory_space<vmem>>, vector<128x196xf32>
    %c0_1 = arith.constant 0 : index
    %c0_2 = arith.constant 0 : index
    %1 = vector.load %arg3[%c0_1, %c0_2] : memref<128x1xf32, #tpu.memory_space<vmem>>, vector<128x1xf32>
    %2 = vector.broadcast %1 : vector<128x1xf32> to vector<128x196xf32>
    %3 = arith.mulf %0, %2 : vector<128x196xf32>
    %c0_3 = arith.constant 0 : index
    %c0_4 = arith.constant 0 : index
    %4 = vector.load %arg4[%c0_3, %c0_4] : memref<128x1xf32, #tpu.memory_space<vmem>>, vector<128x1xf32>
    %5 = vector.broadcast %4 : vector<128x1xf32> to vector<128x196xf32>
    %6 = arith.addf %3, %5 : vector<128x196xf32>
    %cst = arith.constant 0.000000e+00 : f32
    %7 = vector.broadcast %cst : f32 to vector<128x196xf32>
    %8 = arith.maximumf %6, %7 : vector<128x196xf32>
    %c0_5 = arith.constant 0 : index
    %c0_6 = arith.constant 0 : index
    %9 = vector.load %arg5[%c0_5, %c0_6] : memref<64x128xf32, #tpu.memory_space<vmem>>, vector<64x128xf32>
    %cst_7 = arith.constant dense<0.000000e+00> : vector<64x196xf32>
    %10 = tpu.matmul %9, %8, %cst_7 {dimension_numbers = #tpu.dot_dimension_numbers<[1], [0], [0], [1], [0, 0, 1, 1], [], []>} : vector<64x128xf32>, vector<128x196xf32>, vector<64x196xf32> -> vector<64x196xf32>
    %c0_8 = arith.constant 0 : index
    %c0_9 = arith.constant 0 : index
    %11 = vector.load %arg6[%c0_8, %c0_9] : memref<64x1xf32, #tpu.memory_space<vmem>>, vector<64x1xf32>
    %12 = vector.broadcast %11 : vector<64x1xf32> to vector<64x196xf32>
    %13 = arith.mulf %10, %12 : vector<64x196xf32>
    %c0_10 = arith.constant 0 : index
    %c0_11 = arith.constant 0 : index
    %14 = vector.load %arg7[%c0_10, %c0_11] : memref<64x1xf32, #tpu.memory_space<vmem>>, vector<64x1xf32>
    %15 = vector.broadcast %14 : vector<64x1xf32> to vector<64x196xf32>
    %16 = arith.addf %13, %15 : vector<64x196xf32>
    %cst_12 = arith.constant 0.000000e+00 : f32
    %17 = vector.broadcast %cst_12 : f32 to vector<64x196xf32>
    %18 = arith.maximumf %16, %17 : vector<64x196xf32>
    %19 = tpu.iota {dimensions = array<i32: 0>} : vector<196x196xi32>
    %20 = tpu.iota {dimensions = array<i32: 1>} : vector<196x196xi32>
    %cst_13 = arith.constant 0.000000e+00 : f32
    %21 = vector.broadcast %cst_13 : f32 to vector<64x196xf32>
    %c-15_i32 = arith.constant -15 : i32
    %22 = vector.broadcast %c-15_i32 : i32 to vector<196x196xi32>
    %23 = arith.addi %20, %22 : vector<196x196xi32>
    %24 = arith.cmpi eq, %19, %23 : vector<196x196xi32>
    %cst_14 = arith.constant 1.000000e+00 : f32
    %cst_15 = arith.constant 0.000000e+00 : f32
    %25 = vector.broadcast %cst_14 : f32 to vector<196x196xf32>
    %26 = vector.broadcast %cst_15 : f32 to vector<196x196xf32>
    %27 = arith.select %24, %25, %26 : vector<196x196xi1>, vector<196x196xf32>
    %c0_16 = arith.constant 0 : index
    %c0_17 = arith.constant 0 : index
    %c0_18 = arith.constant 0 : index
    %28 = vector.load %arg1[%c0_16, %c0_17, %c0_18] : memref<9x1x196xf32, #tpu.memory_space<vmem>>, vector<1x1x196xf32>
    %29 = vector.shape_cast %28 : vector<1x1x196xf32> to vector<1x196xf32>
    %30 = vector.broadcast %29 : vector<1x196xf32> to vector<196x196xf32>
    %31 = arith.mulf %27, %30 : vector<196x196xf32>
    %c0_19 = arith.constant 0 : index
    %c0_20 = arith.constant 0 : index
    %c0_21 = arith.constant 0 : index
    %32 = vector.load %arg8[%c0_19, %c0_20, %c0_21] : memref<9x64x64xf32, #tpu.memory_space<vmem>>, vector<1x64x64xf32>
    %33 = vector.shape_cast %32 : vector<1x64x64xf32> to vector<64x64xf32>
    %cst_22 = arith.constant dense<0.000000e+00> : vector<64x196xf32>
    %34 = tpu.matmul %33, %18, %cst_22 {dimension_numbers = #tpu.dot_dimension_numbers<[1], [0], [0], [1], [0, 0, 1, 1], [], []>} : vector<64x64xf32>, vector<64x196xf32>, vector<64x196xf32> -> vector<64x196xf32>
    %cst_23 = arith.constant dense<0.000000e+00> : vector<64x196xf32>
    %35 = tpu.matmul %34, %31, %cst_23 {dimension_numbers = #tpu.dot_dimension_numbers<[1], [0], [0], [1], [0, 0, 1, 1], [], []>} : vector<64x196xf32>, vector<196x196xf32>, vector<64x196xf32> -> vector<64x196xf32>
    %36 = arith.addf %21, %35 : vector<64x196xf32>
    %c-14_i32 = arith.constant -14 : i32
    %37 = vector.broadcast %c-14_i32 : i32 to vector<196x196xi32>
    %38 = arith.addi %20, %37 : vector<196x196xi32>
    %39 = arith.cmpi eq, %19, %38 : vector<196x196xi32>
    %cst_24 = arith.constant 1.000000e+00 : f32
    %cst_25 = arith.constant 0.000000e+00 : f32
    %40 = vector.broadcast %cst_24 : f32 to vector<196x196xf32>
    %41 = vector.broadcast %cst_25 : f32 to vector<196x196xf32>
    %42 = arith.select %39, %40, %41 : vector<196x196xi1>, vector<196x196xf32>
    %c1 = arith.constant 1 : index
    %c0_26 = arith.constant 0 : index
    %c0_27 = arith.constant 0 : index
    %43 = vector.load %arg1[%c1, %c0_26, %c0_27] : memref<9x1x196xf32, #tpu.memory_space<vmem>>, vector<1x1x196xf32>
    %44 = vector.shape_cast %43 : vector<1x1x196xf32> to vector<1x196xf32>
    %45 = vector.broadcast %44 : vector<1x196xf32> to vector<196x196xf32>
    %46 = arith.mulf %42, %45 : vector<196x196xf32>
    %c1_28 = arith.constant 1 : index
    %c0_29 = arith.constant 0 : index
    %c0_30 = arith.constant 0 : index
    %47 = vector.load %arg8[%c1_28, %c0_29, %c0_30] : memref<9x64x64xf32, #tpu.memory_space<vmem>>, vector<1x64x64xf32>
    %48 = vector.shape_cast %47 : vector<1x64x64xf32> to vector<64x64xf32>
    %cst_31 = arith.constant dense<0.000000e+00> : vector<64x196xf32>
    %49 = tpu.matmul %48, %18, %cst_31 {dimension_numbers = #tpu.dot_dimension_numbers<[1], [0], [0], [1], [0, 0, 1, 1], [], []>} : vector<64x64xf32>, vector<64x196xf32>, vector<64x196xf32> -> vector<64x196xf32>
    %cst_32 = arith.constant dense<0.000000e+00> : vector<64x196xf32>
    %50 = tpu.matmul %49, %46, %cst_32 {dimension_numbers = #tpu.dot_dimension_numbers<[1], [0], [0], [1], [0, 0, 1, 1], [], []>} : vector<64x196xf32>, vector<196x196xf32>, vector<64x196xf32> -> vector<64x196xf32>
    %51 = arith.addf %36, %50 : vector<64x196xf32>
    %c-13_i32 = arith.constant -13 : i32
    %52 = vector.broadcast %c-13_i32 : i32 to vector<196x196xi32>
    %53 = arith.addi %20, %52 : vector<196x196xi32>
    %54 = arith.cmpi eq, %19, %53 : vector<196x196xi32>
    %cst_33 = arith.constant 1.000000e+00 : f32
    %cst_34 = arith.constant 0.000000e+00 : f32
    %55 = vector.broadcast %cst_33 : f32 to vector<196x196xf32>
    %56 = vector.broadcast %cst_34 : f32 to vector<196x196xf32>
    %57 = arith.select %54, %55, %56 : vector<196x196xi1>, vector<196x196xf32>
    %c2 = arith.constant 2 : index
    %c0_35 = arith.constant 0 : index
    %c0_36 = arith.constant 0 : index
    %58 = vector.load %arg1[%c2, %c0_35, %c0_36] : memref<9x1x196xf32, #tpu.memory_space<vmem>>, vector<1x1x196xf32>
    %59 = vector.shape_cast %58 : vector<1x1x196xf32> to vector<1x196xf32>
    %60 = vector.broadcast %59 : vector<1x196xf32> to vector<196x196xf32>
    %61 = arith.mulf %57, %60 : vector<196x196xf32>
    %c2_37 = arith.constant 2 : index
    %c0_38 = arith.constant 0 : index
    %c0_39 = arith.constant 0 : index
    %62 = vector.load %arg8[%c2_37, %c0_38, %c0_39] : memref<9x64x64xf32, #tpu.memory_space<vmem>>, vector<1x64x64xf32>
    %63 = vector.shape_cast %62 : vector<1x64x64xf32> to vector<64x64xf32>
    %cst_40 = arith.constant dense<0.000000e+00> : vector<64x196xf32>
    %64 = tpu.matmul %63, %18, %cst_40 {dimension_numbers = #tpu.dot_dimension_numbers<[1], [0], [0], [1], [0, 0, 1, 1], [], []>} : vector<64x64xf32>, vector<64x196xf32>, vector<64x196xf32> -> vector<64x196xf32>
    %cst_41 = arith.constant dense<0.000000e+00> : vector<64x196xf32>
    %65 = tpu.matmul %64, %61, %cst_41 {dimension_numbers = #tpu.dot_dimension_numbers<[1], [0], [0], [1], [0, 0, 1, 1], [], []>} : vector<64x196xf32>, vector<196x196xf32>, vector<64x196xf32> -> vector<64x196xf32>
    %66 = arith.addf %51, %65 : vector<64x196xf32>
    %c-1_i32 = arith.constant -1 : i32
    %67 = vector.broadcast %c-1_i32 : i32 to vector<196x196xi32>
    %68 = arith.addi %20, %67 : vector<196x196xi32>
    %69 = arith.cmpi eq, %19, %68 : vector<196x196xi32>
    %cst_42 = arith.constant 1.000000e+00 : f32
    %cst_43 = arith.constant 0.000000e+00 : f32
    %70 = vector.broadcast %cst_42 : f32 to vector<196x196xf32>
    %71 = vector.broadcast %cst_43 : f32 to vector<196x196xf32>
    %72 = arith.select %69, %70, %71 : vector<196x196xi1>, vector<196x196xf32>
    %c3 = arith.constant 3 : index
    %c0_44 = arith.constant 0 : index
    %c0_45 = arith.constant 0 : index
    %73 = vector.load %arg1[%c3, %c0_44, %c0_45] : memref<9x1x196xf32, #tpu.memory_space<vmem>>, vector<1x1x196xf32>
    %74 = vector.shape_cast %73 : vector<1x1x196xf32> to vector<1x196xf32>
    %75 = vector.broadcast %74 : vector<1x196xf32> to vector<196x196xf32>
    %76 = arith.mulf %72, %75 : vector<196x196xf32>
    %c3_46 = arith.constant 3 : index
    %c0_47 = arith.constant 0 : index
    %c0_48 = arith.constant 0 : index
    %77 = vector.load %arg8[%c3_46, %c0_47, %c0_48] : memref<9x64x64xf32, #tpu.memory_space<vmem>>, vector<1x64x64xf32>
    %78 = vector.shape_cast %77 : vector<1x64x64xf32> to vector<64x64xf32>
    %cst_49 = arith.constant dense<0.000000e+00> : vector<64x196xf32>
    %79 = tpu.matmul %78, %18, %cst_49 {dimension_numbers = #tpu.dot_dimension_numbers<[1], [0], [0], [1], [0, 0, 1, 1], [], []>} : vector<64x64xf32>, vector<64x196xf32>, vector<64x196xf32> -> vector<64x196xf32>
    %cst_50 = arith.constant dense<0.000000e+00> : vector<64x196xf32>
    %80 = tpu.matmul %79, %76, %cst_50 {dimension_numbers = #tpu.dot_dimension_numbers<[1], [0], [0], [1], [0, 0, 1, 1], [], []>} : vector<64x196xf32>, vector<196x196xf32>, vector<64x196xf32> -> vector<64x196xf32>
    %81 = arith.addf %66, %80 : vector<64x196xf32>
    %c0_i32 = arith.constant 0 : i32
    %82 = vector.broadcast %c0_i32 : i32 to vector<196x196xi32>
    %83 = arith.addi %20, %82 : vector<196x196xi32>
    %84 = arith.cmpi eq, %19, %83 : vector<196x196xi32>
    %cst_51 = arith.constant 1.000000e+00 : f32
    %cst_52 = arith.constant 0.000000e+00 : f32
    %85 = vector.broadcast %cst_51 : f32 to vector<196x196xf32>
    %86 = vector.broadcast %cst_52 : f32 to vector<196x196xf32>
    %87 = arith.select %84, %85, %86 : vector<196x196xi1>, vector<196x196xf32>
    %c4 = arith.constant 4 : index
    %c0_53 = arith.constant 0 : index
    %c0_54 = arith.constant 0 : index
    %88 = vector.load %arg1[%c4, %c0_53, %c0_54] : memref<9x1x196xf32, #tpu.memory_space<vmem>>, vector<1x1x196xf32>
    %89 = vector.shape_cast %88 : vector<1x1x196xf32> to vector<1x196xf32>
    %90 = vector.broadcast %89 : vector<1x196xf32> to vector<196x196xf32>
    %91 = arith.mulf %87, %90 : vector<196x196xf32>
    %c4_55 = arith.constant 4 : index
    %c0_56 = arith.constant 0 : index
    %c0_57 = arith.constant 0 : index
    %92 = vector.load %arg8[%c4_55, %c0_56, %c0_57] : memref<9x64x64xf32, #tpu.memory_space<vmem>>, vector<1x64x64xf32>
    %93 = vector.shape_cast %92 : vector<1x64x64xf32> to vector<64x64xf32>
    %cst_58 = arith.constant dense<0.000000e+00> : vector<64x196xf32>
    %94 = tpu.matmul %93, %18, %cst_58 {dimension_numbers = #tpu.dot_dimension_numbers<[1], [0], [0], [1], [0, 0, 1, 1], [], []>} : vector<64x64xf32>, vector<64x196xf32>, vector<64x196xf32> -> vector<64x196xf32>
    %cst_59 = arith.constant dense<0.000000e+00> : vector<64x196xf32>
    %95 = tpu.matmul %94, %91, %cst_59 {dimension_numbers = #tpu.dot_dimension_numbers<[1], [0], [0], [1], [0, 0, 1, 1], [], []>} : vector<64x196xf32>, vector<196x196xf32>, vector<64x196xf32> -> vector<64x196xf32>
    %96 = arith.addf %81, %95 : vector<64x196xf32>
    %c1_i32 = arith.constant 1 : i32
    %97 = vector.broadcast %c1_i32 : i32 to vector<196x196xi32>
    %98 = arith.addi %20, %97 : vector<196x196xi32>
    %99 = arith.cmpi eq, %19, %98 : vector<196x196xi32>
    %cst_60 = arith.constant 1.000000e+00 : f32
    %cst_61 = arith.constant 0.000000e+00 : f32
    %100 = vector.broadcast %cst_60 : f32 to vector<196x196xf32>
    %101 = vector.broadcast %cst_61 : f32 to vector<196x196xf32>
    %102 = arith.select %99, %100, %101 : vector<196x196xi1>, vector<196x196xf32>
    %c5 = arith.constant 5 : index
    %c0_62 = arith.constant 0 : index
    %c0_63 = arith.constant 0 : index
    %103 = vector.load %arg1[%c5, %c0_62, %c0_63] : memref<9x1x196xf32, #tpu.memory_space<vmem>>, vector<1x1x196xf32>
    %104 = vector.shape_cast %103 : vector<1x1x196xf32> to vector<1x196xf32>
    %105 = vector.broadcast %104 : vector<1x196xf32> to vector<196x196xf32>
    %106 = arith.mulf %102, %105 : vector<196x196xf32>
    %c5_64 = arith.constant 5 : index
    %c0_65 = arith.constant 0 : index
    %c0_66 = arith.constant 0 : index
    %107 = vector.load %arg8[%c5_64, %c0_65, %c0_66] : memref<9x64x64xf32, #tpu.memory_space<vmem>>, vector<1x64x64xf32>
    %108 = vector.shape_cast %107 : vector<1x64x64xf32> to vector<64x64xf32>
    %cst_67 = arith.constant dense<0.000000e+00> : vector<64x196xf32>
    %109 = tpu.matmul %108, %18, %cst_67 {dimension_numbers = #tpu.dot_dimension_numbers<[1], [0], [0], [1], [0, 0, 1, 1], [], []>} : vector<64x64xf32>, vector<64x196xf32>, vector<64x196xf32> -> vector<64x196xf32>
    %cst_68 = arith.constant dense<0.000000e+00> : vector<64x196xf32>
    %110 = tpu.matmul %109, %106, %cst_68 {dimension_numbers = #tpu.dot_dimension_numbers<[1], [0], [0], [1], [0, 0, 1, 1], [], []>} : vector<64x196xf32>, vector<196x196xf32>, vector<64x196xf32> -> vector<64x196xf32>
    %111 = arith.addf %96, %110 : vector<64x196xf32>
    %c13_i32 = arith.constant 13 : i32
    %112 = vector.broadcast %c13_i32 : i32 to vector<196x196xi32>
    %113 = arith.addi %20, %112 : vector<196x196xi32>
    %114 = arith.cmpi eq, %19, %113 : vector<196x196xi32>
    %cst_69 = arith.constant 1.000000e+00 : f32
    %cst_70 = arith.constant 0.000000e+00 : f32
    %115 = vector.broadcast %cst_69 : f32 to vector<196x196xf32>
    %116 = vector.broadcast %cst_70 : f32 to vector<196x196xf32>
    %117 = arith.select %114, %115, %116 : vector<196x196xi1>, vector<196x196xf32>
    %c6 = arith.constant 6 : index
    %c0_71 = arith.constant 0 : index
    %c0_72 = arith.constant 0 : index
    %118 = vector.load %arg1[%c6, %c0_71, %c0_72] : memref<9x1x196xf32, #tpu.memory_space<vmem>>, vector<1x1x196xf32>
    %119 = vector.shape_cast %118 : vector<1x1x196xf32> to vector<1x196xf32>
    %120 = vector.broadcast %119 : vector<1x196xf32> to vector<196x196xf32>
    %121 = arith.mulf %117, %120 : vector<196x196xf32>
    %c6_73 = arith.constant 6 : index
    %c0_74 = arith.constant 0 : index
    %c0_75 = arith.constant 0 : index
    %122 = vector.load %arg8[%c6_73, %c0_74, %c0_75] : memref<9x64x64xf32, #tpu.memory_space<vmem>>, vector<1x64x64xf32>
    %123 = vector.shape_cast %122 : vector<1x64x64xf32> to vector<64x64xf32>
    %cst_76 = arith.constant dense<0.000000e+00> : vector<64x196xf32>
    %124 = tpu.matmul %123, %18, %cst_76 {dimension_numbers = #tpu.dot_dimension_numbers<[1], [0], [0], [1], [0, 0, 1, 1], [], []>} : vector<64x64xf32>, vector<64x196xf32>, vector<64x196xf32> -> vector<64x196xf32>
    %cst_77 = arith.constant dense<0.000000e+00> : vector<64x196xf32>
    %125 = tpu.matmul %124, %121, %cst_77 {dimension_numbers = #tpu.dot_dimension_numbers<[1], [0], [0], [1], [0, 0, 1, 1], [], []>} : vector<64x196xf32>, vector<196x196xf32>, vector<64x196xf32> -> vector<64x196xf32>
    %126 = arith.addf %111, %125 : vector<64x196xf32>
    %c14_i32 = arith.constant 14 : i32
    %127 = vector.broadcast %c14_i32 : i32 to vector<196x196xi32>
    %128 = arith.addi %20, %127 : vector<196x196xi32>
    %129 = arith.cmpi eq, %19, %128 : vector<196x196xi32>
    %cst_78 = arith.constant 1.000000e+00 : f32
    %cst_79 = arith.constant 0.000000e+00 : f32
    %130 = vector.broadcast %cst_78 : f32 to vector<196x196xf32>
    %131 = vector.broadcast %cst_79 : f32 to vector<196x196xf32>
    %132 = arith.select %129, %130, %131 : vector<196x196xi1>, vector<196x196xf32>
    %c7 = arith.constant 7 : index
    %c0_80 = arith.constant 0 : index
    %c0_81 = arith.constant 0 : index
    %133 = vector.load %arg1[%c7, %c0_80, %c0_81] : memref<9x1x196xf32, #tpu.memory_space<vmem>>, vector<1x1x196xf32>
    %134 = vector.shape_cast %133 : vector<1x1x196xf32> to vector<1x196xf32>
    %135 = vector.broadcast %134 : vector<1x196xf32> to vector<196x196xf32>
    %136 = arith.mulf %132, %135 : vector<196x196xf32>
    %c7_82 = arith.constant 7 : index
    %c0_83 = arith.constant 0 : index
    %c0_84 = arith.constant 0 : index
    %137 = vector.load %arg8[%c7_82, %c0_83, %c0_84] : memref<9x64x64xf32, #tpu.memory_space<vmem>>, vector<1x64x64xf32>
    %138 = vector.shape_cast %137 : vector<1x64x64xf32> to vector<64x64xf32>
    %cst_85 = arith.constant dense<0.000000e+00> : vector<64x196xf32>
    %139 = tpu.matmul %138, %18, %cst_85 {dimension_numbers = #tpu.dot_dimension_numbers<[1], [0], [0], [1], [0, 0, 1, 1], [], []>} : vector<64x64xf32>, vector<64x196xf32>, vector<64x196xf32> -> vector<64x196xf32>
    %cst_86 = arith.constant dense<0.000000e+00> : vector<64x196xf32>
    %140 = tpu.matmul %139, %136, %cst_86 {dimension_numbers = #tpu.dot_dimension_numbers<[1], [0], [0], [1], [0, 0, 1, 1], [], []>} : vector<64x196xf32>, vector<196x196xf32>, vector<64x196xf32> -> vector<64x196xf32>
    %141 = arith.addf %126, %140 : vector<64x196xf32>
    %c15_i32 = arith.constant 15 : i32
    %142 = vector.broadcast %c15_i32 : i32 to vector<196x196xi32>
    %143 = arith.addi %20, %142 : vector<196x196xi32>
    %144 = arith.cmpi eq, %19, %143 : vector<196x196xi32>
    %cst_87 = arith.constant 1.000000e+00 : f32
    %cst_88 = arith.constant 0.000000e+00 : f32
    %145 = vector.broadcast %cst_87 : f32 to vector<196x196xf32>
    %146 = vector.broadcast %cst_88 : f32 to vector<196x196xf32>
    %147 = arith.select %144, %145, %146 : vector<196x196xi1>, vector<196x196xf32>
    %c8 = arith.constant 8 : index
    %c0_89 = arith.constant 0 : index
    %c0_90 = arith.constant 0 : index
    %148 = vector.load %arg1[%c8, %c0_89, %c0_90] : memref<9x1x196xf32, #tpu.memory_space<vmem>>, vector<1x1x196xf32>
    %149 = vector.shape_cast %148 : vector<1x1x196xf32> to vector<1x196xf32>
    %150 = vector.broadcast %149 : vector<1x196xf32> to vector<196x196xf32>
    %151 = arith.mulf %147, %150 : vector<196x196xf32>
    %c8_91 = arith.constant 8 : index
    %c0_92 = arith.constant 0 : index
    %c0_93 = arith.constant 0 : index
    %152 = vector.load %arg8[%c8_91, %c0_92, %c0_93] : memref<9x64x64xf32, #tpu.memory_space<vmem>>, vector<1x64x64xf32>
    %153 = vector.shape_cast %152 : vector<1x64x64xf32> to vector<64x64xf32>
    %cst_94 = arith.constant dense<0.000000e+00> : vector<64x196xf32>
    %154 = tpu.matmul %153, %18, %cst_94 {dimension_numbers = #tpu.dot_dimension_numbers<[1], [0], [0], [1], [0, 0, 1, 1], [], []>} : vector<64x64xf32>, vector<64x196xf32>, vector<64x196xf32> -> vector<64x196xf32>
    %cst_95 = arith.constant dense<0.000000e+00> : vector<64x196xf32>
    %155 = tpu.matmul %154, %151, %cst_95 {dimension_numbers = #tpu.dot_dimension_numbers<[1], [0], [0], [1], [0, 0, 1, 1], [], []>} : vector<64x196xf32>, vector<196x196xf32>, vector<64x196xf32> -> vector<64x196xf32>
    %156 = arith.addf %141, %155 : vector<64x196xf32>
    %c0_96 = arith.constant 0 : index
    %c0_97 = arith.constant 0 : index
    %157 = vector.load %arg9[%c0_96, %c0_97] : memref<64x1xf32, #tpu.memory_space<vmem>>, vector<64x1xf32>
    %158 = vector.broadcast %157 : vector<64x1xf32> to vector<64x196xf32>
    %159 = arith.mulf %156, %158 : vector<64x196xf32>
    %c0_98 = arith.constant 0 : index
    %c0_99 = arith.constant 0 : index
    %160 = vector.load %arg10[%c0_98, %c0_99] : memref<64x1xf32, #tpu.memory_space<vmem>>, vector<64x1xf32>
    %161 = vector.broadcast %160 : vector<64x1xf32> to vector<64x196xf32>
    %162 = arith.addf %159, %161 : vector<64x196xf32>
    %cst_100 = arith.constant 0.000000e+00 : f32
    %163 = vector.broadcast %cst_100 : f32 to vector<64x196xf32>
    %164 = arith.maximumf %162, %163 : vector<64x196xf32>
    %c0_101 = arith.constant 0 : index
    %c0_102 = arith.constant 0 : index
    %165 = vector.load %arg11[%c0_101, %c0_102] : memref<12x64xf32, #tpu.memory_space<vmem>>, vector<12x64xf32>
    %cst_103 = arith.constant dense<0.000000e+00> : vector<12x196xf32>
    %166 = tpu.matmul %165, %164, %cst_103 {dimension_numbers = #tpu.dot_dimension_numbers<[1], [0], [0], [1], [0, 0, 1, 1], [], []>} : vector<12x64xf32>, vector<64x196xf32>, vector<12x196xf32> -> vector<12x196xf32>
    %c0_104 = arith.constant 0 : index
    %c0_105 = arith.constant 0 : index
    %167 = vector.load %arg12[%c0_104, %c0_105] : memref<128x1xf32, #tpu.memory_space<vmem>>, vector<128x1xf32>
    %168 = vector.broadcast %167 : vector<128x1xf32> to vector<128x196xf32>
    %169 = arith.mulf %0, %168 : vector<128x196xf32>
    %c0_106 = arith.constant 0 : index
    %c0_107 = arith.constant 0 : index
    %170 = vector.load %arg13[%c0_106, %c0_107] : memref<128x1xf32, #tpu.memory_space<vmem>>, vector<128x1xf32>
    %171 = vector.broadcast %170 : vector<128x1xf32> to vector<128x196xf32>
    %172 = arith.addf %169, %171 : vector<128x196xf32>
    %cst_108 = arith.constant 0.000000e+00 : f32
    %173 = vector.broadcast %cst_108 : f32 to vector<128x196xf32>
    %174 = arith.maximumf %172, %173 : vector<128x196xf32>
    %c0_109 = arith.constant 0 : index
    %c0_110 = arith.constant 0 : index
    %175 = vector.load %arg14[%c0_109, %c0_110] : memref<96x128xf32, #tpu.memory_space<vmem>>, vector<96x128xf32>
    %cst_111 = arith.constant dense<0.000000e+00> : vector<96x196xf32>
    %176 = tpu.matmul %175, %174, %cst_111 {dimension_numbers = #tpu.dot_dimension_numbers<[1], [0], [0], [1], [0, 0, 1, 1], [], []>} : vector<96x128xf32>, vector<128x196xf32>, vector<96x196xf32> -> vector<96x196xf32>
    %c0_112 = arith.constant 0 : index
    %c0_113 = arith.constant 0 : index
    %177 = vector.load %arg15[%c0_112, %c0_113] : memref<96x1xf32, #tpu.memory_space<vmem>>, vector<96x1xf32>
    %178 = vector.broadcast %177 : vector<96x1xf32> to vector<96x196xf32>
    %179 = arith.mulf %176, %178 : vector<96x196xf32>
    %c0_114 = arith.constant 0 : index
    %c0_115 = arith.constant 0 : index
    %180 = vector.load %arg16[%c0_114, %c0_115] : memref<96x1xf32, #tpu.memory_space<vmem>>, vector<96x1xf32>
    %181 = vector.broadcast %180 : vector<96x1xf32> to vector<96x196xf32>
    %182 = arith.addf %179, %181 : vector<96x196xf32>
    %cst_116 = arith.constant 0.000000e+00 : f32
    %183 = vector.broadcast %cst_116 : f32 to vector<96x196xf32>
    %184 = arith.maximumf %182, %183 : vector<96x196xf32>
    %c0_117 = arith.constant 0 : index
    %c0_118 = arith.constant 0 : index
    %185 = vector.load %arg17[%c0_117, %c0_118] : memref<12x96xf32, #tpu.memory_space<vmem>>, vector<12x96xf32>
    %cst_119 = arith.constant dense<0.000000e+00> : vector<12x196xf32>
    %186 = tpu.matmul %185, %184, %cst_119 {dimension_numbers = #tpu.dot_dimension_numbers<[1], [0], [0], [1], [0, 0, 1, 1], [], []>} : vector<12x96xf32>, vector<96x196xf32>, vector<12x196xf32> -> vector<12x196xf32>
    %cst_120 = arith.constant dense<0xFF800000> : vector<12xf32>
    %187 = vector.multi_reduction <maximumf>, %166, %cst_120 [1] : vector<12x196xf32> to vector<12xf32>
    %188 = vector.shape_cast %187 : vector<12xf32> to vector<12x1xf32>
    %cst_121 = arith.constant dense<0xFF800000> : vector<1xf32>
    %189 = vector.multi_reduction <maximumf>, %188, %cst_121 [0] : vector<12x1xf32> to vector<1xf32>
    %190 = vector.shape_cast %189 : vector<1xf32> to vector<1x1xf32>
    %191 = vector.broadcast %190 : vector<1x1xf32> to vector<12x196xf32>
    %192 = arith.subf %166, %191 : vector<12x196xf32>
    %193 = math.exp %192 : vector<12x196xf32>
    %c0_122 = arith.constant 0 : index
    %c0_123 = arith.constant 0 : index
    %194 = vector.load %arg2[%c0_122, %c0_123] : memref<12x12xf32, #tpu.memory_space<vmem>>, vector<12x12xf32>
    %cst_124 = arith.constant dense<0.000000e+00> : vector<12x196xf32>
    %195 = tpu.matmul %194, %193, %cst_124 {dimension_numbers = #tpu.dot_dimension_numbers<[1], [0], [0], [1], [0, 0, 1, 1], [], []>} : vector<12x12xf32>, vector<12x196xf32>, vector<12x196xf32> -> vector<12x196xf32>
    %cst_125 = arith.constant dense<0.000000e+00> : vector<12xf32>
    %196 = vector.multi_reduction <add>, %195, %cst_125 [1] : vector<12x196xf32> to vector<12xf32>
    %197 = vector.shape_cast %196 : vector<12xf32> to vector<12x1xf32>
    %198 = tpu.reciprocal %197 : vector<12x1xf32> -> vector<12x1xf32>
    %199 = vector.broadcast %198 : vector<12x1xf32> to vector<12x196xf32>
    %200 = arith.mulf %193, %199 : vector<12x196xf32>
    %cst_126 = arith.constant 0.000000e+00 : f32
    %201 = vector.broadcast %cst_126 : f32 to vector<12x196xf32>
    %202 = arith.subf %201, %186 : vector<12x196xf32>
    %203 = math.exp %202 : vector<12x196xf32>
    %cst_127 = arith.constant 1.000000e+00 : f32
    %204 = vector.broadcast %cst_127 : f32 to vector<12x196xf32>
    %205 = arith.addf %204, %203 : vector<12x196xf32>
    %206 = tpu.reciprocal %205 : vector<12x196xf32> -> vector<12x196xf32>
    %207 = arith.mulf %200, %206 : vector<12x196xf32>
    %208 = arith.mulf %200, %186 : vector<12x196xf32>
    %cst_128 = arith.constant dense<0.000000e+00> : vector<12xf32>
    %209 = vector.multi_reduction <add>, %208, %cst_128 [1] : vector<12x196xf32> to vector<12xf32>
    %210 = vector.shape_cast %209 : vector<12xf32> to vector<12x1xf32>
    %c0_129 = arith.constant 0 : index
    %c0_130 = arith.constant 0 : index
    %211 = vector.load %arg25[%c0_129, %c0_130] : memref<12x1xf32, #tpu.memory_space<vmem>>, vector<12x1xf32>
    tpu.vector_store %arg25[%c0_129, %c0_130], %210 {strides = array<i32>} : memref<12x1xf32, #tpu.memory_space<vmem>>, vector<12x1xf32>,
    %c0_131 = arith.constant 0 : index
    %c0_132 = arith.constant 0 : index
    %212 = vector.load %arg18[%c0_131, %c0_132] : memref<64x12xf32, #tpu.memory_space<vmem>>, vector<64x12xf32>
    %cst_133 = arith.constant dense<0.000000e+00> : vector<64x196xf32>
    %213 = tpu.matmul %212, %207, %cst_133 {dimension_numbers = #tpu.dot_dimension_numbers<[1], [0], [0], [1], [0, 0, 1, 1], [], []>} : vector<64x12xf32>, vector<12x196xf32>, vector<64x196xf32> -> vector<64x196xf32>
    %c0_134 = arith.constant 0 : index
    %c0_135 = arith.constant 0 : index
    %214 = vector.load %arg19[%c0_134, %c0_135] : memref<64x1xf32, #tpu.memory_space<vmem>>, vector<64x1xf32>
    %215 = vector.broadcast %214 : vector<64x1xf32> to vector<64x196xf32>
    %216 = arith.mulf %213, %215 : vector<64x196xf32>
    %c0_136 = arith.constant 0 : index
    %c0_137 = arith.constant 0 : index
    %217 = vector.load %arg20[%c0_136, %c0_137] : memref<64x1xf32, #tpu.memory_space<vmem>>, vector<64x1xf32>
    %218 = vector.broadcast %217 : vector<64x1xf32> to vector<64x196xf32>
    %219 = arith.addf %216, %218 : vector<64x196xf32>
    %cst_138 = arith.constant 0.000000e+00 : f32
    %220 = vector.broadcast %cst_138 : f32 to vector<64x196xf32>
    %221 = arith.maximumf %219, %220 : vector<64x196xf32>
    %c0_139 = arith.constant 0 : index
    %c0_140 = arith.constant 0 : index
    %222 = vector.load %arg21[%c0_139, %c0_140] : memref<64x64xf32, #tpu.memory_space<vmem>>, vector<64x64xf32>
    %cst_141 = arith.constant dense<0.000000e+00> : vector<64x196xf32>
    %223 = tpu.matmul %222, %221, %cst_141 {dimension_numbers = #tpu.dot_dimension_numbers<[1], [0], [0], [1], [0, 0, 1, 1], [], []>} : vector<64x64xf32>, vector<64x196xf32>, vector<64x196xf32> -> vector<64x196xf32>
    %c0_142 = arith.constant 0 : index
    %c0_143 = arith.constant 0 : index
    %224 = vector.load %arg22[%c0_142, %c0_143] : memref<64x1xf32, #tpu.memory_space<vmem>>, vector<64x1xf32>
    %225 = vector.broadcast %224 : vector<64x1xf32> to vector<64x196xf32>
    %226 = arith.mulf %223, %225 : vector<64x196xf32>
    %c0_144 = arith.constant 0 : index
    %c0_145 = arith.constant 0 : index
    %227 = vector.load %arg23[%c0_144, %c0_145] : memref<64x1xf32, #tpu.memory_space<vmem>>, vector<64x1xf32>
    %228 = vector.broadcast %227 : vector<64x1xf32> to vector<64x196xf32>
    %229 = arith.addf %226, %228 : vector<64x196xf32>
    %cst_146 = arith.constant 0.000000e+00 : f32
    %230 = vector.broadcast %cst_146 : f32 to vector<64x196xf32>
    %231 = arith.maximumf %229, %230 : vector<64x196xf32>
    %c0_147 = arith.constant 0 : index
    %c0_148 = arith.constant 0 : index
    %232 = vector.load %arg24[%c0_147, %c0_148] : memref<64x196xf32, #tpu.memory_space<vmem>>, vector<64x196xf32>
    tpu.vector_store %arg24[%c0_147, %c0_148], %231 {strides = array<i32>} : memref<64x196xf32, #tpu.memory_space<vmem>>, vector<64x196xf32>,
    return
  }
}

module attributes {stable_mosaic.version = 11 : i64} {
  func.func @_head_kernel(%arg0: memref<2x6272xf32, #tpu.memory_space<vmem>>, %arg1: memref<6272x128xf32, #tpu.memory_space<vmem>>, %arg2: memref<1x128xf32, #tpu.memory_space<vmem>>, %arg3: memref<1x128xf32, #tpu.memory_space<vmem>>, %arg4: memref<128x6xf32, #tpu.memory_space<vmem>>, %arg5: memref<1x6xf32, #tpu.memory_space<vmem>>, %arg6: memref<2x2048xf32, #tpu.memory_space<vmem>>, %arg7: memref<2048x6xf32, #tpu.memory_space<vmem>>, %arg8: memref<1x6xf32, #tpu.memory_space<vmem>>, %arg9: memref<2x6xf32, #tpu.memory_space<vmem>>, %arg10: memref<2x6xf32, #tpu.memory_space<vmem>>) attributes {dimension_semantics = [], scalar_prefetch = 0 : i64, scratch_operands = 0 : i64, tpu.core_type = #tpu.core_type<tc>} {
    %c0 = arith.constant 0 : index
    %c0_0 = arith.constant 0 : index
    %0 = vector.load %arg0[%c0, %c0_0] : memref<2x6272xf32, #tpu.memory_space<vmem>>, vector<2x6272xf32>
    %c0_1 = arith.constant 0 : index
    %c0_2 = arith.constant 0 : index
    %1 = vector.load %arg1[%c0_1, %c0_2] : memref<6272x128xf32, #tpu.memory_space<vmem>>, vector<6272x128xf32>
    %cst = arith.constant dense<0.000000e+00> : vector<2x128xf32>
    %2 = tpu.matmul %0, %1, %cst {dimension_numbers = #tpu.dot_dimension_numbers<[1], [0], [0], [1], [0, 0, 1, 1], [], []>} : vector<2x6272xf32>, vector<6272x128xf32>, vector<2x128xf32> -> vector<2x128xf32>
    %c0_3 = arith.constant 0 : index
    %c0_4 = arith.constant 0 : index
    %3 = vector.load %arg2[%c0_3, %c0_4] : memref<1x128xf32, #tpu.memory_space<vmem>>, vector<1x128xf32>
    %4 = vector.broadcast %3 : vector<1x128xf32> to vector<2x128xf32>
    %5 = arith.mulf %2, %4 : vector<2x128xf32>
    %c0_5 = arith.constant 0 : index
    %c0_6 = arith.constant 0 : index
    %6 = vector.load %arg3[%c0_5, %c0_6] : memref<1x128xf32, #tpu.memory_space<vmem>>, vector<1x128xf32>
    %7 = vector.broadcast %6 : vector<1x128xf32> to vector<2x128xf32>
    %8 = arith.addf %5, %7 : vector<2x128xf32>
    %cst_7 = arith.constant 0.000000e+00 : f32
    %9 = vector.broadcast %cst_7 : f32 to vector<2x128xf32>
    %10 = arith.maximumf %8, %9 : vector<2x128xf32>
    %c0_8 = arith.constant 0 : index
    %c0_9 = arith.constant 0 : index
    %11 = vector.load %arg4[%c0_8, %c0_9] : memref<128x6xf32, #tpu.memory_space<vmem>>, vector<128x6xf32>
    %cst_10 = arith.constant dense<0.000000e+00> : vector<2x6xf32>
    %12 = tpu.matmul %10, %11, %cst_10 {dimension_numbers = #tpu.dot_dimension_numbers<[1], [0], [0], [1], [0, 0, 1, 1], [], []>} : vector<2x128xf32>, vector<128x6xf32>, vector<2x6xf32> -> vector<2x6xf32>
    %c0_11 = arith.constant 0 : index
    %c0_12 = arith.constant 0 : index
    %13 = vector.load %arg5[%c0_11, %c0_12] : memref<1x6xf32, #tpu.memory_space<vmem>>, vector<1x6xf32>
    %14 = vector.broadcast %13 : vector<1x6xf32> to vector<2x6xf32>
    %15 = arith.addf %12, %14 : vector<2x6xf32>
    %c0_13 = arith.constant 0 : index
    %c0_14 = arith.constant 0 : index
    %16 = vector.load %arg6[%c0_13, %c0_14] : memref<2x2048xf32, #tpu.memory_space<vmem>>, vector<2x2048xf32>
    %c0_15 = arith.constant 0 : index
    %c0_16 = arith.constant 0 : index
    %17 = vector.load %arg7[%c0_15, %c0_16] : memref<2048x6xf32, #tpu.memory_space<vmem>>, vector<2048x6xf32>
    %cst_17 = arith.constant dense<0.000000e+00> : vector<2x6xf32>
    %18 = tpu.matmul %16, %17, %cst_17 {dimension_numbers = #tpu.dot_dimension_numbers<[1], [0], [0], [1], [0, 0, 1, 1], [], []>} : vector<2x2048xf32>, vector<2048x6xf32>, vector<2x6xf32> -> vector<2x6xf32>
    %c0_18 = arith.constant 0 : index
    %c0_19 = arith.constant 0 : index
    %19 = vector.load %arg8[%c0_18, %c0_19] : memref<1x6xf32, #tpu.memory_space<vmem>>, vector<1x6xf32>
    %20 = vector.broadcast %19 : vector<1x6xf32> to vector<2x6xf32>
    %21 = arith.addf %18, %20 : vector<2x6xf32>
    %c0_20 = arith.constant 0 : index
    %c0_21 = arith.constant 0 : index
    %22 = vector.load %arg10[%c0_20, %c0_21] : memref<2x6xf32, #tpu.memory_space<vmem>>, vector<2x6xf32>
    tpu.vector_store %arg10[%c0_20, %c0_21], %21 {strides = array<i32>} : memref<2x6xf32, #tpu.memory_space<vmem>>, vector<2x6xf32>,
    %23 = arith.addf %21, %15 : vector<2x6xf32>
    %c0_22 = arith.constant 0 : index
    %c0_23 = arith.constant 0 : index
    %24 = vector.load %arg9[%c0_22, %c0_23] : memref<2x6xf32, #tpu.memory_space<vmem>>, vector<2x6xf32>
    tpu.vector_store %arg9[%c0_22, %c0_23], %23 {strides = array<i32>} : memref<2x6xf32, #tpu.memory_space<vmem>>, vector<2x6xf32>,
    return
  }
}

</mosaic_0001>

<llo_original>
// kernel: srn_forward.3
$region0: #{srn_forward.3}
  #allocation0 [shape = 'u32[]', space=smem, size = 0x4, offset = 0x4, fixed_abs, tag = 'smem constant byte address 0x4 - core index']
  #allocation1 [shape = 'u32[144,128]{1,0:T(1,128)}', space=vmem, size = 0x12000, scoped, tag = 'internal scratch']
  %s0 = inlined_call_operand.vmem [shape: f32[2,6272], index: 0, kind: input, shape index: {}]
  %s1 = inlined_call_operand.vmem [shape: f32[6272,128], index: 1, kind: input, shape index: {}]
  %s2 = inlined_call_operand.vmem [shape: f32[1,128], index: 2, kind: input, shape index: {}]
  %s3 = inlined_call_operand.vmem [shape: f32[1,128], index: 3, kind: input, shape index: {}]
  %s4 = inlined_call_operand.vmem [shape: f32[128,6], index: 4, kind: input, shape index: {}]
  %s5 = inlined_call_operand.vmem [shape: f32[1,6], index: 5, kind: input, shape index: {}]
  %s6 = inlined_call_operand.vmem [shape: f32[2,2048], index: 6, kind: input, shape index: {}]
  %s7 = inlined_call_operand.vmem [shape: f32[2048,6], index: 7, kind: input, shape index: {}]
  %s8 = inlined_call_operand.vmem [shape: f32[1,6], index: 8, kind: input, shape index: {}]
  %s9 = inlined_call_operand.hbm [shape: f32[2,6], index: 9, kind: output, shape index: {0}]
  %s10 = inlined_call_operand.hbm [shape: f32[2,6], index: 10, kind: output, shape index: {1}]
  %11 = xla_tuple %s9, %s10
  %s12 = sld [smem:[#allocation0]]
  $region54: #{srn_forward.3} parent=0
    _
  %s14 = ssub.s32 1, %s12
  %s15 = scalar_select 0, %s14, %s12
  $region1: #{srn_forward.3} parent=0
    #allocation2 [shape = 'u8[1024]{0}', space=vmem, size = 0x400, scoped, tag = 'output window, operand 0, single buffered']
    #allocation3 [shape = 's32[1]{0}', space=sflag, size = 0x4, scoped, tag = 'scoped memory for srn_forward.3']
    #allocation4 [shape = 'u8[1024]{0}', space=vmem, size = 0x400, scoped, tag = 'output window, operand 1, single buffered']
    #allocation5 [shape = 's32[1]{0}', space=sflag, size = 0x4, scoped, tag = 'scoped memory for srn_forward.3']
    %16 = vsyncpa [#allocation3], 0
    %17 = vsyncpa [#allocation5], 0
    // Predicated region
    $region2: #{srn_forward.3} parent=1 // pred_check
      _
    $region3: #{srn_forward.3} parent=1 // pred_check_branch
      %19 = sbr.rel (0) target = $region5
    $region4: #{srn_forward.3} parent=1 // pred_region
      _
    $region5: #{srn_forward.3} parent=1 // pred_fallthru
      _
    // Predicated region
    $region6: #{srn_forward.3} parent=1 // pred_check
      _
    $region7: #{srn_forward.3} parent=1 // pred_check_branch
      %21 = sbr.rel (0) target = $region9
    $region8: #{srn_forward.3} parent=1 // pred_region
      _
    $region9: #{srn_forward.3} parent=1 // pred_fallthru
      _
    // Predicated region
    $region10: #{srn_forward.3} parent=1 // pred_check
      _
    $region11: #{srn_forward.3} parent=1 // pred_check_branch
      %23 = sbr.rel (0) target = $region13
    $region12: #{srn_forward.3} parent=1 // pred_region
      _
    $region13: #{srn_forward.3} parent=1 // pred_fallthru
      _
    // Predicated region
    $region14: #{srn_forward.3} parent=1 // pred_check
      _
    $region15: #{srn_forward.3} parent=1 // pred_check_branch
      %25 = sbr.rel (0) target = $region17
    $region16: #{srn_forward.3} parent=1 // pred_region
      _
    $region17: #{srn_forward.3} parent=1 // pred_fallthru
      _
    // Predicated region
    $region18: #{srn_forward.3} parent=1 // pred_check
      _
    $region19: #{srn_forward.3} parent=1 // pred_check_branch
      %27 = sbr.rel (0) target = $region21
    $region20: #{srn_forward.3} parent=1 // pred_region
      _
    $region21: #{srn_forward.3} parent=1 // pred_fallthru
      _
    // Predicated region
    $region22: #{srn_forward.3} parent=1 // pred_check
      _
    $region23: #{srn_forward.3} parent=1 // pred_check_branch
      %29 = sbr.rel (0) target = $region25
    $region24: #{srn_forward.3} parent=1 // pred_region
      _
    $region25: #{srn_forward.3} parent=1 // pred_fallthru
      _
    // Predicated region
    $region26: #{srn_forward.3} parent=1 // pred_check
      _
    $region27: #{srn_forward.3} parent=1 // pred_check_branch
      %31 = sbr.rel (0) target = $region29
    $region28: #{srn_forward.3} parent=1 // pred_region
      _
    $region29: #{srn_forward.3} parent=1 // pred_fallthru
      _
    // Predicated region
    $region30: #{srn_forward.3} parent=1 // pred_check
      _
    $region31: #{srn_forward.3} parent=1 // pred_check_branch
      %33 = sbr.rel (0) target = $region33
    $region32: #{srn_forward.3} parent=1 // pred_region
      _
    $region33: #{srn_forward.3} parent=1 // pred_fallthru
      _
    // Predicated region
    $region34: #{srn_forward.3} parent=1 // pred_check
      _
    $region35: #{srn_forward.3} parent=1 // pred_check_branch
      %35 = sbr.rel (0) target = $region37
    $region36: #{srn_forward.3} parent=1 // pred_region
      _
    $region37: #{srn_forward.3} parent=1 // pred_fallthru
      _
    %v36 = vld [vmem:[%s0] sm:$0xff]
    %v37 = vld [vmem:[%s0 + $0x8] sm:$0xff]
    %v38 = vld [vmem:[%s0 + $0x10] sm:$0xff]
    %v39 = vld [vmem:[%s0 + $0x18] sm:$0xff]
    %v40 = vld [vmem:[%s0 + $0x20] sm:$0xff]
    %v41 = vld [vmem:[%s0 + $0x28] sm:$0xff]
    %v42 = vld [vmem:[%s0 + $0x30] sm:$0xff]
    %v43 = vld [vmem:[%s0 + $0x38] sm:$0xff]
    %v44 = vld [vmem:[%s0 + $0x40] sm:$0xff]
    %v45 = vld [vmem:[%s0 + $0x48] sm:$0xff]
    %v46 = vld [vmem:[%s0 + $0x50] sm:$0xff]
    %v47 = vld [vmem:[%s0 + $0x58] sm:$0xff]
    %v48 = vld [vmem:[%s0 + $0x60] sm:$0x3]
    %v49 = vld [vmem:[%s1] sm:$0xff]
    %v50 = vld [vmem:[%s1 + $0x8] sm:$0xff]
    %v51 = vld [vmem:[%s1 + $0x10] sm:$0xff]
    %v52 = vld [vmem:[%s1 + $0x18] sm:$0xff]
    %v53 = vld [vmem:[%s1 + $0x20] sm:$0xff]
    %v54 = vld [vmem:[%s1 + $0x28] sm:$0xff]
    %v55 = vld [vmem:[%s1 + $0x30] sm:$0xff]
    %v56 = vld [vmem:[%s1 + $0x38] sm:$0xff]
    %v57 = vld [vmem:[%s1 + $0x40] sm:$0xff]
    %v58 = vld [vmem:[%s1 + $0x48] sm:$0xff]
    %v59 = vld [vmem:[%s1 + $0x50] sm:$0xff]
    %v60 = vld [vmem:[%s1 + $0x58] sm:$0xff]
    %v61 = vld [vmem:[%s1 + $0x60] sm:$0xff]
    %v62 = vld [vmem:[%s1 + $0x68] sm:$0xff]
    %v63 = vld [vmem:[%s1 + $0x70] sm:$0xff]
    %v64 = vld [vmem:[%s1 + $0x78] sm:$0xff]
    %v65 = vld [vmem:[%s1 + $0x80] sm:$0xff]
    %v66 = vld [vmem:[%s1 + $0x88] sm:$0xff]
    %v67 = vld [vmem:[%s1 + $0x90] sm:$0xff]
    %v68 = vld [vmem:[%s1 + $0x98] sm:$0xff]
    %v69 = vld [vmem:[%s1 + $0xa0] sm:$0xff]
    %v70 = vld [vmem:[%s1 + $0xa8] sm:$0xff]
    %v71 = vld [vmem:[%s1 + $0xb0] sm:$0xff]
    %v72 = vld [vmem:[%s1 + $0xb8] sm:$0xff]
    %v73 = vld [vmem:[%s1 + $0xc0] sm:$0xff]
    %v74 = vld [vmem:[%s1 + $0xc8] sm:$0xff]
    %v75 = vld [vmem:[%s1 + $0xd0] sm:$0xff]
    %v76 = vld [vmem:[%s1 + $0xd8] sm:$0xff]
    %v77 = vld [vmem:[%s1 + $0xe0] sm:$0xff]
    %v78 = vld [vmem:[%s1 + $0xe8] sm:$0xff]
    %v79 = vld [vmem:[%s1 + $0xf0] sm:$0xff]
    %v80 = vld [vmem:[%s1 + $0xf8] sm:$0xff]
    %v81 = vld [vmem:[%s1 + $0x100] sm:$0xff]
    %v82 = vld [vmem:[%s1 + $0x108] sm:$0xff]
    %v83 = vld [vmem:[%s1 + $0x110] sm:$0xff]
    %v84 = vld [vmem:[%s1 + $0x118] sm:$0xff]
    %v85 = vld [vmem:[%s1 + $0x120] sm:$0xff]
    %v86 = vld [vmem:[%s1 + $0x128] sm:$0xff]
    %v87 = vld [vmem:[%s1 + $0x130] sm:$0xff]
    %v88 = vld [vmem:[%s1 + $0x138] sm:$0xff]
    %v89 = vld [vmem:[%s1 + $0x140] sm:$0xff]
    %v90 = vld [vmem:[%s1 + $0x148] sm:$0xff]
    %v91 = vld [vmem:[%s1 + $0x150] sm:$0xff]
    %v92 = vld [vmem:[%s1 + $0x158] sm:$0xff]
    %v93 = vld [vmem:[%s1 + $0x160] sm:$0xff]
    %v94 = vld [vmem:[%s1 + $0x168] sm:$0xff]
    %v95 = vld [vmem:[%s1 + $0x170] sm:$0xff]
    %v96 = vld [vmem:[%s1 + $0x178] sm:$0xff]
    %v97 = vld [vmem:[%s1 + $0x180] sm:$0xff]
    %v98 = vld [vmem:[%s1 + $0x188] sm:$0xff]
    %v99 = vld [vmem:[%s1 + $0x190] sm:$0xff]
    %v100 = vld [vmem:[%s1 + $0x198] sm:$0xff]
    %v101 = vld [vmem:[%s1 + $0x1a0] sm:$0xff]
    %v102 = vld [vmem:[%s1 + $0x1a8] sm:$0xff]
    %v103 = vld [vmem:[%s1 + $0x1b0] sm:$0xff]
    %v104 = vld [vmem:[%s1 + $0x1b8] sm:$0xff]
    %v105 = vld [vmem:[%s1 + $0x1c0] sm:$0xff]
    %v106 = vld [vmem:[%s1 + $0x1c8] sm:$0xff]
    %v107 = vld [vmem:[%s1 + $0x1d0] sm:$0xff]
    %v108 = vld [vmem:[%s1 + $0x1d8] sm:$0xff]
    %v109 = vld [vmem:[%s1 + $0x1e0] sm:$0xff]
    %v110 = vld [vmem:[%s1 + $0x1e8] sm:$0xff]
    %v111 = vld [vmem:[%s1 + $0x1f0] sm:$0xff]
    %v112 = vld [vmem:[%s1 + $0x1f8] sm:$0xff]
    %v113 = vld [vmem:[%s1 + $0x200] sm:$0xff]
    %v114 = vld [vmem:[%s1 + $0x208] sm:$0xff]
    %v115 = vld [vmem:[%s1 + $0x210] sm:$0xff]
    %v116 = vld [vmem:[%s1 + $0x218] sm:$0xff]
    %v117 = vld [vmem:[%s1 + $0x220] sm:$0xff]
    %v118 = vld [vmem:[%s1 + $0x228] sm:$0xff]
    %v119 = vld [vmem:[%s1 + $0x230] sm:$0xff]
    %v120 = vld [vmem:[%s1 + $0x238] sm:$0xff]
    %v121 = vld [vmem:[%s1 + $0x240] sm:$0xff]
    %v122 = vld [vmem:[%s1 + $0x248] sm:$0xff]
    %v123 = vld [vmem:[%s1 + $0x250] sm:$0xff]
    %v124 = vld [vmem:[%s1 + $0x258] sm:$0xff]
    %v125 = vld [vmem:[%s1 + $0x260] sm:$0xff]
    %v126 = vld [vmem:[%s1 + $0x268] sm:$0xff]
    %v127 = vld [vmem:[%s1 + $0x270] sm:$0xff]
    %v128 = vld [vmem:[%s1 + $0x278] sm:$0xff]
    %v129 = vld [vmem:[%s1 + $0x280] sm:$0xff]
    %v130 = vld [vmem:[%s1 + $0x288] sm:$0xff]
    %v131 = vld [vmem:[%s1 + $0x290] sm:$0xff]
    %v132 = vld [vmem:[%s1 + $0x298] sm:$0xff]
    %v133 = vld [vmem:[%s1 + $0x2a0] sm:$0xff]
    %v134 = vld [vmem:[%s1 + $0x2a8] sm:$0xff]
    %v135 = vld [vmem:[%s1 + $0x2b0] sm:$0xff]
    %v136 = vld [vmem:[%s1 + $0x2b8] sm:$0xff]
    %v137 = vld [vmem:[%s1 + $0x2c0] sm:$0xff]
    %v138 = vld [vmem:[%s1 + $0x2c8] sm:$0xff]
    %v139 = vld [vmem:[%s1 + $0x2d0] sm:$0xff]
    %v140 = vld [vmem:[%s1 + $0x2d8] sm:$0xff]
    %v141 = vld [vmem:[%s1 + $0x2e0] sm:$0xff]
    %v142 = vld [vmem:[%s1 + $0x2e8] sm:$0xff]
    %v143 = vld [vmem:[%s1 + $0x2f0] sm:$0xff]
    %v144 = vld [vmem:[%s1 + $0x2f8] sm:$0xff]
    %v145 = vld [vmem:[%s1 + $0x300] sm:$0xff]
    %v146 = vld [vmem:[%s1 + $0x308] sm:$0xff]
    %v147 = vld [vmem:[%s1 + $0x310] sm:$0xff]
    %v148 = vld [vmem:[%s1 + $0x318] sm:$0xff]
    %v149 = vld [vmem:[%s1 + $0x320] sm:$0xff]
    %v150 = vld [vmem:[%s1 + $0x328] sm:$0xff]
    %v151 = vld [vmem:[%s1 + $0x330] sm:$0xff]
    %v152 = vld [vmem:[%s1 + $0x338] sm:$0xff]
    %v153 = vld [vmem:[%s1 + $0x340] sm:$0xff]
    %v154 = vld [vmem:[%s1 + $0x348] sm:$0xff]
    %v155 = vld [vmem:[%s1 + $0x350] sm:$0xff]
    %v156 = vld [vmem:[%s1 + $0x358] sm:$0xff]
    %v157 = vld [vmem:[%s1 + $0x360] sm:$0xff]
    %v158 = vld [vmem:[%s1 + $0x368] sm:$0xff]
    %v159 = vld [vmem:[%s1 + $0x370] sm:$0xff]
    %v160 = vld [vmem:[%s1 + $0x378] sm:$0xff]
    %v161 = vld [vmem:[%s1 + $0x380] sm:$0xff]
    %v162 = vld [vmem:[%s1 + $0x388] sm:$0xff]
    %v163 = vld [vmem:[%s1 + $0x390] sm:$0xff]
    %v164 = vld [vmem:[%s1 + $0x398] sm:$0xff]
    %v165 = vld [vmem:[%s1 + $0x3a0] sm:$0xff]
    %v166 = vld [vmem:[%s1 + $0x3a8] sm:$0xff]
    %v167 = vld [vmem:[%s1 + $0x3b0] sm:$0xff]
    %v168 = vld [vmem:[%s1 + $0x3b8] sm:$0xff]
    %v169 = vld [vmem:[%s1 + $0x3c0] sm:$0xff]
    %v170 = vld [vmem:[%s1 + $0x3c8] sm:$0xff]
    %v171 = vld [vmem:[%s1 + $0x3d0] sm:$0xff]
    %v172 = vld [vmem:[%s1 + $0x3d8] sm:$0xff]
    %v173 = vld [vmem:[%s1 + $0x3e0] sm:$0xff]
    %v174 = vld [vmem:[%s1 + $0x3e8] sm:$0xff]
    %v175 = vld [vmem:[%s1 + $0x3f0] sm:$0xff]
    %v176 = vld [vmem:[%s1 + $0x3f8] sm:$0xff]
    %v177 = vld [vmem:[%s1 + $0x400] sm:$0xff]
    %v178 = vld [vmem:[%s1 + $0x408] sm:$0xff]
    %v179 = vld [vmem:[%s1 + $0x410] sm:$0xff]
    %v180 = vld [vmem:[%s1 + $0x418] sm:$0xff]
    %v181 = vld [vmem:[%s1 + $0x420] sm:$0xff]
    %v182 = vld [vmem:[%s1 + $0x428] sm:$0xff]
    %v183 = vld [vmem:[%s1 + $0x430] sm:$0xff]
    %v184 = vld [vmem:[%s1 + $0x438] sm:$0xff]
    %v185 = vld [vmem:[%s1 + $0x440] sm:$0xff]
    %v186 = vld [vmem:[%s1 + $0x448] sm:$0xff]
    %v187 = vld [vmem:[%s1 + $0x450] sm:$0xff]
    %v188 = vld [vmem:[%s1 + $0x458] sm:$0xff]
    %v189 = vld [vmem:[%s1 + $0x460] sm:$0xff]
    %v190 = vld [vmem:[%s1 + $0x468] sm:$0xff]
    %v191 = vld [vmem:[%s1 + $0x470] sm:$0xff]
    %v192 = vld [vmem:[%s1 + $0x478] sm:$0xff]
    %v193 = vld [vmem:[%s1 + $0x480] sm:$0xff]
    %v194 = vld [vmem:[%s1 + $0x488] sm:$0xff]
    %v195 = vld [vmem:[%s1 + $0x490] sm:$0xff]
    %v196 = vld [vmem:[%s1 + $0x498] sm:$0xff]
    %v197 = vld [vmem:[%s1 + $0x4a0] sm:$0xff]
    %v198 = vld [vmem:[%s1 + $0x4a8] sm:$0xff]
    %v199 = vld [vmem:[%s1 + $0x4b0] sm:$0xff]
    %v200 = vld [vmem:[%s1 + $0x4b8] sm:$0xff]
    %v201 = vld [vmem:[%s1 + $0x4c0] sm:$0xff]
    %v202 = vld [vmem:[%s1 + $0x4c8] sm:$0xff]
    %v203 = vld [vmem:[%s1 + $0x4d0] sm:$0xff]
    %v204 = vld [vmem:[%s1 + $0x4d8] sm:$0xff]
    %v205 = vld [vmem:[%s1 + $0x4e0] sm:$0xff]
    %v206 = vld [vmem:[%s1 + $0x4e8] sm:$0xff]
    %v207 = vld [vmem:[%s1 + $0x4f0] sm:$0xff]
    %v208 = vld [vmem:[%s1 + $0x4f8] sm:$0xff]
    %v209 = vld [vmem:[%s1 + $0x500] sm:$0xff]
    %v210 = vld [vmem:[%s1 + $0x508] sm:$0xff]
    %v211 = vld [vmem:[%s1 + $0x510] sm:$0xff]
    %v212 = vld [vmem:[%s1 + $0x518] sm:$0xff]
    %v213 = vld [vmem:[%s1 + $0x520] sm:$0xff]
    %v214 = vld [vmem:[%s1 + $0x528] sm:$0xff]
    %v215 = vld [vmem:[%s1 + $0x530] sm:$0xff]
    %v216 = vld [vmem:[%s1 + $0x538] sm:$0xff]
    %v217 = vld [vmem:[%s1 + $0x540] sm:$0xff]
    %v218 = vld [vmem:[%s1 + $0x548] sm:$0xff]
    %v219 = vld [vmem:[%s1 + $0x550] sm:$0xff]
    %v220 = vld [vmem:[%s1 + $0x558] sm:$0xff]
    %v221 = vld [vmem:[%s1 + $0x560] sm:$0xff]
    %v222 = vld [vmem:[%s1 + $0x568] sm:$0xff]
    %v223 = vld [vmem:[%s1 + $0x570] sm:$0xff]
    %v224 = vld [vmem:[%s1 + $0x578] sm:$0xff]
    %v225 = vld [vmem:[%s1 + $0x580] sm:$0xff]
    %v226 = vld [vmem:[%s1 + $0x588] sm:$0xff]
    %v227 = vld [vmem:[%s1 + $0x590] sm:$0xff]
    %v228 = vld [vmem:[%s1 + $0x598] sm:$0xff]
    %v229 = vld [vmem:[%s1 + $0x5a0] sm:$0xff]
    %v230 = vld [vmem:[%s1 + $0x5a8] sm:$0xff]
    %v231 = vld [vmem:[%s1 + $0x5b0] sm:$0xff]
    %v232 = vld [vmem:[%s1 + $0x5b8] sm:$0xff]
    %v233 = vld [vmem:[%s1 + $0x5c0] sm:$0xff]
    %v234 = vld [vmem:[%s1 + $0x5c8] sm:$0xff]
    %v235 = vld [vmem:[%s1 + $0x5d0] sm:$0xff]
    %v236 = vld [vmem:[%s1 + $0x5d8] sm:$0xff]
    %v237 = vld [vmem:[%s1 + $0x5e0] sm:$0xff]
    %v238 = vld [vmem:[%s1 + $0x5e8] sm:$0xff]
    %v239 = vld [vmem:[%s1 + $0x5f0] sm:$0xff]
    %v240 = vld [vmem:[%s1 + $0x5f8] sm:$0xff]
    %v241 = vld [vmem:[%s1 + $0x600] sm:$0xff]
    %v242 = vld [vmem:[%s1 + $0x608] sm:$0xff]
    %v243 = vld [vmem:[%s1 + $0x610] sm:$0xff]
    %v244 = vld [vmem:[%s1 + $0x618] sm:$0xff]
    %v245 = vld [vmem:[%s1 + $0x620] sm:$0xff]
    %v246 = vld [vmem:[%s1 + $0x628] sm:$0xff]
    %v247 = vld [vmem:[%s1 + $0x630] sm:$0xff]
    %v248 = vld [vmem:[%s1 + $0x638] sm:$0xff]
    %v249 = vld [vmem:[%s1 + $0x640] sm:$0xff]
    %v250 = vld [vmem:[%s1 + $0x648] sm:$0xff]
    %v251 = vld [vmem:[%s1 + $0x650] sm:$0xff]
    %v252 = vld [vmem:[%s1 + $0x658] sm:$0xff]
    %v253 = vld [vmem:[%s1 + $0x660] sm:$0xff]
    %v254 = vld [vmem:[%s1 + $0x668] sm:$0xff]
    %v255 = vld [vmem:[%s1 + $0x670] sm:$0xff]
    %v256 = vld [vmem:[%s1 + $0x678] sm:$0xff]
    %v257 = vld [vmem:[%s1 + $0x680] sm:$0xff]
    %v258 = vld [vmem:[%s1 + $0x688] sm:$0xff]
    %v259 = vld [vmem:[%s1 + $0x690] sm:$0xff]
    %v260 = vld [vmem:[%s1 + $0x698] sm:$0xff]
    %v261 = vld [vmem:[%s1 + $0x6a0] sm:$0xff]
    %v262 = vld [vmem:[%s1 + $0x6a8] sm:$0xff]
    %v263 = vld [vmem:[%s1 + $0x6b0] sm:$0xff]
    %v264 = vld [vmem:[%s1 + $0x6b8] sm:$0xff]
    %v265 = vld [vmem:[%s1 + $0x6c0] sm:$0xff]
    %v266 = vld [vmem:[%s1 + $0x6c8] sm:$0xff]
    %v267 = vld [vmem:[%s1 + $0x6d0] sm:$0xff]
    %v268 = vld [vmem:[%s1 + $0x6d8] sm:$0xff]
    %v269 = vld [vmem:[%s1 + $0x6e0] sm:$0xff]
    %v270 = vld [vmem:[%s1 + $0x6e8] sm:$0xff]
    %v271 = vld [vmem:[%s1 + $0x6f0] sm:$0xff]
    %v272 = vld [vmem:[%s1 + $0x6f8] sm:$0xff]
    %v273 = vld [vmem:[%s1 + $0x700] sm:$0xff]
    %v274 = vld [vmem:[%s1 + $0x708] sm:$0xff]
    %v275 = vld [vmem:[%s1 + $0x710] sm:$0xff]
    %v276 = vld [vmem:[%s1 + $0x718] sm:$0xff]
    %v277 = vld [vmem:[%s1 + $0x720] sm:$0xff]
    %v278 = vld [vmem:[%s1 + $0x728] sm:$0xff]
    %v279 = vld [vmem:[%s1 + $0x730] sm:$0xff]
    %v280 = vld [vmem:[%s1 + $0x738] sm:$0xff]
    %v281 = vld [vmem:[%s1 + $0x740] sm:$0xff]
    %v282 = vld [vmem:[%s1 + $0x748] sm:$0xff]
    %v283 = vld [vmem:[%s1 + $0x750] sm:$0xff]
    %v284 = vld [vmem:[%s1 + $0x758] sm:$0xff]
    %v285 = vld [vmem:[%s1 + $0x760] sm:$0xff]
    %v286 = vld [vmem:[%s1 + $0x768] sm:$0xff]
    %v287 = vld [vmem:[%s1 + $0x770] sm:$0xff]
    %v288 = vld [vmem:[%s1 + $0x778] sm:$0xff]
    %v289 = vld [vmem:[%s1 + $0x780] sm:$0xff]
    %v290 = vld [vmem:[%s1 + $0x788] sm:$0xff]
    %v291 = vld [vmem:[%s1 + $0x790] sm:$0xff]
    %v292 = vld [vmem:[%s1 + $0x798] sm:$0xff]
    %v293 = vld [vmem:[%s1 + $0x7a0] sm:$0xff]
    %v294 = vld [vmem:[%s1 + $0x7a8] sm:$0xff]
    %v295 = vld [vmem:[%s1 + $0x7b0] sm:$0xff]
    %v296 = vld [vmem:[%s1 + $0x7b8] sm:$0xff]
    %v297 = vld [vmem:[%s1 + $0x7c0] sm:$0xff]
    %v298 = vld [vmem:[%s1 + $0x7c8] sm:$0xff]
    %v299 = vld [vmem:[%s1 + $0x7d0] sm:$0xff]
    %v300 = vld [vmem:[%s1 + $0x7d8] sm:$0xff]
    %v301 = vld [vmem:[%s1 + $0x7e0] sm:$0xff]
    %v302 = vld [vmem:[%s1 + $0x7e8] sm:$0xff]
    %v303 = vld [vmem:[%s1 + $0x7f0] sm:$0xff]
    %v304 = vld [vmem:[%s1 + $0x7f8] sm:$0xff]
    %v305 = vld [vmem:[%s1 + $0x800] sm:$0xff]
    %v306 = vld [vmem:[%s1 + $0x808] sm:$0xff]
    %v307 = vld [vmem:[%s1 + $0x810] sm:$0xff]
    %v308 = vld [vmem:[%s1 + $0x818] sm:$0xff]
    %v309 = vld [vmem:[%s1 + $0x820] sm:$0xff]
    %v310 = vld [vmem:[%s1 + $0x828] sm:$0xff]
    %v311 = vld [vmem:[%s1 + $0x830] sm:$0xff]
    %v312 = vld [vmem:[%s1 + $0x838] sm:$0xff]
    %v313 = vld [vmem:[%s1 + $0x840] sm:$0xff]
    %v314 = vld [vmem:[%s1 + $0x848] sm:$0xff]
    %v315 = vld [vmem:[%s1 + $0x850] sm:$0xff]
    %v316 = vld [vmem:[%s1 + $0x858] sm:$0xff]
    %v317 = vld [vmem:[%s1 + $0x860] sm:$0xff]
    %v318 = vld [vmem:[%s1 + $0x868] sm:$0xff]
    %v319 = vld [vmem:[%s1 + $0x870] sm:$0xff]
    %v320 = vld [vmem:[%s1 + $0x878] sm:$0xff]
    %v321 = vld [vmem:[%s1 + $0x880] sm:$0xff]
    %v322 = vld [vmem:[%s1 + $0x888] sm:$0xff]
    %v323 = vld [vmem:[%s1 + $0x890] sm:$0xff]
    %v324 = vld [vmem:[%s1 + $0x898] sm:$0xff]
    %v325 = vld [vmem:[%s1 + $0x8a0] sm:$0xff]
    %v326 = vld [vmem:[%s1 + $0x8a8] sm:$0xff]
    %v327 = vld [vmem:[%s1 + $0x8b0] sm:$0xff]
    %v328 = vld [vmem:[%s1 + $0x8b8] sm:$0xff]
    %v329 = vld [vmem:[%s1 + $0x8c0] sm:$0xff]
    %v330 = vld [vmem:[%s1 + $0x8c8] sm:$0xff]
    %v331 = vld [vmem:[%s1 + $0x8d0] sm:$0xff]
    %v332 = vld [vmem:[%s1 + $0x8d8] sm:$0xff]
    %v333 = vld [vmem:[%s1 + $0x8e0] sm:$0xff]
    %v334 = vld [vmem:[%s1 + $0x8e8] sm:$0xff]
    %v335 = vld [vmem:[%s1 + $0x8f0] sm:$0xff]
    %v336 = vld [vmem:[%s1 + $0x8f8] sm:$0xff]
    %v337 = vld [vmem:[%s1 + $0x900] sm:$0xff]
    %v338 = vld [vmem:[%s1 + $0x908] sm:$0xff]
    %v339 = vld [vmem:[%s1 + $0x910] sm:$0xff]
    %v340 = vld [vmem:[%s1 + $0x918] sm:$0xff]
    %v341 = vld [vmem:[%s1 + $0x920] sm:$0xff]
    %v342 = vld [vmem:[%s1 + $0x928] sm:$0xff]
    %v343 = vld [vmem:[%s1 + $0x930] sm:$0xff]
    %v344 = vld [vmem:[%s1 + $0x938] sm:$0xff]
    %v345 = vld [vmem:[%s1 + $0x940] sm:$0xff]
    %v346 = vld [vmem:[%s1 + $0x948] sm:$0xff]
    %v347 = vld [vmem:[%s1 + $0x950] sm:$0xff]
    %v348 = vld [vmem:[%s1 + $0x958] sm:$0xff]
    %v349 = vld [vmem:[%s1 + $0x960] sm:$0xff]
    %v350 = vld [vmem:[%s1 + $0x968] sm:$0xff]
    %v351 = vld [vmem:[%s1 + $0x970] sm:$0xff]
    %v352 = vld [vmem:[%s1 + $0x978] sm:$0xff]
    %v353 = vld [vmem:[%s1 + $0x980] sm:$0xff]
    %v354 = vld [vmem:[%s1 + $0x988] sm:$0xff]
    %v355 = vld [vmem:[%s1 + $0x990] sm:$0xff]
    %v356 = vld [vmem:[%s1 + $0x998] sm:$0xff]
    %v357 = vld [vmem:[%s1 + $0x9a0] sm:$0xff]
    %v358 = vld [vmem:[%s1 + $0x9a8] sm:$0xff]
    %v359 = vld [vmem:[%s1 + $0x9b0] sm:$0xff]
    %v360 = vld [vmem:[%s1 + $0x9b8] sm:$0xff]
    %v361 = vld [vmem:[%s1 + $0x9c0] sm:$0xff]
    %v362 = vld [vmem:[%s1 + $0x9c8] sm:$0xff]
    %v363 = vld [vmem:[%s1 + $0x9d0] sm:$0xff]
    %v364 = vld [vmem:[%s1 + $0x9d8] sm:$0xff]
    %v365 = vld [vmem:[%s1 + $0x9e0] sm:$0xff]
    %v366 = vld [vmem:[%s1 + $0x9e8] sm:$0xff]
    %v367 = vld [vmem:[%s1 + $0x9f0] sm:$0xff]
    %v368 = vld [vmem:[%s1 + $0x9f8] sm:$0xff]
    %v369 = vld [vmem:[%s1 + $0xa00] sm:$0xff]
    %v370 = vld [vmem:[%s1 + $0xa08] sm:$0xff]
    %v371 = vld [vmem:[%s1 + $0xa10] sm:$0xff]
    %v372 = vld [vmem:[%s1 + $0xa18] sm:$0xff]
    %v373 = vld [vmem:[%s1 + $0xa20] sm:$0xff]
    %v374 = vld [vmem:[%s1 + $0xa28] sm:$0xff]
    %v375 = vld [vmem:[%s1 + $0xa30] sm:$0xff]
    %v376 = vld [vmem:[%s1 + $0xa38] sm:$0xff]
    %v377 = vld [vmem:[%s1 + $0xa40] sm:$0xff]
    %v378 = vld [vmem:[%s1 + $0xa48] sm:$0xff]
    %v379 = vld [vmem:[%s1 + $0xa50] sm:$0xff]
    %v380 = vld [vmem:[%s1 + $0xa58] sm:$0xff]
    %v381 = vld [vmem:[%s1 + $0xa60] sm:$0xff]
    %v382 = vld [vmem:[%s1 + $0xa68] sm:$0xff]
    %v383 = vld [vmem:[%s1 + $0xa70] sm:$0xff]
    %v384 = vld [vmem:[%s1 + $0xa78] sm:$0xff]
    %v385 = vld [vmem:[%s1 + $0xa80] sm:$0xff]
    %v386 = vld [vmem:[%s1 + $0xa88] sm:$0xff]
    %v387 = vld [vmem:[%s1 + $0xa90] sm:$0xff]
    %v388 = vld [vmem:[%s1 + $0xa98] sm:$0xff]
    %v389 = vld [vmem:[%s1 + $0xaa0] sm:$0xff]
    %v390 = vld [vmem:[%s1 + $0xaa8] sm:$0xff]
    %v391 = vld [vmem:[%s1 + $0xab0] sm:$0xff]
    %v392 = vld [vmem:[%s1 + $0xab8] sm:$0xff]
    %v393 = vld [vmem:[%s1 + $0xac0] sm:$0xff]
    %v394 = vld [vmem:[%s1 + $0xac8] sm:$0xff]
    %v395 = vld [vmem:[%s1 + $0xad0] sm:$0xff]
    %v396 = vld [vmem:[%s1 + $0xad8] sm:$0xff]
    %v397 = vld [vmem:[%s1 + $0xae0] sm:$0xff]
    %v398 = vld [vmem:[%s1 + $0xae8] sm:$0xff]
    %v399 = vld [vmem:[%s1 + $0xaf0] sm:$0xff]
    %v400 = vld [vmem:[%s1 + $0xaf8] sm:$0xff]
    %v401 = vld [vmem:[%s1 + $0xb00] sm:$0xff]
    %v402 = vld [vmem:[%s1 + $0xb08] sm:$0xff]
    %v403 = vld [vmem:[%s1 + $0xb10] sm:$0xff]
    %v404 = vld [vmem:[%s1 + $0xb18] sm:$0xff]
    %v405 = vld [vmem:[%s1 + $0xb20] sm:$0xff]
    %v406 = vld [vmem:[%s1 + $0xb28] sm:$0xff]
    %v407 = vld [vmem:[%s1 + $0xb30] sm:$0xff]
    %v408 = vld [vmem:[%s1 + $0xb38] sm:$0xff]
    %v409 = vld [vmem:[%s1 + $0xb40] sm:$0xff]
    %v410 = vld [vmem:[%s1 + $0xb48] sm:$0xff]
    %v411 = vld [vmem:[%s1 + $0xb50] sm:$0xff]
    %v412 = vld [vmem:[%s1 + $0xb58] sm:$0xff]
    %v413 = vld [vmem:[%s1 + $0xb60] sm:$0xff]
    %v414 = vld [vmem:[%s1 + $0xb68] sm:$0xff]
    %v415 = vld [vmem:[%s1 + $0xb70] sm:$0xff]
    %v416 = vld [vmem:[%s1 + $0xb78] sm:$0xff]
    %v417 = vld [vmem:[%s1 + $0xb80] sm:$0xff]
    %v418 = vld [vmem:[%s1 + $0xb88] sm:$0xff]
    %v419 = vld [vmem:[%s1 + $0xb90] sm:$0xff]
    %v420 = vld [vmem:[%s1 + $0xb98] sm:$0xff]
    %v421 = vld [vmem:[%s1 + $0xba0] sm:$0xff]
    %v422 = vld [vmem:[%s1 + $0xba8] sm:$0xff]
    %v423 = vld [vmem:[%s1 + $0xbb0] sm:$0xff]
    %v424 = vld [vmem:[%s1 + $0xbb8] sm:$0xff]
    %v425 = vld [vmem:[%s1 + $0xbc0] sm:$0xff]
    %v426 = vld [vmem:[%s1 + $0xbc8] sm:$0xff]
    %v427 = vld [vmem:[%s1 + $0xbd0] sm:$0xff]
    %v428 = vld [vmem:[%s1 + $0xbd8] sm:$0xff]
    %v429 = vld [vmem:[%s1 + $0xbe0] sm:$0xff]
    %v430 = vld [vmem:[%s1 + $0xbe8] sm:$0xff]
    %v431 = vld [vmem:[%s1 + $0xbf0] sm:$0xff]
    %v432 = vld [vmem:[%s1 + $0xbf8] sm:$0xff]
    %v433 = vld [vmem:[%s1 + $0xc00] sm:$0xff]
    %v434 = vld [vmem:[%s1 + $0xc08] sm:$0xff]
    %v435 = vld [vmem:[%s1 + $0xc10] sm:$0xff]
    %v436 = vld [vmem:[%s1 + $0xc18] sm:$0xff]
    %v437 = vld [vmem:[%s1 + $0xc20] sm:$0xff]
    %v438 = vld [vmem:[%s1 + $0xc28] sm:$0xff]
    %v439 = vld [vmem:[%s1 + $0xc30] sm:$0xff]
    %v440 = vld [vmem:[%s1 + $0xc38] sm:$0xff]
    %v441 = vld [vmem:[%s1 + $0xc40] sm:$0xff]
    %v442 = vld [vmem:[%s1 + $0xc48] sm:$0xff]
    %v443 = vld [vmem:[%s1 + $0xc50] sm:$0xff]
    %v444 = vld [vmem:[%s1 + $0xc58] sm:$0xff]
    %v445 = vld [vmem:[%s1 + $0xc60] sm:$0xff]
    %v446 = vld [vmem:[%s1 + $0xc68] sm:$0xff]
    %v447 = vld [vmem:[%s1 + $0xc70] sm:$0xff]
    %v448 = vld [vmem:[%s1 + $0xc78] sm:$0xff]
    %v449 = vld [vmem:[%s1 + $0xc80] sm:$0xff]
    %v450 = vld [vmem:[%s1 + $0xc88] sm:$0xff]
    %v451 = vld [vmem:[%s1 + $0xc90] sm:$0xff]
    %v452 = vld [vmem:[%s1 + $0xc98] sm:$0xff]
    %v453 = vld [vmem:[%s1 + $0xca0] sm:$0xff]
    %v454 = vld [vmem:[%s1 + $0xca8] sm:$0xff]
    %v455 = vld [vmem:[%s1 + $0xcb0] sm:$0xff]
    %v456 = vld [vmem:[%s1 + $0xcb8] sm:$0xff]
    %v457 = vld [vmem:[%s1 + $0xcc0] sm:$0xff]
    %v458 = vld [vmem:[%s1 + $0xcc8] sm:$0xff]
    %v459 = vld [vmem:[%s1 + $0xcd0] sm:$0xff]
    %v460 = vld [vmem:[%s1 + $0xcd8] sm:$0xff]
    %v461 = vld [vmem:[%s1 + $0xce0] sm:$0xff]
    %v462 = vld [vmem:[%s1 + $0xce8] sm:$0xff]
    %v463 = vld [vmem:[%s1 + $0xcf0] sm:$0xff]
    %v464 = vld [vmem:[%s1 + $0xcf8] sm:$0xff]
    %v465 = vld [vmem:[%s1 + $0xd00] sm:$0xff]
    %v466 = vld [vmem:[%s1 + $0xd08] sm:$0xff]
    %v467 = vld [vmem:[%s1 + $0xd10] sm:$0xff]
    %v468 = vld [vmem:[%s1 + $0xd18] sm:$0xff]
    %v469 = vld [vmem:[%s1 + $0xd20] sm:$0xff]
    %v470 = vld [vmem:[%s1 + $0xd28] sm:$0xff]
    %v471 = vld [vmem:[%s1 + $0xd30] sm:$0xff]
    %v472 = vld [vmem:[%s1 + $0xd38] sm:$0xff]
    %v473 = vld [vmem:[%s1 + $0xd40] sm:$0xff]
    %v474 = vld [vmem:[%s1 + $0xd48] sm:$0xff]
    %v475 = vld [vmem:[%s1 + $0xd50] sm:$0xff]
    %v476 = vld [vmem:[%s1 + $0xd58] sm:$0xff]
    %v477 = vld [vmem:[%s1 + $0xd60] sm:$0xff]
    %v478 = vld [vmem:[%s1 + $0xd68] sm:$0xff]
    %v479 = vld [vmem:[%s1 + $0xd70] sm:$0xff]
    %v480 = vld [vmem:[%s1 + $0xd78] sm:$0xff]
    %v481 = vld [vmem:[%s1 + $0xd80] sm:$0xff]
    %v482 = vld [vmem:[%s1 + $0xd88] sm:$0xff]
    %v483 = vld [vmem:[%s1 + $0xd90] sm:$0xff]
    %v484 = vld [vmem:[%s1 + $0xd98] sm:$0xff]
    %v485 = vld [vmem:[%s1 + $0xda0] sm:$0xff]
    %v486 = vld [vmem:[%s1 + $0xda8] sm:$0xff]
    %v487 = vld [vmem:[%s1 + $0xdb0] sm:$0xff]
    %v488 = vld [vmem:[%s1 + $0xdb8] sm:$0xff]
    %v489 = vld [vmem:[%s1 + $0xdc0] sm:$0xff]
    %v490 = vld [vmem:[%s1 + $0xdc8] sm:$0xff]
    %v491 = vld [vmem:[%s1 + $0xdd0] sm:$0xff]
    %v492 = vld [vmem:[%s1 + $0xdd8] sm:$0xff]
    %v493 = vld [vmem:[%s1 + $0xde0] sm:$0xff]
    %v494 = vld [vmem:[%s1 + $0xde8] sm:$0xff]
    %v495 = vld [vmem:[%s1 + $0xdf0] sm:$0xff]
    %v496 = vld [vmem:[%s1 + $0xdf8] sm:$0xff]
    %v497 = vld [vmem:[%s1 + $0xe00] sm:$0xff]
    %v498 = vld [vmem:[%s1 + $0xe08] sm:$0xff]
    %v499 = vld [vmem:[%s1 + $0xe10] sm:$0xff]
    %v500 = vld [vmem:[%s1 + $0xe18] sm:$0xff]
    %v501 = vld [vmem:[%s1 + $0xe20] sm:$0xff]
    %v502 = vld [vmem:[%s1 + $0xe28] sm:$0xff]
    %v503 = vld [vmem:[%s1 + $0xe30] sm:$0xff]
    %v504 = vld [vmem:[%s1 + $0xe38] sm:$0xff]
    %v505 = vld [vmem:[%s1 + $0xe40] sm:$0xff]
    %v506 = vld [vmem:[%s1 + $0xe48] sm:$0xff]
    %v507 = vld [vmem:[%s1 + $0xe50] sm:$0xff]
    %v508 = vld [vmem:[%s1 + $0xe58] sm:$0xff]
    %v509 = vld [vmem:[%s1 + $0xe60] sm:$0xff]
    %v510 = vld [vmem:[%s1 + $0xe68] sm:$0xff]
    %v511 = vld [vmem:[%s1 + $0xe70] sm:$0xff]
    %v512 = vld [vmem:[%s1 + $0xe78] sm:$0xff]
    %v513 = vld [vmem:[%s1 + $0xe80] sm:$0xff]
    %v514 = vld [vmem:[%s1 + $0xe88] sm:$0xff]
    %v515 = vld [vmem:[%s1 + $0xe90] sm:$0xff]
    %v516 = vld [vmem:[%s1 + $0xe98] sm:$0xff]
    %v517 = vld [vmem:[%s1 + $0xea0] sm:$0xff]
    %v518 = vld [vmem:[%s1 + $0xea8] sm:$0xff]
    %v519 = vld [vmem:[%s1 + $0xeb0] sm:$0xff]
    %v520 = vld [vmem:[%s1 + $0xeb8] sm:$0xff]
    %v521 = vld [vmem:[%s1 + $0xec0] sm:$0xff]
    %v522 = vld [vmem:[%s1 + $0xec8] sm:$0xff]
    %v523 = vld [vmem:[%s1 + $0xed0] sm:$0xff]
    %v524 = vld [vmem:[%s1 + $0xed8] sm:$0xff]
    %v525 = vld [vmem:[%s1 + $0xee0] sm:$0xff]
    %v526 = vld [vmem:[%s1 + $0xee8] sm:$0xff]
    %v527 = vld [vmem:[%s1 + $0xef0] sm:$0xff]
    %v528 = vld [vmem:[%s1 + $0xef8] sm:$0xff]
    %v529 = vld [vmem:[%s1 + $0xf00] sm:$0xff]
    %v530 = vld [vmem:[%s1 + $0xf08] sm:$0xff]
    %v531 = vld [vmem:[%s1 + $0xf10] sm:$0xff]
    %v532 = vld [vmem:[%s1 + $0xf18] sm:$0xff]
    %v533 = vld [vmem:[%s1 + $0xf20] sm:$0xff]
    %v534 = vld [vmem:[%s1 + $0xf28] sm:$0xff]
    %v535 = vld [vmem:[%s1 + $0xf30] sm:$0xff]
    %v536 = vld [vmem:[%s1 + $0xf38] sm:$0xff]
    %v537 = vld [vmem:[%s1 + $0xf40] sm:$0xff]
    %v538 = vld [vmem:[%s1 + $0xf48] sm:$0xff]
    %v539 = vld [vmem:[%s1 + $0xf50] sm:$0xff]
    %v540 = vld [vmem:[%s1 + $0xf58] sm:$0xff]
    %v541 = vld [vmem:[%s1 + $0xf60] sm:$0xff]
    %v542 = vld [vmem:[%s1 + $0xf68] sm:$0xff]
    %v543 = vld [vmem:[%s1 + $0xf70] sm:$0xff]
    %v544 = vld [vmem:[%s1 + $0xf78] sm:$0xff]
    %v545 = vld [vmem:[%s1 + $0xf80] sm:$0xff]
    %v546 = vld [vmem:[%s1 + $0xf88] sm:$0xff]
    %v547 = vld [vmem:[%s1 + $0xf90] sm:$0xff]
    %v548 = vld [vmem:[%s1 + $0xf98] sm:$0xff]
    %v549 = vld [vmem:[%s1 + $0xfa0] sm:$0xff]
    %v550 = vld [vmem:[%s1 + $0xfa8] sm:$0xff]
    %v551 = vld [vmem:[%s1 + $0xfb0] sm:$0xff]
    %v552 = vld [vmem:[%s1 + $0xfb8] sm:$0xff]
    %v553 = vld [vmem:[%s1 + $0xfc0] sm:$0xff]
    %v554 = vld [vmem:[%s1 + $0xfc8] sm:$0xff]
    %v555 = vld [vmem:[%s1 + $0xfd0] sm:$0xff]
    %v556 = vld [vmem:[%s1 + $0xfd8] sm:$0xff]
    %v557 = vld [vmem:[%s1 + $0xfe0] sm:$0xff]
    %v558 = vld [vmem:[%s1 + $0xfe8] sm:$0xff]
    %v559 = vld [vmem:[%s1 + $0xff0] sm:$0xff]
    %v560 = vld [vmem:[%s1 + $0xff8] sm:$0xff]
    %v561 = vld [vmem:[%s1 + $0x1000] sm:$0xff]
    %v562 = vld [vmem:[%s1 + $0x1008] sm:$0xff]
    %v563 = vld [vmem:[%s1 + $0x1010] sm:$0xff]
    %v564 = vld [vmem:[%s1 + $0x1018] sm:$0xff]
    %v565 = vld [vmem:[%s1 + $0x1020] sm:$0xff]
    %v566 = vld [vmem:[%s1 + $0x1028] sm:$0xff]
    %v567 = vld [vmem:[%s1 + $0x1030] sm:$0xff]
    %v568 = vld [vmem:[%s1 + $0x1038] sm:$0xff]
    %v569 = vld [vmem:[%s1 + $0x1040] sm:$0xff]
    %v570 = vld [vmem:[%s1 + $0x1048] sm:$0xff]
    %v571 = vld [vmem:[%s1 + $0x1050] sm:$0xff]
    %v572 = vld [vmem:[%s1 + $0x1058] sm:$0xff]
    %v573 = vld [vmem:[%s1 + $0x1060] sm:$0xff]
    %v574 = vld [vmem:[%s1 + $0x1068] sm:$0xff]
    %v575 = vld [vmem:[%s1 + $0x1070] sm:$0xff]
    %v576 = vld [vmem:[%s1 + $0x1078] sm:$0xff]
    %v577 = vld [vmem:[%s1 + $0x1080] sm:$0xff]
    %v578 = vld [vmem:[%s1 + $0x1088] sm:$0xff]
    %v579 = vld [vmem:[%s1 + $0x1090] sm:$0xff]
    %v580 = vld [vmem:[%s1 + $0x1098] sm:$0xff]
    %v581 = vld [vmem:[%s1 + $0x10a0] sm:$0xff]
    %v582 = vld [vmem:[%s1 + $0x10a8] sm:$0xff]
    %v583 = vld [vmem:[%s1 + $0x10b0] sm:$0xff]
    %v584 = vld [vmem:[%s1 + $0x10b8] sm:$0xff]
    %v585 = vld [vmem:[%s1 + $0x10c0] sm:$0xff]
    %v586 = vld [vmem:[%s1 + $0x10c8] sm:$0xff]
    %v587 = vld [vmem:[%s1 + $0x10d0] sm:$0xff]
    %v588 = vld [vmem:[%s1 + $0x10d8] sm:$0xff]
    %v589 = vld [vmem:[%s1 + $0x10e0] sm:$0xff]
    %v590 = vld [vmem:[%s1 + $0x10e8] sm:$0xff]
    %v591 = vld [vmem:[%s1 + $0x10f0] sm:$0xff]
    %v592 = vld [vmem:[%s1 + $0x10f8] sm:$0xff]
    %v593 = vld [vmem:[%s1 + $0x1100] sm:$0xff]
    %v594 = vld [vmem:[%s1 + $0x1108] sm:$0xff]
    %v595 = vld [vmem:[%s1 + $0x1110] sm:$0xff]
    %v596 = vld [vmem:[%s1 + $0x1118] sm:$0xff]
    %v597 = vld [vmem:[%s1 + $0x1120] sm:$0xff]
    %v598 = vld [vmem:[%s1 + $0x1128] sm:$0xff]
    %v599 = vld [vmem:[%s1 + $0x1130] sm:$0xff]
    %v600 = vld [vmem:[%s1 + $0x1138] sm:$0xff]
    %v601 = vld [vmem:[%s1 + $0x1140] sm:$0xff]
    %v602 = vld [vmem:[%s1 + $0x1148] sm:$0xff]
    %v603 = vld [vmem:[%s1 + $0x1150] sm:$0xff]
    %v604 = vld [vmem:[%s1 + $0x1158] sm:$0xff]
    %v605 = vld [vmem:[%s1 + $0x1160] sm:$0xff]
    %v606 = vld [vmem:[%s1 + $0x1168] sm:$0xff]
    %v607 = vld [vmem:[%s1 + $0x1170] sm:$0xff]
    %v608 = vld [vmem:[%s1 + $0x1178] sm:$0xff]
    %v609 = vld [vmem:[%s1 + $0x1180] sm:$0xff]
    %v610 = vld [vmem:[%s1 + $0x1188] sm:$0xff]
    %v611 = vld [vmem:[%s1 + $0x1190] sm:$0xff]
    %v612 = vld [vmem:[%s1 + $0x1198] sm:$0xff]
    %v613 = vld [vmem:[%s1 + $0x11a0] sm:$0xff]
    %v614 = vld [vmem:[%s1 + $0x11a8] sm:$0xff]
    %v615 = vld [vmem:[%s1 + $0x11b0] sm:$0xff]
    %v616 = vld [vmem:[%s1 + $0x11b8] sm:$0xff]
    %v617 = vld [vmem:[%s1 + $0x11c0] sm:$0xff]
    %v618 = vld [vmem:[%s1 + $0x11c8] sm:$0xff]
    %v619 = vld [vmem:[%s1 + $0x11d0] sm:$0xff]
    %v620 = vld [vmem:[%s1 + $0x11d8] sm:$0xff]
    %v621 = vld [vmem:[%s1 + $0x11e0] sm:$0xff]
    %v622 = vld [vmem:[%s1 + $0x11e8] sm:$0xff]
    %v623 = vld [vmem:[%s1 + $0x11f0] sm:$0xff]
    %v624 = vld [vmem:[%s1 + $0x11f8] sm:$0xff]
    %v625 = vld [vmem:[%s1 + $0x1200] sm:$0xff]
    %v626 = vld [vmem:[%s1 + $0x1208] sm:$0xff]
    %v627 = vld [vmem:[%s1 + $0x1210] sm:$0xff]
    %v628 = vld [vmem:[%s1 + $0x1218] sm:$0xff]
    %v629 = vld [vmem:[%s1 + $0x1220] sm:$0xff]
    %v630 = vld [vmem:[%s1 + $0x1228] sm:$0xff]
    %v631 = vld [vmem:[%s1 + $0x1230] sm:$0xff]
    %v632 = vld [vmem:[%s1 + $0x1238] sm:$0xff]
    %v633 = vld [vmem:[%s1 + $0x1240] sm:$0xff]
    %v634 = vld [vmem:[%s1 + $0x1248] sm:$0xff]
    %v635 = vld [vmem:[%s1 + $0x1250] sm:$0xff]
    %v636 = vld [vmem:[%s1 + $0x1258] sm:$0xff]
    %v637 = vld [vmem:[%s1 + $0x1260] sm:$0xff]
    %v638 = vld [vmem:[%s1 + $0x1268] sm:$0xff]
    %v639 = vld [vmem:[%s1 + $0x1270] sm:$0xff]
    %v640 = vld [vmem:[%s1 + $0x1278] sm:$0xff]
    %v641 = vld [vmem:[%s1 + $0x1280] sm:$0xff]
    %v642 = vld [vmem:[%s1 + $0x1288] sm:$0xff]
    %v643 = vld [vmem:[%s1 + $0x1290] sm:$0xff]
    %v644 = vld [vmem:[%s1 + $0x1298] sm:$0xff]
    %v645 = vld [vmem:[%s1 + $0x12a0] sm:$0xff]
    %v646 = vld [vmem:[%s1 + $0x12a8] sm:$0xff]
    %v647 = vld [vmem:[%s1 + $0x12b0] sm:$0xff]
    %v648 = vld [vmem:[%s1 + $0x12b8] sm:$0xff]
    %v649 = vld [vmem:[%s1 + $0x12c0] sm:$0xff]
    %v650 = vld [vmem:[%s1 + $0x12c8] sm:$0xff]
    %v651 = vld [vmem:[%s1 + $0x12d0] sm:$0xff]
    %v652 = vld [vmem:[%s1 + $0x12d8] sm:$0xff]
    %v653 = vld [vmem:[%s1 + $0x12e0] sm:$0xff]
    %v654 = vld [vmem:[%s1 + $0x12e8] sm:$0xff]
    %v655 = vld [vmem:[%s1 + $0x12f0] sm:$0xff]
    %v656 = vld [vmem:[%s1 + $0x12f8] sm:$0xff]
    %v657 = vld [vmem:[%s1 + $0x1300] sm:$0xff]
    %v658 = vld [vmem:[%s1 + $0x1308] sm:$0xff]
    %v659 = vld [vmem:[%s1 + $0x1310] sm:$0xff]
    %v660 = vld [vmem:[%s1 + $0x1318] sm:$0xff]
    %v661 = vld [vmem:[%s1 + $0x1320] sm:$0xff]
    %v662 = vld [vmem:[%s1 + $0x1328] sm:$0xff]
    %v663 = vld [vmem:[%s1 + $0x1330] sm:$0xff]
    %v664 = vld [vmem:[%s1 + $0x1338] sm:$0xff]
    %v665 = vld [vmem:[%s1 + $0x1340] sm:$0xff]
    %v666 = vld [vmem:[%s1 + $0x1348] sm:$0xff]
    %v667 = vld [vmem:[%s1 + $0x1350] sm:$0xff]
    %v668 = vld [vmem:[%s1 + $0x1358] sm:$0xff]
    %v669 = vld [vmem:[%s1 + $0x1360] sm:$0xff]
    %v670 = vld [vmem:[%s1 + $0x1368] sm:$0xff]
    %v671 = vld [vmem:[%s1 + $0x1370] sm:$0xff]
    %v672 = vld [vmem:[%s1 + $0x1378] sm:$0xff]
    %v673 = vld [vmem:[%s1 + $0x1380] sm:$0xff]
    %v674 = vld [vmem:[%s1 + $0x1388] sm:$0xff]
    %v675 = vld [vmem:[%s1 + $0x1390] sm:$0xff]
    %v676 = vld [vmem:[%s1 + $0x1398] sm:$0xff]
    %v677 = vld [vmem:[%s1 + $0x13a0] sm:$0xff]
    %v678 = vld [vmem:[%s1 + $0x13a8] sm:$0xff]
    %v679 = vld [vmem:[%s1 + $0x13b0] sm:$0xff]
    %v680 = vld [vmem:[%s1 + $0x13b8] sm:$0xff]
    %v681 = vld [vmem:[%s1 + $0x13c0] sm:$0xff]
    %v682 = vld [vmem:[%s1 + $0x13c8] sm:$0xff]
    %v683 = vld [vmem:[%s1 + $0x13d0] sm:$0xff]
    %v684 = vld [vmem:[%s1 + $0x13d8] sm:$0xff]
    %v685 = vld [vmem:[%s1 + $0x13e0] sm:$0xff]
    %v686 = vld [vmem:[%s1 + $0x13e8] sm:$0xff]
    %v687 = vld [vmem:[%s1 + $0x13f0] sm:$0xff]
    %v688 = vld [vmem:[%s1 + $0x13f8] sm:$0xff]
    %v689 = vld [vmem:[%s1 + $0x1400] sm:$0xff]
    %v690 = vld [vmem:[%s1 + $0x1408] sm:$0xff]
    %v691 = vld [vmem:[%s1 + $0x1410] sm:$0xff]
    %v692 = vld [vmem:[%s1 + $0x1418] sm:$0xff]
    %v693 = vld [vmem:[%s1 + $0x1420] sm:$0xff]
    %v694 = vld [vmem:[%s1 + $0x1428] sm:$0xff]
    %v695 = vld [vmem:[%s1 + $0x1430] sm:$0xff]
    %v696 = vld [vmem:[%s1 + $0x1438] sm:$0xff]
    %v697 = vld [vmem:[%s1 + $0x1440] sm:$0xff]
    %v698 = vld [vmem:[%s1 + $0x1448] sm:$0xff]
    %v699 = vld [vmem:[%s1 + $0x1450] sm:$0xff]
    %v700 = vld [vmem:[%s1 + $0x1458] sm:$0xff]
    %v701 = vld [vmem:[%s1 + $0x1460] sm:$0xff]
    %v702 = vld [vmem:[%s1 + $0x1468] sm:$0xff]
    %v703 = vld [vmem:[%s1 + $0x1470] sm:$0xff]
    %v704 = vld [vmem:[%s1 + $0x1478] sm:$0xff]
    %v705 = vld [vmem:[%s1 + $0x1480] sm:$0xff]
    %v706 = vld [vmem:[%s1 + $0x1488] sm:$0xff]
    %v707 = vld [vmem:[%s1 + $0x1490] sm:$0xff]
    %v708 = vld [vmem:[%s1 + $0x1498] sm:$0xff]
    %v709 = vld [vmem:[%s1 + $0x14a0] sm:$0xff]
    %v710 = vld [vmem:[%s1 + $0x14a8] sm:$0xff]
    %v711 = vld [vmem:[%s1 + $0x14b0] sm:$0xff]
    %v712 = vld [vmem:[%s1 + $0x14b8] sm:$0xff]
    %v713 = vld [vmem:[%s1 + $0x14c0] sm:$0xff]
    %v714 = vld [vmem:[%s1 + $0x14c8] sm:$0xff]
    %v715 = vld [vmem:[%s1 + $0x14d0] sm:$0xff]
    %v716 = vld [vmem:[%s1 + $0x14d8] sm:$0xff]
    %v717 = vld [vmem:[%s1 + $0x14e0] sm:$0xff]
    %v718 = vld [vmem:[%s1 + $0x14e8] sm:$0xff]
    %v719 = vld [vmem:[%s1 + $0x14f0] sm:$0xff]
    %v720 = vld [vmem:[%s1 + $0x14f8] sm:$0xff]
    %v721 = vld [vmem:[%s1 + $0x1500] sm:$0xff]
    %v722 = vld [vmem:[%s1 + $0x1508] sm:$0xff]
    %v723 = vld [vmem:[%s1 + $0x1510] sm:$0xff]
    %v724 = vld [vmem:[%s1 + $0x1518] sm:$0xff]
    %v725 = vld [vmem:[%s1 + $0x1520] sm:$0xff]
    %v726 = vld [vmem:[%s1 + $0x1528] sm:$0xff]
    %v727 = vld [vmem:[%s1 + $0x1530] sm:$0xff]
    %v728 = vld [vmem:[%s1 + $0x1538] sm:$0xff]
    %v729 = vld [vmem:[%s1 + $0x1540] sm:$0xff]
    %v730 = vld [vmem:[%s1 + $0x1548] sm:$0xff]
    %v731 = vld [vmem:[%s1 + $0x1550] sm:$0xff]
    %v732 = vld [vmem:[%s1 + $0x1558] sm:$0xff]
    %v733 = vld [vmem:[%s1 + $0x1560] sm:$0xff]
    %v734 = vld [vmem:[%s1 + $0x1568] sm:$0xff]
    %v735 = vld [vmem:[%s1 + $0x1570] sm:$0xff]
    %v736 = vld [vmem:[%s1 + $0x1578] sm:$0xff]
    %v737 = vld [vmem:[%s1 + $0x1580] sm:$0xff]
    %v738 = vld [vmem:[%s1 + $0x1588] sm:$0xff]
    %v739 = vld [vmem:[%s1 + $0x1590] sm:$0xff]
    %v740 = vld [vmem:[%s1 + $0x1598] sm:$0xff]
    %v741 = vld [vmem:[%s1 + $0x15a0] sm:$0xff]
    %v742 = vld [vmem:[%s1 + $0x15a8] sm:$0xff]
    %v743 = vld [vmem:[%s1 + $0x15b0] sm:$0xff]
    %v744 = vld [vmem:[%s1 + $0x15b8] sm:$0xff]
    %v745 = vld [vmem:[%s1 + $0x15c0] sm:$0xff]
    %v746 = vld [vmem:[%s1 + $0x15c8] sm:$0xff]
    %v747 = vld [vmem:[%s1 + $0x15d0] sm:$0xff]
    %v748 = vld [vmem:[%s1 + $0x15d8] sm:$0xff]
    %v749 = vld [vmem:[%s1 + $0x15e0] sm:$0xff]
    %v750 = vld [vmem:[%s1 + $0x15e8] sm:$0xff]
    %v751 = vld [vmem:[%s1 + $0x15f0] sm:$0xff]
    %v752 = vld [vmem:[%s1 + $0x15f8] sm:$0xff]
    %v753 = vld [vmem:[%s1 + $0x1600] sm:$0xff]
    %v754 = vld [vmem:[%s1 + $0x1608] sm:$0xff]
    %v755 = vld [vmem:[%s1 + $0x1610] sm:$0xff]
    %v756 = vld [vmem:[%s1 + $0x1618] sm:$0xff]
    %v757 = vld [vmem:[%s1 + $0x1620] sm:$0xff]
    %v758 = vld [vmem:[%s1 + $0x1628] sm:$0xff]
    %v759 = vld [vmem:[%s1 + $0x1630] sm:$0xff]
    %v760 = vld [vmem:[%s1 + $0x1638] sm:$0xff]
    %v761 = vld [vmem:[%s1 + $0x1640] sm:$0xff]
    %v762 = vld [vmem:[%s1 + $0x1648] sm:$0xff]
    %v763 = vld [vmem:[%s1 + $0x1650] sm:$0xff]
    %v764 = vld [vmem:[%s1 + $0x1658] sm:$0xff]
    %v765 = vld [vmem:[%s1 + $0x1660] sm:$0xff]
    %v766 = vld [vmem:[%s1 + $0x1668] sm:$0xff]
    %v767 = vld [vmem:[%s1 + $0x1670] sm:$0xff]
    %v768 = vld [vmem:[%s1 + $0x1678] sm:$0xff]
    %v769 = vld [vmem:[%s1 + $0x1680] sm:$0xff]
    %v770 = vld [vmem:[%s1 + $0x1688] sm:$0xff]
    %v771 = vld [vmem:[%s1 + $0x1690] sm:$0xff]
    %v772 = vld [vmem:[%s1 + $0x1698] sm:$0xff]
    %v773 = vld [vmem:[%s1 + $0x16a0] sm:$0xff]
    %v774 = vld [vmem:[%s1 + $0x16a8] sm:$0xff]
    %v775 = vld [vmem:[%s1 + $0x16b0] sm:$0xff]
    %v776 = vld [vmem:[%s1 + $0x16b8] sm:$0xff]
    %v777 = vld [vmem:[%s1 + $0x16c0] sm:$0xff]
    %v778 = vld [vmem:[%s1 + $0x16c8] sm:$0xff]
    %v779 = vld [vmem:[%s1 + $0x16d0] sm:$0xff]
    %v780 = vld [vmem:[%s1 + $0x16d8] sm:$0xff]
    %v781 = vld [vmem:[%s1 + $0x16e0] sm:$0xff]
    %v782 = vld [vmem:[%s1 + $0x16e8] sm:$0xff]
    %v783 = vld [vmem:[%s1 + $0x16f0] sm:$0xff]
    %v784 = vld [vmem:[%s1 + $0x16f8] sm:$0xff]
    %v785 = vld [vmem:[%s1 + $0x1700] sm:$0xff]
    %v786 = vld [vmem:[%s1 + $0x1708] sm:$0xff]
    %v787 = vld [vmem:[%s1 + $0x1710] sm:$0xff]
    %v788 = vld [vmem:[%s1 + $0x1718] sm:$0xff]
    %v789 = vld [vmem:[%s1 + $0x1720] sm:$0xff]
    %v790 = vld [vmem:[%s1 + $0x1728] sm:$0xff]
    %v791 = vld [vmem:[%s1 + $0x1730] sm:$0xff]
    %v792 = vld [vmem:[%s1 + $0x1738] sm:$0xff]
    %v793 = vld [vmem:[%s1 + $0x1740] sm:$0xff]
    %v794 = vld [vmem:[%s1 + $0x1748] sm:$0xff]
    %v795 = vld [vmem:[%s1 + $0x1750] sm:$0xff]
    %v796 = vld [vmem:[%s1 + $0x1758] sm:$0xff]
    %v797 = vld [vmem:[%s1 + $0x1760] sm:$0xff]
    %v798 = vld [vmem:[%s1 + $0x1768] sm:$0xff]
    %v799 = vld [vmem:[%s1 + $0x1770] sm:$0xff]
    %v800 = vld [vmem:[%s1 + $0x1778] sm:$0xff]
    %v801 = vld [vmem:[%s1 + $0x1780] sm:$0xff]
    %v802 = vld [vmem:[%s1 + $0x1788] sm:$0xff]
    %v803 = vld [vmem:[%s1 + $0x1790] sm:$0xff]
    %v804 = vld [vmem:[%s1 + $0x1798] sm:$0xff]
    %v805 = vld [vmem:[%s1 + $0x17a0] sm:$0xff]
    %v806 = vld [vmem:[%s1 + $0x17a8] sm:$0xff]
    %v807 = vld [vmem:[%s1 + $0x17b0] sm:$0xff]
    %v808 = vld [vmem:[%s1 + $0x17b8] sm:$0xff]
    %v809 = vld [vmem:[%s1 + $0x17c0] sm:$0xff]
    %v810 = vld [vmem:[%s1 + $0x17c8] sm:$0xff]
    %v811 = vld [vmem:[%s1 + $0x17d0] sm:$0xff]
    %v812 = vld [vmem:[%s1 + $0x17d8] sm:$0xff]
    %v813 = vld [vmem:[%s1 + $0x17e0] sm:$0xff]
    %v814 = vld [vmem:[%s1 + $0x17e8] sm:$0xff]
    %v815 = vld [vmem:[%s1 + $0x17f0] sm:$0xff]
    %v816 = vld [vmem:[%s1 + $0x17f8] sm:$0xff]
    %v817 = vld [vmem:[%s1 + $0x1800] sm:$0xff]
    %v818 = vld [vmem:[%s1 + $0x1808] sm:$0xff]
    %v819 = vld [vmem:[%s1 + $0x1810] sm:$0xff]
    %v820 = vld [vmem:[%s1 + $0x1818] sm:$0xff]
    %v821 = vld [vmem:[%s1 + $0x1820] sm:$0xff]
    %v822 = vld [vmem:[%s1 + $0x1828] sm:$0xff]
    %v823 = vld [vmem:[%s1 + $0x1830] sm:$0xff]
    %v824 = vld [vmem:[%s1 + $0x1838] sm:$0xff]
    %v825 = vld [vmem:[%s1 + $0x1840] sm:$0xff]
    %v826 = vld [vmem:[%s1 + $0x1848] sm:$0xff]
    %v827 = vld [vmem:[%s1 + $0x1850] sm:$0xff]
    %v828 = vld [vmem:[%s1 + $0x1858] sm:$0xff]
    %v829 = vld [vmem:[%s1 + $0x1860] sm:$0xff]
    %v830 = vld [vmem:[%s1 + $0x1868] sm:$0xff]
    %v831 = vld [vmem:[%s1 + $0x1870] sm:$0xff]
    %v832 = vld [vmem:[%s1 + $0x1878] sm:$0xff]
    %v846 = vcombine.high %v36, %v36
    %v848 = vunpack.c.l.s4 1983009808
    %v849 = vunpack.c.0.s8 %v848
    %v850 = vlaneseq
    %v851 = vshrl.u32 %v850, 7
    %v852 = vsub.s32 %v849, %v851
    %v853 = vrot.slane %v36, %v852
    %v855 = vunpack.c.l.s4 1983009808
    %v856 = vunpack.c.0.s8 %v855
    %v857 = vlaneseq
    %v858 = vshrl.u32 %v857, 7
    %v859 = vsub.s32 %v856, %v858
    %v860 = vrot.slane %v846, %v859
    %v861 = vcombine.high %v853, %v853
    %v862 = vcombine.high %v860, %v860
    %v863 = vcombine.high %v37, %v37
    %v865 = vunpack.c.l.s4 1983009808
    %v866 = vunpack.c.0.s8 %v865
    %v867 = vlaneseq
    %v868 = vshrl.u32 %v867, 7
    %v869 = vsub.s32 %v866, %v868
    %v870 = vrot.slane %v37, %v869
    %v872 = vunpack.c.l.s4 1983009808
    %v873 = vunpack.c.0.s8 %v872
    %v874 = vlaneseq
    %v875 = vshrl.u32 %v874, 7
    %v876 = vsub.s32 %v873, %v875
    %v877 = vrot.slane %v863, %v876
    %v878 = vcombine.high %v870, %v870
    %v879 = vcombine.high %v877, %v877
    %v880 = vcombine.high %v38, %v38
    %v882 = vunpack.c.l.s4 1983009808
    %v883 = vunpack.c.0.s8 %v882
    %v884 = vlaneseq
    %v885 = vshrl.u32 %v884, 7
    %v886 = vsub.s32 %v883, %v885
    %v887 = vrot.slane %v38, %v886
    %v889 = vunpack.c.l.s4 1983009808
    %v890 = vunpack.c.0.s8 %v889
    %v891 = vlaneseq
    %v892 = vshrl.u32 %v891, 7
    %v893 = vsub.s32 %v890, %v892
    %v894 = vrot.slane %v880, %v893
    %v895 = vcombine.high %v887, %v887
    %v896 = vcombine.high %v894, %v894
    %v897 = vcombine.high %v39, %v39
    %v899 = vunpack.c.l.s4 1983009808
    %v900 = vunpack.c.0.s8 %v899
    %v901 = vlaneseq
    %v902 = vshrl.u32 %v901, 7
    %v903 = vsub.s32 %v900, %v902
    %v904 = vrot.slane %v39, %v903
    %v906 = vunpack.c.l.s4 1983009808
    %v907 = vunpack.c.0.s8 %v906
    %v908 = vlaneseq
    %v909 = vshrl.u32 %v908, 7
    %v910 = vsub.s32 %v907, %v909
    %v911 = vrot.slane %v897, %v910
    %v912 = vcombine.high %v904, %v904
    %v913 = vcombine.high %v911, %v911
    %v914 = vcombine.high %v40, %v40
    %v916 = vunpack.c.l.s4 1983009808
    %v917 = vunpack.c.0.s8 %v916
    %v918 = vlaneseq
    %v919 = vshrl.u32 %v918, 7
    %v920 = vsub.s32 %v917, %v919
    %v921 = vrot.slane %v40, %v920
    %v923 = vunpack.c.l.s4 1983009808
    %v924 = vunpack.c.0.s8 %v923
    %v925 = vlaneseq
    %v926 = vshrl.u32 %v925, 7
    %v927 = vsub.s32 %v924, %v926
    %v928 = vrot.slane %v914, %v927
    %v929 = vcombine.high %v921, %v921
    %v930 = vcombine.high %v928, %v928
    %v931 = vcombine.high %v41, %v41
    %v933 = vunpack.c.l.s4 1983009808
    %v934 = vunpack.c.0.s8 %v933
    %v935 = vlaneseq
    %v936 = vshrl.u32 %v935, 7
    %v937 = vsub.s32 %v934, %v936
    %v938 = vrot.slane %v41, %v937
    %v940 = vunpack.c.l.s4 1983009808
    %v941 = vunpack.c.0.s8 %v940
    %v942 = vlaneseq
    %v943 = vshrl.u32 %v942, 7
    %v944 = vsub.s32 %v941, %v943
    %v945 = vrot.slane %v931, %v944
    %v946 = vcombine.high %v938, %v938
    %v947 = vcombine.high %v945, %v945
    %v948 = vcombine.high %v42, %v42
    %v950 = vunpack.c.l.s4 1983009808
    %v951 = vunpack.c.0.s8 %v950
    %v952 = vlaneseq
    %v953 = vshrl.u32 %v952, 7
    %v954 = vsub.s32 %v951, %v953
    %v955 = vrot.slane %v42, %v954
    %v957 = vunpack.c.l.s4 1983009808
    %v958 = vunpack.c.0.s8 %v957
    %v959 = vlaneseq
    %v960 = vshrl.u32 %v959, 7
    %v961 = vsub.s32 %v958, %v960
    %v962 = vrot.slane %v948, %v961
    %v963 = vcombine.high %v955, %v955
    %v964 = vcombine.high %v962, %v962
    %v965 = vcombine.high %v43, %v43
    %v967 = vunpack.c.l.s4 1983009808
    %v968 = vunpack.c.0.s8 %v967
    %v969 = vlaneseq
    %v970 = vshrl.u32 %v969, 7
    %v971 = vsub.s32 %v968, %v970
    %v972 = vrot.slane %v43, %v971
    %v974 = vunpack.c.l.s4 1983009808
    %v975 = vunpack.c.0.s8 %v974
    %v976 = vlaneseq
    %v977 = vshrl.u32 %v976, 7
    %v978 = vsub.s32 %v975, %v977
    %v979 = vrot.slane %v965, %v978
    %v980 = vcombine.high %v972, %v972
    %v981 = vcombine.high %v979, %v979
    %v982 = vcombine.high %v44, %v44
    %v984 = vunpack.c.l.s4 1983009808
    %v985 = vunpack.c.0.s8 %v984
    %v986 = vlaneseq
    %v987 = vshrl.u32 %v986, 7
    %v988 = vsub.s32 %v985, %v987
    %v989 = vrot.slane %v44, %v988
    %v991 = vunpack.c.l.s4 1983009808
    %v992 = vunpack.c.0.s8 %v991
    %v993 = vlaneseq
    %v994 = vshrl.u32 %v993, 7
    %v995 = vsub.s32 %v992, %v994
    %v996 = vrot.slane %v982, %v995
    %v997 = vcombine.high %v989, %v989
    %v998 = vcombine.high %v996, %v996
    %v999 = vcombine.high %v45, %v45
    %v1001 = vunpack.c.l.s4 1983009808
    %v1002 = vunpack.c.0.s8 %v1001
    %v1003 = vlaneseq
    %v1004 = vshrl.u32 %v1003, 7
    %v1005 = vsub.s32 %v1002, %v1004
    %v1006 = vrot.slane %v45, %v1005
    %v1008 = vunpack.c.l.s4 1983009808
    %v1009 = vunpack.c.0.s8 %v1008
    %v1010 = vlaneseq
    %v1011 = vshrl.u32 %v1010, 7
    %v1012 = vsub.s32 %v1009, %v1011
    %v1013 = vrot.slane %v999, %v1012
    %v1014 = vcombine.high %v1006, %v1006
    %v1015 = vcombine.high %v1013, %v1013
    %v1016 = vcombine.high %v46, %v46
    %v1018 = vunpack.c.l.s4 1983009808
    %v1019 = vunpack.c.0.s8 %v1018
    %v1020 = vlaneseq
    %v1021 = vshrl.u32 %v1020, 7
    %v1022 = vsub.s32 %v1019, %v1021
    %v1023 = vrot.slane %v46, %v1022
    %v1025 = vunpack.c.l.s4 1983009808
    %v1026 = vunpack.c.0.s8 %v1025
    %v1027 = vlaneseq
    %v1028 = vshrl.u32 %v1027, 7
    %v1029 = vsub.s32 %v1026, %v1028
    %v1030 = vrot.slane %v1016, %v1029
    %v1031 = vcombine.high %v1023, %v1023
    %v1032 = vcombine.high %v1030, %v1030
    %v1033 = vcombine.high %v47, %v47
    %v1035 = vunpack.c.l.s4 1983009808
    %v1036 = vunpack.c.0.s8 %v1035
    %v1037 = vlaneseq
    %v1038 = vshrl.u32 %v1037, 7
    %v1039 = vsub.s32 %v1036, %v1038
    %v1040 = vrot.slane %v47, %v1039
    %v1042 = vunpack.c.l.s4 1983009808
    %v1043 = vunpack.c.0.s8 %v1042
    %v1044 = vlaneseq
    %v1045 = vshrl.u32 %v1044, 7
    %v1046 = vsub.s32 %v1043, %v1045
    %v1047 = vrot.slane %v1033, %v1046
    %v1048 = vcombine.high %v1040, %v1040
    %v1049 = vcombine.high %v1047, %v1047
    %v1051 = vunpack.c.l.s4 1983009808
    %v1052 = vunpack.c.0.s8 %v1051
    %v1053 = vlaneseq
    %v1054 = vshrl.u32 %v1053, 7
    %v1055 = vsub.s32 %v1052, %v1054
    %v1056 = vrot.slane %v48, %v1055
    %1106 = vmatprep.subr.mxu0 0.0
    %1107 = vmatpush1.msra.mxu0 %v49
    %1108 = vmatprep.subr.mxu0 0.0
    %1109 = vmatpush1.msra.mxu0 %v50
    %1110 = vmatprep.subr.mxu0 0.0
    %1111 = vmatpush1.msra.mxu0 %v51
    %1112 = vmatprep.subr.mxu0 0.0
    %1113 = vmatpush1.msra.mxu0 %v52
    %1114 = vmatprep.subr.mxu0 0.0
    %1115 = vmatpush1.msra.mxu0 %v53
    %1116 = vmatprep.subr.mxu0 0.0
    %1117 = vmatpush1.msra.mxu0 %v54
    %1118 = vmatprep.subr.mxu0 0.0
    %1119 = vmatpush1.msra.mxu0 %v55
    %1120 = vmatprep.subr.mxu0 0.0
    %1121 = vmatpush1.msra.mxu0 %v56
    %1122 = vmatprep.subr.mxu0 0.0
    %1123 = vmatpush1.msra.mxu0 %v57
    %1124 = vmatprep.subr.mxu0 0.0
    %1125 = vmatpush1.msra.mxu0 %v58
    %1126 = vmatprep.subr.mxu0 0.0
    %1127 = vmatpush1.msra.mxu0 %v59
    %1128 = vmatprep.subr.mxu0 0.0
    %1129 = vmatpush1.msra.mxu0 %v60
    %1130 = vmatprep.subr.mxu0 0.0
    %1131 = vmatpush1.msra.mxu0 %v61
    %1132 = vmatprep.subr.mxu0 0.0
    %1133 = vmatpush1.msra.mxu0 %v62
    %1134 = vmatprep.subr.mxu0 0.0
    %1135 = vmatpush1.msra.mxu0 %v63
    %1136 = vmatprep.subr.mxu0 0.0
    %1137 = vmatpush1.msra.mxu0 %v64
    %1138 = vmatprep.subr.mxu0 0.0
    %1139 = vmatpush1.msra.mxu0 %v65
    %1140 = vmatprep.subr.mxu0 0.0
    %1141 = vmatpush1.msra.mxu0 %v66
    %1142 = vmatprep.subr.mxu0 0.0
    %1143 = vmatpush1.msra.mxu0 %v67
    %1144 = vmatprep.subr.mxu0 0.0
    %1145 = vmatpush1.msra.mxu0 %v68
    %1146 = vmatprep.subr.mxu0 0.0
    %1147 = vmatpush1.msra.mxu0 %v69
    %1148 = vmatprep.subr.mxu0 0.0
    %1149 = vmatpush1.msra.mxu0 %v70
    %1150 = vmatprep.subr.mxu0 0.0
    %1151 = vmatpush1.msra.mxu0 %v71
    %1152 = vmatprep.subr.mxu0 0.0
    %1153 = vmatpush1.msra.mxu0 %v72
    %1154 = vmatprep.subr.mxu0 0.0
    %1155 = vmatpush1.msra.mxu0 %v73
    %1156 = vmatprep.subr.mxu0 0.0
    %1157 = vmatpush1.msra.mxu0 %v74
    %1158 = vmatprep.subr.mxu0 0.0
    %1159 = vmatpush1.msra.mxu0 %v75
    %1160 = vmatprep.subr.mxu0 0.0
    %1161 = vmatpush1.msra.mxu0 %v76
    %1162 = vmatprep.subr.mxu0 0.0
    %1163 = vmatpush1.msra.mxu0 %v77
    %1164 = vmatprep.subr.mxu0 0.0
    %1165 = vmatpush1.msra.mxu0 %v78
    %1166 = vmatprep.subr.mxu0 0.0
    %1167 = vmatpush1.msra.mxu0 %v79
    %1168 = vmatprep.subr.mxu0 0.0
    %1169 = vmatpush1.msra.mxu0 %v80
    %1170 = vmatprep.mubr.f32.mxu0 %v861
    %1171 = vmatmul.mubr.f32.gmra.mrb[0].mxu0 %v853
    %v1172 = vpop.f32.mrb[0].mxu0
    %v1173 = vadd.f32 0.0, %v1172
    %v1174 = vpop.f32.mrb[0].mxu0
    %1175 = vdwg.mxu0
    %1176 = vmatprep.subr.mxu0 0.0
    %1177 = vmatpush1.msra.mxu0 %v81
    %1178 = vmatprep.subr.mxu0 0.0
    %1179 = vmatpush1.msra.mxu0 %v82
    %1180 = vmatprep.subr.mxu0 0.0
    %1181 = vmatpush1.msra.mxu0 %v83
    %1182 = vmatprep.subr.mxu0 0.0
    %1183 = vmatpush1.msra.mxu0 %v84
    %1184 = vmatprep.subr.mxu0 0.0
    %1185 = vmatpush1.msra.mxu0 %v85
    %1186 = vmatprep.subr.mxu0 0.0
    %1187 = vmatpush1.msra.mxu0 %v86
    %1188 = vmatprep.subr.mxu0 0.0
    %1189 = vmatpush1.msra.mxu0 %v87
    %1190 = vmatprep.subr.mxu0 0.0
    %1191 = vmatpush1.msra.mxu0 %v88
    %1192 = vmatprep.subr.mxu0 0.0
    %1193 = vmatpush1.msra.mxu0 %v89
    %1194 = vmatprep.subr.mxu0 0.0
    %1195 = vmatpush1.msra.mxu0 %v90
    %1196 = vmatprep.subr.mxu0 0.0
    %1197 = vmatpush1.msra.mxu0 %v91
    %1198 = vmatprep.subr.mxu0 0.0
    %1199 = vmatpush1.msra.mxu0 %v92
    %1200 = vmatprep.subr.mxu0 0.0
    %1201 = vmatpush1.msra.mxu0 %v93
    %1202 = vmatprep.subr.mxu0 0.0
    %1203 = vmatpush1.msra.mxu0 %v94
    %1204 = vmatprep.subr.mxu0 0.0
    %1205 = vmatpush1.msra.mxu0 %v95
    %1206 = vmatprep.subr.mxu0 0.0
    %1207 = vmatpush1.msra.mxu0 %v96
    %1208 = vmatprep.subr.mxu0 0.0
    %1209 = vmatpush1.msra.mxu0 %v97
    %1210 = vmatprep.subr.mxu0 0.0
    %1211 = vmatpush1.msra.mxu0 %v98
    %1212 = vmatprep.subr.mxu0 0.0
    %1213 = vmatpush1.msra.mxu0 %v99
    %1214 = vmatprep.subr.mxu0 0.0
    %1215 = vmatpush1.msra.mxu0 %v100
    %1216 = vmatprep.subr.mxu0 0.0
    %1217 = vmatpush1.msra.mxu0 %v101
    %1218 = vmatprep.subr.mxu0 0.0
    %1219 = vmatpush1.msra.mxu0 %v102
    %1220 = vmatprep.subr.mxu0 0.0
    %1221 = vmatpush1.msra.mxu0 %v103
    %1222 = vmatprep.subr.mxu0 0.0
    %1223 = vmatpush1.msra.mxu0 %v104
    %1224 = vmatprep.subr.mxu0 0.0
    %1225 = vmatpush1.msra.mxu0 %v105
    %1226 = vmatprep.subr.mxu0 0.0
    %1227 = vmatpush1.msra.mxu0 %v106
    %1228 = vmatprep.subr.mxu0 0.0
    %1229 = vmatpush1.msra.mxu0 %v107
    %1230 = vmatprep.subr.mxu0 0.0
    %1231 = vmatpush1.msra.mxu0 %v108
    %1232 = vmatprep.subr.mxu0 0.0
    %1233 = vmatpush1.msra.mxu0 %v109
    %1234 = vmatprep.subr.mxu0 0.0
    %1235 = vmatpush1.msra.mxu0 %v110
    %1236 = vmatprep.subr.mxu0 0.0
    %1237 = vmatpush1.msra.mxu0 %v111
    %1238 = vmatprep.subr.mxu0 0.0
    %1239 = vmatpush1.msra.mxu0 %v112
    %1240 = vmatprep.mubr.f32.mxu0 %v862
    %1241 = vmatmul.mubr.f32.gmra.mrb[0].mxu0 %v860
    %v1242 = vpop.f32.mrb[0].mxu0
    %v1243 = vadd.f32 %v1173, %v1242
    %v1244 = vpop.f32.mrb[0].mxu0
    %1245 = vdwg.mxu0
    %1246 = vmatprep.subr.mxu0 0.0
    %1247 = vmatpush1.msra.mxu0 %v113
    %1248 = vmatprep.subr.mxu0 0.0
    %1249 = vmatpush1.msra.mxu0 %v114
    %1250 = vmatprep.subr.mxu0 0.0
    %1251 = vmatpush1.msra.mxu0 %v115
    %1252 = vmatprep.subr.mxu0 0.0
    %1253 = vmatpush1.msra.mxu0 %v116
    %1254 = vmatprep.subr.mxu0 0.0
    %1255 = vmatpush1.msra.mxu0 %v117
    %1256 = vmatprep.subr.mxu0 0.0
    %1257 = vmatpush1.msra.mxu0 %v118
    %1258 = vmatprep.subr.mxu0 0.0
    %1259 = vmatpush1.msra.mxu0 %v119
    %1260 = vmatprep.subr.mxu0 0.0
    %1261 = vmatpush1.msra.mxu0 %v120
    %1262 = vmatprep.subr.mxu0 0.0
    %1263 = vmatpush1.msra.mxu0 %v121
    %1264 = vmatprep.subr.mxu0 0.0
    %1265 = vmatpush1.msra.mxu0 %v122
    %1266 = vmatprep.subr.mxu0 0.0
    %1267 = vmatpush1.msra.mxu0 %v123
    %1268 = vmatprep.subr.mxu0 0.0
    %1269 = vmatpush1.msra.mxu0 %v124
    %1270 = vmatprep.subr.mxu0 0.0
    %1271 = vmatpush1.msra.mxu0 %v125
    %1272 = vmatprep.subr.mxu0 0.0
    %1273 = vmatpush1.msra.mxu0 %v126
    %1274 = vmatprep.subr.mxu0 0.0
    %1275 = vmatpush1.msra.mxu0 %v127
    %1276 = vmatprep.subr.mxu0 0.0
    %1277 = vmatpush1.msra.mxu0 %v128
    %1278 = vmatprep.subr.mxu0 0.0
    %1279 = vmatpush1.msra.mxu0 %v129
    %1280 = vmatprep.subr.mxu0 0.0
    %1281 = vmatpush1.msra.mxu0 %v130
    %1282 = vmatprep.subr.mxu0 0.0
    %1283 = vmatpush1.msra.mxu0 %v131
    %1284 = vmatprep.subr.mxu0 0.0
    %1285 = vmatpush1.msra.mxu0 %v132
    %1286 = vmatprep.subr.mxu0 0.0
    %1287 = vmatpush1.msra.mxu0 %v133
    %1288 = vmatprep.subr.mxu0 0.0
    %1289 = vmatpush1.msra.mxu0 %v134
    %1290 = vmatprep.subr.mxu0 0.0
    %1291 = vmatpush1.msra.mxu0 %v135
    %1292 = vmatprep.subr.mxu0 0.0
    %1293 = vmatpush1.msra.mxu0 %v136
    %1294 = vmatprep.subr.mxu0 0.0
    %1295 = vmatpush1.msra.mxu0 %v137
    %1296 = vmatprep.subr.mxu0 0.0
    %1297 = vmatpush1.msra.mxu0 %v138
    %1298 = vmatprep.subr.mxu0 0.0
    %1299 = vmatpush1.msra.mxu0 %v139
    %1300 = vmatprep.subr.mxu0 0.0
    %1301 = vmatpush1.msra.mxu0 %v140
    %1302 = vmatprep.subr.mxu0 0.0
    %1303 = vmatpush1.msra.mxu0 %v141
    %1304 = vmatprep.subr.mxu0 0.0
    %1305 = vmatpush1.msra.mxu0 %v142
    %1306 = vmatprep.subr.mxu0 0.0
    %1307 = vmatpush1.msra.mxu0 %v143
    %1308 = vmatprep.subr.mxu0 0.0
    %1309 = vmatpush1.msra.mxu0 %v144
    %1310 = vmatprep.mubr.f32.mxu0 %v878
    %1311 = vmatmul.mubr.f32.gmra.mrb[0].mxu0 %v870
    %v1312 = vpop.f32.mrb[0].mxu0
    %v1313 = vadd.f32 %v1243, %v1312
    %v1314 = vpop.f32.mrb[0].mxu0
    %1315 = vdwg.mxu0
    %1316 = vmatprep.subr.mxu0 0.0
    %1317 = vmatpush1.msra.mxu0 %v145
    %1318 = vmatprep.subr.mxu0 0.0
    %1319 = vmatpush1.msra.mxu0 %v146
    %1320 = vmatprep.subr.mxu0 0.0
    %1321 = vmatpush1.msra.mxu0 %v147
    %1322 = vmatprep.subr.mxu0 0.0
    %1323 = vmatpush1.msra.mxu0 %v148
    %1324 = vmatprep.subr.mxu0 0.0
    %1325 = vmatpush1.msra.mxu0 %v149
    %1326 = vmatprep.subr.mxu0 0.0
    %1327 = vmatpush1.msra.mxu0 %v150
    %1328 = vmatprep.subr.mxu0 0.0
    %1329 = vmatpush1.msra.mxu0 %v151
    %1330 = vmatprep.subr.mxu0 0.0
    %1331 = vmatpush1.msra.mxu0 %v152
    %1332 = vmatprep.subr.mxu0 0.0
    %1333 = vmatpush1.msra.mxu0 %v153
    %1334 = vmatprep.subr.mxu0 0.0
    %1335 = vmatpush1.msra.mxu0 %v154
    %1336 = vmatprep.subr.mxu0 0.0
    %1337 = vmatpush1.msra.mxu0 %v155
    %1338 = vmatprep.subr.mxu0 0.0
    %1339 = vmatpush1.msra.mxu0 %v156
    %1340 = vmatprep.subr.mxu0 0.0
    %1341 = vmatpush1.msra.mxu0 %v157
    %1342 = vmatprep.subr.mxu0 0.0
    %1343 = vmatpush1.msra.mxu0 %v158
    %1344 = vmatprep.subr.mxu0 0.0
    %1345 = vmatpush1.msra.mxu0 %v159
    %1346 = vmatprep.subr.mxu0 0.0
    %1347 = vmatpush1.msra.mxu0 %v160
    %1348 = vmatprep.subr.mxu0 0.0
    %1349 = vmatpush1.msra.mxu0 %v161
    %1350 = vmatprep.subr.mxu0 0.0
    %1351 = vmatpush1.msra.mxu0 %v162
    %1352 = vmatprep.subr.mxu0 0.0
    %1353 = vmatpush1.msra.mxu0 %v163
    %1354 = vmatprep.subr.mxu0 0.0
    %1355 = vmatpush1.msra.mxu0 %v164
    %1356 = vmatprep.subr.mxu0 0.0
    %1357 = vmatpush1.msra.mxu0 %v165
    %1358 = vmatprep.subr.mxu0 0.0
    %1359 = vmatpush1.msra.mxu0 %v166
    %1360 = vmatprep.subr.mxu0 0.0
    %1361 = vmatpush1.msra.mxu0 %v167
    %1362 = vmatprep.subr.mxu0 0.0
    %1363 = vmatpush1.msra.mxu0 %v168
    %1364 = vmatprep.subr.mxu0 0.0
    %1365 = vmatpush1.msra.mxu0 %v169
    %1366 = vmatprep.subr.mxu0 0.0
    %1367 = vmatpush1.msra.mxu0 %v170
    %1368 = vmatprep.subr.mxu0 0.0
    %1369 = vmatpush1.msra.mxu0 %v171
    %1370 = vmatprep.subr.mxu0 0.0
    %1371 = vmatpush1.msra.mxu0 %v172
    %1372 = vmatprep.subr.mxu0 0.0
    %1373 = vmatpush1.msra.mxu0 %v173
    %1374 = vmatprep.subr.mxu0 0.0
    %1375 = vmatpush1.msra.mxu0 %v174
    %1376 = vmatprep.subr.mxu0 0.0
    %1377 = vmatpush1.msra.mxu0 %v175
    %1378 = vmatprep.subr.mxu0 0.0
    %1379 = vmatpush1.msra.mxu0 %v176
    %1380 = vmatprep.mubr.f32.mxu0 %v879
    %1381 = vmatmul.mubr.f32.gmra.mrb[0].mxu0 %v877
    %v1382 = vpop.f32.mrb[0].mxu0
    %v1383 = vadd.f32 %v1313, %v1382
    %v1384 = vpop.f32.mrb[0].mxu0
    %1385 = vdwg.mxu0
    %1386 = vmatprep.subr.mxu0 0.0
    %1387 = vmatpush1.msra.mxu0 %v177
    %1388 = vmatprep.subr.mxu0 0.0
    %1389 = vmatpush1.msra.mxu0 %v178
    %1390 = vmatprep.subr.mxu0 0.0
    %1391 = vmatpush1.msra.mxu0 %v179
    %1392 = vmatprep.subr.mxu0 0.0
    %1393 = vmatpush1.msra.mxu0 %v180
    %1394 = vmatprep.subr.mxu0 0.0
    %1395 = vmatpush1.msra.mxu0 %v181
    %1396 = vmatprep.subr.mxu0 0.0
    %1397 = vmatpush1.msra.mxu0 %v182
    %1398 = vmatprep.subr.mxu0 0.0
    %1399 = vmatpush1.msra.mxu0 %v183
    %1400 = vmatprep.subr.mxu0 0.0
    %1401 = vmatpush1.msra.mxu0 %v184
    %1402 = vmatprep.subr.mxu0 0.0
    %1403 = vmatpush1.msra.mxu0 %v185
    %1404 = vmatprep.subr.mxu0 0.0
    %1405 = vmatpush1.msra.mxu0 %v186
    %1406 = vmatprep.subr.mxu0 0.0
    %1407 = vmatpush1.msra.mxu0 %v187
    %1408 = vmatprep.subr.mxu0 0.0
    %1409 = vmatpush1.msra.mxu0 %v188
    %1410 = vmatprep.subr.mxu0 0.0
    %1411 = vmatpush1.msra.mxu0 %v189
    %1412 = vmatprep.subr.mxu0 0.0
    %1413 = vmatpush1.msra.mxu0 %v190
    %1414 = vmatprep.subr.mxu0 0.0
    %1415 = vmatpush1.msra.mxu0 %v191
    %1416 = vmatprep.subr.mxu0 0.0
    %1417 = vmatpush1.msra.mxu0 %v192
    %1418 = vmatprep.subr.mxu0 0.0
    %1419 = vmatpush1.msra.mxu0 %v193
    %1420 = vmatprep.subr.mxu0 0.0
    %1421 = vmatpush1.msra.mxu0 %v194
    %1422 = vmatprep.subr.mxu0 0.0
    %1423 = vmatpush1.msra.mxu0 %v195
    %1424 = vmatprep.subr.mxu0 0.0
    %1425 = vmatpush1.msra.mxu0 %v196
    %1426 = vmatprep.subr.mxu0 0.0
    %1427 = vmatpush1.msra.mxu0 %v197
    %1428 = vmatprep.subr.mxu0 0.0
    %1429 = vmatpush1.msra.mxu0 %v198
    %1430 = vmatprep.subr.mxu0 0.0
    %1431 = vmatpush1.msra.mxu0 %v199
    %1432 = vmatprep.subr.mxu0 0.0
    %1433 = vmatpush1.msra.mxu0 %v200
    %1434 = vmatprep.subr.mxu0 0.0
    %1435 = vmatpush1.msra.mxu0 %v201
    %1436 = vmatprep.subr.mxu0 0.0
    %1437 = vmatpush1.msra.mxu0 %v202
    %1438 = vmatprep.subr.mxu0 0.0
    %1439 = vmatpush1.msra.mxu0 %v203
    %1440 = vmatprep.subr.mxu0 0.0
    %1441 = vmatpush1.msra.mxu0 %v204
    %1442 = vmatprep.subr.mxu0 0.0
    %1443 = vmatpush1.msra.mxu0 %v205
    %1444 = vmatprep.subr.mxu0 0.0
    %1445 = vmatpush1.msra.mxu0 %v206
    %1446 = vmatprep.subr.mxu0 0.0
    %1447 = vmatpush1.msra.mxu0 %v207
    %1448 = vmatprep.subr.mxu0 0.0
    %1449 = vmatpush1.msra.mxu0 %v208
    %1450 = vmatprep.mubr.f32.mxu0 %v895
    %1451 = vmatmul.mubr.f32.gmra.mrb[0].mxu0 %v887
    %v1452 = vpop.f32.mrb[0].mxu0
    %v1453 = vadd.f32 %v1383, %v1452
    %v1454 = vpop.f32.mrb[0].mxu0
    %1455 = vdwg.mxu0
    %1456 = vmatprep.subr.mxu0 0.0
    %1457 = vmatpush1.msra.mxu0 %v209
    %1458 = vmatprep.subr.mxu0 0.0
    %1459 = vmatpush1.msra.mxu0 %v210
    %1460 = vmatprep.subr.mxu0 0.0
    %1461 = vmatpush1.msra.mxu0 %v211
    %1462 = vmatprep.subr.mxu0 0.0
    %1463 = vmatpush1.msra.mxu0 %v212
    %1464 = vmatprep.subr.mxu0 0.0
    %1465 = vmatpush1.msra.mxu0 %v213
    %1466 = vmatprep.subr.mxu0 0.0
    %1467 = vmatpush1.msra.mxu0 %v214
    %1468 = vmatprep.subr.mxu0 0.0
    %1469 = vmatpush1.msra.mxu0 %v215
    %1470 = vmatprep.subr.mxu0 0.0
    %1471 = vmatpush1.msra.mxu0 %v216
    %1472 = vmatprep.subr.mxu0 0.0
    %1473 = vmatpush1.msra.mxu0 %v217
    %1474 = vmatprep.subr.mxu0 0.0
    %1475 = vmatpush1.msra.mxu0 %v218
    %1476 = vmatprep.subr.mxu0 0.0
    %1477 = vmatpush1.msra.mxu0 %v219
    %1478 = vmatprep.subr.mxu0 0.0
    %1479 = vmatpush1.msra.mxu0 %v220
    %1480 = vmatprep.subr.mxu0 0.0
    %1481 = vmatpush1.msra.mxu0 %v221
    %1482 = vmatprep.subr.mxu0 0.0
    %1483 = vmatpush1.msra.mxu0 %v222
    %1484 = vmatprep.subr.mxu0 0.0
    %1485 = vmatpush1.msra.mxu0 %v223
    %1486 = vmatprep.subr.mxu0 0.0
    %1487 = vmatpush1.msra.mxu0 %v224
    %1488 = vmatprep.subr.mxu0 0.0
    %1489 = vmatpush1.msra.mxu0 %v225
    %1490 = vmatprep.subr.mxu0 0.0
    %1491 = vmatpush1.msra.mxu0 %v226
    %1492 = vmatprep.subr.mxu0 0.0
    %1493 = vmatpush1.msra.mxu0 %v227
    %1494 = vmatprep.subr.mxu0 0.0
    %1495 = vmatpush1.msra.mxu0 %v228
    %1496 = vmatprep.subr.mxu0 0.0
    %1497 = vmatpush1.msra.mxu0 %v229
    %1498 = vmatprep.subr.mxu0 0.0
    %1499 = vmatpush1.msra.mxu0 %v230
    %1500 = vmatprep.subr.mxu0 0.0
    %1501 = vmatpush1.msra.mxu0 %v231
    %1502 = vmatprep.subr.mxu0 0.0
    %1503 = vmatpush1.msra.mxu0 %v232
    %1504 = vmatprep.subr.mxu0 0.0
    %1505 = vmatpush1.msra.mxu0 %v233
    %1506 = vmatprep.subr.mxu0 0.0
    %1507 = vmatpush1.msra.mxu0 %v234
    %1508 = vmatprep.subr.mxu0 0.0
    %1509 = vmatpush1.msra.mxu0 %v235
    %1510 = vmatprep.subr.mxu0 0.0
    %1511 = vmatpush1.msra.mxu0 %v236
    %1512 = vmatprep.subr.mxu0 0.0
    %1513 = vmatpush1.msra.mxu0 %v237
    %1514 = vmatprep.subr.mxu0 0.0
    %1515 = vmatpush1.msra.mxu0 %v238
    %1516 = vmatprep.subr.mxu0 0.0
    %1517 = vmatpush1.msra.mxu0 %v239
    %1518 = vmatprep.subr.mxu0 0.0
    %1519 = vmatpush1.msra.mxu0 %v240
    %1520 = vmatprep.mubr.f32.mxu0 %v896
    %1521 = vmatmul.mubr.f32.gmra.mrb[0].mxu0 %v894
    %v1522 = vpop.f32.mrb[0].mxu0
    %v1523 = vadd.f32 %v1453, %v1522
    %v1524 = vpop.f32.mrb[0].mxu0
    %1525 = vdwg.mxu0
    %1526 = vmatprep.subr.mxu0 0.0
    %1527 = vmatpush1.msra.mxu0 %v241
    %1528 = vmatprep.subr.mxu0 0.0
    %1529 = vmatpush1.msra.mxu0 %v242
    %1530 = vmatprep.subr.mxu0 0.0
    %1531 = vmatpush1.msra.mxu0 %v243
    %1532 = vmatprep.subr.mxu0 0.0
    %1533 = vmatpush1.msra.mxu0 %v244
    %1534 = vmatprep.subr.mxu0 0.0
    %1535 = vmatpush1.msra.mxu0 %v245
    %1536 = vmatprep.subr.mxu0 0.0
    %1537 = vmatpush1.msra.mxu0 %v246
    %1538 = vmatprep.subr.mxu0 0.0
    %1539 = vmatpush1.msra.mxu0 %v247
    %1540 = vmatprep.subr.mxu0 0.0
    %1541 = vmatpush1.msra.mxu0 %v248
    %1542 = vmatprep.subr.mxu0 0.0
    %1543 = vmatpush1.msra.mxu0 %v249
    %1544 = vmatprep.subr.mxu0 0.0
    %1545 = vmatpush1.msra.mxu0 %v250
    %1546 = vmatprep.subr.mxu0 0.0
    %1547 = vmatpush1.msra.mxu0 %v251
    %1548 = vmatprep.subr.mxu0 0.0
    %1549 = vmatpush1.msra.mxu0 %v252
    %1550 = vmatprep.subr.mxu0 0.0
    %1551 = vmatpush1.msra.mxu0 %v253
    %1552 = vmatprep.subr.mxu0 0.0
    %1553 = vmatpush1.msra.mxu0 %v254
    %1554 = vmatprep.subr.mxu0 0.0
    %1555 = vmatpush1.msra.mxu0 %v255
    %1556 = vmatprep.subr.mxu0 0.0
    %1557 = vmatpush1.msra.mxu0 %v256
    %1558 = vmatprep.subr.mxu0 0.0
    %1559 = vmatpush1.msra.mxu0 %v257
    %1560 = vmatprep.subr.mxu0 0.0
    %1561 = vmatpush1.msra.mxu0 %v258
    %1562 = vmatprep.subr.mxu0 0.0
    %1563 = vmatpush1.msra.mxu0 %v259
    %1564 = vmatprep.subr.mxu0 0.0
    %1565 = vmatpush1.msra.mxu0 %v260
    %1566 = vmatprep.subr.mxu0 0.0
    %1567 = vmatpush1.msra.mxu0 %v261
    %1568 = vmatprep.subr.mxu0 0.0
    %1569 = vmatpush1.msra.mxu0 %v262
    %1570 = vmatprep.subr.mxu0 0.0
    %1571 = vmatpush1.msra.mxu0 %v263
    %1572 = vmatprep.subr.mxu0 0.0
    %1573 = vmatpush1.msra.mxu0 %v264
    %1574 = vmatprep.subr.mxu0 0.0
    %1575 = vmatpush1.msra.mxu0 %v265
    %1576 = vmatprep.subr.mxu0 0.0
    %1577 = vmatpush1.msra.mxu0 %v266
    %1578 = vmatprep.subr.mxu0 0.0
    %1579 = vmatpush1.msra.mxu0 %v267
    %1580 = vmatprep.subr.mxu0 0.0
    %1581 = vmatpush1.msra.mxu0 %v268
    %1582 = vmatprep.subr.mxu0 0.0
    %1583 = vmatpush1.msra.mxu0 %v269
    %1584 = vmatprep.subr.mxu0 0.0
    %1585 = vmatpush1.msra.mxu0 %v270
    %1586 = vmatprep.subr.mxu0 0.0
    %1587 = vmatpush1.msra.mxu0 %v271
    %1588 = vmatprep.subr.mxu0 0.0
    %1589 = vmatpush1.msra.mxu0 %v272
    %1590 = vmatprep.mubr.f32.mxu0 %v912
    %1591 = vmatmul.mubr.f32.gmra.mrb[0].mxu0 %v904
    %v1592 = vpop.f32.mrb[0].mxu0
    %v1593 = vadd.f32 %v1523, %v1592
    %v1594 = vpop.f32.mrb[0].mxu0
    %1595 = vdwg.mxu0
    %1596 = vmatprep.subr.mxu0 0.0
    %1597 = vmatpush1.msra.mxu0 %v273
    %1598 = vmatprep.subr.mxu0 0.0
    %1599 = vmatpush1.msra.mxu0 %v274
    %1600 = vmatprep.subr.mxu0 0.0
    %1601 = vmatpush1.msra.mxu0 %v275
    %1602 = vmatprep.subr.mxu0 0.0
    %1603 = vmatpush1.msra.mxu0 %v276
    %1604 = vmatprep.subr.mxu0 0.0
    %1605 = vmatpush1.msra.mxu0 %v277
    %1606 = vmatprep.subr.mxu0 0.0
    %1607 = vmatpush1.msra.mxu0 %v278
    %1608 = vmatprep.subr.mxu0 0.0
    %1609 = vmatpush1.msra.mxu0 %v279
    %1610 = vmatprep.subr.mxu0 0.0
    %1611 = vmatpush1.msra.mxu0 %v280
    %1612 = vmatprep.subr.mxu0 0.0
    %1613 = vmatpush1.msra.mxu0 %v281
    %1614 = vmatprep.subr.mxu0 0.0
    %1615 = vmatpush1.msra.mxu0 %v282
    %1616 = vmatprep.subr.mxu0 0.0
    %1617 = vmatpush1.msra.mxu0 %v283
    %1618 = vmatprep.subr.mxu0 0.0
    %1619 = vmatpush1.msra.mxu0 %v284
    %1620 = vmatprep.subr.mxu0 0.0
    %1621 = vmatpush1.msra.mxu0 %v285
    %1622 = vmatprep.subr.mxu0 0.0
    %1623 = vmatpush1.msra.mxu0 %v286
    %1624 = vmatprep.subr.mxu0 0.0
    %1625 = vmatpush1.msra.mxu0 %v287
    %1626 = vmatprep.subr.mxu0 0.0
    %1627 = vmatpush1.msra.mxu0 %v288
    %1628 = vmatprep.subr.mxu0 0.0
    %1629 = vmatpush1.msra.mxu0 %v289
    %1630 = vmatprep.subr.mxu0 0.0
    %1631 = vmatpush1.msra.mxu0 %v290
    %1632 = vmatprep.subr.mxu0 0.0
    %1633 = vmatpush1.msra.mxu0 %v291
    %1634 = vmatprep.subr.mxu0 0.0
    %1635 = vmatpush1.msra.mxu0 %v292
    %1636 = vmatprep.subr.mxu0 0.0
    %1637 = vmatpush1.msra.mxu0 %v293
    %1638 = vmatprep.subr.mxu0 0.0
    %1639 = vmatpush1.msra.mxu0 %v294
    %1640 = vmatprep.subr.mxu0 0.0
    %1641 = vmatpush1.msra.mxu0 %v295
    %1642 = vmatprep.subr.mxu0 0.0
    %1643 = vmatpush1.msra.mxu0 %v296
    %1644 = vmatprep.subr.mxu0 0.0
    %1645 = vmatpush1.msra.mxu0 %v297
    %1646 = vmatprep.subr.mxu0 0.0
    %1647 = vmatpush1.msra.mxu0 %v298
    %1648 = vmatprep.subr.mxu0 0.0
    %1649 = vmatpush1.msra.mxu0 %v299
    %1650 = vmatprep.subr.mxu0 0.0
    %1651 = vmatpush1.msra.mxu0 %v300
    %1652 = vmatprep.subr.mxu0 0.0
    %1653 = vmatpush1.msra.mxu0 %v301
    %1654 = vmatprep.subr.mxu0 0.0
    %1655 = vmatpush1.msra.mxu0 %v302
    %1656 = vmatprep.subr.mxu0 0.0
    %1657 = vmatpush1.msra.mxu0 %v303
    %1658 = vmatprep.subr.mxu0 0.0
    %1659 = vmatpush1.msra.mxu0 %v304
    %1660 = vmatprep.mubr.f32.mxu0 %v913
    %1661 = vmatmul.mubr.f32.gmra.mrb[0].mxu0 %v911
    %v1662 = vpop.f32.mrb[0].mxu0
    %v1663 = vadd.f32 %v1593, %v1662
    %v1664 = vpop.f32.mrb[0].mxu0
    %1665 = vdwg.mxu0
    %1666 = vmatprep.subr.mxu0 0.0
    %1667 = vmatpush1.msra.mxu0 %v305
    %1668 = vmatprep.subr.mxu0 0.0
    %1669 = vmatpush1.msra.mxu0 %v306
    %1670 = vmatprep.subr.mxu0 0.0
    %1671 = vmatpush1.msra.mxu0 %v307
    %1672 = vmatprep.subr.mxu0 0.0
    %1673 = vmatpush1.msra.mxu0 %v308
    %1674 = vmatprep.subr.mxu0 0.0
    %1675 = vmatpush1.msra.mxu0 %v309
    %1676 = vmatprep.subr.mxu0 0.0
    %1677 = vmatpush1.msra.mxu0 %v310
    %1678 = vmatprep.subr.mxu0 0.0
    %1679 = vmatpush1.msra.mxu0 %v311
    %1680 = vmatprep.subr.mxu0 0.0
    %1681 = vmatpush1.msra.mxu0 %v312
    %1682 = vmatprep.subr.mxu0 0.0
    %1683 = vmatpush1.msra.mxu0 %v313
    %1684 = vmatprep.subr.mxu0 0.0
    %1685 = vmatpush1.msra.mxu0 %v314
    %1686 = vmatprep.subr.mxu0 0.0
    %1687 = vmatpush1.msra.mxu0 %v315
    %1688 = vmatprep.subr.mxu0 0.0
    %1689 = vmatpush1.msra.mxu0 %v316
    %1690 = vmatprep.subr.mxu0 0.0
    %1691 = vmatpush1.msra.mxu0 %v317
    %1692 = vmatprep.subr.mxu0 0.0
    %1693 = vmatpush1.msra.mxu0 %v318
    %1694 = vmatprep.subr.mxu0 0.0
    %1695 = vmatpush1.msra.mxu0 %v319
    %1696 = vmatprep.subr.mxu0 0.0
    %1697 = vmatpush1.msra.mxu0 %v320
    %1698 = vmatprep.subr.mxu0 0.0
    %1699 = vmatpush1.msra.mxu0 %v321
    %1700 = vmatprep.subr.mxu0 0.0
    %1701 = vmatpush1.msra.mxu0 %v322
    %1702 = vmatprep.subr.mxu0 0.0
    %1703 = vmatpush1.msra.mxu0 %v323
    %1704 = vmatprep.subr.mxu0 0.0
    %1705 = vmatpush1.msra.mxu0 %v324
    %1706 = vmatprep.subr.mxu0 0.0
    %1707 = vmatpush1.msra.mxu0 %v325
    %1708 = vmatprep.subr.mxu0 0.0
    %1709 = vmatpush1.msra.mxu0 %v326
    %1710 = vmatprep.subr.mxu0 0.0
    %1711 = vmatpush1.msra.mxu0 %v327
    %1712 = vmatprep.subr.mxu0 0.0
    %1713 = vmatpush1.msra.mxu0 %v328
    %1714 = vmatprep.subr.mxu0 0.0
    %1715 = vmatpush1.msra.mxu0 %v329
    %1716 = vmatprep.subr.mxu0 0.0
    %1717 = vmatpush1.msra.mxu0 %v330
    %1718 = vmatprep.subr.mxu0 0.0
    %1719 = vmatpush1.msra.mxu0 %v331
    %1720 = vmatprep.subr.mxu0 0.0
    %1721 = vmatpush1.msra.mxu0 %v332
    %1722 = vmatprep.subr.mxu0 0.0
    %1723 = vmatpush1.msra.mxu0 %v333
    %1724 = vmatprep.subr.mxu0 0.0
    %1725 = vmatpush1.msra.mxu0 %v334
    %1726 = vmatprep.subr.mxu0 0.0
    %1727 = vmatpush1.msra.mxu0 %v335
    %1728 = vmatprep.subr.mxu0 0.0
    %1729 = vmatpush1.msra.mxu0 %v336
    %1730 = vmatprep.mubr.f32.mxu0 %v929
    %1731 = vmatmul.mubr.f32.gmra.mrb[0].mxu0 %v921
    %v1732 = vpop.f32.mrb[0].mxu0
    %v1733 = vadd.f32 %v1663, %v1732
    %v1734 = vpop.f32.mrb[0].mxu0
    %1735 = vdwg.mxu0
    %1736 = vmatprep.subr.mxu0 0.0
    %1737 = vmatpush1.msra.mxu0 %v337
    %1738 = vmatprep.subr.mxu0 0.0
    %1739 = vmatpush1.msra.mxu0 %v338
    %1740 = vmatprep.subr.mxu0 0.0
    %1741 = vmatpush1.msra.mxu0 %v339
    %1742 = vmatprep.subr.mxu0 0.0
    %1743 = vmatpush1.msra.mxu0 %v340
    %1744 = vmatprep.subr.mxu0 0.0
    %1745 = vmatpush1.msra.mxu0 %v341
    %1746 = vmatprep.subr.mxu0 0.0
    %1747 = vmatpush1.msra.mxu0 %v342
    %1748 = vmatprep.subr.mxu0 0.0
    %1749 = vmatpush1.msra.mxu0 %v343
    %1750 = vmatprep.subr.mxu0 0.0
    %1751 = vmatpush1.msra.mxu0 %v344
    %1752 = vmatprep.subr.mxu0 0.0
    %1753 = vmatpush1.msra.mxu0 %v345
    %1754 = vmatprep.subr.mxu0 0.0
    %1755 = vmatpush1.msra.mxu0 %v346
    %1756 = vmatprep.subr.mxu0 0.0
    %1757 = vmatpush1.msra.mxu0 %v347
    %1758 = vmatprep.subr.mxu0 0.0
    %1759 = vmatpush1.msra.mxu0 %v348
    %1760 = vmatprep.subr.mxu0 0.0
    %1761 = vmatpush1.msra.mxu0 %v349
    %1762 = vmatprep.subr.mxu0 0.0
    %1763 = vmatpush1.msra.mxu0 %v350
    %1764 = vmatprep.subr.mxu0 0.0
    %1765 = vmatpush1.msra.mxu0 %v351
    %1766 = vmatprep.subr.mxu0 0.0
    %1767 = vmatpush1.msra.mxu0 %v352
    %1768 = vmatprep.subr.mxu0 0.0
    %1769 = vmatpush1.msra.mxu0 %v353
    %1770 = vmatprep.subr.mxu0 0.0
    %1771 = vmatpush1.msra.mxu0 %v354
    %1772 = vmatprep.subr.mxu0 0.0
    %1773 = vmatpush1.msra.mxu0 %v355
    %1774 = vmatprep.subr.mxu0 0.0
    %1775 = vmatpush1.msra.mxu0 %v356
    %1776 = vmatprep.subr.mxu0 0.0
    %1777 = vmatpush1.msra.mxu0 %v357
    %1778 = vmatprep.subr.mxu0 0.0
    %1779 = vmatpush1.msra.mxu0 %v358
    %1780 = vmatprep.subr.mxu0 0.0
    %1781 = vmatpush1.msra.mxu0 %v359
    %1782 = vmatprep.subr.mxu0 0.0
    %1783 = vmatpush1.msra.mxu0 %v360
    %1784 = vmatprep.subr.mxu0 0.0
    %1785 = vmatpush1.msra.mxu0 %v361
    %1786 = vmatprep.subr.mxu0 0.0
    %1787 = vmatpush1.msra.mxu0 %v362
    %1788 = vmatprep.subr.mxu0 0.0
    %1789 = vmatpush1.msra.mxu0 %v363
    %1790 = vmatprep.subr.mxu0 0.0
    %1791 = vmatpush1.msra.mxu0 %v364
    %1792 = vmatprep.subr.mxu0 0.0
    %1793 = vmatpush1.msra.mxu0 %v365
    %1794 = vmatprep.subr.mxu0 0.0
    %1795 = vmatpush1.msra.mxu0 %v366
    %1796 = vmatprep.subr.mxu0 0.0
    %1797 = vmatpush1.msra.mxu0 %v367
    %1798 = vmatprep.subr.mxu0 0.0
    %1799 = vmatpush1.msra.mxu0 %v368
    %1800 = vmatprep.mubr.f32.mxu0 %v930
    %1801 = vmatmul.mubr.f32.gmra.mrb[0].mxu0 %v928
    %v1802 = vpop.f32.mrb[0].mxu0
    %v1803 = vadd.f32 %v1733, %v1802
    %v1804 = vpop.f32.mrb[0].mxu0
    %1805 = vdwg.mxu0
    %1806 = vmatprep.subr.mxu0 0.0
    %1807 = vmatpush1.msra.mxu0 %v369
    %1808 = vmatprep.subr.mxu0 0.0
    %1809 = vmatpush1.msra.mxu0 %v370
    %1810 = vmatprep.subr.mxu0 0.0
    %1811 = vmatpush1.msra.mxu0 %v371
    %1812 = vmatprep.subr.mxu0 0.0
    %1813 = vmatpush1.msra.mxu0 %v372
    %1814 = vmatprep.subr.mxu0 0.0
    %1815 = vmatpush1.msra.mxu0 %v373
    %1816 = vmatprep.subr.mxu0 0.0
    %1817 = vmatpush1.msra.mxu0 %v374
    %1818 = vmatprep.subr.mxu0 0.0
    %1819 = vmatpush1.msra.mxu0 %v375
    %1820 = vmatprep.subr.mxu0 0.0
    %1821 = vmatpush1.msra.mxu0 %v376
    %1822 = vmatprep.subr.mxu0 0.0
    %1823 = vmatpush1.msra.mxu0 %v377
    %1824 = vmatprep.subr.mxu0 0.0
    %1825 = vmatpush1.msra.mxu0 %v378
    %1826 = vmatprep.subr.mxu0 0.0
    %1827 = vmatpush1.msra.mxu0 %v379
    %1828 = vmatprep.subr.mxu0 0.0
    %1829 = vmatpush1.msra.mxu0 %v380
    %1830 = vmatprep.subr.mxu0 0.0
    %1831 = vmatpush1.msra.mxu0 %v381
    %1832 = vmatprep.subr.mxu0 0.0
    %1833 = vmatpush1.msra.mxu0 %v382
    %1834 = vmatprep.subr.mxu0 0.0
    %1835 = vmatpush1.msra.mxu0 %v383
    %1836 = vmatprep.subr.mxu0 0.0
    %1837 = vmatpush1.msra.mxu0 %v384
    %1838 = vmatprep.subr.mxu0 0.0
    %1839 = vmatpush1.msra.mxu0 %v385
    %1840 = vmatprep.subr.mxu0 0.0
    %1841 = vmatpush1.msra.mxu0 %v386
    %1842 = vmatprep.subr.mxu0 0.0
    %1843 = vmatpush1.msra.mxu0 %v387
    %1844 = vmatprep.subr.mxu0 0.0
    %1845 = vmatpush1.msra.mxu0 %v388
    %1846 = vmatprep.subr.mxu0 0.0
    %1847 = vmatpush1.msra.mxu0 %v389
    %1848 = vmatprep.subr.mxu0 0.0
    %1849 = vmatpush1.msra.mxu0 %v390
    %1850 = vmatprep.subr.mxu0 0.0
    %1851 = vmatpush1.msra.mxu0 %v391
    %1852 = vmatprep.subr.mxu0 0.0
    %1853 = vmatpush1.msra.mxu0 %v392
    %1854 = vmatprep.subr.mxu0 0.0
    %1855 = vmatpush1.msra.mxu0 %v393
    %1856 = vmatprep.subr.mxu0 0.0
    %1857 = vmatpush1.msra.mxu0 %v394
    %1858 = vmatprep.subr.mxu0 0.0
    %1859 = vmatpush1.msra.mxu0 %v395
    %1860 = vmatprep.subr.mxu0 0.0
    %1861 = vmatpush1.msra.mxu0 %v396
    %1862 = vmatprep.subr.mxu0 0.0
    %1863 = vmatpush1.msra.mxu0 %v397
    %1864 = vmatprep.subr.mxu0 0.0
    %1865 = vmatpush1.msra.mxu0 %v398
    %1866 = vmatprep.subr.mxu0 0.0
    %1867 = vmatpush1.msra.mxu0 %v399
    %1868 = vmatprep.subr.mxu0 0.0
    %1869 = vmatpush1.msra.mxu0 %v400
    %1870 = vmatprep.mubr.f32.mxu0 %v946
    %1871 = vmatmul.mubr.f32.gmra.mrb[0].mxu0 %v938
    %v1872 = vpop.f32.mrb[0].mxu0
    %v1873 = vadd.f32 %v1803, %v1872
    %v1874 = vpop.f32.mrb[0].mxu0
    %1875 = vdwg.mxu0
    %1876 = vmatprep.subr.mxu0 0.0
    %1877 = vmatpush1.msra.mxu0 %v401
    %1878 = vmatprep.subr.mxu0 0.0
    %1879 = vmatpush1.msra.mxu0 %v402
    %1880 = vmatprep.subr.mxu0 0.0
    %1881 = vmatpush1.msra.mxu0 %v403
    %1882 = vmatprep.subr.mxu0 0.0
    %1883 = vmatpush1.msra.mxu0 %v404
    %1884 = vmatprep.subr.mxu0 0.0
    %1885 = vmatpush1.msra.mxu0 %v405
    %1886 = vmatprep.subr.mxu0 0.0
    %1887 = vmatpush1.msra.mxu0 %v406
    %1888 = vmatprep.subr.mxu0 0.0
    %1889 = vmatpush1.msra.mxu0 %v407
    %1890 = vmatprep.subr.mxu0 0.0
    %1891 = vmatpush1.msra.mxu0 %v408
    %1892 = vmatprep.subr.mxu0 0.0
    %1893 = vmatpush1.msra.mxu0 %v409
    %1894 = vmatprep.subr.mxu0 0.0
    %1895 = vmatpush1.msra.mxu0 %v410
    %1896 = vmatprep.subr.mxu0 0.0
    %1897 = vmatpush1.msra.mxu0 %v411
    %1898 = vmatprep.subr.mxu0 0.0
    %1899 = vmatpush1.msra.mxu0 %v412
    %1900 = vmatprep.subr.mxu0 0.0
    %1901 = vmatpush1.msra.mxu0 %v413
    %1902 = vmatprep.subr.mxu0 0.0
    %1903 = vmatpush1.msra.mxu0 %v414
    %1904 = vmatprep.subr.mxu0 0.0
    %1905 = vmatpush1.msra.mxu0 %v415
    %1906 = vmatprep.subr.mxu0 0.0
    %1907 = vmatpush1.msra.mxu0 %v416
    %1908 = vmatprep.subr.mxu0 0.0
    %1909 = vmatpush1.msra.mxu0 %v417
    %1910 = vmatprep.subr.mxu0 0.0
    %1911 = vmatpush1.msra.mxu0 %v418
    %1912 = vmatprep.subr.mxu0 0.0
    %1913 = vmatpush1.msra.mxu0 %v419
    %1914 = vmatprep.subr.mxu0 0.0
    %1915 = vmatpush1.msra.mxu0 %v420
    %1916 = vmatprep.subr.mxu0 0.0
    %1917 = vmatpush1.msra.mxu0 %v421
    %1918 = vmatprep.subr.mxu0 0.0
    %1919 = vmatpush1.msra.mxu0 %v422
    %1920 = vmatprep.subr.mxu0 0.0
    %1921 = vmatpush1.msra.mxu0 %v423
    %1922 = vmatprep.subr.mxu0 0.0
    %1923 = vmatpush1.msra.mxu0 %v424
    %1924 = vmatprep.subr.mxu0 0.0
    %1925 = vmatpush1.msra.mxu0 %v425
    %1926 = vmatprep.subr.mxu0 0.0
    %1927 = vmatpush1.msra.mxu0 %v426
    %1928 = vmatprep.subr.mxu0 0.0
    %1929 = vmatpush1.msra.mxu0 %v427
    %1930 = vmatprep.subr.mxu0 0.0
    %1931 = vmatpush1.msra.mxu0 %v428
    %1932 = vmatprep.subr.mxu0 0.0
    %1933 = vmatpush1.msra.mxu0 %v429
    %1934 = vmatprep.subr.mxu0 0.0
    %1935 = vmatpush1.msra.mxu0 %v430
    %1936 = vmatprep.subr.mxu0 0.0
    %1937 = vmatpush1.msra.mxu0 %v431
    %1938 = vmatprep.subr.mxu0 0.0
    %1939 = vmatpush1.msra.mxu0 %v432
    %1940 = vmatprep.mubr.f32.mxu0 %v947
    %1941 = vmatmul.mubr.f32.gmra.mrb[0].mxu0 %v945
    %v1942 = vpop.f32.mrb[0].mxu0
    %v1943 = vadd.f32 %v1873, %v1942
    %v1944 = vpop.f32.mrb[0].mxu0
    %1945 = vdwg.mxu0
    %1946 = vmatprep.subr.mxu0 0.0
    %1947 = vmatpush1.msra.mxu0 %v433
    %1948 = vmatprep.subr.mxu0 0.0
    %1949 = vmatpush1.msra.mxu0 %v434
    %1950 = vmatprep.subr.mxu0 0.0
    %1951 = vmatpush1.msra.mxu0 %v435
    %1952 = vmatprep.subr.mxu0 0.0
    %1953 = vmatpush1.msra.mxu0 %v436
    %1954 = vmatprep.subr.mxu0 0.0
    %1955 = vmatpush1.msra.mxu0 %v437
    %1956 = vmatprep.subr.mxu0 0.0
    %1957 = vmatpush1.msra.mxu0 %v438
    %1958 = vmatprep.subr.mxu0 0.0
    %1959 = vmatpush1.msra.mxu0 %v439
    %1960 = vmatprep.subr.mxu0 0.0
    %1961 = vmatpush1.msra.mxu0 %v440
    %1962 = vmatprep.subr.mxu0 0.0
    %1963 = vmatpush1.msra.mxu0 %v441
    %1964 = vmatprep.subr.mxu0 0.0
    %1965 = vmatpush1.msra.mxu0 %v442
    %1966 = vmatprep.subr.mxu0 0.0
    %1967 = vmatpush1.msra.mxu0 %v443
    %1968 = vmatprep.subr.mxu0 0.0
    %1969 = vmatpush1.msra.mxu0 %v444
    %1970 = vmatprep.subr.mxu0 0.0
    %1971 = vmatpush1.msra.mxu0 %v445
    %1972 = vmatprep.subr.mxu0 0.0
    %1973 = vmatpush1.msra.mxu0 %v446
    %1974 = vmatprep.subr.mxu0 0.0
    %1975 = vmatpush1.msra.mxu0 %v447
    %1976 = vmatprep.subr.mxu0 0.0
    %1977 = vmatpush1.msra.mxu0 %v448
    %1978 = vmatprep.subr.mxu0 0.0
    %1979 = vmatpush1.msra.mxu0 %v449
    %1980 = vmatprep.subr.mxu0 0.0
    %1981 = vmatpush1.msra.mxu0 %v450
    %1982 = vmatprep.subr.mxu0 0.0
    %1983 = vmatpush1.msra.mxu0 %v451
    %1984 = vmatprep.subr.mxu0 0.0
    %1985 = vmatpush1.msra.mxu0 %v452
    %1986 = vmatprep.subr.mxu0 0.0
    %1987 = vmatpush1.msra.mxu0 %v453
    %1988 = vmatprep.subr.mxu0 0.0
    %1989 = vmatpush1.msra.mxu0 %v454
    %1990 = vmatprep.subr.mxu0 0.0
    %1991 = vmatpush1.msra.mxu0 %v455
    %1992 = vmatprep.subr.mxu0 0.0
    %1993 = vmatpush1.msra.mxu0 %v456
    %1994 = vmatprep.subr.mxu0 0.0
    %1995 = vmatpush1.msra.mxu0 %v457
    %1996 = vmatprep.subr.mxu0 0.0
    %1997 = vmatpush1.msra.mxu0 %v458
    %1998 = vmatprep.subr.mxu0 0.0
    %1999 = vmatpush1.msra.mxu0 %v459
    %2000 = vmatprep.subr.mxu0 0.0
    %2001 = vmatpush1.msra.mxu0 %v460
    %2002 = vmatprep.subr.mxu0 0.0
    %2003 = vmatpush1.msra.mxu0 %v461
    %2004 = vmatprep.subr.mxu0 0.0
    %2005 = vmatpush1.msra.mxu0 %v462
    %2006 = vmatprep.subr.mxu0 0.0
    %2007 = vmatpush1.msra.mxu0 %v463
    %2008 = vmatprep.subr.mxu0 0.0
    %2009 = vmatpush1.msra.mxu0 %v464
    %2010 = vmatprep.mubr.f32.mxu0 %v963
    %2011 = vmatmul.mubr.f32.gmra.mrb[0].mxu0 %v955
    %v2012 = vpop.f32.mrb[0].mxu0
    %v2013 = vadd.f32 %v1943, %v2012
    %v2014 = vpop.f32.mrb[0].mxu0
    %2015 = vdwg.mxu0
    %2016 = vmatprep.subr.mxu0 0.0
    %2017 = vmatpush1.msra.mxu0 %v465
    %2018 = vmatprep.subr.mxu0 0.0
    %2019 = vmatpush1.msra.mxu0 %v466
    %2020 = vmatprep.subr.mxu0 0.0
    %2021 = vmatpush1.msra.mxu0 %v467
    %2022 = vmatprep.subr.mxu0 0.0
    %2023 = vmatpush1.msra.mxu0 %v468
    %2024 = vmatprep.subr.mxu0 0.0
    %2025 = vmatpush1.msra.mxu0 %v469
    %2026 = vmatprep.subr.mxu0 0.0
    %2027 = vmatpush1.msra.mxu0 %v470
    %2028 = vmatprep.subr.mxu0 0.0
    %2029 = vmatpush1.msra.mxu0 %v471
    %2030 = vmatprep.subr.mxu0 0.0
    %2031 = vmatpush1.msra.mxu0 %v472
    %2032 = vmatprep.subr.mxu0 0.0
    %2033 = vmatpush1.msra.mxu0 %v473
    %2034 = vmatprep.subr.mxu0 0.0
    %2035 = vmatpush1.msra.mxu0 %v474
    %2036 = vmatprep.subr.mxu0 0.0
    %2037 = vmatpush1.msra.mxu0 %v475
    %2038 = vmatprep.subr.mxu0 0.0
    %2039 = vmatpush1.msra.mxu0 %v476
    %2040 = vmatprep.subr.mxu0 0.0
    %2041 = vmatpush1.msra.mxu0 %v477
    %2042 = vmatprep.subr.mxu0 0.0
    %2043 = vmatpush1.msra.mxu0 %v478
    %2044 = vmatprep.subr.mxu0 0.0
    %2045 = vmatpush1.msra.mxu0 %v479
    %2046 = vmatprep.subr.mxu0 0.0
    %2047 = vmatpush1.msra.mxu0 %v480
    %2048 = vmatprep.subr.mxu0 0.0
    %2049 = vmatpush1.msra.mxu0 %v481
    %2050 = vmatprep.subr.mxu0 0.0
    %2051 = vmatpush1.msra.mxu0 %v482
    %2052 = vmatprep.subr.mxu0 0.0
    %2053 = vmatpush1.msra.mxu0 %v483
    %2054 = vmatprep.subr.mxu0 0.0
    %2055 = vmatpush1.msra.mxu0 %v484
    %2056 = vmatprep.subr.mxu0 0.0
    %2057 = vmatpush1.msra.mxu0 %v485
    %2058 = vmatprep.subr.mxu0 0.0
    %2059 = vmatpush1.msra.mxu0 %v486
    %2060 = vmatprep.subr.mxu0 0.0
    %2061 = vmatpush1.msra.mxu0 %v487
    %2062 = vmatprep.subr.mxu0 0.0
    %2063 = vmatpush1.msra.mxu0 %v488
    %2064 = vmatprep.subr.mxu0 0.0
    %2065 = vmatpush1.msra.mxu0 %v489
    %2066 = vmatprep.subr.mxu0 0.0
    %2067 = vmatpush1.msra.mxu0 %v490
    %2068 = vmatprep.subr.mxu0 0.0
    %2069 = vmatpush1.msra.mxu0 %v491
    %2070 = vmatprep.subr.mxu0 0.0
    %2071 = vmatpush1.msra.mxu0 %v492
    %2072 = vmatprep.subr.mxu0 0.0
    %2073 = vmatpush1.msra.mxu0 %v493
    %2074 = vmatprep.subr.mxu0 0.0
    %2075 = vmatpush1.msra.mxu0 %v494
    %2076 = vmatprep.subr.mxu0 0.0
    %2077 = vmatpush1.msra.mxu0 %v495
    %2078 = vmatprep.subr.mxu0 0.0
    %2079 = vmatpush1.msra.mxu0 %v496
    %2080 = vmatprep.mubr.f32.mxu0 %v964
    %2081 = vmatmul.mubr.f32.gmra.mrb[0].mxu0 %v962
    %v2082 = vpop.f32.mrb[0].mxu0
    %v2083 = vadd.f32 %v2013, %v2082
    %v2084 = vpop.f32.mrb[0].mxu0
    %2085 = vdwg.mxu0
    %2086 = vmatprep.subr.mxu0 0.0
    %2087 = vmatpush1.msra.mxu0 %v497
    %2088 = vmatprep.subr.mxu0 0.0
    %2089 = vmatpush1.msra.mxu0 %v498
    %2090 = vmatprep.subr.mxu0 0.0
    %2091 = vmatpush1.msra.mxu0 %v499
    %2092 = vmatprep.subr.mxu0 0.0
    %2093 = vmatpush1.msra.mxu0 %v500
    %2094 = vmatprep.subr.mxu0 0.0
    %2095 = vmatpush1.msra.mxu0 %v501
    %2096 = vmatprep.subr.mxu0 0.0
    %2097 = vmatpush1.msra.mxu0 %v502
    %2098 = vmatprep.subr.mxu0 0.0
    %2099 = vmatpush1.msra.mxu0 %v503
    %2100 = vmatprep.subr.mxu0 0.0
    %2101 = vmatpush1.msra.mxu0 %v504
    %2102 = vmatprep.subr.mxu0 0.0
    %2103 = vmatpush1.msra.mxu0 %v505
    %2104 = vmatprep.subr.mxu0 0.0
    %2105 = vmatpush1.msra.mxu0 %v506
    %2106 = vmatprep.subr.mxu0 0.0
    %2107 = vmatpush1.msra.mxu0 %v507
    %2108 = vmatprep.subr.mxu0 0.0
    %2109 = vmatpush1.msra.mxu0 %v508
    %2110 = vmatprep.subr.mxu0 0.0
    %2111 = vmatpush1.msra.mxu0 %v509
    %2112 = vmatprep.subr.mxu0 0.0
    %2113 = vmatpush1.msra.mxu0 %v510
    %2114 = vmatprep.subr.mxu0 0.0
    %2115 = vmatpush1.msra.mxu0 %v511
    %2116 = vmatprep.subr.mxu0 0.0
    %2117 = vmatpush1.msra.mxu0 %v512
    %2118 = vmatprep.subr.mxu0 0.0
    %2119 = vmatpush1.msra.mxu0 %v513
    %2120 = vmatprep.subr.mxu0 0.0
    %2121 = vmatpush1.msra.mxu0 %v514
    %2122 = vmatprep.subr.mxu0 0.0
    %2123 = vmatpush1.msra.mxu0 %v515
    %2124 = vmatprep.subr.mxu0 0.0
    %2125 = vmatpush1.msra.mxu0 %v516
    %2126 = vmatprep.subr.mxu0 0.0
    %2127 = vmatpush1.msra.mxu0 %v517
    %2128 = vmatprep.subr.mxu0 0.0
    %2129 = vmatpush1.msra.mxu0 %v518
    %2130 = vmatprep.subr.mxu0 0.0
    %2131 = vmatpush1.msra.mxu0 %v519
    %2132 = vmatprep.subr.mxu0 0.0
    %2133 = vmatpush1.msra.mxu0 %v520
    %2134 = vmatprep.subr.mxu0 0.0
    %2135 = vmatpush1.msra.mxu0 %v521
    %2136 = vmatprep.subr.mxu0 0.0
    %2137 = vmatpush1.msra.mxu0 %v522
    %2138 = vmatprep.subr.mxu0 0.0
    %2139 = vmatpush1.msra.mxu0 %v523
    %2140 = vmatprep.subr.mxu0 0.0
    %2141 = vmatpush1.msra.mxu0 %v524
    %2142 = vmatprep.subr.mxu0 0.0
    %2143 = vmatpush1.msra.mxu0 %v525
    %2144 = vmatprep.subr.mxu0 0.0
    %2145 = vmatpush1.msra.mxu0 %v526
    %2146 = vmatprep.subr.mxu0 0.0
    %2147 = vmatpush1.msra.mxu0 %v527
    %2148 = vmatprep.subr.mxu0 0.0
    %2149 = vmatpush1.msra.mxu0 %v528
    %2150 = vmatprep.mubr.f32.mxu0 %v980
    %2151 = vmatmul.mubr.f32.gmra.mrb[0].mxu0 %v972
    %v2152 = vpop.f32.mrb[0].mxu0
    %v2153 = vadd.f32 %v2083, %v2152
    %v2154 = vpop.f32.mrb[0].mxu0
    %2155 = vdwg.mxu0
    %2156 = vmatprep.subr.mxu0 0.0
    %2157 = vmatpush1.msra.mxu0 %v529
    %2158 = vmatprep.subr.mxu0 0.0
    %2159 = vmatpush1.msra.mxu0 %v530
    %2160 = vmatprep.subr.mxu0 0.0
    %2161 = vmatpush1.msra.mxu0 %v531
    %2162 = vmatprep.subr.mxu0 0.0
    %2163 = vmatpush1.msra.mxu0 %v532
    %2164 = vmatprep.subr.mxu0 0.0
    %2165 = vmatpush1.msra.mxu0 %v533
    %2166 = vmatprep.subr.mxu0 0.0
    %2167 = vmatpush1.msra.mxu0 %v534
    %2168 = vmatprep.subr.mxu0 0.0
    %2169 = vmatpush1.msra.mxu0 %v535
    %2170 = vmatprep.subr.mxu0 0.0
    %2171 = vmatpush1.msra.mxu0 %v536
    %2172 = vmatprep.subr.mxu0 0.0
    %2173 = vmatpush1.msra.mxu0 %v537
    %2174 = vmatprep.subr.mxu0 0.0
    %2175 = vmatpush1.msra.mxu0 %v538
    %2176 = vmatprep.subr.mxu0 0.0
    %2177 = vmatpush1.msra.mxu0 %v539
    %2178 = vmatprep.subr.mxu0 0.0
    %2179 = vmatpush1.msra.mxu0 %v540
    %2180 = vmatprep.subr.mxu0 0.0
    %2181 = vmatpush1.msra.mxu0 %v541
    %2182 = vmatprep.subr.mxu0 0.0
    %2183 = vmatpush1.msra.mxu0 %v542
    %2184 = vmatprep.subr.mxu0 0.0
    %2185 = vmatpush1.msra.mxu0 %v543
    %2186 = vmatprep.subr.mxu0 0.0
    %2187 = vmatpush1.msra.mxu0 %v544
    %2188 = vmatprep.subr.mxu0 0.0
    %2189 = vmatpush1.msra.mxu0 %v545
    %2190 = vmatprep.subr.mxu0 0.0
    %2191 = vmatpush1.msra.mxu0 %v546
    %2192 = vmatprep.subr.mxu0 0.0
    %2193 = vmatpush1.msra.mxu0 %v547
    %2194 = vmatprep.subr.mxu0 0.0
    %2195 = vmatpush1.msra.mxu0 %v548
    %2196 = vmatprep.subr.mxu0 0.0
    %2197 = vmatpush1.msra.mxu0 %v549
    %2198 = vmatprep.subr.mxu0 0.0
    %2199 = vmatpush1.msra.mxu0 %v550
    %2200 = vmatprep.subr.mxu0 0.0
    %2201 = vmatpush1.msra.mxu0 %v551
    %2202 = vmatprep.subr.mxu0 0.0
    %2203 = vmatpush1.msra.mxu0 %v552
    %2204 = vmatprep.subr.mxu0 0.0
    %2205 = vmatpush1.msra.mxu0 %v553
    %2206 = vmatprep.subr.mxu0 0.0
    %2207 = vmatpush1.msra.mxu0 %v554
    %2208 = vmatprep.subr.mxu0 0.0
    %2209 = vmatpush1.msra.mxu0 %v555
    %2210 = vmatprep.subr.mxu0 0.0
    %2211 = vmatpush1.msra.mxu0 %v556
    %2212 = vmatprep.subr.mxu0 0.0
    %2213 = vmatpush1.msra.mxu0 %v557
    %2214 = vmatprep.subr.mxu0 0.0
    %2215 = vmatpush1.msra.mxu0 %v558
    %2216 = vmatprep.subr.mxu0 0.0
    %2217 = vmatpush1.msra.mxu0 %v559
    %2218 = vmatprep.subr.mxu0 0.0
    %2219 = vmatpush1.msra.mxu0 %v560
    %2220 = vmatprep.mubr.f32.mxu0 %v981
    %2221 = vmatmul.mubr.f32.gmra.mrb[0].mxu0 %v979
    %v2222 = vpop.f32.mrb[0].mxu0
    %v2223 = vadd.f32 %v2153, %v2222
    %v2224 = vpop.f32.mrb[0].mxu0
    %2225 = vdwg.mxu0
    %2226 = vmatprep.subr.mxu0 0.0
    %2227 = vmatpush1.msra.mxu0 %v561
    %2228 = vmatprep.subr.mxu0 0.0
    %2229 = vmatpush1.msra.mxu0 %v562
    %2230 = vmatprep.subr.mxu0 0.0
    %2231 = vmatpush1.msra.mxu0 %v563
    %2232 = vmatprep.subr.mxu0 0.0
    %2233 = vmatpush1.msra.mxu0 %v564
    %2234 = vmatprep.subr.mxu0 0.0
    %2235 = vmatpush1.msra.mxu0 %v565
    %2236 = vmatprep.subr.mxu0 0.0
    %2237 = vmatpush1.msra.mxu0 %v566
    %2238 = vmatprep.subr.mxu0 0.0
    %2239 = vmatpush1.msra.mxu0 %v567
    %2240 = vmatprep.subr.mxu0 0.0
    %2241 = vmatpush1.msra.mxu0 %v568
    %2242 = vmatprep.subr.mxu0 0.0
    %2243 = vmatpush1.msra.mxu0 %v569
    %2244 = vmatprep.subr.mxu0 0.0
    %2245 = vmatpush1.msra.mxu0 %v570
    %2246 = vmatprep.subr.mxu0 0.0
    %2247 = vmatpush1.msra.mxu0 %v571
    %2248 = vmatprep.subr.mxu0 0.0
    %2249 = vmatpush1.msra.mxu0 %v572
    %2250 = vmatprep.subr.mxu0 0.0
    %2251 = vmatpush1.msra.mxu0 %v573
    %2252 = vmatprep.subr.mxu0 0.0
    %2253 = vmatpush1.msra.mxu0 %v574
    %2254 = vmatprep.subr.mxu0 0.0
    %2255 = vmatpush1.msra.mxu0 %v575
    %2256 = vmatprep.subr.mxu0 0.0
    %2257 = vmatpush1.msra.mxu0 %v576
    %2258 = vmatprep.subr.mxu0 0.0
    %2259 = vmatpush1.msra.mxu0 %v577
    %2260 = vmatprep.subr.mxu0 0.0
    %2261 = vmatpush1.msra.mxu0 %v578
    %2262 = vmatprep.subr.mxu0 0.0
    %2263 = vmatpush1.msra.mxu0 %v579
    %2264 = vmatprep.subr.mxu0 0.0
    %2265 = vmatpush1.msra.mxu0 %v580
    %2266 = vmatprep.subr.mxu0 0.0
    %2267 = vmatpush1.msra.mxu0 %v581
    %2268 = vmatprep.subr.mxu0 0.0
    %2269 = vmatpush1.msra.mxu0 %v582
    %2270 = vmatprep.subr.mxu0 0.0
    %2271 = vmatpush1.msra.mxu0 %v583
    %2272 = vmatprep.subr.mxu0 0.0
    %2273 = vmatpush1.msra.mxu0 %v584
    %2274 = vmatprep.subr.mxu0 0.0
    %2275 = vmatpush1.msra.mxu0 %v585
    %2276 = vmatprep.subr.mxu0 0.0
    %2277 = vmatpush1.msra.mxu0 %v586
    %2278 = vmatprep.subr.mxu0 0.0
    %2279 = vmatpush1.msra.mxu0 %v587
    %2280 = vmatprep.subr.mxu0 0.0
    %2281 = vmatpush1.msra.mxu0 %v588
    %2282 = vmatprep.subr.mxu0 0.0
    %2283 = vmatpush1.msra.mxu0 %v589
    %2284 = vmatprep.subr.mxu0 0.0
    %2285 = vmatpush1.msra.mxu0 %v590
    %2286 = vmatprep.subr.mxu0 0.0
    %2287 = vmatpush1.msra.mxu0 %v591
    %2288 = vmatprep.subr.mxu0 0.0
    %2289 = vmatpush1.msra.mxu0 %v592
    %2290 = vmatprep.mubr.f32.mxu0 %v997
    %2291 = vmatmul.mubr.f32.gmra.mrb[0].mxu0 %v989
    %v2292 = vpop.f32.mrb[0].mxu0
    %v2293 = vadd.f32 %v2223, %v2292
    %v2294 = vpop.f32.mrb[0].mxu0
    %2295 = vdwg.mxu0
    %2296 = vmatprep.subr.mxu0 0.0
    %2297 = vmatpush1.msra.mxu0 %v593
    %2298 = vmatprep.subr.mxu0 0.0
    %2299 = vmatpush1.msra.mxu0 %v594
    %2300 = vmatprep.subr.mxu0 0.0
    %2301 = vmatpush1.msra.mxu0 %v595
    %2302 = vmatprep.subr.mxu0 0.0
    %2303 = vmatpush1.msra.mxu0 %v596
    %2304 = vmatprep.subr.mxu0 0.0
    %2305 = vmatpush1.msra.mxu0 %v597
    %2306 = vmatprep.subr.mxu0 0.0
    %2307 = vmatpush1.msra.mxu0 %v598
    %2308 = vmatprep.subr.mxu0 0.0
    %2309 = vmatpush1.msra.mxu0 %v599
    %2310 = vmatprep.subr.mxu0 0.0
    %2311 = vmatpush1.msra.mxu0 %v600
    %2312 = vmatprep.subr.mxu0 0.0
    %2313 = vmatpush1.msra.mxu0 %v601
    %2314 = vmatprep.subr.mxu0 0.0
    %2315 = vmatpush1.msra.mxu0 %v602
    %2316 = vmatprep.subr.mxu0 0.0
    %2317 = vmatpush1.msra.mxu0 %v603
    %2318 = vmatprep.subr.mxu0 0.0
    %2319 = vmatpush1.msra.mxu0 %v604
    %2320 = vmatprep.subr.mxu0 0.0
    %2321 = vmatpush1.msra.mxu0 %v605
    %2322 = vmatprep.subr.mxu0 0.0
    %2323 = vmatpush1.msra.mxu0 %v606
    %2324 = vmatprep.subr.mxu0 0.0
    %2325 = vmatpush1.msra.mxu0 %v607
    %2326 = vmatprep.subr.mxu0 0.0
    %2327 = vmatpush1.msra.mxu0 %v608
    %2328 = vmatprep.subr.mxu0 0.0
    %2329 = vmatpush1.msra.mxu0 %v609
    %2330 = vmatprep.subr.mxu0 0.0
    %2331 = vmatpush1.msra.mxu0 %v610
    %2332 = vmatprep.subr.mxu0 0.0
    %2333 = vmatpush1.msra.mxu0 %v611
    %2334 = vmatprep.subr.mxu0 0.0
    %2335 = vmatpush1.msra.mxu0 %v612
    %2336 = vmatprep.subr.mxu0 0.0
    %2337 = vmatpush1.msra.mxu0 %v613
    %2338 = vmatprep.subr.mxu0 0.0
    %2339 = vmatpush1.msra.mxu0 %v614
    %2340 = vmatprep.subr.mxu0 0.0
    %2341 = vmatpush1.msra.mxu0 %v615
    %2342 = vmatprep.subr.mxu0 0.0
    %2343 = vmatpush1.msra.mxu0 %v616
    %2344 = vmatprep.subr.mxu0 0.0
    %2345 = vmatpush1.msra.mxu0 %v617
    %2346 = vmatprep.subr.mxu0 0.0
    %2347 = vmatpush1.msra.mxu0 %v618
    %2348 = vmatprep.subr.mxu0 0.0
    %2349 = vmatpush1.msra.mxu0 %v619
    %2350 = vmatprep.subr.mxu0 0.0
    %2351 = vmatpush1.msra.mxu0 %v620
    %2352 = vmatprep.subr.mxu0 0.0
    %2353 = vmatpush1.msra.mxu0 %v621
    %2354 = vmatprep.subr.mxu0 0.0
    %2355 = vmatpush1.msra.mxu0 %v622
    %2356 = vmatprep.subr.mxu0 0.0
    %2357 = vmatpush1.msra.mxu0 %v623
    %2358 = vmatprep.subr.mxu0 0.0
    %2359 = vmatpush1.msra.mxu0 %v624
    %2360 = vmatprep.mubr.f32.mxu0 %v998
    %2361 = vmatmul.mubr.f32.gmra.mrb[0].mxu0 %v996
    %v2362 = vpop.f32.mrb[0].mxu0
    %v2363 = vadd.f32 %v2293, %v2362
    %v2364 = vpop.f32.mrb[0].mxu0
    %2365 = vdwg.mxu0
    %2366 = vmatprep.subr.mxu0 0.0
    %2367 = vmatpush1.msra.mxu0 %v625
    %2368 = vmatprep.subr.mxu0 0.0
    %2369 = vmatpush1.msra.mxu0 %v626
    %2370 = vmatprep.subr.mxu0 0.0
    %2371 = vmatpush1.msra.mxu0 %v627
    %2372 = vmatprep.subr.mxu0 0.0
    %2373 = vmatpush1.msra.mxu0 %v628
    %2374 = vmatprep.subr.mxu0 0.0
    %2375 = vmatpush1.msra.mxu0 %v629
    %2376 = vmatprep.subr.mxu0 0.0
    %2377 = vmatpush1.msra.mxu0 %v630
    %2378 = vmatprep.subr.mxu0 0.0
    %2379 = vmatpush1.msra.mxu0 %v631
    %2380 = vmatprep.subr.mxu0 0.0
    %2381 = vmatpush1.msra.mxu0 %v632
    %2382 = vmatprep.subr.mxu0 0.0
    %2383 = vmatpush1.msra.mxu0 %v633
    %2384 = vmatprep.subr.mxu0 0.0
    %2385 = vmatpush1.msra.mxu0 %v634
    %2386 = vmatprep.subr.mxu0 0.0
    %2387 = vmatpush1.msra.mxu0 %v635
    %2388 = vmatprep.subr.mxu0 0.0
    %2389 = vmatpush1.msra.mxu0 %v636
    %2390 = vmatprep.subr.mxu0 0.0
    %2391 = vmatpush1.msra.mxu0 %v637
    %2392 = vmatprep.subr.mxu0 0.0
    %2393 = vmatpush1.msra.mxu0 %v638
    %2394 = vmatprep.subr.mxu0 0.0
    %2395 = vmatpush1.msra.mxu0 %v639
    %2396 = vmatprep.subr.mxu0 0.0
    %2397 = vmatpush1.msra.mxu0 %v640
    %2398 = vmatprep.subr.mxu0 0.0
    %2399 = vmatpush1.msra.mxu0 %v641
    %2400 = vmatprep.subr.mxu0 0.0
    %2401 = vmatpush1.msra.mxu0 %v642
    %2402 = vmatprep.subr.mxu0 0.0
    %2403 = vmatpush1.msra.mxu0 %v643
    %2404 = vmatprep.subr.mxu0 0.0
    %2405 = vmatpush1.msra.mxu0 %v644
    %2406 = vmatprep.subr.mxu0 0.0
    %2407 = vmatpush1.msra.mxu0 %v645
    %2408 = vmatprep.subr.mxu0 0.0
    %2409 = vmatpush1.msra.mxu0 %v646
    %2410 = vmatprep.subr.mxu0 0.0
    %2411 = vmatpush1.msra.mxu0 %v647
    %2412 = vmatprep.subr.mxu0 0.0
    %2413 = vmatpush1.msra.mxu0 %v648
    %2414 = vmatprep.subr.mxu0 0.0
    %2415 = vmatpush1.msra.mxu0 %v649
    %2416 = vmatprep.subr.mxu0 0.0
    %2417 = vmatpush1.msra.mxu0 %v650
    %2418 = vmatprep.subr.mxu0 0.0
    %2419 = vmatpush1.msra.mxu0 %v651
    %2420 = vmatprep.subr.mxu0 0.0
    %2421 = vmatpush1.msra.mxu0 %v652
    %2422 = vmatprep.subr.mxu0 0.0
    %2423 = vmatpush1.msra.mxu0 %v653
    %2424 = vmatprep.subr.mxu0 0.0
    %2425 = vmatpush1.msra.mxu0 %v654
    %2426 = vmatprep.subr.mxu0 0.0
    %2427 = vmatpush1.msra.mxu0 %v655
    %2428 = vmatprep.subr.mxu0 0.0
    %2429 = vmatpush1.msra.mxu0 %v656
    %2430 = vmatprep.mubr.f32.mxu0 %v1014
    %2431 = vmatmul.mubr.f32.gmra.mrb[0].mxu0 %v1006
    %v2432 = vpop.f32.mrb[0].mxu0
    %v2433 = vadd.f32 %v2363, %v2432
    %v2434 = vpop.f32.mrb[0].mxu0
    %2435 = vdwg.mxu0
    %2436 = vmatprep.subr.mxu0 0.0
    %2437 = vmatpush1.msra.mxu0 %v657
    %2438 = vmatprep.subr.mxu0 0.0
    %2439 = vmatpush1.msra.mxu0 %v658
    %2440 = vmatprep.subr.mxu0 0.0
    %2441 = vmatpush1.msra.mxu0 %v659
    %2442 = vmatprep.subr.mxu0 0.0
    %2443 = vmatpush1.msra.mxu0 %v660
    %2444 = vmatprep.subr.mxu0 0.0
    %2445 = vmatpush1.msra.mxu0 %v661
    %2446 = vmatprep.subr.mxu0 0.0
    %2447 = vmatpush1.msra.mxu0 %v662
    %2448 = vmatprep.subr.mxu0 0.0
    %2449 = vmatpush1.msra.mxu0 %v663
    %2450 = vmatprep.subr.mxu0 0.0
    %2451 = vmatpush1.msra.mxu0 %v664
    %2452 = vmatprep.subr.mxu0 0.0
    %2453 = vmatpush1.msra.mxu0 %v665
    %2454 = vmatprep.subr.mxu0 0.0
    %2455 = vmatpush1.msra.mxu0 %v666
    %2456 = vmatprep.subr.mxu0 0.0
    %2457 = vmatpush1.msra.mxu0 %v667
    %2458 = vmatprep.subr.mxu0 0.0
    %2459 = vmatpush1.msra.mxu0 %v668
    %2460 = vmatprep.subr.mxu0 0.0
    %2461 = vmatpush1.msra.mxu0 %v669
    %2462 = vmatprep.subr.mxu0 0.0
    %2463 = vmatpush1.msra.mxu0 %v670
    %2464 = vmatprep.subr.mxu0 0.0
    %2465 = vmatpush1.msra.mxu0 %v671
    %2466 = vmatprep.subr.mxu0 0.0
    %2467 = vmatpush1.msra.mxu0 %v672
    %2468 = vmatprep.subr.mxu0 0.0
    %2469 = vmatpush1.msra.mxu0 %v673
    %2470 = vmatprep.subr.mxu0 0.0
    %2471 = vmatpush1.msra.mxu0 %v674
    %2472 = vmatprep.subr.mxu0 0.0
    %2473 = vmatpush1.msra.mxu0 %v675
    %2474 = vmatprep.subr.mxu0 0.0
    %2475 = vmatpush1.msra.mxu0 %v676
    %2476 = vmatprep.subr.mxu0 0.0
    %2477 = vmatpush1.msra.mxu0 %v677
    %2478 = vmatprep.subr.mxu0 0.0
    %2479 = vmatpush1.msra.mxu0 %v678
    %2480 = vmatprep.subr.mxu0 0.0
    %2481 = vmatpush1.msra.mxu0 %v679
    %2482 = vmatprep.subr.mxu0 0.0
    %2483 = vmatpush1.msra.mxu0 %v680
    %2484 = vmatprep.subr.mxu0 0.0
    %2485 = vmatpush1.msra.mxu0 %v681
    %2486 = vmatprep.subr.mxu0 0.0
    %2487 = vmatpush1.msra.mxu0 %v682
    %2488 = vmatprep.subr.mxu0 0.0
    %2489 = vmatpush1.msra.mxu0 %v683
    %2490 = vmatprep.subr.mxu0 0.0
    %2491 = vmatpush1.msra.mxu0 %v684
    %2492 = vmatprep.subr.mxu0 0.0
    %2493 = vmatpush1.msra.mxu0 %v685
    %2494 = vmatprep.subr.mxu0 0.0
    %2495 = vmatpush1.msra.mxu0 %v686
    %2496 = vmatprep.subr.mxu0 0.0
    %2497 = vmatpush1.msra.mxu0 %v687
    %2498 = vmatprep.subr.mxu0 0.0
    %2499 = vmatpush1.msra.mxu0 %v688
    %2500 = vmatprep.mubr.f32.mxu0 %v1015
    %2501 = vmatmul.mubr.f32.gmra.mrb[0].mxu0 %v1013
    %v2502 = vpop.f32.mrb[0].mxu0
    %v2503 = vadd.f32 %v2433, %v2502
    %v2504 = vpop.f32.mrb[0].mxu0
    %2505 = vdwg.mxu0
    %2506 = vmatprep.subr.mxu0 0.0
    %2507 = vmatpush1.msra.mxu0 %v689
    %2508 = vmatprep.subr.mxu0 0.0
    %2509 = vmatpush1.msra.mxu0 %v690
    %2510 = vmatprep.subr.mxu0 0.0
    %2511 = vmatpush1.msra.mxu0 %v691
    %2512 = vmatprep.subr.mxu0 0.0
    %2513 = vmatpush1.msra.mxu0 %v692
    %2514 = vmatprep.subr.mxu0 0.0
    %2515 = vmatpush1.msra.mxu0 %v693
    %2516 = vmatprep.subr.mxu0 0.0
    %2517 = vmatpush1.msra.mxu0 %v694
    %2518 = vmatprep.subr.mxu0 0.0
    %2519 = vmatpush1.msra.mxu0 %v695
    %2520 = vmatprep.subr.mxu0 0.0
    %2521 = vmatpush1.msra.mxu0 %v696
    %2522 = vmatprep.subr.mxu0 0.0
    %2523 = vmatpush1.msra.mxu0 %v697
    %2524 = vmatprep.subr.mxu0 0.0
    %2525 = vmatpush1.msra.mxu0 %v698
    %2526 = vmatprep.subr.mxu0 0.0
    %2527 = vmatpush1.msra.mxu0 %v699
    %2528 = vmatprep.subr.mxu0 0.0
    %2529 = vmatpush1.msra.mxu0 %v700
    %2530 = vmatprep.subr.mxu0 0.0
    %2531 = vmatpush1.msra.mxu0 %v701
    %2532 = vmatprep.subr.mxu0 0.0
    %2533 = vmatpush1.msra.mxu0 %v702
    %2534 = vmatprep.subr.mxu0 0.0
    %2535 = vmatpush1.msra.mxu0 %v703
    %2536 = vmatprep.subr.mxu0 0.0
    %2537 = vmatpush1.msra.mxu0 %v704
    %2538 = vmatprep.subr.mxu0 0.0
    %2539 = vmatpush1.msra.mxu0 %v705
    %2540 = vmatprep.subr.mxu0 0.0
    %2541 = vmatpush1.msra.mxu0 %v706
    %2542 = vmatprep.subr.mxu0 0.0
    %2543 = vmatpush1.msra.mxu0 %v707
    %2544 = vmatprep.subr.mxu0 0.0
    %2545 = vmatpush1.msra.mxu0 %v708
    %2546 = vmatprep.subr.mxu0 0.0
    %2547 = vmatpush1.msra.mxu0 %v709
    %2548 = vmatprep.subr.mxu0 0.0
    %2549 = vmatpush1.msra.mxu0 %v710
    %2550 = vmatprep.subr.mxu0 0.0
    %2551 = vmatpush1.msra.mxu0 %v711
    %2552 = vmatprep.subr.mxu0 0.0
    %2553 = vmatpush1.msra.mxu0 %v712
    %2554 = vmatprep.subr.mxu0 0.0
    %2555 = vmatpush1.msra.mxu0 %v713
    %2556 = vmatprep.subr.mxu0 0.0
    %2557 = vmatpush1.msra.mxu0 %v714
    %2558 = vmatprep.subr.mxu0 0.0
    %2559 = vmatpush1.msra.mxu0 %v715
    %2560 = vmatprep.subr.mxu0 0.0
    %2561 = vmatpush1.msra.mxu0 %v716
    %2562 = vmatprep.subr.mxu0 0.0
    %2563 = vmatpush1.msra.mxu0 %v717
    %2564 = vmatprep.subr.mxu0 0.0
    %2565 = vmatpush1.msra.mxu0 %v718
    %2566 = vmatprep.subr.mxu0 0.0
    %2567 = vmatpush1.msra.mxu0 %v719
    %2568 = vmatprep.subr.mxu0 0.0
    %2569 = vmatpush1.msra.mxu0 %v720
    %2570 = vmatprep.mubr.f32.mxu0 %v1031
    %2571 = vmatmul.mubr.f32.gmra.mrb[0].mxu0 %v1023
    %v2572 = vpop.f32.mrb[0].mxu0
    %v2573 = vadd.f32 %v2503, %v2572
    %v2574 = vpop.f32.mrb[0].mxu0
    %2575 = vdwg.mxu0
    %2576 = vmatprep.subr.mxu0 0.0
    %2577 = vmatpush1.msra.mxu0 %v721
    %2578 = vmatprep.subr.mxu0 0.0
    %2579 = vmatpush1.msra.mxu0 %v722
    %2580 = vmatprep.subr.mxu0 0.0
    %2581 = vmatpush1.msra.mxu0 %v723
    %2582 = vmatprep.subr.mxu0 0.0
    %2583 = vmatpush1.msra.mxu0 %v724
    %2584 = vmatprep.subr.mxu0 0.0
    %2585 = vmatpush1.msra.mxu0 %v725
    %2586 = vmatprep.subr.mxu0 0.0
    %2587 = vmatpush1.msra.mxu0 %v726
    %2588 = vmatprep.subr.mxu0 0.0
    %2589 = vmatpush1.msra.mxu0 %v727
    %2590 = vmatprep.subr.mxu0 0.0
    %2591 = vmatpush1.msra.mxu0 %v728
    %2592 = vmatprep.subr.mxu0 0.0
    %2593 = vmatpush1.msra.mxu0 %v729
    %2594 = vmatprep.subr.mxu0 0.0
    %2595 = vmatpush1.msra.mxu0 %v730
    %2596 = vmatprep.subr.mxu0 0.0
    %2597 = vmatpush1.msra.mxu0 %v731
    %2598 = vmatprep.subr.mxu0 0.0
    %2599 = vmatpush1.msra.mxu0 %v732
    %2600 = vmatprep.subr.mxu0 0.0
    %2601 = vmatpush1.msra.mxu0 %v733
    %2602 = vmatprep.subr.mxu0 0.0
    %2603 = vmatpush1.msra.mxu0 %v734
    %2604 = vmatprep.subr.mxu0 0.0
    %2605 = vmatpush1.msra.mxu0 %v735
    %2606 = vmatprep.subr.mxu0 0.0
    %2607 = vmatpush1.msra.mxu0 %v736
    %2608 = vmatprep.subr.mxu0 0.0
    %2609 = vmatpush1.msra.mxu0 %v737
    %2610 = vmatprep.subr.mxu0 0.0
    %2611 = vmatpush1.msra.mxu0 %v738
    %2612 = vmatprep.subr.mxu0 0.0
    %2613 = vmatpush1.msra.mxu0 %v739
    %2614 = vmatprep.subr.mxu0 0.0
    %2615 = vmatpush1.msra.mxu0 %v740
    %2616 = vmatprep.subr.mxu0 0.0
    %2617 = vmatpush1.msra.mxu0 %v741
    %2618 = vmatprep.subr.mxu0 0.0
    %2619 = vmatpush1.msra.mxu0 %v742
    %2620 = vmatprep.subr.mxu0 0.0
    %2621 = vmatpush1.msra.mxu0 %v743
    %2622 = vmatprep.subr.mxu0 0.0
    %2623 = vmatpush1.msra.mxu0 %v744
    %2624 = vmatprep.subr.mxu0 0.0
    %2625 = vmatpush1.msra.mxu0 %v745
    %2626 = vmatprep.subr.mxu0 0.0
    %2627 = vmatpush1.msra.mxu0 %v746
    %2628 = vmatprep.subr.mxu0 0.0
    %2629 = vmatpush1.msra.mxu0 %v747
    %2630 = vmatprep.subr.mxu0 0.0
    %2631 = vmatpush1.msra.mxu0 %v748
    %2632 = vmatprep.subr.mxu0 0.0
    %2633 = vmatpush1.msra.mxu0 %v749
    %2634 = vmatprep.subr.mxu0 0.0
    %2635 = vmatpush1.msra.mxu0 %v750
    %2636 = vmatprep.subr.mxu0 0.0
    %2637 = vmatpush1.msra.mxu0 %v751
    %2638 = vmatprep.subr.mxu0 0.0
    %2639 = vmatpush1.msra.mxu0 %v752
    %2640 = vmatprep.mubr.f32.mxu0 %v1032
    %2641 = vmatmul.mubr.f32.gmra.mrb[0].mxu0 %v1030
    %v2642 = vpop.f32.mrb[0].mxu0
    %v2643 = vadd.f32 %v2573, %v2642
    %v2644 = vpop.f32.mrb[0].mxu0
    %2645 = vdwg.mxu0
    %2646 = vmatprep.subr.mxu0 0.0
    %2647 = vmatpush1.msra.mxu0 %v753
    %2648 = vmatprep.subr.mxu0 0.0
    %2649 = vmatpush1.msra.mxu0 %v754
    %2650 = vmatprep.subr.mxu0 0.0
    %2651 = vmatpush1.msra.mxu0 %v755
    %2652 = vmatprep.subr.mxu0 0.0
    %2653 = vmatpush1.msra.mxu0 %v756
    %2654 = vmatprep.subr.mxu0 0.0
    %2655 = vmatpush1.msra.mxu0 %v757
    %2656 = vmatprep.subr.mxu0 0.0
    %2657 = vmatpush1.msra.mxu0 %v758
    %2658 = vmatprep.subr.mxu0 0.0
    %2659 = vmatpush1.msra.mxu0 %v759
    %2660 = vmatprep.subr.mxu0 0.0
    %2661 = vmatpush1.msra.mxu0 %v760
    %2662 = vmatprep.subr.mxu0 0.0
    %2663 = vmatpush1.msra.mxu0 %v761
    %2664 = vmatprep.subr.mxu0 0.0
    %2665 = vmatpush1.msra.mxu0 %v762
    %2666 = vmatprep.subr.mxu0 0.0
    %2667 = vmatpush1.msra.mxu0 %v763
    %2668 = vmatprep.subr.mxu0 0.0
    %2669 = vmatpush1.msra.mxu0 %v764
    %2670 = vmatprep.subr.mxu0 0.0
    %2671 = vmatpush1.msra.mxu0 %v765
    %2672 = vmatprep.subr.mxu0 0.0
    %2673 = vmatpush1.msra.mxu0 %v766
    %2674 = vmatprep.subr.mxu0 0.0
    %2675 = vmatpush1.msra.mxu0 %v767
    %2676 = vmatprep.subr.mxu0 0.0
    %2677 = vmatpush1.msra.mxu0 %v768
    %2678 = vmatprep.subr.mxu0 0.0
    %2679 = vmatpush1.msra.mxu0 %v769
    %2680 = vmatprep.subr.mxu0 0.0
    %2681 = vmatpush1.msra.mxu0 %v770
    %2682 = vmatprep.subr.mxu0 0.0
    %2683 = vmatpush1.msra.mxu0 %v771
    %2684 = vmatprep.subr.mxu0 0.0
    %2685 = vmatpush1.msra.mxu0 %v772
    %2686 = vmatprep.subr.mxu0 0.0
    %2687 = vmatpush1.msra.mxu0 %v773
    %2688 = vmatprep.subr.mxu0 0.0
    %2689 = vmatpush1.msra.mxu0 %v774
    %2690 = vmatprep.subr.mxu0 0.0
    %2691 = vmatpush1.msra.mxu0 %v775
    %2692 = vmatprep.subr.mxu0 0.0
    %2693 = vmatpush1.msra.mxu0 %v776
    %2694 = vmatprep.subr.mxu0 0.0
    %2695 = vmatpush1.msra.mxu0 %v777
    %2696 = vmatprep.subr.mxu0 0.0
    %2697 = vmatpush1.msra.mxu0 %v778
    %2698 = vmatprep.subr.mxu0 0.0
    %2699 = vmatpush1.msra.mxu0 %v779
    %2700 = vmatprep.subr.mxu0 0.0
    %2701 = vmatpush1.msra.mxu0 %v780
    %2702 = vmatprep.subr.mxu0 0.0
    %2703 = vmatpush1.msra.mxu0 %v781
    %2704 = vmatprep.subr.mxu0 0.0
    %2705 = vmatpush1.msra.mxu0 %v782
    %2706 = vmatprep.subr.mxu0 0.0
    %2707 = vmatpush1.msra.mxu0 %v783
    %2708 = vmatprep.subr.mxu0 0.0
    %2709 = vmatpush1.msra.mxu0 %v784
    %2710 = vmatprep.mubr.f32.mxu0 %v1048
    %2711 = vmatmul.mubr.f32.gmra.mrb[0].mxu0 %v1040
    %v2712 = vpop.f32.mrb[0].mxu0
    %v2713 = vadd.f32 %v2643, %v2712
    %v2714 = vpop.f32.mrb[0].mxu0
    %2715 = vdwg.mxu0
    %2716 = vmatprep.subr.mxu0 0.0
    %2717 = vmatpush1.msra.mxu0 %v785
    %2718 = vmatprep.subr.mxu0 0.0
    %2719 = vmatpush1.msra.mxu0 %v786
    %2720 = vmatprep.subr.mxu0 0.0
    %2721 = vmatpush1.msra.mxu0 %v787
    %2722 = vmatprep.subr.mxu0 0.0
    %2723 = vmatpush1.msra.mxu0 %v788
    %2724 = vmatprep.subr.mxu0 0.0
    %2725 = vmatpush1.msra.mxu0 %v789
    %2726 = vmatprep.subr.mxu0 0.0
    %2727 = vmatpush1.msra.mxu0 %v790
    %2728 = vmatprep.subr.mxu0 0.0
    %2729 = vmatpush1.msra.mxu0 %v791
    %2730 = vmatprep.subr.mxu0 0.0
    %2731 = vmatpush1.msra.mxu0 %v792
    %2732 = vmatprep.subr.mxu0 0.0
    %2733 = vmatpush1.msra.mxu0 %v793
    %2734 = vmatprep.subr.mxu0 0.0
    %2735 = vmatpush1.msra.mxu0 %v794
    %2736 = vmatprep.subr.mxu0 0.0
    %2737 = vmatpush1.msra.mxu0 %v795
    %2738 = vmatprep.subr.mxu0 0.0
    %2739 = vmatpush1.msra.mxu0 %v796
    %2740 = vmatprep.subr.mxu0 0.0
    %2741 = vmatpush1.msra.mxu0 %v797
    %2742 = vmatprep.subr.mxu0 0.0
    %2743 = vmatpush1.msra.mxu0 %v798
    %2744 = vmatprep.subr.mxu0 0.0
    %2745 = vmatpush1.msra.mxu0 %v799
    %2746 = vmatprep.subr.mxu0 0.0
    %2747 = vmatpush1.msra.mxu0 %v800
    %2748 = vmatprep.subr.mxu0 0.0
    %2749 = vmatpush1.msra.mxu0 %v801
    %2750 = vmatprep.subr.mxu0 0.0
    %2751 = vmatpush1.msra.mxu0 %v802
    %2752 = vmatprep.subr.mxu0 0.0
    %2753 = vmatpush1.msra.mxu0 %v803
    %2754 = vmatprep.subr.mxu0 0.0
    %2755 = vmatpush1.msra.mxu0 %v804
    %2756 = vmatprep.subr.mxu0 0.0
    %2757 = vmatpush1.msra.mxu0 %v805
    %2758 = vmatprep.subr.mxu0 0.0
    %2759 = vmatpush1.msra.mxu0 %v806
    %2760 = vmatprep.subr.mxu0 0.0
    %2761 = vmatpush1.msra.mxu0 %v807
    %2762 = vmatprep.subr.mxu0 0.0
    %2763 = vmatpush1.msra.mxu0 %v808
    %2764 = vmatprep.subr.mxu0 0.0
    %2765 = vmatpush1.msra.mxu0 %v809
    %2766 = vmatprep.subr.mxu0 0.0
    %2767 = vmatpush1.msra.mxu0 %v810
    %2768 = vmatprep.subr.mxu0 0.0
    %2769 = vmatpush1.msra.mxu0 %v811
    %2770 = vmatprep.subr.mxu0 0.0
    %2771 = vmatpush1.msra.mxu0 %v812
    %2772 = vmatprep.subr.mxu0 0.0
    %2773 = vmatpush1.msra.mxu0 %v813
    %2774 = vmatprep.subr.mxu0 0.0
    %2775 = vmatpush1.msra.mxu0 %v814
    %2776 = vmatprep.subr.mxu0 0.0
    %2777 = vmatpush1.msra.mxu0 %v815
    %2778 = vmatprep.subr.mxu0 0.0
    %2779 = vmatpush1.msra.mxu0 %v816
    %2780 = vmatprep.mubr.f32.mxu0 %v1049
    %2781 = vmatmul.mubr.f32.gmra.mrb[0].mxu0 %v1047
    %v2782 = vpop.f32.mrb[0].mxu0
    %v2783 = vadd.f32 %v2713, %v2782
    %v2784 = vpop.f32.mrb[0].mxu0
    %2785 = vdwg.mxu0
    %2786 = vmatprep.subr.mxu0 0.0
    %2787 = vmatpush1.msra.mxu0 %v817
    %2788 = vmatprep.subr.mxu0 0.0
    %2789 = vmatpush1.msra.mxu0 %v818
    %2790 = vmatprep.subr.mxu0 0.0
    %2791 = vmatpush1.msra.mxu0 %v819
    %2792 = vmatprep.subr.mxu0 0.0
    %2793 = vmatpush1.msra.mxu0 %v820
    %2794 = vmatprep.subr.mxu0 0.0
    %2795 = vmatpush1.msra.mxu0 %v821
    %2796 = vmatprep.subr.mxu0 0.0
    %2797 = vmatpush1.msra.mxu0 %v822
    %2798 = vmatprep.subr.mxu0 0.0
    %2799 = vmatpush1.msra.mxu0 %v823
    %2800 = vmatprep.subr.mxu0 0.0
    %2801 = vmatpush1.msra.mxu0 %v824
    %2802 = vmatprep.subr.mxu0 0.0
    %2803 = vmatpush1.msra.mxu0 %v825
    %2804 = vmatprep.subr.mxu0 0.0
    %2805 = vmatpush1.msra.mxu0 %v826
    %2806 = vmatprep.subr.mxu0 0.0
    %2807 = vmatpush1.msra.mxu0 %v827
    %2808 = vmatprep.subr.mxu0 0.0
    %2809 = vmatpush1.msra.mxu0 %v828
    %2810 = vmatprep.subr.mxu0 0.0
    %2811 = vmatpush1.msra.mxu0 %v829
    %2812 = vmatprep.subr.mxu0 0.0
    %2813 = vmatpush1.msra.mxu0 %v830
    %2814 = vmatprep.subr.mxu0 0.0
    %2815 = vmatpush1.msra.mxu0 %v831
    %2816 = vmatprep.subr.mxu0 0.0
    %2817 = vmatpush1.msra.mxu0 %v832
    %2818 = vmatprep.subr.mxu0 0.0
    %2819 = vmatpush1.msra.mxu0 0.0
    %2820 = vmatprep.subr.mxu0 0.0
    %2821 = vmatpush1.msra.mxu0 0.0
    %2822 = vmatprep.subr.mxu0 0.0
    %2823 = vmatpush1.msra.mxu0 0.0
    %2824 = vmatprep.subr.mxu0 0.0
    %2825 = vmatpush1.msra.mxu0 0.0
    %2826 = vmatprep.subr.mxu0 0.0
    %2827 = vmatpush1.msra.mxu0 0.0
    %2828 = vmatprep.subr.mxu0 0.0
    %2829 = vmatpush1.msra.mxu0 0.0
    %2830 = vmatprep.subr.mxu0 0.0
    %2831 = vmatpush1.msra.mxu0 0.0
    %2832 = vmatprep.subr.mxu0 0.0
    %2833 = vmatpush1.msra.mxu0 0.0
    %2834 = vmatprep.subr.mxu0 0.0
    %2835 = vmatpush1.msra.mxu0 0.0
    %2836 = vmatprep.subr.mxu0 0.0
    %2837 = vmatpush1.msra.mxu0 0.0
    %2838 = vmatprep.subr.mxu0 0.0
    %2839 = vmatpush1.msra.mxu0 0.0
    %2840 = vmatprep.subr.mxu0 0.0
    %2841 = vmatpush1.msra.mxu0 0.0
    %2842 = vmatprep.subr.mxu0 0.0
    %2843 = vmatpush1.msra.mxu0 0.0
    %2844 = vmatprep.subr.mxu0 0.0
    %2845 = vmatpush1.msra.mxu0 0.0
    %2846 = vmatprep.subr.mxu0 0.0
    %2847 = vmatpush1.msra.mxu0 0.0
    %2848 = vmatprep.subr.mxu0 0.0
    %2849 = vmatpush1.msra.mxu0 0.0
    %2850 = vmatprep.mubr.f32.mxu0 0.0
    %2851 = vmatmul.mubr.f32.gmra.mrb[0].mxu0 %v1056
    %v2852 = vpop.f32.mrb[0].mxu0
    %v2853 = vadd.f32 %v2783, %v2852
    %v2854 = vpop.f32.mrb[0].mxu0
    %2855 = vdwg.mxu0
    %v2856 = vld [vmem:[%s2] sm:$0x1]
    %v2858 = vlaneseq
    %v2859 = vshrl.u32 %v2858, 7
    %v2860 = vsub.s32 0, %v2859
    %v2861 = vrot.slane %v2856, %v2860
    %v2863 = vmul.f32 %v2853, %v2861
    %v2864 = vld [vmem:[%s3] sm:$0x1]
    %v2866 = vlaneseq
    %v2867 = vshrl.u32 %v2866, 7
    %v2868 = vsub.s32 0, %v2867
    %v2869 = vrot.slane %v2864, %v2868
    %v2871 = vadd.f32 %v2863, %v2869
    %v2872 = vmax.f32 %v2871, 0.0
    %v2873 = vld [vmem:[%s4] sm:$0xff]
    %v2874 = vld [vmem:[%s4 + $0x8] sm:$0xff]
    %v2875 = vld [vmem:[%s4 + $0x10] sm:$0xff]
    %v2876 = vld [vmem:[%s4 + $0x18] sm:$0xff]
    %v2877 = vld [vmem:[%s4 + $0x20] sm:$0xff]
    %v2878 = vld [vmem:[%s4 + $0x28] sm:$0xff]
    %v2879 = vld [vmem:[%s4 + $0x30] sm:$0xff]
    %v2880 = vld [vmem:[%s4 + $0x38] sm:$0xff]
    %v2881 = vld [vmem:[%s4 + $0x40] sm:$0xff]
    %v2882 = vld [vmem:[%s4 + $0x48] sm:$0xff]
    %v2883 = vld [vmem:[%s4 + $0x50] sm:$0xff]
    %v2884 = vld [vmem:[%s4 + $0x58] sm:$0xff]
    %v2885 = vld [vmem:[%s4 + $0x60] sm:$0xff]
    %v2886 = vld [vmem:[%s4 + $0x68] sm:$0xff]
    %v2887 = vld [vmem:[%s4 + $0x70] sm:$0xff]
    %v2888 = vld [vmem:[%s4 + $0x78] sm:$0xff]
    %v2889 = vld [vmem:[%s5] sm:$0x1]
    %v2891 = vlaneseq
    %v2892 = vshrl.u32 %v2891, 7
    %v2893 = vsub.s32 0, %v2892
    %v2894 = vrot.slane %v2889, %v2893
    %2896 = vmatprep.subr.mxu0 0.0
    %2897 = vmatpush1.msra.mxu0 %v2873
    %2898 = vmatprep.subr.mxu0 0.0
    %2899 = vmatpush1.msra.mxu0 %v2874
    %2900 = vmatprep.subr.mxu0 0.0
    %2901 = vmatpush1.msra.mxu0 %v2875
    %2902 = vmatprep.subr.mxu0 0.0
    %2903 = vmatpush1.msra.mxu0 %v2876
    %2904 = vmatprep.subr.mxu0 0.0
    %2905 = vmatpush1.msra.mxu0 %v2877
    %2906 = vmatprep.subr.mxu0 0.0
    %2907 = vmatpush1.msra.mxu0 %v2878
    %2908 = vmatprep.subr.mxu0 0.0
    %2909 = vmatpush1.msra.mxu0 %v2879
    %2910 = vmatprep.subr.mxu0 0.0
    %2911 = vmatpush1.msra.mxu0 %v2880
    %2912 = vmatprep.subr.mxu0 0.0
    %2913 = vmatpush1.msra.mxu0 %v2881
    %2914 = vmatprep.subr.mxu0 0.0
    %2915 = vmatpush1.msra.mxu0 %v2882
    %2916 = vmatprep.subr.mxu0 0.0
    %2917 = vmatpush1.msra.mxu0 %v2883
    %2918 = vmatprep.subr.mxu0 0.0
    %2919 = vmatpush1.msra.mxu0 %v2884
    %2920 = vmatprep.subr.mxu0 0.0
    %2921 = vmatpush1.msra.mxu0 %v2885
    %2922 = vmatprep.subr.mxu0 0.0
    %2923 = vmatpush1.msra.mxu0 %v2886
    %2924 = vmatprep.subr.mxu0 0.0
    %2925 = vmatpush1.msra.mxu0 %v2887
    %2926 = vmatprep.subr.mxu0 0.0
    %2927 = vmatpush1.msra.mxu0 %v2888
    %2928 = vmatprep.subr.mxu0 0.0
    %2929 = vmatpush1.msra.mxu0 0.0
    %2930 = vmatprep.subr.mxu0 0.0
    %2931 = vmatpush1.msra.mxu0 0.0
    %2932 = vmatprep.subr.mxu0 0.0
    %2933 = vmatpush1.msra.mxu0 0.0
    %2934 = vmatprep.subr.mxu0 0.0
    %2935 = vmatpush1.msra.mxu0 0.0
    %2936 = vmatprep.subr.mxu0 0.0
    %2937 = vmatpush1.msra.mxu0 0.0
    %2938 = vmatprep.subr.mxu0 0.0
    %2939 = vmatpush1.msra.mxu0 0.0
    %2940 = vmatprep.subr.mxu0 0.0
    %2941 = vmatpush1.msra.mxu0 0.0
    %2942 = vmatprep.subr.mxu0 0.0
    %2943 = vmatpush1.msra.mxu0 0.0
    %2944 = vmatprep.subr.mxu0 0.0
    %2945 = vmatpush1.msra.mxu0 0.0
    %2946 = vmatprep.subr.mxu0 0.0
    %2947 = vmatpush1.msra.mxu0 0.0
    %2948 = vmatprep.subr.mxu0 0.0
    %2949 = vmatpush1.msra.mxu0 0.0
    %2950 = vmatprep.subr.mxu0 0.0
    %2951 = vmatpush1.msra.mxu0 0.0
    %2952 = vmatprep.subr.mxu0 0.0
    %2953 = vmatpush1.msra.mxu0 0.0
    %2954 = vmatprep.subr.mxu0 0.0
    %2955 = vmatpush1.msra.mxu0 0.0
    %2956 = vmatprep.subr.mxu0 0.0
    %2957 = vmatpush1.msra.mxu0 0.0
    %2958 = vmatprep.subr.mxu0 0.0
    %2959 = vmatpush1.msra.mxu0 0.0
    %2960 = vmatprep.mubr.f32.mxu0 0.0
    %2961 = vmatmul.mubr.f32.gmra.mrb[0].mxu0 %v2872
    %v2962 = vpop.f32.mrb[0].mxu0
    %v2963 = vadd.f32 %v2894, %v2962
    %v2964 = vpop.f32.mrb[0].mxu0
    %2965 = vdwg.mxu0
    %v2966 = vld [vmem:[%s6] sm:$0xff]
    %v2967 = vld [vmem:[%s6 + $0x8] sm:$0xff]
    %v2968 = vld [vmem:[%s6 + $0x10] sm:$0xff]
    %v2969 = vld [vmem:[%s6 + $0x18] sm:$0xff]
    %v2970 = vld [vmem:[%s7] sm:$0xff]
    %v2971 = vld [vmem:[%s7 + $0x8] sm:$0xff]
    %v2972 = vld [vmem:[%s7 + $0x10] sm:$0xff]
    %v2973 = vld [vmem:[%s7 + $0x18] sm:$0xff]
    %v2974 = vld [vmem:[%s7 + $0x20] sm:$0xff]
    %v2975 = vld [vmem:[%s7 + $0x28] sm:$0xff]
    %v2976 = vld [vmem:[%s7 + $0x30] sm:$0xff]
    %v2977 = vld [vmem:[%s7 + $0x38] sm:$0xff]
    %v2978 = vld [vmem:[%s7 + $0x40] sm:$0xff]
    %v2979 = vld [vmem:[%s7 + $0x48] sm:$0xff]
    %v2980 = vld [vmem:[%s7 + $0x50] sm:$0xff]
    %v2981 = vld [vmem:[%s7 + $0x58] sm:$0xff]
    %v2982 = vld [vmem:[%s7 + $0x60] sm:$0xff]
    %v2983 = vld [vmem:[%s7 + $0x68] sm:$0xff]
    %v2984 = vld [vmem:[%s7 + $0x70] sm:$0xff]
    %v2985 = vld [vmem:[%s7 + $0x78] sm:$0xff]
    %v2986 = vld [vmem:[%s7 + $0x80] sm:$0xff]
    %v2987 = vld [vmem:[%s7 + $0x88] sm:$0xff]
    %v2988 = vld [vmem:[%s7 + $0x90] sm:$0xff]
    %v2989 = vld [vmem:[%s7 + $0x98] sm:$0xff]
    %v2990 = vld [vmem:[%s7 + $0xa0] sm:$0xff]
    %v2991 = vld [vmem:[%s7 + $0xa8] sm:$0xff]
    %v2992 = vld [vmem:[%s7 + $0xb0] sm:$0xff]
    %v2993 = vld [vmem:[%s7 + $0xb8] sm:$0xff]
    %v2994 = vld [vmem:[%s7 + $0xc0] sm:$0xff]
    %v2995 = vld [vmem:[%s7 + $0xc8] sm:$0xff]
    %v2996 = vld [vmem:[%s7 + $0xd0] sm:$0xff]
    %v2997 = vld [vmem:[%s7 + $0xd8] sm:$0xff]
    %v2998 = vld [vmem:[%s7 + $0xe0] sm:$0xff]
    %v2999 = vld [vmem:[%s7 + $0xe8] sm:$0xff]
    %v3000 = vld [vmem:[%s7 + $0xf0] sm:$0xff]
    %v3001 = vld [vmem:[%s7 + $0xf8] sm:$0xff]
    %v3002 = vld [vmem:[%s7 + $0x100] sm:$0xff]
    %v3003 = vld [vmem:[%s7 + $0x108] sm:$0xff]
    %v3004 = vld [vmem:[%s7 + $0x110] sm:$0xff]
    %v3005 = vld [vmem:[%s7 + $0x118] sm:$0xff]
    %v3006 = vld [vmem:[%s7 + $0x120] sm:$0xff]
    %v3007 = vld [vmem:[%s7 + $0x128] sm:$0xff]
    %v3008 = vld [vmem:[%s7 + $0x130] sm:$0xff]
    %v3009 = vld [vmem:[%s7 + $0x138] sm:$0xff]
    %v3010 = vld [vmem:[%s7 + $0x140] sm:$0xff]
    %v3011 = vld [vmem:[%s7 + $0x148] sm:$0xff]
    %v3012 = vld [vmem:[%s7 + $0x150] sm:$0xff]
    %v3013 = vld [vmem:[%s7 + $0x158] sm:$0xff]
    %v3014 = vld [vmem:[%s7 + $0x160] sm:$0xff]
    %v3015 = vld [vmem:[%s7 + $0x168] sm:$0xff]
    %v3016 = vld [vmem:[%s7 + $0x170] sm:$0xff]
    %v3017 = vld [vmem:[%s7 + $0x178] sm:$0xff]
    %v3018 = vld [vmem:[%s7 + $0x180] sm:$0xff]
    %v3019 = vld [vmem:[%s7 + $0x188] sm:$0xff]
    %v3020 = vld [vmem:[%s7 + $0x190] sm:$0xff]
    %v3021 = vld [vmem:[%s7 + $0x198] sm:$0xff]
    %v3022 = vld [vmem:[%s7 + $0x1a0] sm:$0xff]
    %v3023 = vld [vmem:[%s7 + $0x1a8] sm:$0xff]
    %v3024 = vld [vmem:[%s7 + $0x1b0] sm:$0xff]
    %v3025 = vld [vmem:[%s7 + $0x1b8] sm:$0xff]
    %v3026 = vld [vmem:[%s7 + $0x1c0] sm:$0xff]
    %v3027 = vld [vmem:[%s7 + $0x1c8] sm:$0xff]
    %v3028 = vld [vmem:[%s7 + $0x1d0] sm:$0xff]
    %v3029 = vld [vmem:[%s7 + $0x1d8] sm:$0xff]
    %v3030 = vld [vmem:[%s7 + $0x1e0] sm:$0xff]
    %v3031 = vld [vmem:[%s7 + $0x1e8] sm:$0xff]
    %v3032 = vld [vmem:[%s7 + $0x1f0] sm:$0xff]
    %v3033 = vld [vmem:[%s7 + $0x1f8] sm:$0xff]
    %v3034 = vld [vmem:[%s7 + $0x200] sm:$0xff]
    %v3035 = vld [vmem:[%s7 + $0x208] sm:$0xff]
    %v3036 = vld [vmem:[%s7 + $0x210] sm:$0xff]
    %v3037 = vld [vmem:[%s7 + $0x218] sm:$0xff]
    %v3038 = vld [vmem:[%s7 + $0x220] sm:$0xff]
    %v3039 = vld [vmem:[%s7 + $0x228] sm:$0xff]
    %v3040 = vld [vmem:[%s7 + $0x230] sm:$0xff]
    %v3041 = vld [vmem:[%s7 + $0x238] sm:$0xff]
    %v3042 = vld [vmem:[%s7 + $0x240] sm:$0xff]
    %v3043 = vld [vmem:[%s7 + $0x248] sm:$0xff]
    %v3044 = vld [vmem:[%s7 + $0x250] sm:$0xff]
    %v3045 = vld [vmem:[%s7 + $0x258] sm:$0xff]
    %v3046 = vld [vmem:[%s7 + $0x260] sm:$0xff]
    %v3047 = vld [vmem:[%s7 + $0x268] sm:$0xff]
    %v3048 = vld [vmem:[%s7 + $0x270] sm:$0xff]
    %v3049 = vld [vmem:[%s7 + $0x278] sm:$0xff]
    %v3050 = vld [vmem:[%s7 + $0x280] sm:$0xff]
    %v3051 = vld [vmem:[%s7 + $0x288] sm:$0xff]
    %v3052 = vld [vmem:[%s7 + $0x290] sm:$0xff]
    %v3053 = vld [vmem:[%s7 + $0x298] sm:$0xff]
    %v3054 = vld [vmem:[%s7 + $0x2a0] sm:$0xff]
    %v3055 = vld [vmem:[%s7 + $0x2a8] sm:$0xff]
    %v3056 = vld [vmem:[%s7 + $0x2b0] sm:$0xff]
    %v3057 = vld [vmem:[%s7 + $0x2b8] sm:$0xff]
    %v3058 = vld [vmem:[%s7 + $0x2c0] sm:$0xff]
    %v3059 = vld [vmem:[%s7 + $0x2c8] sm:$0xff]
    %v3060 = vld [vmem:[%s7 + $0x2d0] sm:$0xff]
    %v3061 = vld [vmem:[%s7 + $0x2d8] sm:$0xff]
    %v3062 = vld [vmem:[%s7 + $0x2e0] sm:$0xff]
    %v3063 = vld [vmem:[%s7 + $0x2e8] sm:$0xff]
    %v3064 = vld [vmem:[%s7 + $0x2f0] sm:$0xff]
    %v3065 = vld [vmem:[%s7 + $0x2f8] sm:$0xff]
    %v3066 = vld [vmem:[%s7 + $0x300] sm:$0xff]
    %v3067 = vld [vmem:[%s7 + $0x308] sm:$0xff]
    %v3068 = vld [vmem:[%s7 + $0x310] sm:$0xff]
    %v3069 = vld [vmem:[%s7 + $0x318] sm:$0xff]
    %v3070 = vld [vmem:[%s7 + $0x320] sm:$0xff]
    %v3071 = vld [vmem:[%s7 + $0x328] sm:$0xff]
    %v3072 = vld [vmem:[%s7 + $0x330] sm:$0xff]
    %v3073 = vld [vmem:[%s7 + $0x338] sm:$0xff]
    %v3074 = vld [vmem:[%s7 + $0x340] sm:$0xff]
    %v3075 = vld [vmem:[%s7 + $0x348] sm:$0xff]
    %v3076 = vld [vmem:[%s7 + $0x350] sm:$0xff]
    %v3077 = vld [vmem:[%s7 + $0x358] sm:$0xff]
    %v3078 = vld [vmem:[%s7 + $0x360] sm:$0xff]
    %v3079 = vld [vmem:[%s7 + $0x368] sm:$0xff]
    %v3080 = vld [vmem:[%s7 + $0x370] sm:$0xff]
    %v3081 = vld [vmem:[%s7 + $0x378] sm:$0xff]
    %v3082 = vld [vmem:[%s7 + $0x380] sm:$0xff]
    %v3083 = vld [vmem:[%s7 + $0x388] sm:$0xff]
    %v3084 = vld [vmem:[%s7 + $0x390] sm:$0xff]
    %v3085 = vld [vmem:[%s7 + $0x398] sm:$0xff]
    %v3086 = vld [vmem:[%s7 + $0x3a0] sm:$0xff]
    %v3087 = vld [vmem:[%s7 + $0x3a8] sm:$0xff]
    %v3088 = vld [vmem:[%s7 + $0x3b0] sm:$0xff]
    %v3089 = vld [vmem:[%s7 + $0x3b8] sm:$0xff]
    %v3090 = vld [vmem:[%s7 + $0x3c0] sm:$0xff]
    %v3091 = vld [vmem:[%s7 + $0x3c8] sm:$0xff]
    %v3092 = vld [vmem:[%s7 + $0x3d0] sm:$0xff]
    %v3093 = vld [vmem:[%s7 + $0x3d8] sm:$0xff]
    %v3094 = vld [vmem:[%s7 + $0x3e0] sm:$0xff]
    %v3095 = vld [vmem:[%s7 + $0x3e8] sm:$0xff]
    %v3096 = vld [vmem:[%s7 + $0x3f0] sm:$0xff]
    %v3097 = vld [vmem:[%s7 + $0x3f8] sm:$0xff]
    %v3098 = vld [vmem:[%s7 + $0x400] sm:$0xff]
    %v3099 = vld [vmem:[%s7 + $0x408] sm:$0xff]
    %v3100 = vld [vmem:[%s7 + $0x410] sm:$0xff]
    %v3101 = vld [vmem:[%s7 + $0x418] sm:$0xff]
    %v3102 = vld [vmem:[%s7 + $0x420] sm:$0xff]
    %v3103 = vld [vmem:[%s7 + $0x428] sm:$0xff]
    %v3104 = vld [vmem:[%s7 + $0x430] sm:$0xff]
    %v3105 = vld [vmem:[%s7 + $0x438] sm:$0xff]
    %v3106 = vld [vmem:[%s7 + $0x440] sm:$0xff]
    %v3107 = vld [vmem:[%s7 + $0x448] sm:$0xff]
    %v3108 = vld [vmem:[%s7 + $0x450] sm:$0xff]
    %v3109 = vld [vmem:[%s7 + $0x458] sm:$0xff]
    %v3110 = vld [vmem:[%s7 + $0x460] sm:$0xff]
    %v3111 = vld [vmem:[%s7 + $0x468] sm:$0xff]
    %v3112 = vld [vmem:[%s7 + $0x470] sm:$0xff]
    %v3113 = vld [vmem:[%s7 + $0x478] sm:$0xff]
    %v3114 = vld [vmem:[%s7 + $0x480] sm:$0xff]
    %v3115 = vld [vmem:[%s7 + $0x488] sm:$0xff]
    %v3116 = vld [vmem:[%s7 + $0x490] sm:$0xff]
    %v3117 = vld [vmem:[%s7 + $0x498] sm:$0xff]
    %v3118 = vld [vmem:[%s7 + $0x4a0] sm:$0xff]
    %v3119 = vld [vmem:[%s7 + $0x4a8] sm:$0xff]
    %v3120 = vld [vmem:[%s7 + $0x4b0] sm:$0xff]
    %v3121 = vld [vmem:[%s7 + $0x4b8] sm:$0xff]
    %v3122 = vld [vmem:[%s7 + $0x4c0] sm:$0xff]
    %v3123 = vld [vmem:[%s7 + $0x4c8] sm:$0xff]
    %v3124 = vld [vmem:[%s7 + $0x4d0] sm:$0xff]
    %v3125 = vld [vmem:[%s7 + $0x4d8] sm:$0xff]
    %v3126 = vld [vmem:[%s7 + $0x4e0] sm:$0xff]
    %v3127 = vld [vmem:[%s7 + $0x4e8] sm:$0xff]
    %v3128 = vld [vmem:[%s7 + $0x4f0] sm:$0xff]
    %v3129 = vld [vmem:[%s7 + $0x4f8] sm:$0xff]
    %v3130 = vld [vmem:[%s7 + $0x500] sm:$0xff]
    %v3131 = vld [vmem:[%s7 + $0x508] sm:$0xff]
    %v3132 = vld [vmem:[%s7 + $0x510] sm:$0xff]
    %v3133 = vld [vmem:[%s7 + $0x518] sm:$0xff]
    %v3134 = vld [vmem:[%s7 + $0x520] sm:$0xff]
    %v3135 = vld [vmem:[%s7 + $0x528] sm:$0xff]
    %v3136 = vld [vmem:[%s7 + $0x530] sm:$0xff]
    %v3137 = vld [vmem:[%s7 + $0x538] sm:$0xff]
    %v3138 = vld [vmem:[%s7 + $0x540] sm:$0xff]
    %v3139 = vld [vmem:[%s7 + $0x548] sm:$0xff]
    %v3140 = vld [vmem:[%s7 + $0x550] sm:$0xff]
    %v3141 = vld [vmem:[%s7 + $0x558] sm:$0xff]
    %v3142 = vld [vmem:[%s7 + $0x560] sm:$0xff]
    %v3143 = vld [vmem:[%s7 + $0x568] sm:$0xff]
    %v3144 = vld [vmem:[%s7 + $0x570] sm:$0xff]
    %v3145 = vld [vmem:[%s7 + $0x578] sm:$0xff]
    %v3146 = vld [vmem:[%s7 + $0x580] sm:$0xff]
    %v3147 = vld [vmem:[%s7 + $0x588] sm:$0xff]
    %v3148 = vld [vmem:[%s7 + $0x590] sm:$0xff]
    %v3149 = vld [vmem:[%s7 + $0x598] sm:$0xff]
    %v3150 = vld [vmem:[%s7 + $0x5a0] sm:$0xff]
    %v3151 = vld [vmem:[%s7 + $0x5a8] sm:$0xff]
    %v3152 = vld [vmem:[%s7 + $0x5b0] sm:$0xff]
    %v3153 = vld [vmem:[%s7 + $0x5b8] sm:$0xff]
    %v3154 = vld [vmem:[%s7 + $0x5c0] sm:$0xff]
    %v3155 = vld [vmem:[%s7 + $0x5c8] sm:$0xff]
    %v3156 = vld [vmem:[%s7 + $0x5d0] sm:$0xff]
    %v3157 = vld [vmem:[%s7 + $0x5d8] sm:$0xff]
    %v3158 = vld [vmem:[%s7 + $0x5e0] sm:$0xff]
    %v3159 = vld [vmem:[%s7 + $0x5e8] sm:$0xff]
    %v3160 = vld [vmem:[%s7 + $0x5f0] sm:$0xff]
    %v3161 = vld [vmem:[%s7 + $0x5f8] sm:$0xff]
    %v3162 = vld [vmem:[%s7 + $0x600] sm:$0xff]
    %v3163 = vld [vmem:[%s7 + $0x608] sm:$0xff]
    %v3164 = vld [vmem:[%s7 + $0x610] sm:$0xff]
    %v3165 = vld [vmem:[%s7 + $0x618] sm:$0xff]
    %v3166 = vld [vmem:[%s7 + $0x620] sm:$0xff]
    %v3167 = vld [vmem:[%s7 + $0x628] sm:$0xff]
    %v3168 = vld [vmem:[%s7 + $0x630] sm:$0xff]
    %v3169 = vld [vmem:[%s7 + $0x638] sm:$0xff]
    %v3170 = vld [vmem:[%s7 + $0x640] sm:$0xff]
    %v3171 = vld [vmem:[%s7 + $0x648] sm:$0xff]
    %v3172 = vld [vmem:[%s7 + $0x650] sm:$0xff]
    %v3173 = vld [vmem:[%s7 + $0x658] sm:$0xff]
    %v3174 = vld [vmem:[%s7 + $0x660] sm:$0xff]
    %v3175 = vld [vmem:[%s7 + $0x668] sm:$0xff]
    %v3176 = vld [vmem:[%s7 + $0x670] sm:$0xff]
    %v3177 = vld [vmem:[%s7 + $0x678] sm:$0xff]
    %v3178 = vld [vmem:[%s7 + $0x680] sm:$0xff]
    %v3179 = vld [vmem:[%s7 + $0x688] sm:$0xff]
    %v3180 = vld [vmem:[%s7 + $0x690] sm:$0xff]
    %v3181 = vld [vmem:[%s7 + $0x698] sm:$0xff]
    %v3182 = vld [vmem:[%s7 + $0x6a0] sm:$0xff]
    %v3183 = vld [vmem:[%s7 + $0x6a8] sm:$0xff]
    %v3184 = vld [vmem:[%s7 + $0x6b0] sm:$0xff]
    %v3185 = vld [vmem:[%s7 + $0x6b8] sm:$0xff]
    %v3186 = vld [vmem:[%s7 + $0x6c0] sm:$0xff]
    %v3187 = vld [vmem:[%s7 + $0x6c8] sm:$0xff]
    %v3188 = vld [vmem:[%s7 + $0x6d0] sm:$0xff]
    %v3189 = vld [vmem:[%s7 + $0x6d8] sm:$0xff]
    %v3190 = vld [vmem:[%s7 + $0x6e0] sm:$0xff]
    %v3191 = vld [vmem:[%s7 + $0x6e8] sm:$0xff]
    %v3192 = vld [vmem:[%s7 + $0x6f0] sm:$0xff]
    %v3193 = vld [vmem:[%s7 + $0x6f8] sm:$0xff]
    %v3194 = vld [vmem:[%s7 + $0x700] sm:$0xff]
    %v3195 = vld [vmem:[%s7 + $0x708] sm:$0xff]
    %v3196 = vld [vmem:[%s7 + $0x710] sm:$0xff]
    %v3197 = vld [vmem:[%s7 + $0x718] sm:$0xff]
    %v3198 = vld [vmem:[%s7 + $0x720] sm:$0xff]
    %v3199 = vld [vmem:[%s7 + $0x728] sm:$0xff]
    %v3200 = vld [vmem:[%s7 + $0x730] sm:$0xff]
    %v3201 = vld [vmem:[%s7 + $0x738] sm:$0xff]
    %v3202 = vld [vmem:[%s7 + $0x740] sm:$0xff]
    %v3203 = vld [vmem:[%s7 + $0x748] sm:$0xff]
    %v3204 = vld [vmem:[%s7 + $0x750] sm:$0xff]
    %v3205 = vld [vmem:[%s7 + $0x758] sm:$0xff]
    %v3206 = vld [vmem:[%s7 + $0x760] sm:$0xff]
    %v3207 = vld [vmem:[%s7 + $0x768] sm:$0xff]
    %v3208 = vld [vmem:[%s7 + $0x770] sm:$0xff]
    %v3209 = vld [vmem:[%s7 + $0x778] sm:$0xff]
    %v3210 = vld [vmem:[%s7 + $0x780] sm:$0xff]
    %v3211 = vld [vmem:[%s7 + $0x788] sm:$0xff]
    %v3212 = vld [vmem:[%s7 + $0x790] sm:$0xff]
    %v3213 = vld [vmem:[%s7 + $0x798] sm:$0xff]
    %v3214 = vld [vmem:[%s7 + $0x7a0] sm:$0xff]
    %v3215 = vld [vmem:[%s7 + $0x7a8] sm:$0xff]
    %v3216 = vld [vmem:[%s7 + $0x7b0] sm:$0xff]
    %v3217 = vld [vmem:[%s7 + $0x7b8] sm:$0xff]
    %v3218 = vld [vmem:[%s7 + $0x7c0] sm:$0xff]
    %v3219 = vld [vmem:[%s7 + $0x7c8] sm:$0xff]
    %v3220 = vld [vmem:[%s7 + $0x7d0] sm:$0xff]
    %v3221 = vld [vmem:[%s7 + $0x7d8] sm:$0xff]
    %v3222 = vld [vmem:[%s7 + $0x7e0] sm:$0xff]
    %v3223 = vld [vmem:[%s7 + $0x7e8] sm:$0xff]
    %v3224 = vld [vmem:[%s7 + $0x7f0] sm:$0xff]
    %v3225 = vld [vmem:[%s7 + $0x7f8] sm:$0xff]
    %v3226 = vld [vmem:[%s8] sm:$0x1]
    %v3228 = vlaneseq
    %v3229 = vshrl.u32 %v3228, 7
    %v3230 = vsub.s32 0, %v3229
    %v3231 = vrot.slane %v3226, %v3230
    %v3237 = vcombine.high %v2966, %v2966
    %v3239 = vunpack.c.l.s4 1983009808
    %v3240 = vunpack.c.0.s8 %v3239
    %v3241 = vlaneseq
    %v3242 = vshrl.u32 %v3241, 7
    %v3243 = vsub.s32 %v3240, %v3242
    %v3244 = vrot.slane %v2966, %v3243
    %v3246 = vunpack.c.l.s4 1983009808
    %v3247 = vunpack.c.0.s8 %v3246
    %v3248 = vlaneseq
    %v3249 = vshrl.u32 %v3248, 7
    %v3250 = vsub.s32 %v3247, %v3249
    %v3251 = vrot.slane %v3237, %v3250
    %v3252 = vcombine.high %v3244, %v3244
    %v3253 = vcombine.high %v3251, %v3251
    %v3254 = vcombine.high %v2967, %v2967
    %v3256 = vunpack.c.l.s4 1983009808
    %v3257 = vunpack.c.0.s8 %v3256
    %v3258 = vlaneseq
    %v3259 = vshrl.u32 %v3258, 7
    %v3260 = vsub.s32 %v3257, %v3259
    %v3261 = vrot.slane %v2967, %v3260
    %v3263 = vunpack.c.l.s4 1983009808
    %v3264 = vunpack.c.0.s8 %v3263
    %v3265 = vlaneseq
    %v3266 = vshrl.u32 %v3265, 7
    %v3267 = vsub.s32 %v3264, %v3266
    %v3268 = vrot.slane %v3254, %v3267
    %v3269 = vcombine.high %v3261, %v3261
    %v3270 = vcombine.high %v3268, %v3268
    %v3271 = vcombine.high %v2968, %v2968
    %v3273 = vunpack.c.l.s4 1983009808
    %v3274 = vunpack.c.0.s8 %v3273
    %v3275 = vlaneseq
    %v3276 = vshrl.u32 %v3275, 7
    %v3277 = vsub.s32 %v3274, %v3276
    %v3278 = vrot.slane %v2968, %v3277
    %v3280 = vunpack.c.l.s4 1983009808
    %v3281 = vunpack.c.0.s8 %v3280
    %v3282 = vlaneseq
    %v3283 = vshrl.u32 %v3282, 7
    %v3284 = vsub.s32 %v3281, %v3283
    %v3285 = vrot.slane %v3271, %v3284
    %v3286 = vcombine.high %v3278, %v3278
    %v3287 = vcombine.high %v3285, %v3285
    %v3288 = vcombine.high %v2969, %v2969
    %v3290 = vunpack.c.l.s4 1983009808
    %v3291 = vunpack.c.0.s8 %v3290
    %v3292 = vlaneseq
    %v3293 = vshrl.u32 %v3292, 7
    %v3294 = vsub.s32 %v3291, %v3293
    %v3295 = vrot.slane %v2969, %v3294
    %v3297 = vunpack.c.l.s4 1983009808
    %v3298 = vunpack.c.0.s8 %v3297
    %v3299 = vlaneseq
    %v3300 = vshrl.u32 %v3299, 7
    %v3301 = vsub.s32 %v3298, %v3300
    %v3302 = vrot.slane %v3288, %v3301
    %v3303 = vcombine.high %v3295, %v3295
    %v3304 = vcombine.high %v3302, %v3302
    %3321 = vmatprep.subr.mxu0 0.0
    %3322 = vmatpush1.msra.mxu0 %v2970
    %3323 = vmatprep.subr.mxu0 0.0
    %3324 = vmatpush1.msra.mxu0 %v2971
    %3325 = vmatprep.subr.mxu0 0.0
    %3326 = vmatpush1.msra.mxu0 %v2972
    %3327 = vmatprep.subr.mxu0 0.0
    %3328 = vmatpush1.msra.mxu0 %v2973
    %3329 = vmatprep.subr.mxu0 0.0
    %3330 = vmatpush1.msra.mxu0 %v2974
    %3331 = vmatprep.subr.mxu0 0.0
    %3332 = vmatpush1.msra.mxu0 %v2975
    %3333 = vmatprep.subr.mxu0 0.0
    %3334 = vmatpush1.msra.mxu0 %v2976
    %3335 = vmatprep.subr.mxu0 0.0
    %3336 = vmatpush1.msra.mxu0 %v2977
    %3337 = vmatprep.subr.mxu0 0.0
    %3338 = vmatpush1.msra.mxu0 %v2978
    %3339 = vmatprep.subr.mxu0 0.0
    %3340 = vmatpush1.msra.mxu0 %v2979
    %3341 = vmatprep.subr.mxu0 0.0
    %3342 = vmatpush1.msra.mxu0 %v2980
    %3343 = vmatprep.subr.mxu0 0.0
    %3344 = vmatpush1.msra.mxu0 %v2981
    %3345 = vmatprep.subr.mxu0 0.0
    %3346 = vmatpush1.msra.mxu0 %v2982
    %3347 = vmatprep.subr.mxu0 0.0
    %3348 = vmatpush1.msra.mxu0 %v2983
    %3349 = vmatprep.subr.mxu0 0.0
    %3350 = vmatpush1.msra.mxu0 %v2984
    %3351 = vmatprep.subr.mxu0 0.0
    %3352 = vmatpush1.msra.mxu0 %v2985
    %3353 = vmatprep.subr.mxu0 0.0
    %3354 = vmatpush1.msra.mxu0 %v2986
    %3355 = vmatprep.subr.mxu0 0.0
    %3356 = vmatpush1.msra.mxu0 %v2987
    %3357 = vmatprep.subr.mxu0 0.0
    %3358 = vmatpush1.msra.mxu0 %v2988
    %3359 = vmatprep.subr.mxu0 0.0
    %3360 = vmatpush1.msra.mxu0 %v2989
    %3361 = vmatprep.subr.mxu0 0.0
    %3362 = vmatpush1.msra.mxu0 %v2990
    %3363 = vmatprep.subr.mxu0 0.0
    %3364 = vmatpush1.msra.mxu0 %v2991
    %3365 = vmatprep.subr.mxu0 0.0
    %3366 = vmatpush1.msra.mxu0 %v2992
    %3367 = vmatprep.subr.mxu0 0.0
    %3368 = vmatpush1.msra.mxu0 %v2993
    %3369 = vmatprep.subr.mxu0 0.0
    %3370 = vmatpush1.msra.mxu0 %v2994
    %3371 = vmatprep.subr.mxu0 0.0
    %3372 = vmatpush1.msra.mxu0 %v2995
    %3373 = vmatprep.subr.mxu0 0.0
    %3374 = vmatpush1.msra.mxu0 %v2996
    %3375 = vmatprep.subr.mxu0 0.0
    %3376 = vmatpush1.msra.mxu0 %v2997
    %3377 = vmatprep.subr.mxu0 0.0
    %3378 = vmatpush1.msra.mxu0 %v2998
    %3379 = vmatprep.subr.mxu0 0.0
    %3380 = vmatpush1.msra.mxu0 %v2999
    %3381 = vmatprep.subr.mxu0 0.0
    %3382 = vmatpush1.msra.mxu0 %v3000
    %3383 = vmatprep.subr.mxu0 0.0
    %3384 = vmatpush1.msra.mxu0 %v3001
    %3385 = vmatprep.mubr.f32.mxu0 %v3252
    %3386 = vmatmul.mubr.f32.gmra.mrb[0].mxu0 %v3244
    %v3387 = vpop.f32.mrb[0].mxu0
    %v3388 = vadd.f32 %v3231, %v3387
    %v3389 = vpop.f32.mrb[0].mxu0
    %3390 = vdwg.mxu0
    %3391 = vmatprep.subr.mxu0 0.0
    %3392 = vmatpush1.msra.mxu0 %v3002
    %3393 = vmatprep.subr.mxu0 0.0
    %3394 = vmatpush1.msra.mxu0 %v3003
    %3395 = vmatprep.subr.mxu0 0.0
    %3396 = vmatpush1.msra.mxu0 %v3004
    %3397 = vmatprep.subr.mxu0 0.0
    %3398 = vmatpush1.msra.mxu0 %v3005
    %3399 = vmatprep.subr.mxu0 0.0
    %3400 = vmatpush1.msra.mxu0 %v3006
    %3401 = vmatprep.subr.mxu0 0.0
    %3402 = vmatpush1.msra.mxu0 %v3007
    %3403 = vmatprep.subr.mxu0 0.0
    %3404 = vmatpush1.msra.mxu0 %v3008
    %3405 = vmatprep.subr.mxu0 0.0
    %3406 = vmatpush1.msra.mxu0 %v3009
    %3407 = vmatprep.subr.mxu0 0.0
    %3408 = vmatpush1.msra.mxu0 %v3010
    %3409 = vmatprep.subr.mxu0 0.0
    %3410 = vmatpush1.msra.mxu0 %v3011
    %3411 = vmatprep.subr.mxu0 0.0
    %3412 = vmatpush1.msra.mxu0 %v3012
    %3413 = vmatprep.subr.mxu0 0.0
    %3414 = vmatpush1.msra.mxu0 %v3013
    %3415 = vmatprep.subr.mxu0 0.0
    %3416 = vmatpush1.msra.mxu0 %v3014
    %3417 = vmatprep.subr.mxu0 0.0
    %3418 = vmatpush1.msra.mxu0 %v3015
    %3419 = vmatprep.subr.mxu0 0.0
    %3420 = vmatpush1.msra.mxu0 %v3016
    %3421 = vmatprep.subr.mxu0 0.0
    %3422 = vmatpush1.msra.mxu0 %v3017
    %3423 = vmatprep.subr.mxu0 0.0
    %3424 = vmatpush1.msra.mxu0 %v3018
    %3425 = vmatprep.subr.mxu0 0.0
    %3426 = vmatpush1.msra.mxu0 %v3019
    %3427 = vmatprep.subr.mxu0 0.0
    %3428 = vmatpush1.msra.mxu0 %v3020
    %3429 = vmatprep.subr.mxu0 0.0
    %3430 = vmatpush1.msra.mxu0 %v3021
    %3431 = vmatprep.subr.mxu0 0.0
    %3432 = vmatpush1.msra.mxu0 %v3022
    %3433 = vmatprep.subr.mxu0 0.0
    %3434 = vmatpush1.msra.mxu0 %v3023
    %3435 = vmatprep.subr.mxu0 0.0
    %3436 = vmatpush1.msra.mxu0 %v3024
    %3437 = vmatprep.subr.mxu0 0.0
    %3438 = vmatpush1.msra.mxu0 %v3025
    %3439 = vmatprep.subr.mxu0 0.0
    %3440 = vmatpush1.msra.mxu0 %v3026
    %3441 = vmatprep.subr.mxu0 0.0
    %3442 = vmatpush1.msra.mxu0 %v3027
    %3443 = vmatprep.subr.mxu0 0.0
    %3444 = vmatpush1.msra.mxu0 %v3028
    %3445 = vmatprep.subr.mxu0 0.0
    %3446 = vmatpush1.msra.mxu0 %v3029
    %3447 = vmatprep.subr.mxu0 0.0
    %3448 = vmatpush1.msra.mxu0 %v3030
    %3449 = vmatprep.subr.mxu0 0.0
    %3450 = vmatpush1.msra.mxu0 %v3031
    %3451 = vmatprep.subr.mxu0 0.0
    %3452 = vmatpush1.msra.mxu0 %v3032
    %3453 = vmatprep.subr.mxu0 0.0
    %3454 = vmatpush1.msra.mxu0 %v3033
    %3455 = vmatprep.mubr.f32.mxu0 %v3253
    %3456 = vmatmul.mubr.f32.gmra.mrb[0].mxu0 %v3251
    %v3457 = vpop.f32.mrb[0].mxu0
    %v3458 = vadd.f32 %v3388, %v3457
    %v3459 = vpop.f32.mrb[0].mxu0
    %3460 = vdwg.mxu0
    %3461 = vmatprep.subr.mxu0 0.0
    %3462 = vmatpush1.msra.mxu0 %v3034
    %3463 = vmatprep.subr.mxu0 0.0
    %3464 = vmatpush1.msra.mxu0 %v3035
    %3465 = vmatprep.subr.mxu0 0.0
    %3466 = vmatpush1.msra.mxu0 %v3036
    %3467 = vmatprep.subr.mxu0 0.0
    %3468 = vmatpush1.msra.mxu0 %v3037
    %3469 = vmatprep.subr.mxu0 0.0
    %3470 = vmatpush1.msra.mxu0 %v3038
    %3471 = vmatprep.subr.mxu0 0.0
    %3472 = vmatpush1.msra.mxu0 %v3039
    %3473 = vmatprep.subr.mxu0 0.0
    %3474 = vmatpush1.msra.mxu0 %v3040
    %3475 = vmatprep.subr.mxu0 0.0
    %3476 = vmatpush1.msra.mxu0 %v3041
    %3477 = vmatprep.subr.mxu0 0.0
    %3478 = vmatpush1.msra.mxu0 %v3042
    %3479 = vmatprep.subr.mxu0 0.0
    %3480 = vmatpush1.msra.mxu0 %v3043
    %3481 = vmatprep.subr.mxu0 0.0
    %3482 = vmatpush1.msra.mxu0 %v3044
    %3483 = vmatprep.subr.mxu0 0.0
    %3484 = vmatpush1.msra.mxu0 %v3045
    %3485 = vmatprep.subr.mxu0 0.0
    %3486 = vmatpush1.msra.mxu0 %v3046
    %3487 = vmatprep.subr.mxu0 0.0
    %3488 = vmatpush1.msra.mxu0 %v3047
    %3489 = vmatprep.subr.mxu0 0.0
    %3490 = vmatpush1.msra.mxu0 %v3048
    %3491 = vmatprep.subr.mxu0 0.0
    %3492 = vmatpush1.msra.mxu0 %v3049
    %3493 = vmatprep.subr.mxu0 0.0
    %3494 = vmatpush1.msra.mxu0 %v3050
    %3495 = vmatprep.subr.mxu0 0.0
    %3496 = vmatpush1.msra.mxu0 %v3051
    %3497 = vmatprep.subr.mxu0 0.0
    %3498 = vmatpush1.msra.mxu0 %v3052
    %3499 = vmatprep.subr.mxu0 0.0
    %3500 = vmatpush1.msra.mxu0 %v3053
    %3501 = vmatprep.subr.mxu0 0.0
    %3502 = vmatpush1.msra.mxu0 %v3054
    %3503 = vmatprep.subr.mxu0 0.0
    %3504 = vmatpush1.msra.mxu0 %v3055
    %3505 = vmatprep.subr.mxu0 0.0
    %3506 = vmatpush1.msra.mxu0 %v3056
    %3507 = vmatprep.subr.mxu0 0.0
    %3508 = vmatpush1.msra.mxu0 %v3057
    %3509 = vmatprep.subr.mxu0 0.0
    %3510 = vmatpush1.msra.mxu0 %v3058
    %3511 = vmatprep.subr.mxu0 0.0
    %3512 = vmatpush1.msra.mxu0 %v3059
    %3513 = vmatprep.subr.mxu0 0.0
    %3514 = vmatpush1.msra.mxu0 %v3060
    %3515 = vmatprep.subr.mxu0 0.0
    %3516 = vmatpush1.msra.mxu0 %v3061
    %3517 = vmatprep.subr.mxu0 0.0
    %3518 = vmatpush1.msra.mxu0 %v3062
    %3519 = vmatprep.subr.mxu0 0.0
    %3520 = vmatpush1.msra.mxu0 %v3063
    %3521 = vmatprep.subr.mxu0 0.0
    %3522 = vmatpush1.msra.mxu0 %v3064
    %3523 = vmatprep.subr.mxu0 0.0
    %3524 = vmatpush1.msra.mxu0 %v3065
    %3525 = vmatprep.mubr.f32.mxu0 %v3269
    %3526 = vmatmul.mubr.f32.gmra.mrb[0].mxu0 %v3261
    %v3527 = vpop.f32.mrb[0].mxu0
    %v3528 = vadd.f32 %v3458, %v3527
    %v3529 = vpop.f32.mrb[0].mxu0
    %3530 = vdwg.mxu0
    %3531 = vmatprep.subr.mxu0 0.0
    %3532 = vmatpush1.msra.mxu0 %v3066
    %3533 = vmatprep.subr.mxu0 0.0
    %3534 = vmatpush1.msra.mxu0 %v3067
    %3535 = vmatprep.subr.mxu0 0.0
    %3536 = vmatpush1.msra.mxu0 %v3068
    %3537 = vmatprep.subr.mxu0 0.0
    %3538 = vmatpush1.msra.mxu0 %v3069
    %3539 = vmatprep.subr.mxu0 0.0
    %3540 = vmatpush1.msra.mxu0 %v3070
    %3541 = vmatprep.subr.mxu0 0.0
    %3542 = vmatpush1.msra.mxu0 %v3071
    %3543 = vmatprep.subr.mxu0 0.0
    %3544 = vmatpush1.msra.mxu0 %v3072
    %3545 = vmatprep.subr.mxu0 0.0
    %3546 = vmatpush1.msra.mxu0 %v3073
    %3547 = vmatprep.subr.mxu0 0.0
    %3548 = vmatpush1.msra.mxu0 %v3074
    %3549 = vmatprep.subr.mxu0 0.0
    %3550 = vmatpush1.msra.mxu0 %v3075
    %3551 = vmatprep.subr.mxu0 0.0
    %3552 = vmatpush1.msra.mxu0 %v3076
    %3553 = vmatprep.subr.mxu0 0.0
    %3554 = vmatpush1.msra.mxu0 %v3077
    %3555 = vmatprep.subr.mxu0 0.0
    %3556 = vmatpush1.msra.mxu0 %v3078
    %3557 = vmatprep.subr.mxu0 0.0
    %3558 = vmatpush1.msra.mxu0 %v3079
    %3559 = vmatprep.subr.mxu0 0.0
    %3560 = vmatpush1.msra.mxu0 %v3080
    %3561 = vmatprep.subr.mxu0 0.0
    %3562 = vmatpush1.msra.mxu0 %v3081
    %3563 = vmatprep.subr.mxu0 0.0
    %3564 = vmatpush1.msra.mxu0 %v3082
    %3565 = vmatprep.subr.mxu0 0.0
    %3566 = vmatpush1.msra.mxu0 %v3083
    %3567 = vmatprep.subr.mxu0 0.0
    %3568 = vmatpush1.msra.mxu0 %v3084
    %3569 = vmatprep.subr.mxu0 0.0
    %3570 = vmatpush1.msra.mxu0 %v3085
    %3571 = vmatprep.subr.mxu0 0.0
    %3572 = vmatpush1.msra.mxu0 %v3086
    %3573 = vmatprep.subr.mxu0 0.0
    %3574 = vmatpush1.msra.mxu0 %v3087
    %3575 = vmatprep.subr.mxu0 0.0
    %3576 = vmatpush1.msra.mxu0 %v3088
    %3577 = vmatprep.subr.mxu0 0.0
    %3578 = vmatpush1.msra.mxu0 %v3089
    %3579 = vmatprep.subr.mxu0 0.0
    %3580 = vmatpush1.msra.mxu0 %v3090
    %3581 = vmatprep.subr.mxu0 0.0
    %3582 = vmatpush1.msra.mxu0 %v3091
    %3583 = vmatprep.subr.mxu0 0.0
    %3584 = vmatpush1.msra.mxu0 %v3092
    %3585 = vmatprep.subr.mxu0 0.0
    %3586 = vmatpush1.msra.mxu0 %v3093
    %3587 = vmatprep.subr.mxu0 0.0
    %3588 = vmatpush1.msra.mxu0 %v3094
    %3589 = vmatprep.subr.mxu0 0.0
    %3590 = vmatpush1.msra.mxu0 %v3095
    %3591 = vmatprep.subr.mxu0 0.0
    %3592 = vmatpush1.msra.mxu0 %v3096
    %3593 = vmatprep.subr.mxu0 0.0
    %3594 = vmatpush1.msra.mxu0 %v3097
    %3595 = vmatprep.mubr.f32.mxu0 %v3270
    %3596 = vmatmul.mubr.f32.gmra.mrb[0].mxu0 %v3268
    %v3597 = vpop.f32.mrb[0].mxu0
    %v3598 = vadd.f32 %v3528, %v3597
    %v3599 = vpop.f32.mrb[0].mxu0
    %3600 = vdwg.mxu0
    %3601 = vmatprep.subr.mxu0 0.0
    %3602 = vmatpush1.msra.mxu0 %v3098
    %3603 = vmatprep.subr.mxu0 0.0
    %3604 = vmatpush1.msra.mxu0 %v3099
    %3605 = vmatprep.subr.mxu0 0.0
    %3606 = vmatpush1.msra.mxu0 %v3100
    %3607 = vmatprep.subr.mxu0 0.0
    %3608 = vmatpush1.msra.mxu0 %v3101
    %3609 = vmatprep.subr.mxu0 0.0
    %3610 = vmatpush1.msra.mxu0 %v3102
    %3611 = vmatprep.subr.mxu0 0.0
    %3612 = vmatpush1.msra.mxu0 %v3103
    %3613 = vmatprep.subr.mxu0 0.0
    %3614 = vmatpush1.msra.mxu0 %v3104
    %3615 = vmatprep.subr.mxu0 0.0
    %3616 = vmatpush1.msra.mxu0 %v3105
    %3617 = vmatprep.subr.mxu0 0.0
    %3618 = vmatpush1.msra.mxu0 %v3106
    %3619 = vmatprep.subr.mxu0 0.0
    %3620 = vmatpush1.msra.mxu0 %v3107
    %3621 = vmatprep.subr.mxu0 0.0
    %3622 = vmatpush1.msra.mxu0 %v3108
    %3623 = vmatprep.subr.mxu0 0.0
    %3624 = vmatpush1.msra.mxu0 %v3109
    %3625 = vmatprep.subr.mxu0 0.0
    %3626 = vmatpush1.msra.mxu0 %v3110
    %3627 = vmatprep.subr.mxu0 0.0
    %3628 = vmatpush1.msra.mxu0 %v3111
    %3629 = vmatprep.subr.mxu0 0.0
    %3630 = vmatpush1.msra.mxu0 %v3112
    %3631 = vmatprep.subr.mxu0 0.0
    %3632 = vmatpush1.msra.mxu0 %v3113
    %3633 = vmatprep.subr.mxu0 0.0
    %3634 = vmatpush1.msra.mxu0 %v3114
    %3635 = vmatprep.subr.mxu0 0.0
    %3636 = vmatpush1.msra.mxu0 %v3115
    %3637 = vmatprep.subr.mxu0 0.0
    %3638 = vmatpush1.msra.mxu0 %v3116
    %3639 = vmatprep.subr.mxu0 0.0
    %3640 = vmatpush1.msra.mxu0 %v3117
    %3641 = vmatprep.subr.mxu0 0.0
    %3642 = vmatpush1.msra.mxu0 %v3118
    %3643 = vmatprep.subr.mxu0 0.0
    %3644 = vmatpush1.msra.mxu0 %v3119
    %3645 = vmatprep.subr.mxu0 0.0
    %3646 = vmatpush1.msra.mxu0 %v3120
    %3647 = vmatprep.subr.mxu0 0.0
    %3648 = vmatpush1.msra.mxu0 %v3121
    %3649 = vmatprep.subr.mxu0 0.0
    %3650 = vmatpush1.msra.mxu0 %v3122
    %3651 = vmatprep.subr.mxu0 0.0
    %3652 = vmatpush1.msra.mxu0 %v3123
    %3653 = vmatprep.subr.mxu0 0.0
    %3654 = vmatpush1.msra.mxu0 %v3124
    %3655 = vmatprep.subr.mxu0 0.0
    %3656 = vmatpush1.msra.mxu0 %v3125
    %3657 = vmatprep.subr.mxu0 0.0
    %3658 = vmatpush1.msra.mxu0 %v3126
    %3659 = vmatprep.subr.mxu0 0.0
    %3660 = vmatpush1.msra.mxu0 %v3127
    %3661 = vmatprep.subr.mxu0 0.0
    %3662 = vmatpush1.msra.mxu0 %v3128
    %3663 = vmatprep.subr.mxu0 0.0
    %3664 = vmatpush1.msra.mxu0 %v3129
    %3665 = vmatprep.mubr.f32.mxu0 %v3286
    %3666 = vmatmul.mubr.f32.gmra.mrb[0].mxu0 %v3278
    %v3667 = vpop.f32.mrb[0].mxu0
    %v3668 = vadd.f32 %v3598, %v3667
    %v3669 = vpop.f32.mrb[0].mxu0
    %3670 = vdwg.mxu0
    %3671 = vmatprep.subr.mxu0 0.0
    %3672 = vmatpush1.msra.mxu0 %v3130
    %3673 = vmatprep.subr.mxu0 0.0
    %3674 = vmatpush1.msra.mxu0 %v3131
    %3675 = vmatprep.subr.mxu0 0.0
    %3676 = vmatpush1.msra.mxu0 %v3132
    %3677 = vmatprep.subr.mxu0 0.0
    %3678 = vmatpush1.msra.mxu0 %v3133
    %3679 = vmatprep.subr.mxu0 0.0
    %3680 = vmatpush1.msra.mxu0 %v3134
    %3681 = vmatprep.subr.mxu0 0.0
    %3682 = vmatpush1.msra.mxu0 %v3135
    %3683 = vmatprep.subr.mxu0 0.0
    %3684 = vmatpush1.msra.mxu0 %v3136
    %3685 = vmatprep.subr.mxu0 0.0
    %3686 = vmatpush1.msra.mxu0 %v3137
    %3687 = vmatprep.subr.mxu0 0.0
    %3688 = vmatpush1.msra.mxu0 %v3138
    %3689 = vmatprep.subr.mxu0 0.0
    %3690 = vmatpush1.msra.mxu0 %v3139
    %3691 = vmatprep.subr.mxu0 0.0
    %3692 = vmatpush1.msra.mxu0 %v3140
    %3693 = vmatprep.subr.mxu0 0.0
    %3694 = vmatpush1.msra.mxu0 %v3141
    %3695 = vmatprep.subr.mxu0 0.0
    %3696 = vmatpush1.msra.mxu0 %v3142
    %3697 = vmatprep.subr.mxu0 0.0
    %3698 = vmatpush1.msra.mxu0 %v3143
    %3699 = vmatprep.subr.mxu0 0.0
    %3700 = vmatpush1.msra.mxu0 %v3144
    %3701 = vmatprep.subr.mxu0 0.0
    %3702 = vmatpush1.msra.mxu0 %v3145
    %3703 = vmatprep.subr.mxu0 0.0
    %3704 = vmatpush1.msra.mxu0 %v3146
    %3705 = vmatprep.subr.mxu0 0.0
    %3706 = vmatpush1.msra.mxu0 %v3147
    %3707 = vmatprep.subr.mxu0 0.0
    %3708 = vmatpush1.msra.mxu0 %v3148
    %3709 = vmatprep.subr.mxu0 0.0
    %3710 = vmatpush1.msra.mxu0 %v3149
    %3711 = vmatprep.subr.mxu0 0.0
    %3712 = vmatpush1.msra.mxu0 %v3150
    %3713 = vmatprep.subr.mxu0 0.0
    %3714 = vmatpush1.msra.mxu0 %v3151
    %3715 = vmatprep.subr.mxu0 0.0
    %3716 = vmatpush1.msra.mxu0 %v3152
    %3717 = vmatprep.subr.mxu0 0.0
    %3718 = vmatpush1.msra.mxu0 %v3153
    %3719 = vmatprep.subr.mxu0 0.0
    %3720 = vmatpush1.msra.mxu0 %v3154
    %3721 = vmatprep.subr.mxu0 0.0
    %3722 = vmatpush1.msra.mxu0 %v3155
    %3723 = vmatprep.subr.mxu0 0.0
    %3724 = vmatpush1.msra.mxu0 %v3156
    %3725 = vmatprep.subr.mxu0 0.0
    %3726 = vmatpush1.msra.mxu0 %v3157
    %3727 = vmatprep.subr.mxu0 0.0
    %3728 = vmatpush1.msra.mxu0 %v3158
    %3729 = vmatprep.subr.mxu0 0.0
    %3730 = vmatpush1.msra.mxu0 %v3159
    %3731 = vmatprep.subr.mxu0 0.0
    %3732 = vmatpush1.msra.mxu0 %v3160
    %3733 = vmatprep.subr.mxu0 0.0
    %3734 = vmatpush1.msra.mxu0 %v3161
    %3735 = vmatprep.mubr.f32.mxu0 %v3287
    %3736 = vmatmul.mubr.f32.gmra.mrb[0].mxu0 %v3285
    %v3737 = vpop.f32.mrb[0].mxu0
    %v3738 = vadd.f32 %v3668, %v3737
    %v3739 = vpop.f32.mrb[0].mxu0
    %3740 = vdwg.mxu0
    %3741 = vmatprep.subr.mxu0 0.0
    %3742 = vmatpush1.msra.mxu0 %v3162
    %3743 = vmatprep.subr.mxu0 0.0
    %3744 = vmatpush1.msra.mxu0 %v3163
    %3745 = vmatprep.subr.mxu0 0.0
    %3746 = vmatpush1.msra.mxu0 %v3164
    %3747 = vmatprep.subr.mxu0 0.0
    %3748 = vmatpush1.msra.mxu0 %v3165
    %3749 = vmatprep.subr.mxu0 0.0
    %3750 = vmatpush1.msra.mxu0 %v3166
    %3751 = vmatprep.subr.mxu0 0.0
    %3752 = vmatpush1.msra.mxu0 %v3167
    %3753 = vmatprep.subr.mxu0 0.0
    %3754 = vmatpush1.msra.mxu0 %v3168
    %3755 = vmatprep.subr.mxu0 0.0
    %3756 = vmatpush1.msra.mxu0 %v3169
    %3757 = vmatprep.subr.mxu0 0.0
    %3758 = vmatpush1.msra.mxu0 %v3170
    %3759 = vmatprep.subr.mxu0 0.0
    %3760 = vmatpush1.msra.mxu0 %v3171
    %3761 = vmatprep.subr.mxu0 0.0
    %3762 = vmatpush1.msra.mxu0 %v3172
    %3763 = vmatprep.subr.mxu0 0.0
    %3764 = vmatpush1.msra.mxu0 %v3173
    %3765 = vmatprep.subr.mxu0 0.0
    %3766 = vmatpush1.msra.mxu0 %v3174
    %3767 = vmatprep.subr.mxu0 0.0
    %3768 = vmatpush1.msra.mxu0 %v3175
    %3769 = vmatprep.subr.mxu0 0.0
    %3770 = vmatpush1.msra.mxu0 %v3176
    %3771 = vmatprep.subr.mxu0 0.0
    %3772 = vmatpush1.msra.mxu0 %v3177
    %3773 = vmatprep.subr.mxu0 0.0
    %3774 = vmatpush1.msra.mxu0 %v3178
    %3775 = vmatprep.subr.mxu0 0.0
    %3776 = vmatpush1.msra.mxu0 %v3179
    %3777 = vmatprep.subr.mxu0 0.0
    %3778 = vmatpush1.msra.mxu0 %v3180
    %3779 = vmatprep.subr.mxu0 0.0
    %3780 = vmatpush1.msra.mxu0 %v3181
    %3781 = vmatprep.subr.mxu0 0.0
    %3782 = vmatpush1.msra.mxu0 %v3182
    %3783 = vmatprep.subr.mxu0 0.0
    %3784 = vmatpush1.msra.mxu0 %v3183
    %3785 = vmatprep.subr.mxu0 0.0
    %3786 = vmatpush1.msra.mxu0 %v3184
    %3787 = vmatprep.subr.mxu0 0.0
    %3788 = vmatpush1.msra.mxu0 %v3185
    %3789 = vmatprep.subr.mxu0 0.0
    %3790 = vmatpush1.msra.mxu0 %v3186
    %3791 = vmatprep.subr.mxu0 0.0
    %3792 = vmatpush1.msra.mxu0 %v3187
    %3793 = vmatprep.subr.mxu0 0.0
    %3794 = vmatpush1.msra.mxu0 %v3188
    %3795 = vmatprep.subr.mxu0 0.0
    %3796 = vmatpush1.msra.mxu0 %v3189
    %3797 = vmatprep.subr.mxu0 0.0
    %3798 = vmatpush1.msra.mxu0 %v3190
    %3799 = vmatprep.subr.mxu0 0.0
    %3800 = vmatpush1.msra.mxu0 %v3191
    %3801 = vmatprep.subr.mxu0 0.0
    %3802 = vmatpush1.msra.mxu0 %v3192
    %3803 = vmatprep.subr.mxu0 0.0
    %3804 = vmatpush1.msra.mxu0 %v3193
    %3805 = vmatprep.mubr.f32.mxu0 %v3303
    %3806 = vmatmul.mubr.f32.gmra.mrb[0].mxu0 %v3295
    %v3807 = vpop.f32.mrb[0].mxu0
    %v3808 = vadd.f32 %v3738, %v3807
    %v3809 = vpop.f32.mrb[0].mxu0
    %3810 = vdwg.mxu0
    %3811 = vmatprep.subr.mxu0 0.0
    %3812 = vmatpush1.msra.mxu0 %v3194
    %3813 = vmatprep.subr.mxu0 0.0
    %3814 = vmatpush1.msra.mxu0 %v3195
    %3815 = vmatprep.subr.mxu0 0.0
    %3816 = vmatpush1.msra.mxu0 %v3196
    %3817 = vmatprep.subr.mxu0 0.0
    %3818 = vmatpush1.msra.mxu0 %v3197
    %3819 = vmatprep.subr.mxu0 0.0
    %3820 = vmatpush1.msra.mxu0 %v3198
    %3821 = vmatprep.subr.mxu0 0.0
    %3822 = vmatpush1.msra.mxu0 %v3199
    %3823 = vmatprep.subr.mxu0 0.0
    %3824 = vmatpush1.msra.mxu0 %v3200
    %3825 = vmatprep.subr.mxu0 0.0
    %3826 = vmatpush1.msra.mxu0 %v3201
    %3827 = vmatprep.subr.mxu0 0.0
    %3828 = vmatpush1.msra.mxu0 %v3202
    %3829 = vmatprep.subr.mxu0 0.0
    %3830 = vmatpush1.msra.mxu0 %v3203
    %3831 = vmatprep.subr.mxu0 0.0
    %3832 = vmatpush1.msra.mxu0 %v3204
    %3833 = vmatprep.subr.mxu0 0.0
    %3834 = vmatpush1.msra.mxu0 %v3205
    %3835 = vmatprep.subr.mxu0 0.0
    %3836 = vmatpush1.msra.mxu0 %v3206
    %3837 = vmatprep.subr.mxu0 0.0
    %3838 = vmatpush1.msra.mxu0 %v3207
    %3839 = vmatprep.subr.mxu0 0.0
    %3840 = vmatpush1.msra.mxu0 %v3208
    %3841 = vmatprep.subr.mxu0 0.0
    %3842 = vmatpush1.msra.mxu0 %v3209
    %3843 = vmatprep.subr.mxu0 0.0
    %3844 = vmatpush1.msra.mxu0 %v3210
    %3845 = vmatprep.subr.mxu0 0.0
    %3846 = vmatpush1.msra.mxu0 %v3211
    %3847 = vmatprep.subr.mxu0 0.0
    %3848 = vmatpush1.msra.mxu0 %v3212
    %3849 = vmatprep.subr.mxu0 0.0
    %3850 = vmatpush1.msra.mxu0 %v3213
    %3851 = vmatprep.subr.mxu0 0.0
    %3852 = vmatpush1.msra.mxu0 %v3214
    %3853 = vmatprep.subr.mxu0 0.0
    %3854 = vmatpush1.msra.mxu0 %v3215
    %3855 = vmatprep.subr.mxu0 0.0
    %3856 = vmatpush1.msra.mxu0 %v3216
    %3857 = vmatprep.subr.mxu0 0.0
    %3858 = vmatpush1.msra.mxu0 %v3217
    %3859 = vmatprep.subr.mxu0 0.0
    %3860 = vmatpush1.msra.mxu0 %v3218
    %3861 = vmatprep.subr.mxu0 0.0
    %3862 = vmatpush1.msra.mxu0 %v3219
    %3863 = vmatprep.subr.mxu0 0.0
    %3864 = vmatpush1.msra.mxu0 %v3220
    %3865 = vmatprep.subr.mxu0 0.0
    %3866 = vmatpush1.msra.mxu0 %v3221
    %3867 = vmatprep.subr.mxu0 0.0
    %3868 = vmatpush1.msra.mxu0 %v3222
    %3869 = vmatprep.subr.mxu0 0.0
    %3870 = vmatpush1.msra.mxu0 %v3223
    %3871 = vmatprep.subr.mxu0 0.0
    %3872 = vmatpush1.msra.mxu0 %v3224
    %3873 = vmatprep.subr.mxu0 0.0
    %3874 = vmatpush1.msra.mxu0 %v3225
    %3875 = vmatprep.mubr.f32.mxu0 %v3304
    %3876 = vmatmul.mubr.f32.gmra.mrb[0].mxu0 %v3302
    %v3877 = vpop.f32.mrb[0].mxu0
    %v3878 = vadd.f32 %v3808, %v3877
    %v3879 = vpop.f32.mrb[0].mxu0
    %3880 = vdwg.mxu0
    %vm3881 = vcmask 41984
    %3882 = vst.msk [vmem:[#allocation4] sm:$0x3] %vm3881, %v3878
    %v3883 = vadd.f32 %v3878, %v2963
    %3884 = vst.msk [vmem:[#allocation2] sm:$0x3] %vm3881, %v3883
    // Predicated region
    $region38: #{srn_forward.3} parent=1 // pred_check
      _
    $region39: #{srn_forward.3} parent=1 // pred_check_branch
      %3886 = sbr.rel (0) target = $region41
    $region40: #{srn_forward.3} parent=1 // pred_region
      %s3888 = ssub.s32 32, 32
      %3889 = vsyncadd [#allocation3], %s3888
      %s3891 = sshll.u32 [#allocation2], 4
      %s3892 = int_to_ptr.vmem [resolvable:$true] %s3891
      %3894 = dma.vmem_to_hbm [thread:$0]  %s3892, 32, %s9, [#allocation3]
    $region41: #{srn_forward.3} parent=1 // pred_fallthru
      _
    // Predicated region
    $region42: #{srn_forward.3} parent=1 // pred_check
      _
    $region43: #{srn_forward.3} parent=1 // pred_check_branch
      %3896 = sbr.rel (0) target = $region45
    $region44: #{srn_forward.3} parent=1 // pred_region
      %s3898 = ssub.s32 32, 32
      %3899 = vsyncadd [#allocation5], %s3898
      %s3901 = sshll.u32 [#allocation4], 4
      %s3902 = int_to_ptr.vmem [resolvable:$true] %s3901
      %3904 = dma.vmem_to_hbm [thread:$0]  %s3902, 32, %s10, [#allocation5]
    $region45: #{srn_forward.3} parent=1 // pred_fallthru
      _
    // Predicated region
    $region46: #{srn_forward.3} parent=1 // pred_check
      _
    $region47: #{srn_forward.3} parent=1 // pred_check_branch
      %3906 = sbr.rel (0) target = $region49
    $region48: #{srn_forward.3} parent=1 // pred_region
      %3907 = dma.done [#allocation3], 32
    $region49: #{srn_forward.3} parent=1 // pred_fallthru
      _
    // Predicated region
    $region50: #{srn_forward.3} parent=1 // pred_check
      _
    $region51: #{srn_forward.3} parent=1 // pred_check_branch
      %3909 = sbr.rel (0) target = $region53
    $region52: #{srn_forward.3} parent=1 // pred_region
      %3910 = dma.done [#allocation5], 32
    $region53: #{srn_forward.3} parent=1 // pred_fallthru
      _
    %3911 = vsyncpa [#allocation3], 1
    %3912 = vsyncpa [#allocation5], 1

// kernel: srn_forward.2
$region0: #{srn_forward.2}
  #allocation0 [shape = 'u32[]', space=smem, size = 0x4, offset = 0x4, fixed_abs, tag = 'smem constant byte address 0x4 - core index']
  #allocation1 [shape = 'u32[144,128]{1,0:T(1,128)}', space=vmem, size = 0x12000, scoped, tag = 'internal scratch']
  %s0 = inlined_call_operand.vmem [shape: f32[128,196], index: 0, kind: input, shape index: {}]
  %s1 = inlined_call_operand.hbm [shape: f32[9,1,196], index: 1, kind: input, shape index: {}]
  %s2 = inlined_call_operand.hbm [shape: f32[12,12], index: 2, kind: input, shape index: {}]
  %s3 = inlined_call_operand.vmem [shape: f32[128,1], index: 3, kind: input, shape index: {}]
  %s4 = inlined_call_operand.vmem [shape: f32[128,1], index: 4, kind: input, shape index: {}]
  %s5 = inlined_call_operand.hbm [shape: f32[64,128], index: 5, kind: input, shape index: {}]
  %s6 = inlined_call_operand.vmem [shape: f32[64,1], index: 6, kind: input, shape index: {}]
  %s7 = inlined_call_operand.vmem [shape: f32[64,1], index: 7, kind: input, shape index: {}]
  %s8 = inlined_call_operand.hbm [shape: f32[9,64,64], index: 8, kind: input, shape index: {}]
  %s9 = inlined_call_operand.vmem [shape: f32[64,1], index: 9, kind: input, shape index: {}]
  %s10 = inlined_call_operand.vmem [shape: f32[64,1], index: 10, kind: input, shape index: {}]
  %s11 = inlined_call_operand.hbm [shape: f32[12,64], index: 11, kind: input, shape index: {}]
  %s12 = inlined_call_operand.vmem [shape: f32[128,1], index: 12, kind: input, shape index: {}]
  %s13 = inlined_call_operand.vmem [shape: f32[128,1], index: 13, kind: input, shape index: {}]
  %s14 = inlined_call_operand.hbm [shape: f32[96,128], index: 14, kind: input, shape index: {}]
  %s15 = inlined_call_operand.vmem [shape: f32[96,1], index: 15, kind: input, shape index: {}]
  %s16 = inlined_call_operand.vmem [shape: f32[96,1], index: 16, kind: input, shape index: {}]
  %s17 = inlined_call_operand.hbm [shape: f32[12,96], index: 17, kind: input, shape index: {}]
  %s18 = inlined_call_operand.vmem [shape: f32[64,12], index: 18, kind: input, shape index: {}]
  %s19 = inlined_call_operand.vmem [shape: f32[64,1], index: 19, kind: input, shape index: {}]
  %s20 = inlined_call_operand.vmem [shape: f32[64,1], index: 20, kind: input, shape index: {}]
  %s21 = inlined_call_operand.hbm [shape: f32[64,64], index: 21, kind: input, shape index: {}]
  %s22 = inlined_call_operand.vmem [shape: f32[64,1], index: 22, kind: input, shape index: {}]
  %s23 = inlined_call_operand.vmem [shape: f32[64,1], index: 23, kind: input, shape index: {}]
  %s24 = inlined_call_operand.vmem [shape: f32[64,196], index: 24, kind: output, shape index: {0}]
  %s25 = inlined_call_operand.vmem [shape: f32[12,1], index: 25, kind: output, shape index: {1}]
  %26 = xla_tuple %s24, %s25
  %s27 = sld [smem:[#allocation0]]
  $region146: #{srn_forward.2} parent=0
    _
  %s29 = ssub.s32 1, %s27
  %s30 = scalar_select 0, %s29, %s27
  $region1: #{srn_forward.2} parent=0
    #allocation2 [shape = 'u8[9216]{0}', space=vmem, size = 0x2400, scoped, tag = 'input window, operand 1, single buffered']
    #allocation3 [shape = 's32[1]{0}', space=sflag, size = 0x4, scoped, tag = 'scoped memory for srn_forward.2']
    #allocation4 [shape = 'u8[8192]{0}', space=vmem, size = 0x2000, scoped, tag = 'input window, operand 2, single buffered']
    #allocation5 [shape = 's32[1]{0}', space=sflag, size = 0x4, scoped, tag = 'scoped memory for srn_forward.2']
    #allocation6 [shape = 'u8[32768]{0}', space=vmem, size = 0x8000, scoped, tag = 'input window, operand 5, single buffered']
    #allocation7 [shape = 'u8[294912]{0}', space=vmem, size = 0x48000, scoped, tag = 'input window, operand 8, single buffered']
    #allocation8 [shape = 's32[1]{0}', space=sflag, size = 0x4, scoped, tag = 'scoped memory for srn_forward.2']
    #allocation9 [shape = 'u8[8192]{0}', space=vmem, size = 0x2000, scoped, tag = 'input window, operand 11, single buffered']
    #allocation10 [shape = 'u8[49152]{0}', space=vmem, size = 0xc000, scoped, tag = 'input window, operand 14, single buffered']
    #allocation11 [shape = 's32[1]{0}', space=sflag, size = 0x4, scoped, tag = 'scoped memory for srn_forward.2']
    #allocation12 [shape = 'u8[8192]{0}', space=vmem, size = 0x2000, scoped, tag = 'input window, operand 17, single buffered']
    #allocation13 [shape = 'u8[32768]{0}', space=vmem, size = 0x8000, scoped, tag = 'input window, operand 21, single buffered']
    #allocation14 [shape = 's32[1]{0}', space=sflag, size = 0x4, scoped, tag = 'scoped memory for srn_forward.2']
    %31 = vsyncpa [#allocation3], 0
    %32 = vsyncpa [#allocation5], 0
    %33 = vsyncpa [#allocation8], 0
    %34 = vsyncpa [#allocation11], 0
    %35 = vsyncpa [#allocation14], 0
    // Predicated region
    $region2: #{srn_forward.2} parent=1 // pred_check
      _
    $region3: #{srn_forward.2} parent=1 // pred_check_branch
      %37 = sbr.rel (0) target = $region5
    $region4: #{srn_forward.2} parent=1 // pred_region
      _
    $region5: #{srn_forward.2} parent=1 // pred_fallthru
      _
    // Predicated region
    $region6: #{srn_forward.2} parent=1 // pred_check
      _
    $region7: #{srn_forward.2} parent=1 // pred_check_branch
      %39 = sbr.rel (0) target = $region9
    $region8: #{srn_forward.2} parent=1 // pred_region
      %s41 = ssub.s32 288, 288
      %42 = vsyncadd [#allocation3], %s41
      %s43 = sshll.u32 [#allocation2], 4
      %s44 = int_to_ptr.vmem [resolvable:$true] %s43
      %49 = dma.hbm_to_vmem [thread:$0]  %s1, 288, %s44, [#allocation3], 32, 32, 2
    $region9: #{srn_forward.2} parent=1 // pred_fallthru
      _
    // Predicated region
    $region10: #{srn_forward.2} parent=1 // pred_check
      _
    $region11: #{srn_forward.2} parent=1 // pred_check_branch
      %51 = sbr.rel (0) target = $region13
    $region12: #{srn_forward.2} parent=1 // pred_region
      %s53 = ssub.s32 256, 256
      %54 = vsyncadd [#allocation5], %s53
      %s55 = sshll.u32 [#allocation4], 4
      %s56 = int_to_ptr.vmem [resolvable:$true] %s55
      %61 = dma.hbm_to_vmem [thread:$0]  %s2, 256, %s56, [#allocation5], 128, 128, 8
    $region13: #{srn_forward.2} parent=1 // pred_fallthru
      _
    // Predicated region
    $region14: #{srn_forward.2} parent=1 // pred_check
      _
    $region15: #{srn_forward.2} parent=1 // pred_check_branch
      %63 = sbr.rel (0) target = $region17
    $region16: #{srn_forward.2} parent=1 // pred_region
      _
    $region17: #{srn_forward.2} parent=1 // pred_fallthru
      _
    // Predicated region
    $region18: #{srn_forward.2} parent=1 // pred_check
      _
    $region19: #{srn_forward.2} parent=1 // pred_check_branch
      %65 = sbr.rel (0) target = $region21
    $region20: #{srn_forward.2} parent=1 // pred_region
      _
    $region21: #{srn_forward.2} parent=1 // pred_fallthru
      _
    // Predicated region
    $region22: #{srn_forward.2} parent=1 // pred_check
      _
    $region23: #{srn_forward.2} parent=1 // pred_check_branch
      %67 = sbr.rel (0) target = $region25
    $region24: #{srn_forward.2} parent=1 // pred_region
      %s69 = ssub.s32 1024, 1024
      %70 = vsyncadd [#allocation5], %s69
      %s71 = sshll.u32 [#allocation6], 4
      %s72 = int_to_ptr.vmem [resolvable:$true] %s71
      %77 = dma.hbm_to_vmem [thread:$0]  %s5, 1024, %s72, [#allocation5], 128, 128, 8
    $region25: #{srn_forward.2} parent=1 // pred_fallthru
      _
    // Predicated region
    $region26: #{srn_forward.2} parent=1 // pred_check
      _
    $region27: #{srn_forward.2} parent=1 // pred_check_branch
      %79 = sbr.rel (0) target = $region29
    $region28: #{srn_forward.2} parent=1 // pred_region
      _
    $region29: #{srn_forward.2} parent=1 // pred_fallthru
      _
    // Predicated region
    $region30: #{srn_forward.2} parent=1 // pred_check
      _
    $region31: #{srn_forward.2} parent=1 // pred_check_branch
      %81 = sbr.rel (0) target = $region33
    $region32: #{srn_forward.2} parent=1 // pred_region
      _
    $region33: #{srn_forward.2} parent=1 // pred_fallthru
      _
    // Predicated region
    $region34: #{srn_forward.2} parent=1 // pred_check
      _
    $region35: #{srn_forward.2} parent=1 // pred_check_branch
      %83 = sbr.rel (0) target = $region37
    $region36: #{srn_forward.2} parent=1 // pred_region
      %s85 = ssub.s32 9216, 9216
      %86 = vsyncadd [#allocation8], %s85
      %s87 = sshll.u32 [#allocation7], 4
      %s88 = int_to_ptr.vmem [resolvable:$true] %s87
      %93 = dma.hbm_to_vmem [thread:$0]  %s8, 9216, %s88, [#allocation8], 128, 128, 8
    $region37: #{srn_forward.2} parent=1 // pred_fallthru
      _
    // Predicated region
    $region38: #{srn_forward.2} parent=1 // pred_check
      _
    $region39: #{srn_forward.2} parent=1 // pred_check_branch
      %95 = sbr.rel (0) target = $region41
    $region40: #{srn_forward.2} parent=1 // pred_region
      _
    $region41: #{srn_forward.2} parent=1 // pred_fallthru
      _
    // Predicated region
    $region42: #{srn_forward.2} parent=1 // pred_check
      _
    $region43: #{srn_forward.2} parent=1 // pred_check_branch
      %97 = sbr.rel (0) target = $region45
    $region44: #{srn_forward.2} parent=1 // pred_region
      _
    $region45: #{srn_forward.2} parent=1 // pred_fallthru
      _
    // Predicated region
    $region46: #{srn_forward.2} parent=1 // pred_check
      _
    $region47: #{srn_forward.2} parent=1 // pred_check_branch
      %99 = sbr.rel (0) target = $region49
    $region48: #{srn_forward.2} parent=1 // pred_region
      %s101 = ssub.s32 256, 256
      %102 = vsyncadd [#allocation8], %s101
      %s103 = sshll.u32 [#allocation9], 4
      %s104 = int_to_ptr.vmem [resolvable:$true] %s103
      %109 = dma.hbm_to_vmem [thread:$0]  %s11, 256, %s104, [#allocation8], 128, 128, 8
    $region49: #{srn_forward.2} parent=1 // pred_fallthru
      _
    // Predicated region
    $region50: #{srn_forward.2} parent=1 // pred_check
      _
    $region51: #{srn_forward.2} parent=1 // pred_check_branch
      %111 = sbr.rel (0) target = $region53
    $region52: #{srn_forward.2} parent=1 // pred_region
      _
    $region53: #{srn_forward.2} parent=1 // pred_fallthru
      _
    // Predicated region
    $region54: #{srn_forward.2} parent=1 // pred_check
      _
    $region55: #{srn_forward.2} parent=1 // pred_check_branch
      %113 = sbr.rel (0) target = $region57
    $region56: #{srn_forward.2} parent=1 // pred_region
      _
    $region57: #{srn_forward.2} parent=1 // pred_fallthru
      _
    // Predicated region
    $region58: #{srn_forward.2} parent=1 // pred_check
      _
    $region59: #{srn_forward.2} parent=1 // pred_check_branch
      %115 = sbr.rel (0) target = $region61
    $region60: #{srn_forward.2} parent=1 // pred_region
      %s117 = ssub.s32 1536, 1536
      %118 = vsyncadd [#allocation11], %s117
      %s119 = sshll.u32 [#allocation10], 4
      %s120 = int_to_ptr.vmem [resolvable:$true] %s119
      %125 = dma.hbm_to_vmem [thread:$0]  %s14, 1536, %s120, [#allocation11], 128, 128, 8
    $region61: #{srn_forward.2} parent=1 // pred_fallthru
      _
    // Predicated region
    $region62: #{srn_forward.2} parent=1 // pred_check
      _
    $region63: #{srn_forward.2} parent=1 // pred_check_branch
      %127 = sbr.rel (0) target = $region65
    $region64: #{srn_forward.2} parent=1 // pred_region
      _
    $region65: #{srn_forward.2} parent=1 // pred_fallthru
      _
    // Predicated region
    $region66: #{srn_forward.2} parent=1 // pred_check
      _
    $region67: #{srn_forward.2} parent=1 // pred_check_branch
      %129 = sbr.rel (0) target = $region69
    $region68: #{srn_forward.2} parent=1 // pred_region
      _
    $region69: #{srn_forward.2} parent=1 // pred_fallthru
      _
    // Predicated region
    $region70: #{srn_forward.2} parent=1 // pred_check
      _
    $region71: #{srn_forward.2} parent=1 // pred_check_branch
      %131 = sbr.rel (0) target = $region73
    $region72: #{srn_forward.2} parent=1 // pred_region
      %s133 = ssub.s32 256, 256
      %134 = vsyncadd [#allocation11], %s133
      %s135 = sshll.u32 [#allocation12], 4
      %s136 = int_to_ptr.vmem [resolvable:$true] %s135
      %141 = dma.hbm_to_vmem [thread:$0]  %s17, 256, %s136, [#allocation11], 128, 128, 8
    $region73: #{srn_forward.2} parent=1 // pred_fallthru
      _
    // Predicated region
    $region74: #{srn_forward.2} parent=1 // pred_check
      _
    $region75: #{srn_forward.2} parent=1 // pred_check_branch
      %143 = sbr.rel (0) target = $region77
    $region76: #{srn_forward.2} parent=1 // pred_region
      _
    $region77: #{srn_forward.2} parent=1 // pred_fallthru
      _
    // Predicated region
    $region78: #{srn_forward.2} parent=1 // pred_check
      _
    $region79: #{srn_forward.2} parent=1 // pred_check_branch
      %145 = sbr.rel (0) target = $region81
    $region80: #{srn_forward.2} parent=1 // pred_region
      _
    $region81: #{srn_forward.2} parent=1 // pred_fallthru
      _
    // Predicated region
    $region82: #{srn_forward.2} parent=1 // pred_check
      _
    $region83: #{srn_forward.2} parent=1 // pred_check_branch
      %147 = sbr.rel (0) target = $region85
    $region84: #{srn_forward.2} parent=1 // pred_region
      _
    $region85: #{srn_forward.2} parent=1 // pred_fallthru
      _
    // Predicated region
    $region86: #{srn_forward.2} parent=1 // pred_check
      _
    $region87: #{srn_forward.2} parent=1 // pred_check_branch
      %149 = sbr.rel (0) target = $region89
    $region88: #{srn_forward.2} parent=1 // pred_region
      %s151 = ssub.s32 1024, 1024
      %152 = vsyncadd [#allocation14], %s151
      %s153 = sshll.u32 [#allocation13], 4
      %s154 = int_to_ptr.vmem [resolvable:$true] %s153
      %159 = dma.hbm_to_vmem [thread:$0]  %s21, 1024, %s154, [#allocation14], 128, 128, 8
    $region89: #{srn_forward.2} parent=1 // pred_fallthru
      _
    // Predicated region
    $region90: #{srn_forward.2} parent=1 // pred_check
      _
    $region91: #{srn_forward.2} parent=1 // pred_check_branch
      %161 = sbr.rel (0) target = $region93
    $region92: #{srn_forward.2} parent=1 // pred_region
      _
    $region93: #{srn_forward.2} parent=1 // pred_fallthru
      _
    // Predicated region
    $region94: #{srn_forward.2} parent=1 // pred_check
      _
    $region95: #{srn_forward.2} parent=1 // pred_check_branch
      %163 = sbr.rel (0) target = $region97
    $region96: #{srn_forward.2} parent=1 // pred_region
      _
    $region97: #{srn_forward.2} parent=1 // pred_fallthru
      _
    // Predicated region
    $region98: #{srn_forward.2} parent=1 // pred_check
      _
    $region99: #{srn_forward.2} parent=1 // pred_check_branch
      %165 = sbr.rel (0) target = $region101
    $region100: #{srn_forward.2} parent=1 // pred_region
      %166 = dma.done [#allocation3], 288
    $region101: #{srn_forward.2} parent=1 // pred_fallthru
      _
    // Predicated region
    $region102: #{srn_forward.2} parent=1 // pred_check
      _
    $region103: #{srn_forward.2} parent=1 // pred_check_branch
      %168 = sbr.rel (0) target = $region105
    $region104: #{srn_forward.2} parent=1 // pred_region
      %169 = dma.done [#allocation5], 256
    $region105: #{srn_forward.2} parent=1 // pred_fallthru
      _
    // Predicated region
    $region106: #{srn_forward.2} parent=1 // pred_check
      _
    $region107: #{srn_forward.2} parent=1 // pred_check_branch
      %171 = sbr.rel (0) target = $region109
    $region108: #{srn_forward.2} parent=1 // pred_region
      %172 = dma.done [#allocation5], 1024
    $region109: #{srn_forward.2} parent=1 // pred_fallthru
      _
    // Predicated region
    $region110: #{srn_forward.2} parent=1 // pred_check
      _
    $region111: #{srn_forward.2} parent=1 // pred_check_branch
      %174 = sbr.rel (0) target = $region113
    $region112: #{srn_forward.2} parent=1 // pred_region
      %175 = dma.done [#allocation8], 9216
    $region113: #{srn_forward.2} parent=1 // pred_fallthru
      _
    // Predicated region
    $region114: #{srn_forward.2} parent=1 // pred_check
      _
    $region115: #{srn_forward.2} parent=1 // pred_check_branch
      %177 = sbr.rel (0) target = $region117
    $region116: #{srn_forward.2} parent=1 // pred_region
      %178 = dma.done [#allocation8], 256
    $region117: #{srn_forward.2} parent=1 // pred_fallthru
      _
    // Predicated region
    $region118: #{srn_forward.2} parent=1 // pred_check
      _
    $region119: #{srn_forward.2} parent=1 // pred_check_branch
      %180 = sbr.rel (0) target = $region121
    $region120: #{srn_forward.2} parent=1 // pred_region
      %181 = dma.done [#allocation11], 1536
    $region121: #{srn_forward.2} parent=1 // pred_fallthru
      _
    // Predicated region
    $region122: #{srn_forward.2} parent=1 // pred_check
      _
    $region123: #{srn_forward.2} parent=1 // pred_check_branch
      %183 = sbr.rel (0) target = $region125
    $region124: #{srn_forward.2} parent=1 // pred_region
      %184 = dma.done [#allocation11], 256
    $region125: #{srn_forward.2} parent=1 // pred_fallthru
      _
    // Predicated region
    $region126: #{srn_forward.2} parent=1 // pred_check
      _
    $region127: #{srn_forward.2} parent=1 // pred_check_branch
      %186 = sbr.rel (0) target = $region129
    $region128: #{srn_forward.2} parent=1 // pred_region
      %187 = dma.done [#allocation14], 1024
    $region129: #{srn_forward.2} parent=1 // pred_fallthru
      _
    %v188 = vld [vmem:[%s0] sm:$0xff]
    %v189 = vld [vmem:[%s0 + $0x8] sm:$0xff]
    %v190 = vld [vmem:[%s0 + $0x10] sm:$0xff]
    %v191 = vld [vmem:[%s0 + $0x18] sm:$0xff]
    %v192 = vld [vmem:[%s0 + $0x20] sm:$0xff]
    %v193 = vld [vmem:[%s0 + $0x28] sm:$0xff]
    %v194 = vld [vmem:[%s0 + $0x30] sm:$0xff]
    %v195 = vld [vmem:[%s0 + $0x38] sm:$0xff]
    %v196 = vld [vmem:[%s0 + $0x40] sm:$0xff]
    %v197 = vld [vmem:[%s0 + $0x48] sm:$0xff]
    %v198 = vld [vmem:[%s0 + $0x50] sm:$0xff]
    %v199 = vld [vmem:[%s0 + $0x58] sm:$0xff]
    %v200 = vld [vmem:[%s0 + $0x60] sm:$0xff]
    %v201 = vld [vmem:[%s0 + $0x68] sm:$0xff]
    %v202 = vld [vmem:[%s0 + $0x70] sm:$0xff]
    %v203 = vld [vmem:[%s0 + $0x78] sm:$0xff]
    %v204 = vld [vmem:[%s0 + $0x80] sm:$0xff]
    %v205 = vld [vmem:[%s0 + $0x88] sm:$0xff]
    %v206 = vld [vmem:[%s0 + $0x90] sm:$0xff]
    %v207 = vld [vmem:[%s0 + $0x98] sm:$0xff]
    %v208 = vld [vmem:[%s0 + $0xa0] sm:$0xff]
    %v209 = vld [vmem:[%s0 + $0xa8] sm:$0xff]
    %v210 = vld [vmem:[%s0 + $0xb0] sm:$0xff]
    %v211 = vld [vmem:[%s0 + $0xb8] sm:$0xff]
    %v212 = vld [vmem:[%s0 + $0xc0] sm:$0xff]
    %v213 = vld [vmem:[%s0 + $0xc8] sm:$0xff]
    %v214 = vld [vmem:[%s0 + $0xd0] sm:$0xff]
    %v215 = vld [vmem:[%s0 + $0xd8] sm:$0xff]
    %v216 = vld [vmem:[%s0 + $0xe0] sm:$0xff]
    %v217 = vld [vmem:[%s0 + $0xe8] sm:$0xff]
    %v218 = vld [vmem:[%s0 + $0xf0] sm:$0xff]
    %v219 = vld [vmem:[%s0 + $0xf8] sm:$0xff]
    %v220 = vld [vmem:[%s3] sm:$0xff]
    %v221 = vld [vmem:[%s3 + $0x8] sm:$0xff]
    %v222 = vld [vmem:[%s3 + $0x10] sm:$0xff]
    %v223 = vld [vmem:[%s3 + $0x18] sm:$0xff]
    %v224 = vld [vmem:[%s3 + $0x20] sm:$0xff]
    %v225 = vld [vmem:[%s3 + $0x28] sm:$0xff]
    %v226 = vld [vmem:[%s3 + $0x30] sm:$0xff]
    %v227 = vld [vmem:[%s3 + $0x38] sm:$0xff]
    %v228 = vld [vmem:[%s3 + $0x40] sm:$0xff]
    %v229 = vld [vmem:[%s3 + $0x48] sm:$0xff]
    %v230 = vld [vmem:[%s3 + $0x50] sm:$0xff]
    %v231 = vld [vmem:[%s3 + $0x58] sm:$0xff]
    %v232 = vld [vmem:[%s3 + $0x60] sm:$0xff]
    %v233 = vld [vmem:[%s3 + $0x68] sm:$0xff]
    %v234 = vld [vmem:[%s3 + $0x70] sm:$0xff]
    %v235 = vld [vmem:[%s3 + $0x78] sm:$0xff]
    %237 = vset.pattern.permute.xlu0 0
    %238 = vperm.xlu0 %237, %v220
    %v239 = vpop.permute.xlu0 %238
    %242 = vset.pattern.permute.xlu0 0
    %243 = vperm.xlu0 %242, %v221
    %v244 = vpop.permute.xlu0 %243
    %247 = vset.pattern.permute.xlu0 0
    %248 = vperm.xlu0 %247, %v222
    %v249 = vpop.permute.xlu0 %248
    %252 = vset.pattern.permute.xlu0 0
    %253 = vperm.xlu0 %252, %v223
    %v254 = vpop.permute.xlu0 %253
    %257 = vset.pattern.permute.xlu0 0
    %258 = vperm.xlu0 %257, %v224
    %v259 = vpop.permute.xlu0 %258
    %262 = vset.pattern.permute.xlu0 0
    %263 = vperm.xlu0 %262, %v225
    %v264 = vpop.permute.xlu0 %263
    %267 = vset.pattern.permute.xlu0 0
    %268 = vperm.xlu0 %267, %v226
    %v269 = vpop.permute.xlu0 %268
    %272 = vset.pattern.permute.xlu0 0
    %273 = vperm.xlu0 %272, %v227
    %v274 = vpop.permute.xlu0 %273
    %277 = vset.pattern.permute.xlu0 0
    %278 = vperm.xlu0 %277, %v228
    %v279 = vpop.permute.xlu0 %278
    %282 = vset.pattern.permute.xlu0 0
    %283 = vperm.xlu0 %282, %v229
    %v284 = vpop.permute.xlu0 %283
    %287 = vset.pattern.permute.xlu0 0
    %288 = vperm.xlu0 %287, %v230
    %v289 = vpop.permute.xlu0 %288
    %292 = vset.pattern.permute.xlu0 0
    %293 = vperm.xlu0 %292, %v231
    %v294 = vpop.permute.xlu0 %293
    %297 = vset.pattern.permute.xlu0 0
    %298 = vperm.xlu0 %297, %v232
    %v299 = vpop.permute.xlu0 %298
    %302 = vset.pattern.permute.xlu0 0
    %303 = vperm.xlu0 %302, %v233
    %v304 = vpop.permute.xlu0 %303
    %307 = vset.pattern.permute.xlu0 0
    %308 = vperm.xlu0 %307, %v234
    %v309 = vpop.permute.xlu0 %308
    %312 = vset.pattern.permute.xlu0 0
    %313 = vperm.xlu0 %312, %v235
    %v314 = vpop.permute.xlu0 %313
    %v316 = vmul.f32 %v188, %v239
    %v317 = vmul.f32 %v189, %v239
    %v318 = vmul.f32 %v190, %v244
    %v319 = vmul.f32 %v191, %v244
    %v320 = vmul.f32 %v192, %v249
    %v321 = vmul.f32 %v193, %v249
    %v322 = vmul.f32 %v194, %v254
    %v323 = vmul.f32 %v195, %v254
    %v324 = vmul.f32 %v196, %v259
    %v325 = vmul.f32 %v197, %v259
    %v326 = vmul.f32 %v198, %v264
    %v327 = vmul.f32 %v199, %v264
    %v328 = vmul.f32 %v200, %v269
    %v329 = vmul.f32 %v201, %v269
    %v330 = vmul.f32 %v202, %v274
    %v331 = vmul.f32 %v203, %v274
    %v332 = vmul.f32 %v204, %v279
    %v333 = vmul.f32 %v205, %v279
    %v334 = vmul.f32 %v206, %v284
    %v335 = vmul.f32 %v207, %v284
    %v336 = vmul.f32 %v208, %v289
    %v337 = vmul.f32 %v209, %v289
    %v338 = vmul.f32 %v210, %v294
    %v339 = vmul.f32 %v211, %v294
    %v340 = vmul.f32 %v212, %v299
    %v341 = vmul.f32 %v213, %v299
    %v342 = vmul.f32 %v214, %v304
    %v343 = vmul.f32 %v215, %v304
    %v344 = vmul.f32 %v216, %v309
    %v345 = vmul.f32 %v217, %v309
    %v346 = vmul.f32 %v218, %v314
    %v347 = vmul.f32 %v219, %v314
    %v348 = vld [vmem:[%s4] sm:$0xff]
    %v349 = vld [vmem:[%s4 + $0x8] sm:$0xff]
    %v350 = vld [vmem:[%s4 + $0x10] sm:$0xff]
    %v351 = vld [vmem:[%s4 + $0x18] sm:$0xff]
    %v352 = vld [vmem:[%s4 + $0x20] sm:$0xff]
    %v353 = vld [vmem:[%s4 + $0x28] sm:$0xff]
    %v354 = vld [vmem:[%s4 + $0x30] sm:$0xff]
    %v355 = vld [vmem:[%s4 + $0x38] sm:$0xff]
    %v356 = vld [vmem:[%s4 + $0x40] sm:$0xff]
    %v357 = vld [vmem:[%s4 + $0x48] sm:$0xff]
    %v358 = vld [vmem:[%s4 + $0x50] sm:$0xff]
    %v359 = vld [vmem:[%s4 + $0x58] sm:$0xff]
    %v360 = vld [vmem:[%s4 + $0x60] sm:$0xff]
    %v361 = vld [vmem:[%s4 + $0x68] sm:$0xff]
    %v362 = vld [vmem:[%s4 + $0x70] sm:$0xff]
    %v363 = vld [vmem:[%s4 + $0x78] sm:$0xff]
    %365 = vset.pattern.permute.xlu0 0
    %366 = vperm.xlu0 %365, %v348
    %v367 = vpop.permute.xlu0 %366
    %370 = vset.pattern.permute.xlu0 0
    %371 = vperm.xlu0 %370, %v349
    %v372 = vpop.permute.xlu0 %371
    %375 = vset.pattern.permute.xlu0 0
    %376 = vperm.xlu0 %375, %v350
    %v377 = vpop.permute.xlu0 %376
    %380 = vset.pattern.permute.xlu0 0
    %381 = vperm.xlu0 %380, %v351
    %v382 = vpop.permute.xlu0 %381
    %385 = vset.pattern.permute.xlu0 0
    %386 = vperm.xlu0 %385, %v352
    %v387 = vpop.permute.xlu0 %386
    %390 = vset.pattern.permute.xlu0 0
    %391 = vperm.xlu0 %390, %v353
    %v392 = vpop.permute.xlu0 %391
    %395 = vset.pattern.permute.xlu0 0
    %396 = vperm.xlu0 %395, %v354
    %v397 = vpop.permute.xlu0 %396
    %400 = vset.pattern.permute.xlu0 0
    %401 = vperm.xlu0 %400, %v355
    %v402 = vpop.permute.xlu0 %401
    %405 = vset.pattern.permute.xlu0 0
    %406 = vperm.xlu0 %405, %v356
    %v407 = vpop.permute.xlu0 %406
    %410 = vset.pattern.permute.xlu0 0
    %411 = vperm.xlu0 %410, %v357
    %v412 = vpop.permute.xlu0 %411
    %415 = vset.pattern.permute.xlu0 0
    %416 = vperm.xlu0 %415, %v358
    %v417 = vpop.permute.xlu0 %416
    %420 = vset.pattern.permute.xlu0 0
    %421 = vperm.xlu0 %420, %v359
    %v422 = vpop.permute.xlu0 %421
    %425 = vset.pattern.permute.xlu0 0
    %426 = vperm.xlu0 %425, %v360
    %v427 = vpop.permute.xlu0 %426
    %430 = vset.pattern.permute.xlu0 0
    %431 = vperm.xlu0 %430, %v361
    %v432 = vpop.permute.xlu0 %431
    %435 = vset.pattern.permute.xlu0 0
    %436 = vperm.xlu0 %435, %v362
    %v437 = vpop.permute.xlu0 %436
    %440 = vset.pattern.permute.xlu0 0
    %441 = vperm.xlu0 %440, %v363
    %v442 = vpop.permute.xlu0 %441
    %v444 = vadd.f32 %v316, %v367
    %v445 = vadd.f32 %v317, %v367
    %v446 = vadd.f32 %v318, %v372
    %v447 = vadd.f32 %v319, %v372
    %v448 = vadd.f32 %v320, %v377
    %v449 = vadd.f32 %v321, %v377
    %v450 = vadd.f32 %v322, %v382
    %v451 = vadd.f32 %v323, %v382
    %v452 = vadd.f32 %v324, %v387
    %v453 = vadd.f32 %v325, %v387
    %v454 = vadd.f32 %v326, %v392
    %v455 = vadd.f32 %v327, %v392
    %v456 = vadd.f32 %v328, %v397
    %v457 = vadd.f32 %v329, %v397
    %v458 = vadd.f32 %v330, %v402
    %v459 = vadd.f32 %v331, %v402
    %v460 = vadd.f32 %v332, %v407
    %v461 = vadd.f32 %v333, %v407
    %v462 = vadd.f32 %v334, %v412
    %v463 = vadd.f32 %v335, %v412
    %v464 = vadd.f32 %v336, %v417
    %v465 = vadd.f32 %v337, %v417
    %v466 = vadd.f32 %v338, %v422
    %v467 = vadd.f32 %v339, %v422
    %v468 = vadd.f32 %v340, %v427
    %v469 = vadd.f32 %v341, %v427
    %v470 = vadd.f32 %v342, %v432
    %v471 = vadd.f32 %v343, %v432
    %v472 = vadd.f32 %v344, %v437
    %v473 = vadd.f32 %v345, %v437
    %v474 = vadd.f32 %v346, %v442
    %v475 = vadd.f32 %v347, %v442
    %v476 = vmax.f32 %v444, 0.0
    %v477 = vmax.f32 %v445, 0.0
    %v478 = vmax.f32 %v446, 0.0
    %v479 = vmax.f32 %v447, 0.0
    %v480 = vmax.f32 %v448, 0.0
    %v481 = vmax.f32 %v449, 0.0
    %v482 = vmax.f32 %v450, 0.0
    %v483 = vmax.f32 %v451, 0.0
    %v484 = vmax.f32 %v452, 0.0
    %v485 = vmax.f32 %v453, 0.0
    %v486 = vmax.f32 %v454, 0.0
    %v487 = vmax.f32 %v455, 0.0
    %v488 = vmax.f32 %v456, 0.0
    %v489 = vmax.f32 %v457, 0.0
    %v490 = vmax.f32 %v458, 0.0
    %v491 = vmax.f32 %v459, 0.0
    %v492 = vmax.f32 %v460, 0.0
    %v493 = vmax.f32 %v461, 0.0
    %v494 = vmax.f32 %v462, 0.0
    %v495 = vmax.f32 %v463, 0.0
    %v496 = vmax.f32 %v464, 0.0
    %v497 = vmax.f32 %v465, 0.0
    %v498 = vmax.f32 %v466, 0.0
    %v499 = vmax.f32 %v467, 0.0
    %v500 = vmax.f32 %v468, 0.0
    %v501 = vmax.f32 %v469, 0.0
    %v502 = vmax.f32 %v470, 0.0
    %v503 = vmax.f32 %v471, 0.0
    %v504 = vmax.f32 %v472, 0.0
    %v505 = vmax.f32 %v473, 0.0
    %v506 = vmax.f32 %v474, 0.0
    %v507 = vmax.f32 %v475, 0.0
    %v508 = vld [vmem:[#allocation6] sm:$0xff]
    %v509 = vld [vmem:[#allocation6 + $0x8] sm:$0xff]
    %v510 = vld [vmem:[#allocation6 + $0x10] sm:$0xff]
    %v511 = vld [vmem:[#allocation6 + $0x18] sm:$0xff]
    %v512 = vld [vmem:[#allocation6 + $0x20] sm:$0xff]
    %v513 = vld [vmem:[#allocation6 + $0x28] sm:$0xff]
    %v514 = vld [vmem:[#allocation6 + $0x30] sm:$0xff]
    %v515 = vld [vmem:[#allocation6 + $0x38] sm:$0xff]
    %516 = vmatprep.subr.mxu0 %v477
    %517 = vmatpush1.msra.mxu0 %v476
    %518 = vmatprep.subr.mxu0 %v479
    %519 = vmatpush1.msra.mxu0 %v478
    %520 = vmatprep.subr.mxu0 %v481
    %521 = vmatpush1.msra.mxu0 %v480
    %522 = vmatprep.subr.mxu0 %v483
    %523 = vmatpush1.msra.mxu0 %v482
    %524 = vmatprep.subr.mxu0 %v485
    %525 = vmatpush1.msra.mxu0 %v484
    %526 = vmatprep.subr.mxu0 %v487
    %527 = vmatpush1.msra.mxu0 %v486
    %528 = vmatprep.subr.mxu0 %v489
    %529 = vmatpush1.msra.mxu0 %v488
    %530 = vmatprep.subr.mxu0 %v491
    %531 = vmatpush1.msra.mxu0 %v490
    %532 = vmatprep.subr.mxu0 %v493
    %533 = vmatpush1.msra.mxu0 %v492
    %534 = vmatprep.subr.mxu0 %v495
    %535 = vmatpush1.msra.mxu0 %v494
    %536 = vmatprep.subr.mxu0 %v497
    %537 = vmatpush1.msra.mxu0 %v496
    %538 = vmatprep.subr.mxu0 %v499
    %539 = vmatpush1.msra.mxu0 %v498
    %540 = vmatprep.subr.mxu0 %v501
    %541 = vmatpush1.msra.mxu0 %v500
    %542 = vmatprep.subr.mxu0 %v503
    %543 = vmatpush1.msra.mxu0 %v502
    %544 = vmatprep.subr.mxu0 %v505
    %545 = vmatpush1.msra.mxu0 %v504
    %546 = vmatprep.subr.mxu0 %v507
    %547 = vmatpush1.msra.mxu0 %v506
    %548 = vmatprep.subr.mxu0 0.0
    %549 = vmatpush1.msra.mxu0 0.0
    %550 = vmatprep.subr.mxu0 0.0
    %551 = vmatpush1.msra.mxu0 0.0
    %552 = vmatprep.subr.mxu0 0.0
    %553 = vmatpush1.msra.mxu0 0.0
    %554 = vmatprep.subr.mxu0 0.0
    %555 = vmatpush1.msra.mxu0 0.0
    %556 = vmatprep.subr.mxu0 0.0
    %557 = vmatpush1.msra.mxu0 0.0
    %558 = vmatprep.subr.mxu0 0.0
    %559 = vmatpush1.msra.mxu0 0.0
    %560 = vmatprep.subr.mxu0 0.0
    %561 = vmatpush1.msra.mxu0 0.0
    %562 = vmatprep.subr.mxu0 0.0
    %563 = vmatpush1.msra.mxu0 0.0
    %564 = vmatprep.subr.mxu0 0.0
    %565 = vmatpush1.msra.mxu0 0.0
    %566 = vmatprep.subr.mxu0 0.0
    %567 = vmatpush1.msra.mxu0 0.0
    %568 = vmatprep.subr.mxu0 0.0
    %569 = vmatpush1.msra.mxu0 0.0
    %570 = vmatprep.subr.mxu0 0.0
    %571 = vmatpush1.msra.mxu0 0.0
    %572 = vmatprep.subr.mxu0 0.0
    %573 = vmatpush1.msra.mxu0 0.0
    %574 = vmatprep.subr.mxu0 0.0
    %575 = vmatpush1.msra.mxu0 0.0
    %576 = vmatprep.subr.mxu0 0.0
    %577 = vmatpush1.msra.mxu0 0.0
    %578 = vmatprep.subr.mxu0 0.0
    %579 = vmatpush1.msra.mxu0 0.0
    %580 = vmatprep.mubr.f32.mxu0 0.0
    %581 = vmatmul.mubr.f32.gmra.mrb[0].mxu0 %v508
    %v582 = vpop.f32.mrb[0].mxu0
    %v583 = vadd.f32 0.0, %v582
    %v584 = vpop.f32.mrb[0].mxu0
    %v585 = vadd.f32 0.0, %v584
    %586 = vmatprep.mubr.f32.mxu0 0.0
    %587 = vmatmul.mubr.f32.gmra.mrb[0].mxu0 %v509
    %v588 = vpop.f32.mrb[0].mxu0
    %v589 = vadd.f32 0.0, %v588
    %v590 = vpop.f32.mrb[0].mxu0
    %v591 = vadd.f32 0.0, %v590
    %592 = vmatprep.mubr.f32.mxu0 0.0
    %593 = vmatmul.mubr.f32.gmra.mrb[0].mxu0 %v510
    %v594 = vpop.f32.mrb[0].mxu0
    %v595 = vadd.f32 0.0, %v594
    %v596 = vpop.f32.mrb[0].mxu0
    %v597 = vadd.f32 0.0, %v596
    %598 = vmatprep.mubr.f32.mxu0 0.0
    %599 = vmatmul.mubr.f32.gmra.mrb[0].mxu0 %v511
    %v600 = vpop.f32.mrb[0].mxu0
    %v601 = vadd.f32 0.0, %v600
    %v602 = vpop.f32.mrb[0].mxu0
    %v603 = vadd.f32 0.0, %v602
    %604 = vmatprep.mubr.f32.mxu0 0.0
    %605 = vmatmul.mubr.f32.gmra.mrb[0].mxu0 %v512
    %v606 = vpop.f32.mrb[0].mxu0
    %v607 = vadd.f32 0.0, %v606
    %v608 = vpop.f32.mrb[0].mxu0
    %v609 = vadd.f32 0.0, %v608
    %610 = vmatprep.mubr.f32.mxu0 0.0
    %611 = vmatmul.mubr.f32.gmra.mrb[0].mxu0 %v513
    %v612 = vpop.f32.mrb[0].mxu0
    %v613 = vadd.f32 0.0, %v612
    %v614 = vpop.f32.mrb[0].mxu0
    %v615 = vadd.f32 0.0, %v614
    %616 = vmatprep.mubr.f32.mxu0 0.0
    %617 = vmatmul.mubr.f32.gmra.mrb[0].mxu0 %v514
    %v618 = vpop.f32.mrb[0].mxu0
    %v619 = vadd.f32 0.0, %v618
    %v620 = vpop.f32.mrb[0].mxu0
    %v621 = vadd.f32 0.0, %v620
    %622 = vmatprep.mubr.f32.mxu0 0.0
    %623 = vmatmul.mubr.f32.gmra.mrb[0].mxu0 %v515
    %v624 = vpop.f32.mrb[0].mxu0
    %v625 = vadd.f32 0.0, %v624
    %v626 = vpop.f32.mrb[0].mxu0
    %v627 = vadd.f32 0.0, %v626
    %628 = vdwg.mxu0
    %v629 = vld [vmem:[%s6] sm:$0xff]
    %v630 = vld [vmem:[%s6 + $0x8] sm:$0xff]
    %v631 = vld [vmem:[%s6 + $0x10] sm:$0xff]
    %v632 = vld [vmem:[%s6 + $0x18] sm:$0xff]
    %v633 = vld [vmem:[%s6 + $0x20] sm:$0xff]
    %v634 = vld [vmem:[%s6 + $0x28] sm:$0xff]
    %v635 = vld [vmem:[%s6 + $0x30] sm:$0xff]
    %v636 = vld [vmem:[%s6 + $0x38] sm:$0xff]
    %638 = vset.pattern.permute.xlu0 0
    %639 = vperm.xlu0 %638, %v629
    %v640 = vpop.permute.xlu0 %639
    %643 = vset.pattern.permute.xlu0 0
    %644 = vperm.xlu0 %643, %v630
    %v645 = vpop.permute.xlu0 %644
    %648 = vset.pattern.permute.xlu0 0
    %649 = vperm.xlu0 %648, %v631
    %v650 = vpop.permute.xlu0 %649
    %653 = vset.pattern.permute.xlu0 0
    %654 = vperm.xlu0 %653, %v632
    %v655 = vpop.permute.xlu0 %654
    %658 = vset.pattern.permute.xlu0 0
    %659 = vperm.xlu0 %658, %v633
    %v660 = vpop.permute.xlu0 %659
    %663 = vset.pattern.permute.xlu0 0
    %664 = vperm.xlu0 %663, %v634
    %v665 = vpop.permute.xlu0 %664
    %668 = vset.pattern.permute.xlu0 0
    %669 = vperm.xlu0 %668, %v635
    %v670 = vpop.permute.xlu0 %669
    %673 = vset.pattern.permute.xlu0 0
    %674 = vperm.xlu0 %673, %v636
    %v675 = vpop.permute.xlu0 %674
    %v677 = vmul.f32 %v583, %v640
    %v678 = vmul.f32 %v585, %v640
    %v679 = vmul.f32 %v589, %v645
    %v680 = vmul.f32 %v591, %v645
    %v681 = vmul.f32 %v595, %v650
    %v682 = vmul.f32 %v597, %v650
    %v683 = vmul.f32 %v601, %v655
    %v684 = vmul.f32 %v603, %v655
    %v685 = vmul.f32 %v607, %v660
    %v686 = vmul.f32 %v609, %v660
    %v687 = vmul.f32 %v613, %v665
    %v688 = vmul.f32 %v615, %v665
    %v689 = vmul.f32 %v619, %v670
    %v690 = vmul.f32 %v621, %v670
    %v691 = vmul.f32 %v625, %v675
    %v692 = vmul.f32 %v627, %v675
    %v693 = vld [vmem:[%s7] sm:$0xff]
    %v694 = vld [vmem:[%s7 + $0x8] sm:$0xff]
    %v695 = vld [vmem:[%s7 + $0x10] sm:$0xff]
    %v696 = vld [vmem:[%s7 + $0x18] sm:$0xff]
    %v697 = vld [vmem:[%s7 + $0x20] sm:$0xff]
    %v698 = vld [vmem:[%s7 + $0x28] sm:$0xff]
    %v699 = vld [vmem:[%s7 + $0x30] sm:$0xff]
    %v700 = vld [vmem:[%s7 + $0x38] sm:$0xff]
    %702 = vset.pattern.permute.xlu0 0
    %703 = vperm.xlu0 %702, %v693
    %v704 = vpop.permute.xlu0 %703
    %707 = vset.pattern.permute.xlu0 0
    %708 = vperm.xlu0 %707, %v694
    %v709 = vpop.permute.xlu0 %708
    %712 = vset.pattern.permute.xlu0 0
    %713 = vperm.xlu0 %712, %v695
    %v714 = vpop.permute.xlu0 %713
    %717 = vset.pattern.permute.xlu0 0
    %718 = vperm.xlu0 %717, %v696
    %v719 = vpop.permute.xlu0 %718
    %722 = vset.pattern.permute.xlu0 0
    %723 = vperm.xlu0 %722, %v697
    %v724 = vpop.permute.xlu0 %723
    %727 = vset.pattern.permute.xlu0 0
    %728 = vperm.xlu0 %727, %v698
    %v729 = vpop.permute.xlu0 %728
    %732 = vset.pattern.permute.xlu0 0
    %733 = vperm.xlu0 %732, %v699
    %v734 = vpop.permute.xlu0 %733
    %737 = vset.pattern.permute.xlu0 0
    %738 = vperm.xlu0 %737, %v700
    %v739 = vpop.permute.xlu0 %738
    %v741 = vadd.f32 %v677, %v704
    %v742 = vadd.f32 %v678, %v704
    %v743 = vadd.f32 %v679, %v709
    %v744 = vadd.f32 %v680, %v709
    %v745 = vadd.f32 %v681, %v714
    %v746 = vadd.f32 %v682, %v714
    %v747 = vadd.f32 %v683, %v719
    %v748 = vadd.f32 %v684, %v719
    %v749 = vadd.f32 %v685, %v724
    %v750 = vadd.f32 %v686, %v724
    %v751 = vadd.f32 %v687, %v729
    %v752 = vadd.f32 %v688, %v729
    %v753 = vadd.f32 %v689, %v734
    %v754 = vadd.f32 %v690, %v734
    %v755 = vadd.f32 %v691, %v739
    %v756 = vadd.f32 %v692, %v739
    %v757 = vmax.f32 %v741, 0.0
    %v758 = vmax.f32 %v742, 0.0
    %v759 = vmax.f32 %v743, 0.0
    %v760 = vmax.f32 %v744, 0.0
    %v761 = vmax.f32 %v745, 0.0
    %v762 = vmax.f32 %v746, 0.0
    %v763 = vmax.f32 %v747, 0.0
    %v764 = vmax.f32 %v748, 0.0
    %v765 = vmax.f32 %v749, 0.0
    %v766 = vmax.f32 %v750, 0.0
    %v767 = vmax.f32 %v751, 0.0
    %v768 = vmax.f32 %v752, 0.0
    %v769 = vmax.f32 %v753, 0.0
    %v770 = vmax.f32 %v754, 0.0
    %v771 = vmax.f32 %v755, 0.0
    %v772 = vmax.f32 %v756, 0.0
    %v773 = vlaneseq
    %v774 = vshrl.u32 %v773, 7
    %v775 = vadd.s32 %v774, 8
    %v776 = vadd.s32 %v774, 16
    %v777 = vadd.s32 %v774, 24
    %v778 = vadd.s32 %v774, 32
    %v779 = vadd.s32 %v774, 40
    %v780 = vadd.s32 %v774, 48
    %v781 = vadd.s32 %v774, 56
    %v782 = vadd.s32 %v774, 64
    %v783 = vadd.s32 %v774, 72
    %v784 = vadd.s32 %v774, 80
    %v785 = vadd.s32 %v774, 88
    %v786 = vadd.s32 %v774, 96
    %v787 = vadd.s32 %v774, 104
    %v788 = vadd.s32 %v774, 112
    %v789 = vadd.s32 %v774, 120
    %v790 = vadd.s32 %v774, 128
    %v791 = vadd.s32 %v774, 136
    %v792 = vadd.s32 %v774, 144
    %v793 = vadd.s32 %v774, 152
    %v794 = vadd.s32 %v774, 160
    %v795 = vadd.s32 %v774, 168
    %v796 = vadd.s32 %v774, 176
    %v797 = vadd.s32 %v774, 184
    %v798 = vadd.s32 %v774, 192
    %v799 = vlaneseq
    %v800 = vand.u32 %v799, 127
    %v801 = vadd.s32 %v800, 128
    %v802 = vadd.s32 %v800, 4294967281
    %v803 = vadd.s32 %v801, 4294967281
    %vm804 = vcmp.eq.s32.totalorder %v774, %v802
    %vm805 = vcmp.eq.s32.totalorder %v774, %v803
    %vm806 = vcmp.eq.s32.totalorder %v775, %v802
    %vm807 = vcmp.eq.s32.totalorder %v775, %v803
    %vm808 = vcmp.eq.s32.totalorder %v776, %v802
    %vm809 = vcmp.eq.s32.totalorder %v776, %v803
    %vm810 = vcmp.eq.s32.totalorder %v777, %v802
    %vm811 = vcmp.eq.s32.totalorder %v777, %v803
    %vm812 = vcmp.eq.s32.totalorder %v778, %v802
    %vm813 = vcmp.eq.s32.totalorder %v778, %v803
    %vm814 = vcmp.eq.s32.totalorder %v779, %v802
    %vm815 = vcmp.eq.s32.totalorder %v779, %v803
    %vm816 = vcmp.eq.s32.totalorder %v780, %v802
    %vm817 = vcmp.eq.s32.totalorder %v780, %v803
    %vm818 = vcmp.eq.s32.totalorder %v781, %v802
    %vm819 = vcmp.eq.s32.totalorder %v781, %v803
    %vm820 = vcmp.eq.s32.totalorder %v782, %v802
    %vm821 = vcmp.eq.s32.totalorder %v782, %v803
    %vm822 = vcmp.eq.s32.totalorder %v783, %v802
    %vm823 = vcmp.eq.s32.totalorder %v783, %v803
    %vm824 = vcmp.eq.s32.totalorder %v784, %v802
    %vm825 = vcmp.eq.s32.totalorder %v784, %v803
    %vm826 = vcmp.eq.s32.totalorder %v785, %v802
    %vm827 = vcmp.eq.s32.totalorder %v785, %v803
    %vm828 = vcmp.eq.s32.totalorder %v786, %v802
    %vm829 = vcmp.eq.s32.totalorder %v786, %v803
    %vm830 = vcmp.eq.s32.totalorder %v787, %v802
    %vm831 = vcmp.eq.s32.totalorder %v787, %v803
    %vm832 = vcmp.eq.s32.totalorder %v788, %v802
    %vm833 = vcmp.eq.s32.totalorder %v788, %v803
    %vm834 = vcmp.eq.s32.totalorder %v789, %v802
    %vm835 = vcmp.eq.s32.totalorder %v789, %v803
    %vm836 = vcmp.eq.s32.totalorder %v790, %v802
    %vm837 = vcmp.eq.s32.totalorder %v790, %v803
    %vm838 = vcmp.eq.s32.totalorder %v791, %v802
    %vm839 = vcmp.eq.s32.totalorder %v791, %v803
    %vm840 = vcmp.eq.s32.totalorder %v792, %v802
    %vm841 = vcmp.eq.s32.totalorder %v792, %v803
    %vm842 = vcmp.eq.s32.totalorder %v793, %v802
    %vm843 = vcmp.eq.s32.totalorder %v793, %v803
    %vm844 = vcmp.eq.s32.totalorder %v794, %v802
    %vm845 = vcmp.eq.s32.totalorder %v794, %v803
    %vm846 = vcmp.eq.s32.totalorder %v795, %v802
    %vm847 = vcmp.eq.s32.totalorder %v795, %v803
    %vm848 = vcmp.eq.s32.totalorder %v796, %v802
    %vm849 = vcmp.eq.s32.totalorder %v796, %v803
    %vm850 = vcmp.eq.s32.totalorder %v797, %v802
    %vm851 = vcmp.eq.s32.totalorder %v797, %v803
    %vm852 = vcmp.eq.s32.totalorder %v798, %v802
    %vm853 = vcmp.eq.s32.totalorder %v798, %v803
    %v854 = vsel %vm804, 1.0, 0.0
    %v855 = vsel %vm805, 1.0, 0.0
    %v856 = vsel %vm806, 1.0, 0.0
    %v857 = vsel %vm807, 1.0, 0.0
    %v858 = vsel %vm808, 1.0, 0.0
    %v859 = vsel %vm809, 1.0, 0.0
    %v860 = vsel %vm810, 1.0, 0.0
    %v861 = vsel %vm811, 1.0, 0.0
    %v862 = vsel %vm812, 1.0, 0.0
    %v863 = vsel %vm813, 1.0, 0.0
    %v864 = vsel %vm814, 1.0, 0.0
    %v865 = vsel %vm815, 1.0, 0.0
    %v866 = vsel %vm816, 1.0, 0.0
    %v867 = vsel %vm817, 1.0, 0.0
    %v868 = vsel %vm818, 1.0, 0.0
    %v869 = vsel %vm819, 1.0, 0.0
    %v870 = vsel %vm820, 1.0, 0.0
    %v871 = vsel %vm821, 1.0, 0.0
    %v872 = vsel %vm822, 1.0, 0.0
    %v873 = vsel %vm823, 1.0, 0.0
    %v874 = vsel %vm824, 1.0, 0.0
    %v875 = vsel %vm825, 1.0, 0.0
    %v876 = vsel %vm826, 1.0, 0.0
    %v877 = vsel %vm827, 1.0, 0.0
    %v878 = vsel %vm828, 1.0, 0.0
    %v879 = vsel %vm829, 1.0, 0.0
    %v880 = vsel %vm830, 1.0, 0.0
    %v881 = vsel %vm831, 1.0, 0.0
    %v882 = vsel %vm832, 1.0, 0.0
    %v883 = vsel %vm833, 1.0, 0.0
    %v884 = vsel %vm834, 1.0, 0.0
    %v885 = vsel %vm835, 1.0, 0.0
    %v886 = vsel %vm836, 1.0, 0.0
    %v887 = vsel %vm837, 1.0, 0.0
    %v888 = vsel %vm838, 1.0, 0.0
    %v889 = vsel %vm839, 1.0, 0.0
    %v890 = vsel %vm840, 1.0, 0.0
    %v891 = vsel %vm841, 1.0, 0.0
    %v892 = vsel %vm842, 1.0, 0.0
    %v893 = vsel %vm843, 1.0, 0.0
    %v894 = vsel %vm844, 1.0, 0.0
    %v895 = vsel %vm845, 1.0, 0.0
    %v896 = vsel %vm846, 1.0, 0.0
    %v897 = vsel %vm847, 1.0, 0.0
    %v898 = vsel %vm848, 1.0, 0.0
    %v899 = vsel %vm849, 1.0, 0.0
    %v900 = vsel %vm850, 1.0, 0.0
    %v901 = vsel %vm851, 1.0, 0.0
    %v902 = vsel %vm852, 1.0, 0.0
    %v903 = vsel %vm853, 1.0, 0.0
    %v904 = vld [vmem:[#allocation2] sm:$0x3]
    %v906 = vlaneseq
    %v907 = vshrl.u32 %v906, 7
    %v908 = vsub.s32 0, %v907
    %v909 = vrot.slane %v904, %v908
    %v910 = vlaneseq
    %v911 = vshrl.u32 %v910, 7
    %v912 = vsub.s32 1, %v911
    %v913 = vrot.slane %v904, %v912
    %v916 = vmul.f32 %v854, %v909
    %v917 = vmul.f32 %v855, %v913
    %v918 = vmul.f32 %v856, %v909
    %v919 = vmul.f32 %v857, %v913
    %v920 = vmul.f32 %v858, %v909
    %v921 = vmul.f32 %v859, %v913
    %v922 = vmul.f32 %v860, %v909
    %v923 = vmul.f32 %v861, %v913
    %v924 = vmul.f32 %v862, %v909
    %v925 = vmul.f32 %v863, %v913
    %v926 = vmul.f32 %v864, %v909
    %v927 = vmul.f32 %v865, %v913
    %v928 = vmul.f32 %v866, %v909
    %v929 = vmul.f32 %v867, %v913
    %v930 = vmul.f32 %v868, %v909
    %v931 = vmul.f32 %v869, %v913
    %v932 = vmul.f32 %v870, %v909
    %v933 = vmul.f32 %v871, %v913
    %v934 = vmul.f32 %v872, %v909
    %v935 = vmul.f32 %v873, %v913
    %v936 = vmul.f32 %v874, %v909
    %v937 = vmul.f32 %v875, %v913
    %v938 = vmul.f32 %v876, %v909
    %v939 = vmul.f32 %v877, %v913
    %v940 = vmul.f32 %v878, %v909
    %v941 = vmul.f32 %v879, %v913
    %v942 = vmul.f32 %v880, %v909
    %v943 = vmul.f32 %v881, %v913
    %v944 = vmul.f32 %v882, %v909
    %v945 = vmul.f32 %v883, %v913
    %v946 = vmul.f32 %v884, %v909
    %v947 = vmul.f32 %v885, %v913
    %v948 = vmul.f32 %v886, %v909
    %v949 = vmul.f32 %v887, %v913
    %v950 = vmul.f32 %v888, %v909
    %v951 = vmul.f32 %v889, %v913
    %v952 = vmul.f32 %v890, %v909
    %v953 = vmul.f32 %v891, %v913
    %v954 = vmul.f32 %v892, %v909
    %v955 = vmul.f32 %v893, %v913
    %v956 = vmul.f32 %v894, %v909
    %v957 = vmul.f32 %v895, %v913
    %v958 = vmul.f32 %v896, %v909
    %v959 = vmul.f32 %v897, %v913
    %v960 = vmul.f32 %v898, %v909
    %v961 = vmul.f32 %v899, %v913
    %v962 = vmul.f32 %v900, %v909
    %v963 = vmul.f32 %v901, %v913
    %v964 = vmul.f32 %v902, %v909
    %v965 = vmul.f32 %v903, %v913
    %v966 = vld [vmem:[#allocation7] sm:$0xff]
    %v967 = vld [vmem:[#allocation7 + $0x8] sm:$0xff]
    %v968 = vld [vmem:[#allocation7 + $0x10] sm:$0xff]
    %v969 = vld [vmem:[#allocation7 + $0x18] sm:$0xff]
    %v970 = vld [vmem:[#allocation7 + $0x20] sm:$0xff]
    %v971 = vld [vmem:[#allocation7 + $0x28] sm:$0xff]
    %v972 = vld [vmem:[#allocation7 + $0x30] sm:$0xff]
    %v973 = vld [vmem:[#allocation7 + $0x38] sm:$0xff]
    %vm974 = vcmask 523264
    %v976 = vsel %vm974, %v966, 0
    %v979 = vsel %vm974, %v967, 0
    %v982 = vsel %vm974, %v968, 0
    %v985 = vsel %vm974, %v969, 0
    %v988 = vsel %vm974, %v970, 0
    %v991 = vsel %vm974, %v971, 0
    %v994 = vsel %vm974, %v972, 0
    %v997 = vsel %vm974, %v973, 0
    %999 = vmatprep.subr.mxu0 %v758
    %1000 = vmatpush1.msra.mxu0 %v757
    %1001 = vmatprep.subr.mxu0 %v760
    %1002 = vmatpush1.msra.mxu0 %v759
    %1003 = vmatprep.subr.mxu0 %v762
    %1004 = vmatpush1.msra.mxu0 %v761
    %1005 = vmatprep.subr.mxu0 %v764
    %1006 = vmatpush1.msra.mxu0 %v763
    %1007 = vmatprep.subr.mxu0 %v766
    %1008 = vmatpush1.msra.mxu0 %v765
    %1009 = vmatprep.subr.mxu0 %v768
    %1010 = vmatpush1.msra.mxu0 %v767
    %1011 = vmatprep.subr.mxu0 %v770
    %1012 = vmatpush1.msra.mxu0 %v769
    %1013 = vmatprep.subr.mxu0 %v772
    %1014 = vmatpush1.msra.mxu0 %v771
    %1015 = vmatprep.subr.mxu0 0.0
    %1016 = vmatpush1.msra.mxu0 0.0
    %1017 = vmatprep.subr.mxu0 0.0
    %1018 = vmatpush1.msra.mxu0 0.0
    %1019 = vmatprep.subr.mxu0 0.0
    %1020 = vmatpush1.msra.mxu0 0.0
    %1021 = vmatprep.subr.mxu0 0.0
    %1022 = vmatpush1.msra.mxu0 0.0
    %1023 = vmatprep.subr.mxu0 0.0
    %1024 = vmatpush1.msra.mxu0 0.0
    %1025 = vmatprep.subr.mxu0 0.0
    %1026 = vmatpush1.msra.mxu0 0.0
    %1027 = vmatprep.subr.mxu0 0.0
    %1028 = vmatpush1.msra.mxu0 0.0
    %1029 = vmatprep.subr.mxu0 0.0
    %1030 = vmatpush1.msra.mxu0 0.0
    %1031 = vmatprep.subr.mxu0 0.0
    %1032 = vmatpush1.msra.mxu0 0.0
    %1033 = vmatprep.subr.mxu0 0.0
    %1034 = vmatpush1.msra.mxu0 0.0
    %1035 = vmatprep.subr.mxu0 0.0
    %1036 = vmatpush1.msra.mxu0 0.0
    %1037 = vmatprep.subr.mxu0 0.0
    %1038 = vmatpush1.msra.mxu0 0.0
    %1039 = vmatprep.subr.mxu0 0.0
    %1040 = vmatpush1.msra.mxu0 0.0
    %1041 = vmatprep.subr.mxu0 0.0
    %1042 = vmatpush1.msra.mxu0 0.0
    %1043 = vmatprep.subr.mxu0 0.0
    %1044 = vmatpush1.msra.mxu0 0.0
    %1045 = vmatprep.subr.mxu0 0.0
    %1046 = vmatpush1.msra.mxu0 0.0
    %1047 = vmatprep.subr.mxu0 0.0
    %1048 = vmatpush1.msra.mxu0 0.0
    %1049 = vmatprep.subr.mxu0 0.0
    %1050 = vmatpush1.msra.mxu0 0.0
    %1051 = vmatprep.subr.mxu0 0.0
    %1052 = vmatpush1.msra.mxu0 0.0
    %1053 = vmatprep.subr.mxu0 0.0
    %1054 = vmatpush1.msra.mxu0 0.0
    %1055 = vmatprep.subr.mxu0 0.0
    %1056 = vmatpush1.msra.mxu0 0.0
    %1057 = vmatprep.subr.mxu0 0.0
    %1058 = vmatpush1.msra.mxu0 0.0
    %1059 = vmatprep.subr.mxu0 0.0
    %1060 = vmatpush1.msra.mxu0 0.0
    %1061 = vmatprep.subr.mxu0 0.0
    %1062 = vmatpush1.msra.mxu0 0.0
    %1063 = vmatprep.mubr.f32.mxu0 0.0
    %1064 = vmatmul.mubr.f32.gmra.mrb[0].mxu0 %v976
    %v1065 = vpop.f32.mrb[0].mxu0
    %v1066 = vadd.f32 0.0, %v1065
    %v1067 = vpop.f32.mrb[0].mxu0
    %v1068 = vadd.f32 0.0, %v1067
    %1069 = vmatprep.mubr.f32.mxu0 0.0
    %1070 = vmatmul.mubr.f32.gmra.mrb[0].mxu0 %v979
    %v1071 = vpop.f32.mrb[0].mxu0
    %v1072 = vadd.f32 0.0, %v1071
    %v1073 = vpop.f32.mrb[0].mxu0
    %v1074 = vadd.f32 0.0, %v1073
    %1075 = vmatprep.mubr.f32.mxu0 0.0
    %1076 = vmatmul.mubr.f32.gmra.mrb[0].mxu0 %v982
    %v1077 = vpop.f32.mrb[0].mxu0
    %v1078 = vadd.f32 0.0, %v1077
    %v1079 = vpop.f32.mrb[0].mxu0
    %v1080 = vadd.f32 0.0, %v1079
    %1081 = vmatprep.mubr.f32.mxu0 0.0
    %1082 = vmatmul.mubr.f32.gmra.mrb[0].mxu0 %v985
    %v1083 = vpop.f32.mrb[0].mxu0
    %v1084 = vadd.f32 0.0, %v1083
    %v1085 = vpop.f32.mrb[0].mxu0
    %v1086 = vadd.f32 0.0, %v1085
    %1087 = vmatprep.mubr.f32.mxu0 0.0
    %1088 = vmatmul.mubr.f32.gmra.mrb[0].mxu0 %v988
    %v1089 = vpop.f32.mrb[0].mxu0
    %v1090 = vadd.f32 0.0, %v1089
    %v1091 = vpop.f32.mrb[0].mxu0
    %v1092 = vadd.f32 0.0, %v1091
    %1093 = vmatprep.mubr.f32.mxu0 0.0
    %1094 = vmatmul.mubr.f32.gmra.mrb[0].mxu0 %v991
    %v1095 = vpop.f32.mrb[0].mxu0
    %v1096 = vadd.f32 0.0, %v1095
    %v1097 = vpop.f32.mrb[0].mxu0
    %v1098 = vadd.f32 0.0, %v1097
    %1099 = vmatprep.mubr.f32.mxu0 0.0
    %1100 = vmatmul.mubr.f32.gmra.mrb[0].mxu0 %v994
    %v1101 = vpop.f32.mrb[0].mxu0
    %v1102 = vadd.f32 0.0, %v1101
    %v1103 = vpop.f32.mrb[0].mxu0
    %v1104 = vadd.f32 0.0, %v1103
    %1105 = vmatprep.mubr.f32.mxu0 0.0
    %1106 = vmatmul.mubr.f32.gmra.mrb[0].mxu0 %v997
    %v1107 = vpop.f32.mrb[0].mxu0
    %v1108 = vadd.f32 0.0, %v1107
    %v1109 = vpop.f32.mrb[0].mxu0
    %v1110 = vadd.f32 0.0, %v1109
    %1111 = vdwg.mxu0
    %v1112 = vadd.s32 %v800, 4294967282
    %v1113 = vadd.s32 %v801, 4294967282
    %vm1114 = vcmp.eq.s32.totalorder %v774, %v1112
    %vm1115 = vcmp.eq.s32.totalorder %v774, %v1113
    %vm1116 = vcmp.eq.s32.totalorder %v775, %v1112
    %vm1117 = vcmp.eq.s32.totalorder %v775, %v1113
    %vm1118 = vcmp.eq.s32.totalorder %v776, %v1112
    %vm1119 = vcmp.eq.s32.totalorder %v776, %v1113
    %vm1120 = vcmp.eq.s32.totalorder %v777, %v1112
    %vm1121 = vcmp.eq.s32.totalorder %v777, %v1113
    %vm1122 = vcmp.eq.s32.totalorder %v778, %v1112
    %vm1123 = vcmp.eq.s32.totalorder %v778, %v1113
    %vm1124 = vcmp.eq.s32.totalorder %v779, %v1112
    %vm1125 = vcmp.eq.s32.totalorder %v779, %v1113
    %vm1126 = vcmp.eq.s32.totalorder %v780, %v1112
    %vm1127 = vcmp.eq.s32.totalorder %v780, %v1113
    %vm1128 = vcmp.eq.s32.totalorder %v781, %v1112
    %vm1129 = vcmp.eq.s32.totalorder %v781, %v1113
    %vm1130 = vcmp.eq.s32.totalorder %v782, %v1112
    %vm1131 = vcmp.eq.s32.totalorder %v782, %v1113
    %vm1132 = vcmp.eq.s32.totalorder %v783, %v1112
    %vm1133 = vcmp.eq.s32.totalorder %v783, %v1113
    %vm1134 = vcmp.eq.s32.totalorder %v784, %v1112
    %vm1135 = vcmp.eq.s32.totalorder %v784, %v1113
    %vm1136 = vcmp.eq.s32.totalorder %v785, %v1112
    %vm1137 = vcmp.eq.s32.totalorder %v785, %v1113
    %vm1138 = vcmp.eq.s32.totalorder %v786, %v1112
    %vm1139 = vcmp.eq.s32.totalorder %v786, %v1113
    %vm1140 = vcmp.eq.s32.totalorder %v787, %v1112
    %vm1141 = vcmp.eq.s32.totalorder %v787, %v1113
    %vm1142 = vcmp.eq.s32.totalorder %v788, %v1112
    %vm1143 = vcmp.eq.s32.totalorder %v788, %v1113
    %vm1144 = vcmp.eq.s32.totalorder %v789, %v1112
    %vm1145 = vcmp.eq.s32.totalorder %v789, %v1113
    %vm1146 = vcmp.eq.s32.totalorder %v790, %v1112
    %vm1147 = vcmp.eq.s32.totalorder %v790, %v1113
    %vm1148 = vcmp.eq.s32.totalorder %v791, %v1112
    %vm1149 = vcmp.eq.s32.totalorder %v791, %v1113
    %vm1150 = vcmp.eq.s32.totalorder %v792, %v1112
    %vm1151 = vcmp.eq.s32.totalorder %v792, %v1113
    %vm1152 = vcmp.eq.s32.totalorder %v793, %v1112
    %vm1153 = vcmp.eq.s32.totalorder %v793, %v1113
    %vm1154 = vcmp.eq.s32.totalorder %v794, %v1112
    %vm1155 = vcmp.eq.s32.totalorder %v794, %v1113
    %vm1156 = vcmp.eq.s32.totalorder %v795, %v1112
    %vm1157 = vcmp.eq.s32.totalorder %v795, %v1113
    %vm1158 = vcmp.eq.s32.totalorder %v796, %v1112
    %vm1159 = vcmp.eq.s32.totalorder %v796, %v1113
    %vm1160 = vcmp.eq.s32.totalorder %v797, %v1112
    %vm1161 = vcmp.eq.s32.totalorder %v797, %v1113
    %vm1162 = vcmp.eq.s32.totalorder %v798, %v1112
    %vm1163 = vcmp.eq.s32.totalorder %v798, %v1113
    %v1164 = vsel %vm1114, 1.0, 0.0
    %v1165 = vsel %vm1115, 1.0, 0.0
    %v1166 = vsel %vm1116, 1.0, 0.0
    %v1167 = vsel %vm1117, 1.0, 0.0
    %v1168 = vsel %vm1118, 1.0, 0.0
    %v1169 = vsel %vm1119, 1.0, 0.0
    %v1170 = vsel %vm1120, 1.0, 0.0
    %v1171 = vsel %vm1121, 1.0, 0.0
    %v1172 = vsel %vm1122, 1.0, 0.0
    %v1173 = vsel %vm1123, 1.0, 0.0
    %v1174 = vsel %vm1124, 1.0, 0.0
    %v1175 = vsel %vm1125, 1.0, 0.0
    %v1176 = vsel %vm1126, 1.0, 0.0
    %v1177 = vsel %vm1127, 1.0, 0.0
    %v1178 = vsel %vm1128, 1.0, 0.0
    %v1179 = vsel %vm1129, 1.0, 0.0
    %v1180 = vsel %vm1130, 1.0, 0.0
    %v1181 = vsel %vm1131, 1.0, 0.0
    %v1182 = vsel %vm1132, 1.0, 0.0
    %v1183 = vsel %vm1133, 1.0, 0.0
    %v1184 = vsel %vm1134, 1.0, 0.0
    %v1185 = vsel %vm1135, 1.0, 0.0
    %v1186 = vsel %vm1136, 1.0, 0.0
    %v1187 = vsel %vm1137, 1.0, 0.0
    %v1188 = vsel %vm1138, 1.0, 0.0
    %v1189 = vsel %vm1139, 1.0, 0.0
    %v1190 = vsel %vm1140, 1.0, 0.0
    %v1191 = vsel %vm1141, 1.0, 0.0
    %v1192 = vsel %vm1142, 1.0, 0.0
    %v1193 = vsel %vm1143, 1.0, 0.0
    %v1194 = vsel %vm1144, 1.0, 0.0
    %v1195 = vsel %vm1145, 1.0, 0.0
    %v1196 = vsel %vm1146, 1.0, 0.0
    %v1197 = vsel %vm1147, 1.0, 0.0
    %v1198 = vsel %vm1148, 1.0, 0.0
    %v1199 = vsel %vm1149, 1.0, 0.0
    %v1200 = vsel %vm1150, 1.0, 0.0
    %v1201 = vsel %vm1151, 1.0, 0.0
    %v1202 = vsel %vm1152, 1.0, 0.0
    %v1203 = vsel %vm1153, 1.0, 0.0
    %v1204 = vsel %vm1154, 1.0, 0.0
    %v1205 = vsel %vm1155, 1.0, 0.0
    %v1206 = vsel %vm1156, 1.0, 0.0
    %v1207 = vsel %vm1157, 1.0, 0.0
    %v1208 = vsel %vm1158, 1.0, 0.0
    %v1209 = vsel %vm1159, 1.0, 0.0
    %v1210 = vsel %vm1160, 1.0, 0.0
    %v1211 = vsel %vm1161, 1.0, 0.0
    %v1212 = vsel %vm1162, 1.0, 0.0
    %v1213 = vsel %vm1163, 1.0, 0.0
    %s1214 = scalar_lea.vmem [#allocation2], 2
    %v1215 = vld [vmem:[%s1214] sm:$0x3]
    %v1217 = vlaneseq
    %v1218 = vshrl.u32 %v1217, 7
    %v1219 = vsub.s32 0, %v1218
    %v1220 = vrot.slane %v1215, %v1219
    %v1221 = vlaneseq
    %v1222 = vshrl.u32 %v1221, 7
    %v1223 = vsub.s32 1, %v1222
    %v1224 = vrot.slane %v1215, %v1223
    %v1227 = vmul.f32 %v1164, %v1220
    %v1228 = vmul.f32 %v1165, %v1224
    %v1229 = vmul.f32 %v1166, %v1220
    %v1230 = vmul.f32 %v1167, %v1224
    %v1231 = vmul.f32 %v1168, %v1220
    %v1232 = vmul.f32 %v1169, %v1224
    %v1233 = vmul.f32 %v1170, %v1220
    %v1234 = vmul.f32 %v1171, %v1224
    %v1235 = vmul.f32 %v1172, %v1220
    %v1236 = vmul.f32 %v1173, %v1224
    %v1237 = vmul.f32 %v1174, %v1220
    %v1238 = vmul.f32 %v1175, %v1224
    %v1239 = vmul.f32 %v1176, %v1220
    %v1240 = vmul.f32 %v1177, %v1224
    %v1241 = vmul.f32 %v1178, %v1220
    %v1242 = vmul.f32 %v1179, %v1224
    %v1243 = vmul.f32 %v1180, %v1220
    %v1244 = vmul.f32 %v1181, %v1224
    %v1245 = vmul.f32 %v1182, %v1220
    %v1246 = vmul.f32 %v1183, %v1224
    %v1247 = vmul.f32 %v1184, %v1220
    %v1248 = vmul.f32 %v1185, %v1224
    %v1249 = vmul.f32 %v1186, %v1220
    %v1250 = vmul.f32 %v1187, %v1224
    %v1251 = vmul.f32 %v1188, %v1220
    %v1252 = vmul.f32 %v1189, %v1224
    %v1253 = vmul.f32 %v1190, %v1220
    %v1254 = vmul.f32 %v1191, %v1224
    %v1255 = vmul.f32 %v1192, %v1220
    %v1256 = vmul.f32 %v1193, %v1224
    %v1257 = vmul.f32 %v1194, %v1220
    %v1258 = vmul.f32 %v1195, %v1224
    %v1259 = vmul.f32 %v1196, %v1220
    %v1260 = vmul.f32 %v1197, %v1224
    %v1261 = vmul.f32 %v1198, %v1220
    %v1262 = vmul.f32 %v1199, %v1224
    %v1263 = vmul.f32 %v1200, %v1220
    %v1264 = vmul.f32 %v1201, %v1224
    %v1265 = vmul.f32 %v1202, %v1220
    %v1266 = vmul.f32 %v1203, %v1224
    %v1267 = vmul.f32 %v1204, %v1220
    %v1268 = vmul.f32 %v1205, %v1224
    %v1269 = vmul.f32 %v1206, %v1220
    %v1270 = vmul.f32 %v1207, %v1224
    %v1271 = vmul.f32 %v1208, %v1220
    %v1272 = vmul.f32 %v1209, %v1224
    %v1273 = vmul.f32 %v1210, %v1220
    %v1274 = vmul.f32 %v1211, %v1224
    %v1275 = vmul.f32 %v1212, %v1220
    %v1276 = vmul.f32 %v1213, %v1224
    %s1277 = scalar_lea.vmem [#allocation7], 64
    %v1278 = vld [vmem:[%s1277] sm:$0xff]
    %v1279 = vld [vmem:[%s1277 + $0x8] sm:$0xff]
    %v1280 = vld [vmem:[%s1277 + $0x10] sm:$0xff]
    %v1281 = vld [vmem:[%s1277 + $0x18] sm:$0xff]
    %v1282 = vld [vmem:[%s1277 + $0x20] sm:$0xff]
    %v1283 = vld [vmem:[%s1277 + $0x28] sm:$0xff]
    %v1284 = vld [vmem:[%s1277 + $0x30] sm:$0xff]
    %v1285 = vld [vmem:[%s1277 + $0x38] sm:$0xff]
    %v1287 = vsel %vm974, %v1278, 0
    %v1290 = vsel %vm974, %v1279, 0
    %v1293 = vsel %vm974, %v1280, 0
    %v1296 = vsel %vm974, %v1281, 0
    %v1299 = vsel %vm974, %v1282, 0
    %v1302 = vsel %vm974, %v1283, 0
    %v1305 = vsel %vm974, %v1284, 0
    %v1308 = vsel %vm974, %v1285, 0
    %1310 = vmatprep.subr.mxu0 %v758
    %1311 = vmatpush1.msra.mxu0 %v757
    %1312 = vmatprep.subr.mxu0 %v760
    %1313 = vmatpush1.msra.mxu0 %v759
    %1314 = vmatprep.subr.mxu0 %v762
    %1315 = vmatpush1.msra.mxu0 %v761
    %1316 = vmatprep.subr.mxu0 %v764
    %1317 = vmatpush1.msra.mxu0 %v763
    %1318 = vmatprep.subr.mxu0 %v766
    %1319 = vmatpush1.msra.mxu0 %v765
    %1320 = vmatprep.subr.mxu0 %v768
    %1321 = vmatpush1.msra.mxu0 %v767
    %1322 = vmatprep.subr.mxu0 %v770
    %1323 = vmatpush1.msra.mxu0 %v769
    %1324 = vmatprep.subr.mxu0 %v772
    %1325 = vmatpush1.msra.mxu0 %v771
    %1326 = vmatprep.subr.mxu0 0.0
    %1327 = vmatpush1.msra.mxu0 0.0
    %1328 = vmatprep.subr.mxu0 0.0
    %1329 = vmatpush1.msra.mxu0 0.0
    %1330 = vmatprep.subr.mxu0 0.0
    %1331 = vmatpush1.msra.mxu0 0.0
    %1332 = vmatprep.subr.mxu0 0.0
    %1333 = vmatpush1.msra.mxu0 0.0
    %1334 = vmatprep.subr.mxu0 0.0
    %1335 = vmatpush1.msra.mxu0 0.0
    %1336 = vmatprep.subr.mxu0 0.0
    %1337 = vmatpush1.msra.mxu0 0.0
    %1338 = vmatprep.subr.mxu0 0.0
    %1339 = vmatpush1.msra.mxu0 0.0
    %1340 = vmatprep.subr.mxu0 0.0
    %1341 = vmatpush1.msra.mxu0 0.0
    %1342 = vmatprep.subr.mxu0 0.0
    %1343 = vmatpush1.msra.mxu0 0.0
    %1344 = vmatprep.subr.mxu0 0.0
    %1345 = vmatpush1.msra.mxu0 0.0
    %1346 = vmatprep.subr.mxu0 0.0
    %1347 = vmatpush1.msra.mxu0 0.0
    %1348 = vmatprep.subr.mxu0 0.0
    %1349 = vmatpush1.msra.mxu0 0.0
    %1350 = vmatprep.subr.mxu0 0.0
    %1351 = vmatpush1.msra.mxu0 0.0
    %1352 = vmatprep.subr.mxu0 0.0
    %1353 = vmatpush1.msra.mxu0 0.0
    %1354 = vmatprep.subr.mxu0 0.0
    %1355 = vmatpush1.msra.mxu0 0.0
    %1356 = vmatprep.subr.mxu0 0.0
    %1357 = vmatpush1.msra.mxu0 0.0
    %1358 = vmatprep.subr.mxu0 0.0
    %1359 = vmatpush1.msra.mxu0 0.0
    %1360 = vmatprep.subr.mxu0 0.0
    %1361 = vmatpush1.msra.mxu0 0.0
    %1362 = vmatprep.subr.mxu0 0.0
    %1363 = vmatpush1.msra.mxu0 0.0
    %1364 = vmatprep.subr.mxu0 0.0
    %1365 = vmatpush1.msra.mxu0 0.0
    %1366 = vmatprep.subr.mxu0 0.0
    %1367 = vmatpush1.msra.mxu0 0.0
    %1368 = vmatprep.subr.mxu0 0.0
    %1369 = vmatpush1.msra.mxu0 0.0
    %1370 = vmatprep.subr.mxu0 0.0
    %1371 = vmatpush1.msra.mxu0 0.0
    %1372 = vmatprep.subr.mxu0 0.0
    %1373 = vmatpush1.msra.mxu0 0.0
    %1374 = vmatprep.mubr.f32.mxu0 0.0
    %1375 = vmatmul.mubr.f32.gmra.mrb[0].mxu0 %v1287
    %v1376 = vpop.f32.mrb[0].mxu0
    %v1377 = vadd.f32 0.0, %v1376
    %v1378 = vpop.f32.mrb[0].mxu0
    %v1379 = vadd.f32 0.0, %v1378
    %1380 = vmatprep.mubr.f32.mxu0 0.0
    %1381 = vmatmul.mubr.f32.gmra.mrb[0].mxu0 %v1290
    %v1382 = vpop.f32.mrb[0].mxu0
    %v1383 = vadd.f32 0.0, %v1382
    %v1384 = vpop.f32.mrb[0].mxu0
    %v1385 = vadd.f32 0.0, %v1384
    %1386 = vmatprep.mubr.f32.mxu0 0.0
    %1387 = vmatmul.mubr.f32.gmra.mrb[0].mxu0 %v1293
    %v1388 = vpop.f32.mrb[0].mxu0
    %v1389 = vadd.f32 0.0, %v1388
    %v1390 = vpop.f32.mrb[0].mxu0
    %v1391 = vadd.f32 0.0, %v1390
    %1392 = vmatprep.mubr.f32.mxu0 0.0
    %1393 = vmatmul.mubr.f32.gmra.mrb[0].mxu0 %v1296
    %v1394 = vpop.f32.mrb[0].mxu0
    %v1395 = vadd.f32 0.0, %v1394
    %v1396 = vpop.f32.mrb[0].mxu0
    %v1397 = vadd.f32 0.0, %v1396
    %1398 = vmatprep.mubr.f32.mxu0 0.0
    %1399 = vmatmul.mubr.f32.gmra.mrb[0].mxu0 %v1299
    %v1400 = vpop.f32.mrb[0].mxu0
    %v1401 = vadd.f32 0.0, %v1400
    %v1402 = vpop.f32.mrb[0].mxu0
    %v1403 = vadd.f32 0.0, %v1402
    %1404 = vmatprep.mubr.f32.mxu0 0.0
    %1405 = vmatmul.mubr.f32.gmra.mrb[0].mxu0 %v1302
    %v1406 = vpop.f32.mrb[0].mxu0
    %v1407 = vadd.f32 0.0, %v1406
    %v1408 = vpop.f32.mrb[0].mxu0
    %v1409 = vadd.f32 0.0, %v1408
    %1410 = vmatprep.mubr.f32.mxu0 0.0
    %1411 = vmatmul.mubr.f32.gmra.mrb[0].mxu0 %v1305
    %v1412 = vpop.f32.mrb[0].mxu0
    %v1413 = vadd.f32 0.0, %v1412
    %v1414 = vpop.f32.mrb[0].mxu0
    %v1415 = vadd.f32 0.0, %v1414
    %1416 = vmatprep.mubr.f32.mxu0 0.0
    %1417 = vmatmul.mubr.f32.gmra.mrb[0].mxu0 %v1308
    %v1418 = vpop.f32.mrb[0].mxu0
    %v1419 = vadd.f32 0.0, %v1418
    %v1420 = vpop.f32.mrb[0].mxu0
    %v1421 = vadd.f32 0.0, %v1420
    %1422 = vdwg.mxu0
    %vm1423 = vcmask 556032
    %v1425 = vsel %vm1423, %v1379, 0
    %v1428 = vsel %vm1423, %v1385, 0
    %v1431 = vsel %vm1423, %v1391, 0
    %v1434 = vsel %vm1423, %v1397, 0
    %v1437 = vsel %vm1423, %v1403, 0
    %v1440 = vsel %vm1423, %v1409, 0
    %v1443 = vsel %vm1423, %v1415, 0
    %v1446 = vsel %vm1423, %v1421, 0
    %vm1448 = vcmask 1043456
    %v1450 = vsel %vm1448, %v1275, 0
    %v1453 = vsel %vm1448, %v1276, 0
    %1455 = vmatprep.subr.mxu0 %v1228
    %1456 = vmatpush1.msra.mxu0 %v1227
    %1457 = vmatprep.subr.mxu0 %v1230
    %1458 = vmatpush1.msra.mxu0 %v1229
    %1459 = vmatprep.subr.mxu0 %v1232
    %1460 = vmatpush1.msra.mxu0 %v1231
    %1461 = vmatprep.subr.mxu0 %v1234
    %1462 = vmatpush1.msra.mxu0 %v1233
    %1463 = vmatprep.subr.mxu0 %v1236
    %1464 = vmatpush1.msra.mxu0 %v1235
    %1465 = vmatprep.subr.mxu0 %v1238
    %1466 = vmatpush1.msra.mxu0 %v1237
    %1467 = vmatprep.subr.mxu0 %v1240
    %1468 = vmatpush1.msra.mxu0 %v1239
    %1469 = vmatprep.subr.mxu0 %v1242
    %1470 = vmatpush1.msra.mxu0 %v1241
    %1471 = vmatprep.subr.mxu0 %v1244
    %1472 = vmatpush1.msra.mxu0 %v1243
    %1473 = vmatprep.subr.mxu0 %v1246
    %1474 = vmatpush1.msra.mxu0 %v1245
    %1475 = vmatprep.subr.mxu0 %v1248
    %1476 = vmatpush1.msra.mxu0 %v1247
    %1477 = vmatprep.subr.mxu0 %v1250
    %1478 = vmatpush1.msra.mxu0 %v1249
    %1479 = vmatprep.subr.mxu0 %v1252
    %1480 = vmatpush1.msra.mxu0 %v1251
    %1481 = vmatprep.subr.mxu0 %v1254
    %1482 = vmatpush1.msra.mxu0 %v1253
    %1483 = vmatprep.subr.mxu0 %v1256
    %1484 = vmatpush1.msra.mxu0 %v1255
    %1485 = vmatprep.subr.mxu0 %v1258
    %1486 = vmatpush1.msra.mxu0 %v1257
    %1487 = vmatprep.subr.mxu0 %v1260
    %1488 = vmatpush1.msra.mxu0 %v1259
    %1489 = vmatprep.subr.mxu0 %v1262
    %1490 = vmatpush1.msra.mxu0 %v1261
    %1491 = vmatprep.subr.mxu0 %v1264
    %1492 = vmatpush1.msra.mxu0 %v1263
    %1493 = vmatprep.subr.mxu0 %v1266
    %1494 = vmatpush1.msra.mxu0 %v1265
    %1495 = vmatprep.subr.mxu0 %v1268
    %1496 = vmatpush1.msra.mxu0 %v1267
    %1497 = vmatprep.subr.mxu0 %v1270
    %1498 = vmatpush1.msra.mxu0 %v1269
    %1499 = vmatprep.subr.mxu0 %v1272
    %1500 = vmatpush1.msra.mxu0 %v1271
    %1501 = vmatprep.subr.mxu0 %v1274
    %1502 = vmatpush1.msra.mxu0 %v1273
    %1503 = vmatprep.subr.mxu0 %v1453
    %1504 = vmatpush1.msra.mxu0 %v1450
    %1505 = vmatprep.subr.mxu0 0.0
    %1506 = vmatpush1.msra.mxu0 0.0
    %1507 = vmatprep.subr.mxu0 0.0
    %1508 = vmatpush1.msra.mxu0 0.0
    %1509 = vmatprep.subr.mxu0 0.0
    %1510 = vmatpush1.msra.mxu0 0.0
    %1511 = vmatprep.subr.mxu0 0.0
    %1512 = vmatpush1.msra.mxu0 0.0
    %1513 = vmatprep.subr.mxu0 0.0
    %1514 = vmatpush1.msra.mxu0 0.0
    %1515 = vmatprep.subr.mxu0 0.0
    %1516 = vmatpush1.msra.mxu0 0.0
    %1517 = vmatprep.subr.mxu0 0.0
    %1518 = vmatpush1.msra.mxu0 0.0
    %1519 = vmatprep.mubr.f32.mxu0 %v1425
    %1520 = vmatmul.mubr.f32.gmra.mrb[0].mxu0 %v1377
    %v1521 = vpop.f32.mrb[0].mxu0
    %v1522 = vadd.f32 0.0, %v1521
    %v1523 = vpop.f32.mrb[0].mxu0
    %v1524 = vadd.f32 0.0, %v1523
    %1525 = vmatprep.mubr.f32.mxu0 %v1428
    %1526 = vmatmul.mubr.f32.gmra.mrb[0].mxu0 %v1383
    %v1527 = vpop.f32.mrb[0].mxu0
    %v1528 = vadd.f32 0.0, %v1527
    %v1529 = vpop.f32.mrb[0].mxu0
    %v1530 = vadd.f32 0.0, %v1529
    %1531 = vmatprep.mubr.f32.mxu0 %v1431
    %1532 = vmatmul.mubr.f32.gmra.mrb[0].mxu0 %v1389
    %v1533 = vpop.f32.mrb[0].mxu0
    %v1534 = vadd.f32 0.0, %v1533
    %v1535 = vpop.f32.mrb[0].mxu0
    %v1536 = vadd.f32 0.0, %v1535
    %1537 = vmatprep.mubr.f32.mxu0 %v1434
    %1538 = vmatmul.mubr.f32.gmra.mrb[0].mxu0 %v1395
    %v1539 = vpop.f32.mrb[0].mxu0
    %v1540 = vadd.f32 0.0, %v1539
    %v1541 = vpop.f32.mrb[0].mxu0
    %v1542 = vadd.f32 0.0, %v1541
    %1543 = vmatprep.mubr.f32.mxu0 %v1437
    %1544 = vmatmul.mubr.f32.gmra.mrb[0].mxu0 %v1401
    %v1545 = vpop.f32.mrb[0].mxu0
    %v1546 = vadd.f32 0.0, %v1545
    %v1547 = vpop.f32.mrb[0].mxu0
    %v1548 = vadd.f32 0.0, %v1547
    %1549 = vmatprep.mubr.f32.mxu0 %v1440
    %1550 = vmatmul.mubr.f32.gmra.mrb[0].mxu0 %v1407
    %v1551 = vpop.f32.mrb[0].mxu0
    %v1552 = vadd.f32 0.0, %v1551
    %v1553 = vpop.f32.mrb[0].mxu0
    %v1554 = vadd.f32 0.0, %v1553
    %1555 = vmatprep.mubr.f32.mxu0 %v1443
    %1556 = vmatmul.mubr.f32.gmra.mrb[0].mxu0 %v1413
    %v1557 = vpop.f32.mrb[0].mxu0
    %v1558 = vadd.f32 0.0, %v1557
    %v1559 = vpop.f32.mrb[0].mxu0
    %v1560 = vadd.f32 0.0, %v1559
    %1561 = vmatprep.mubr.f32.mxu0 %v1446
    %1562 = vmatmul.mubr.f32.gmra.mrb[0].mxu0 %v1419
    %v1563 = vpop.f32.mrb[0].mxu0
    %v1564 = vadd.f32 0.0, %v1563
    %v1565 = vpop.f32.mrb[0].mxu0
    %v1566 = vadd.f32 0.0, %v1565
    %1567 = vdwg.mxu0
    %v1569 = vsel %vm1423, %v1068, 0
    %v1572 = vsel %vm1423, %v1074, 0
    %v1575 = vsel %vm1423, %v1080, 0
    %v1578 = vsel %vm1423, %v1086, 0
    %v1581 = vsel %vm1423, %v1092, 0
    %v1584 = vsel %vm1423, %v1098, 0
    %v1587 = vsel %vm1423, %v1104, 0
    %v1590 = vsel %vm1423, %v1110, 0
    %v1593 = vsel %vm1448, %v964, 0
    %v1596 = vsel %vm1448, %v965, 0
    %1598 = vmatprep.subr.mxu0 %v917
    %1599 = vmatpush1.msra.mxu0 %v916
    %1600 = vmatprep.subr.mxu0 %v919
    %1601 = vmatpush1.msra.mxu0 %v918
    %1602 = vmatprep.subr.mxu0 %v921
    %1603 = vmatpush1.msra.mxu0 %v920
    %1604 = vmatprep.subr.mxu0 %v923
    %1605 = vmatpush1.msra.mxu0 %v922
    %1606 = vmatprep.subr.mxu0 %v925
    %1607 = vmatpush1.msra.mxu0 %v924
    %1608 = vmatprep.subr.mxu0 %v927
    %1609 = vmatpush1.msra.mxu0 %v926
    %1610 = vmatprep.subr.mxu0 %v929
    %1611 = vmatpush1.msra.mxu0 %v928
    %1612 = vmatprep.subr.mxu0 %v931
    %1613 = vmatpush1.msra.mxu0 %v930
    %1614 = vmatprep.subr.mxu0 %v933
    %1615 = vmatpush1.msra.mxu0 %v932
    %1616 = vmatprep.subr.mxu0 %v935
    %1617 = vmatpush1.msra.mxu0 %v934
    %1618 = vmatprep.subr.mxu0 %v937
    %1619 = vmatpush1.msra.mxu0 %v936
    %1620 = vmatprep.subr.mxu0 %v939
    %1621 = vmatpush1.msra.mxu0 %v938
    %1622 = vmatprep.subr.mxu0 %v941
    %1623 = vmatpush1.msra.mxu0 %v940
    %1624 = vmatprep.subr.mxu0 %v943
    %1625 = vmatpush1.msra.mxu0 %v942
    %1626 = vmatprep.subr.mxu0 %v945
    %1627 = vmatpush1.msra.mxu0 %v944
    %1628 = vmatprep.subr.mxu0 %v947
    %1629 = vmatpush1.msra.mxu0 %v946
    %1630 = vmatprep.subr.mxu0 %v949
    %1631 = vmatpush1.msra.mxu0 %v948
    %1632 = vmatprep.subr.mxu0 %v951
    %1633 = vmatpush1.msra.mxu0 %v950
    %1634 = vmatprep.subr.mxu0 %v953
    %1635 = vmatpush1.msra.mxu0 %v952
    %1636 = vmatprep.subr.mxu0 %v955
    %1637 = vmatpush1.msra.mxu0 %v954
    %1638 = vmatprep.subr.mxu0 %v957
    %1639 = vmatpush1.msra.mxu0 %v956
    %1640 = vmatprep.subr.mxu0 %v959
    %1641 = vmatpush1.msra.mxu0 %v958
    %1642 = vmatprep.subr.mxu0 %v961
    %1643 = vmatpush1.msra.mxu0 %v960
    %1644 = vmatprep.subr.mxu0 %v963
    %1645 = vmatpush1.msra.mxu0 %v962
    %1646 = vmatprep.subr.mxu0 %v1596
    %1647 = vmatpush1.msra.mxu0 %v1593
    %1648 = vmatprep.subr.mxu0 0.0
    %1649 = vmatpush1.msra.mxu0 0.0
    %1650 = vmatprep.subr.mxu0 0.0
    %1651 = vmatpush1.msra.mxu0 0.0
    %1652 = vmatprep.subr.mxu0 0.0
    %1653 = vmatpush1.msra.mxu0 0.0
    %1654 = vmatprep.subr.mxu0 0.0
    %1655 = vmatpush1.msra.mxu0 0.0
    %1656 = vmatprep.subr.mxu0 0.0
    %1657 = vmatpush1.msra.mxu0 0.0
    %1658 = vmatprep.subr.mxu0 0.0
    %1659 = vmatpush1.msra.mxu0 0.0
    %1660 = vmatprep.subr.mxu0 0.0
    %1661 = vmatpush1.msra.mxu0 0.0
    %1662 = vmatprep.mubr.f32.mxu0 %v1569
    %1663 = vmatmul.mubr.f32.gmra.mrb[0].mxu0 %v1066
    %v1664 = vpop.f32.mrb[0].mxu0
    %v1665 = vadd.f32 %v1522, %v1664
    %v1666 = vpop.f32.mrb[0].mxu0
    %v1667 = vadd.f32 %v1524, %v1666
    %1668 = vmatprep.mubr.f32.mxu0 %v1572
    %1669 = vmatmul.mubr.f32.gmra.mrb[0].mxu0 %v1072
    %v1670 = vpop.f32.mrb[0].mxu0
    %v1671 = vadd.f32 %v1528, %v1670
    %v1672 = vpop.f32.mrb[0].mxu0
    %v1673 = vadd.f32 %v1530, %v1672
    %1674 = vmatprep.mubr.f32.mxu0 %v1575
    %1675 = vmatmul.mubr.f32.gmra.mrb[0].mxu0 %v1078
    %v1676 = vpop.f32.mrb[0].mxu0
    %v1677 = vadd.f32 %v1534, %v1676
    %v1678 = vpop.f32.mrb[0].mxu0
    %v1679 = vadd.f32 %v1536, %v1678
    %1680 = vmatprep.mubr.f32.mxu0 %v1578
    %1681 = vmatmul.mubr.f32.gmra.mrb[0].mxu0 %v1084
    %v1682 = vpop.f32.mrb[0].mxu0
    %v1683 = vadd.f32 %v1540, %v1682
    %v1684 = vpop.f32.mrb[0].mxu0
    %v1685 = vadd.f32 %v1542, %v1684
    %1686 = vmatprep.mubr.f32.mxu0 %v1581
    %1687 = vmatmul.mubr.f32.gmra.mrb[0].mxu0 %v1090
    %v1688 = vpop.f32.mrb[0].mxu0
    %v1689 = vadd.f32 %v1546, %v1688
    %v1690 = vpop.f32.mrb[0].mxu0
    %v1691 = vadd.f32 %v1548, %v1690
    %1692 = vmatprep.mubr.f32.mxu0 %v1584
    %1693 = vmatmul.mubr.f32.gmra.mrb[0].mxu0 %v1096
    %v1694 = vpop.f32.mrb[0].mxu0
    %v1695 = vadd.f32 %v1552, %v1694
    %v1696 = vpop.f32.mrb[0].mxu0
    %v1697 = vadd.f32 %v1554, %v1696
    %1698 = vmatprep.mubr.f32.mxu0 %v1587
    %1699 = vmatmul.mubr.f32.gmra.mrb[0].mxu0 %v1102
    %v1700 = vpop.f32.mrb[0].mxu0
    %v1701 = vadd.f32 %v1558, %v1700
    %v1702 = vpop.f32.mrb[0].mxu0
    %v1703 = vadd.f32 %v1560, %v1702
    %1704 = vmatprep.mubr.f32.mxu0 %v1590
    %1705 = vmatmul.mubr.f32.gmra.mrb[0].mxu0 %v1108
    %v1706 = vpop.f32.mrb[0].mxu0
    %v1707 = vadd.f32 %v1564, %v1706
    %v1708 = vpop.f32.mrb[0].mxu0
    %v1709 = vadd.f32 %v1566, %v1708
    %1710 = vdwg.mxu0
    %v1711 = vadd.s32 %v800, 4294967283
    %v1712 = vadd.s32 %v801, 4294967283
    %vm1713 = vcmp.eq.s32.totalorder %v774, %v1711
    %vm1714 = vcmp.eq.s32.totalorder %v774, %v1712
    %vm1715 = vcmp.eq.s32.totalorder %v775, %v1711
    %vm1716 = vcmp.eq.s32.totalorder %v775, %v1712
    %vm1717 = vcmp.eq.s32.totalorder %v776, %v1711
    %vm1718 = vcmp.eq.s32.totalorder %v776, %v1712
    %vm1719 = vcmp.eq.s32.totalorder %v777, %v1711
    %vm1720 = vcmp.eq.s32.totalorder %v777, %v1712
    %vm1721 = vcmp.eq.s32.totalorder %v778, %v1711
    %vm1722 = vcmp.eq.s32.totalorder %v778, %v1712
    %vm1723 = vcmp.eq.s32.totalorder %v779, %v1711
    %vm1724 = vcmp.eq.s32.totalorder %v779, %v1712
    %vm1725 = vcmp.eq.s32.totalorder %v780, %v1711
    %vm1726 = vcmp.eq.s32.totalorder %v780, %v1712
    %vm1727 = vcmp.eq.s32.totalorder %v781, %v1711
    %vm1728 = vcmp.eq.s32.totalorder %v781, %v1712
    %vm1729 = vcmp.eq.s32.totalorder %v782, %v1711
    %vm1730 = vcmp.eq.s32.totalorder %v782, %v1712
    %vm1731 = vcmp.eq.s32.totalorder %v783, %v1711
    %vm1732 = vcmp.eq.s32.totalorder %v783, %v1712
    %vm1733 = vcmp.eq.s32.totalorder %v784, %v1711
    %vm1734 = vcmp.eq.s32.totalorder %v784, %v1712
    %vm1735 = vcmp.eq.s32.totalorder %v785, %v1711
    %vm1736 = vcmp.eq.s32.totalorder %v785, %v1712
    %vm1737 = vcmp.eq.s32.totalorder %v786, %v1711
    %vm1738 = vcmp.eq.s32.totalorder %v786, %v1712
    %vm1739 = vcmp.eq.s32.totalorder %v787, %v1711
    %vm1740 = vcmp.eq.s32.totalorder %v787, %v1712
    %vm1741 = vcmp.eq.s32.totalorder %v788, %v1711
    %vm1742 = vcmp.eq.s32.totalorder %v788, %v1712
    %vm1743 = vcmp.eq.s32.totalorder %v789, %v1711
    %vm1744 = vcmp.eq.s32.totalorder %v789, %v1712
    %vm1745 = vcmp.eq.s32.totalorder %v790, %v1711
    %vm1746 = vcmp.eq.s32.totalorder %v790, %v1712
    %vm1747 = vcmp.eq.s32.totalorder %v791, %v1711
    %vm1748 = vcmp.eq.s32.totalorder %v791, %v1712
    %vm1749 = vcmp.eq.s32.totalorder %v792, %v1711
    %vm1750 = vcmp.eq.s32.totalorder %v792, %v1712
    %vm1751 = vcmp.eq.s32.totalorder %v793, %v1711
    %vm1752 = vcmp.eq.s32.totalorder %v793, %v1712
    %vm1753 = vcmp.eq.s32.totalorder %v794, %v1711
    %vm1754 = vcmp.eq.s32.totalorder %v794, %v1712
    %vm1755 = vcmp.eq.s32.totalorder %v795, %v1711
    %vm1756 = vcmp.eq.s32.totalorder %v795, %v1712
    %vm1757 = vcmp.eq.s32.totalorder %v796, %v1711
    %vm1758 = vcmp.eq.s32.totalorder %v796, %v1712
    %vm1759 = vcmp.eq.s32.totalorder %v797, %v1711
    %vm1760 = vcmp.eq.s32.totalorder %v797, %v1712
    %vm1761 = vcmp.eq.s32.totalorder %v798, %v1711
    %vm1762 = vcmp.eq.s32.totalorder %v798, %v1712
    %v1763 = vsel %vm1713, 1.0, 0.0
    %v1764 = vsel %vm1714, 1.0, 0.0
    %v1765 = vsel %vm1715, 1.0, 0.0
    %v1766 = vsel %vm1716, 1.0, 0.0
    %v1767 = vsel %vm1717, 1.0, 0.0
    %v1768 = vsel %vm1718, 1.0, 0.0
    %v1769 = vsel %vm1719, 1.0, 0.0
    %v1770 = vsel %vm1720, 1.0, 0.0
    %v1771 = vsel %vm1721, 1.0, 0.0
    %v1772 = vsel %vm1722, 1.0, 0.0
    %v1773 = vsel %vm1723, 1.0, 0.0
    %v1774 = vsel %vm1724, 1.0, 0.0
    %v1775 = vsel %vm1725, 1.0, 0.0
    %v1776 = vsel %vm1726, 1.0, 0.0
    %v1777 = vsel %vm1727, 1.0, 0.0
    %v1778 = vsel %vm1728, 1.0, 0.0
    %v1779 = vsel %vm1729, 1.0, 0.0
    %v1780 = vsel %vm1730, 1.0, 0.0
    %v1781 = vsel %vm1731, 1.0, 0.0
    %v1782 = vsel %vm1732, 1.0, 0.0
    %v1783 = vsel %vm1733, 1.0, 0.0
    %v1784 = vsel %vm1734, 1.0, 0.0
    %v1785 = vsel %vm1735, 1.0, 0.0
    %v1786 = vsel %vm1736, 1.0, 0.0
    %v1787 = vsel %vm1737, 1.0, 0.0
    %v1788 = vsel %vm1738, 1.0, 0.0
    %v1789 = vsel %vm1739, 1.0, 0.0
    %v1790 = vsel %vm1740, 1.0, 0.0
    %v1791 = vsel %vm1741, 1.0, 0.0
    %v1792 = vsel %vm1742, 1.0, 0.0
    %v1793 = vsel %vm1743, 1.0, 0.0
    %v1794 = vsel %vm1744, 1.0, 0.0
    %v1795 = vsel %vm1745, 1.0, 0.0
    %v1796 = vsel %vm1746, 1.0, 0.0
    %v1797 = vsel %vm1747, 1.0, 0.0
    %v1798 = vsel %vm1748, 1.0, 0.0
    %v1799 = vsel %vm1749, 1.0, 0.0
    %v1800 = vsel %vm1750, 1.0, 0.0
    %v1801 = vsel %vm1751, 1.0, 0.0
    %v1802 = vsel %vm1752, 1.0, 0.0
    %v1803 = vsel %vm1753, 1.0, 0.0
    %v1804 = vsel %vm1754, 1.0, 0.0
    %v1805 = vsel %vm1755, 1.0, 0.0
    %v1806 = vsel %vm1756, 1.0, 0.0
    %v1807 = vsel %vm1757, 1.0, 0.0
    %v1808 = vsel %vm1758, 1.0, 0.0
    %v1809 = vsel %vm1759, 1.0, 0.0
    %v1810 = vsel %vm1760, 1.0, 0.0
    %v1811 = vsel %vm1761, 1.0, 0.0
    %v1812 = vsel %vm1762, 1.0, 0.0
    %s1813 = scalar_lea.vmem [#allocation2], 4
    %v1814 = vld [vmem:[%s1813] sm:$0x3]
    %v1816 = vlaneseq
    %v1817 = vshrl.u32 %v1816, 7
    %v1818 = vsub.s32 0, %v1817
    %v1819 = vrot.slane %v1814, %v1818
    %v1820 = vlaneseq
    %v1821 = vshrl.u32 %v1820, 7
    %v1822 = vsub.s32 1, %v1821
    %v1823 = vrot.slane %v1814, %v1822
    %v1826 = vmul.f32 %v1763, %v1819
    %v1827 = vmul.f32 %v1764, %v1823
    %v1828 = vmul.f32 %v1765, %v1819
    %v1829 = vmul.f32 %v1766, %v1823
    %v1830 = vmul.f32 %v1767, %v1819
    %v1831 = vmul.f32 %v1768, %v1823
    %v1832 = vmul.f32 %v1769, %v1819
    %v1833 = vmul.f32 %v1770, %v1823
    %v1834 = vmul.f32 %v1771, %v1819
    %v1835 = vmul.f32 %v1772, %v1823
    %v1836 = vmul.f32 %v1773, %v1819
    %v1837 = vmul.f32 %v1774, %v1823
    %v1838 = vmul.f32 %v1775, %v1819
    %v1839 = vmul.f32 %v1776, %v1823
    %v1840 = vmul.f32 %v1777, %v1819
    %v1841 = vmul.f32 %v1778, %v1823
    %v1842 = vmul.f32 %v1779, %v1819
    %v1843 = vmul.f32 %v1780, %v1823
    %v1844 = vmul.f32 %v1781, %v1819
    %v1845 = vmul.f32 %v1782, %v1823
    %v1846 = vmul.f32 %v1783, %v1819
    %v1847 = vmul.f32 %v1784, %v1823
    %v1848 = vmul.f32 %v1785, %v1819
    %v1849 = vmul.f32 %v1786, %v1823
    %v1850 = vmul.f32 %v1787, %v1819
    %v1851 = vmul.f32 %v1788, %v1823
    %v1852 = vmul.f32 %v1789, %v1819
    %v1853 = vmul.f32 %v1790, %v1823
    %v1854 = vmul.f32 %v1791, %v1819
    %v1855 = vmul.f32 %v1792, %v1823
    %v1856 = vmul.f32 %v1793, %v1819
    %v1857 = vmul.f32 %v1794, %v1823
    %v1858 = vmul.f32 %v1795, %v1819
    %v1859 = vmul.f32 %v1796, %v1823
    %v1860 = vmul.f32 %v1797, %v1819
    %v1861 = vmul.f32 %v1798, %v1823
    %v1862 = vmul.f32 %v1799, %v1819
    %v1863 = vmul.f32 %v1800, %v1823
    %v1864 = vmul.f32 %v1801, %v1819
    %v1865 = vmul.f32 %v1802, %v1823
    %v1866 = vmul.f32 %v1803, %v1819
    %v1867 = vmul.f32 %v1804, %v1823
    %v1868 = vmul.f32 %v1805, %v1819
    %v1869 = vmul.f32 %v1806, %v1823
    %v1870 = vmul.f32 %v1807, %v1819
    %v1871 = vmul.f32 %v1808, %v1823
    %v1872 = vmul.f32 %v1809, %v1819
    %v1873 = vmul.f32 %v1810, %v1823
    %v1874 = vmul.f32 %v1811, %v1819
    %v1875 = vmul.f32 %v1812, %v1823
    %s1876 = scalar_lea.vmem [#allocation7], 128
    %v1877 = vld [vmem:[%s1876] sm:$0xff]
    %v1878 = vld [vmem:[%s1876 + $0x8] sm:$0xff]
    %v1879 = vld [vmem:[%s1876 + $0x10] sm:$0xff]
    %v1880 = vld [vmem:[%s1876 + $0x18] sm:$0xff]
    %v1881 = vld [vmem:[%s1876 + $0x20] sm:$0xff]
    %v1882 = vld [vmem:[%s1876 + $0x28] sm:$0xff]
    %v1883 = vld [vmem:[%s1876 + $0x30] sm:$0xff]
    %v1884 = vld [vmem:[%s1876 + $0x38] sm:$0xff]
    %v1886 = vsel %vm974, %v1877, 0
    %v1889 = vsel %vm974, %v1878, 0
    %v1892 = vsel %vm974, %v1879, 0
    %v1895 = vsel %vm974, %v1880, 0
    %v1898 = vsel %vm974, %v1881, 0
    %v1901 = vsel %vm974, %v1882, 0
    %v1904 = vsel %vm974, %v1883, 0
    %v1907 = vsel %vm974, %v1884, 0
    %1909 = vmatprep.subr.mxu0 %v758
    %1910 = vmatpush1.msra.mxu0 %v757
    %1911 = vmatprep.subr.mxu0 %v760
    %1912 = vmatpush1.msra.mxu0 %v759
    %1913 = vmatprep.subr.mxu0 %v762
    %1914 = vmatpush1.msra.mxu0 %v761
    %1915 = vmatprep.subr.mxu0 %v764
    %1916 = vmatpush1.msra.mxu0 %v763
    %1917 = vmatprep.subr.mxu0 %v766
    %1918 = vmatpush1.msra.mxu0 %v765
    %1919 = vmatprep.subr.mxu0 %v768
    %1920 = vmatpush1.msra.mxu0 %v767
    %1921 = vmatprep.subr.mxu0 %v770
    %1922 = vmatpush1.msra.mxu0 %v769
    %1923 = vmatprep.subr.mxu0 %v772
    %1924 = vmatpush1.msra.mxu0 %v771
    %1925 = vmatprep.subr.mxu0 0.0
    %1926 = vmatpush1.msra.mxu0 0.0
    %1927 = vmatprep.subr.mxu0 0.0
    %1928 = vmatpush1.msra.mxu0 0.0
    %1929 = vmatprep.subr.mxu0 0.0
    %1930 = vmatpush1.msra.mxu0 0.0
    %1931 = vmatprep.subr.mxu0 0.0
    %1932 = vmatpush1.msra.mxu0 0.0
    %1933 = vmatprep.subr.mxu0 0.0
    %1934 = vmatpush1.msra.mxu0 0.0
    %1935 = vmatprep.subr.mxu0 0.0
    %1936 = vmatpush1.msra.mxu0 0.0
    %1937 = vmatprep.subr.mxu0 0.0
    %1938 = vmatpush1.msra.mxu0 0.0
    %1939 = vmatprep.subr.mxu0 0.0
    %1940 = vmatpush1.msra.mxu0 0.0
    %1941 = vmatprep.subr.mxu0 0.0
    %1942 = vmatpush1.msra.mxu0 0.0
    %1943 = vmatprep.subr.mxu0 0.0
    %1944 = vmatpush1.msra.mxu0 0.0
    %1945 = vmatprep.subr.mxu0 0.0
    %1946 = vmatpush1.msra.mxu0 0.0
    %1947 = vmatprep.subr.mxu0 0.0
    %1948 = vmatpush1.msra.mxu0 0.0
    %1949 = vmatprep.subr.mxu0 0.0
    %1950 = vmatpush1.msra.mxu0 0.0
    %1951 = vmatprep.subr.mxu0 0.0
    %1952 = vmatpush1.msra.mxu0 0.0
    %1953 = vmatprep.subr.mxu0 0.0
    %1954 = vmatpush1.msra.mxu0 0.0
    %1955 = vmatprep.subr.mxu0 0.0
    %1956 = vmatpush1.msra.mxu0 0.0
    %1957 = vmatprep.subr.mxu0 0.0
    %1958 = vmatpush1.msra.mxu0 0.0
    %1959 = vmatprep.subr.mxu0 0.0
    %1960 = vmatpush1.msra.mxu0 0.0
    %1961 = vmatprep.subr.mxu0 0.0
    %1962 = vmatpush1.msra.mxu0 0.0
    %1963 = vmatprep.subr.mxu0 0.0
    %1964 = vmatpush1.msra.mxu0 0.0
    %1965 = vmatprep.subr.mxu0 0.0
    %1966 = vmatpush1.msra.mxu0 0.0
    %1967 = vmatprep.subr.mxu0 0.0
    %1968 = vmatpush1.msra.mxu0 0.0
    %1969 = vmatprep.subr.mxu0 0.0
    %1970 = vmatpush1.msra.mxu0 0.0
    %1971 = vmatprep.subr.mxu0 0.0
    %1972 = vmatpush1.msra.mxu0 0.0
    %1973 = vmatprep.mubr.f32.mxu0 0.0
    %1974 = vmatmul.mubr.f32.gmra.mrb[0].mxu0 %v1886
    %v1975 = vpop.f32.mrb[0].mxu0
    %v1976 = vadd.f32 0.0, %v1975
    %v1977 = vpop.f32.mrb[0].mxu0
    %v1978 = vadd.f32 0.0, %v1977
    %1979 = vmatprep.mubr.f32.mxu0 0.0
    %1980 = vmatmul.mubr.f32.gmra.mrb[0].mxu0 %v1889
    %v1981 = vpop.f32.mrb[0].mxu0
    %v1982 = vadd.f32 0.0, %v1981
    %v1983 = vpop.f32.mrb[0].mxu0
    %v1984 = vadd.f32 0.0, %v1983
    %1985 = vmatprep.mubr.f32.mxu0 0.0
    %1986 = vmatmul.mubr.f32.gmra.mrb[0].mxu0 %v1892
    %v1987 = vpop.f32.mrb[0].mxu0
    %v1988 = vadd.f32 0.0, %v1987
    %v1989 = vpop.f32.mrb[0].mxu0
    %v1990 = vadd.f32 0.0, %v1989
    %1991 = vmatprep.mubr.f32.mxu0 0.0
    %1992 = vmatmul.mubr.f32.gmra.mrb[0].mxu0 %v1895
    %v1993 = vpop.f32.mrb[0].mxu0
    %v1994 = vadd.f32 0.0, %v1993
    %v1995 = vpop.f32.mrb[0].mxu0
    %v1996 = vadd.f32 0.0, %v1995
    %1997 = vmatprep.mubr.f32.mxu0 0.0
    %1998 = vmatmul.mubr.f32.gmra.mrb[0].mxu0 %v1898
    %v1999 = vpop.f32.mrb[0].mxu0
    %v2000 = vadd.f32 0.0, %v1999
    %v2001 = vpop.f32.mrb[0].mxu0
    %v2002 = vadd.f32 0.0, %v2001
    %2003 = vmatprep.mubr.f32.mxu0 0.0
    %2004 = vmatmul.mubr.f32.gmra.mrb[0].mxu0 %v1901
    %v2005 = vpop.f32.mrb[0].mxu0
    %v2006 = vadd.f32 0.0, %v2005
    %v2007 = vpop.f32.mrb[0].mxu0
    %v2008 = vadd.f32 0.0, %v2007
    %2009 = vmatprep.mubr.f32.mxu0 0.0
    %2010 = vmatmul.mubr.f32.gmra.mrb[0].mxu0 %v1904
    %v2011 = vpop.f32.mrb[0].mxu0
    %v2012 = vadd.f32 0.0, %v2011
    %v2013 = vpop.f32.mrb[0].mxu0
    %v2014 = vadd.f32 0.0, %v2013
    %2015 = vmatprep.mubr.f32.mxu0 0.0
    %2016 = vmatmul.mubr.f32.gmra.mrb[0].mxu0 %v1907
    %v2017 = vpop.f32.mrb[0].mxu0
    %v2018 = vadd.f32 0.0, %v2017
    %v2019 = vpop.f32.mrb[0].mxu0
    %v2020 = vadd.f32 0.0, %v2019
    %2021 = vdwg.mxu0
    %v2023 = vsel %vm1423, %v1978, 0
    %v2026 = vsel %vm1423, %v1984, 0
    %v2029 = vsel %vm1423, %v1990, 0
    %v2032 = vsel %vm1423, %v1996, 0
    %v2035 = vsel %vm1423, %v2002, 0
    %v2038 = vsel %vm1423, %v2008, 0
    %v2041 = vsel %vm1423, %v2014, 0
    %v2044 = vsel %vm1423, %v2020, 0
    %v2047 = vsel %vm1448, %v1874, 0
    %v2050 = vsel %vm1448, %v1875, 0
    %2052 = vmatprep.subr.mxu0 %v1827
    %2053 = vmatpush1.msra.mxu0 %v1826
    %2054 = vmatprep.subr.mxu0 %v1829
    %2055 = vmatpush1.msra.mxu0 %v1828
    %2056 = vmatprep.subr.mxu0 %v1831
    %2057 = vmatpush1.msra.mxu0 %v1830
    %2058 = vmatprep.subr.mxu0 %v1833
    %2059 = vmatpush1.msra.mxu0 %v1832
    %2060 = vmatprep.subr.mxu0 %v1835
    %2061 = vmatpush1.msra.mxu0 %v1834
    %2062 = vmatprep.subr.mxu0 %v1837
    %2063 = vmatpush1.msra.mxu0 %v1836
    %2064 = vmatprep.subr.mxu0 %v1839
    %2065 = vmatpush1.msra.mxu0 %v1838
    %2066 = vmatprep.subr.mxu0 %v1841
    %2067 = vmatpush1.msra.mxu0 %v1840
    %2068 = vmatprep.subr.mxu0 %v1843
    %2069 = vmatpush1.msra.mxu0 %v1842
    %2070 = vmatprep.subr.mxu0 %v1845
    %2071 = vmatpush1.msra.mxu0 %v1844
    %2072 = vmatprep.subr.mxu0 %v1847
    %2073 = vmatpush1.msra.mxu0 %v1846
    %2074 = vmatprep.subr.mxu0 %v1849
    %2075 = vmatpush1.msra.mxu0 %v1848
    %2076 = vmatprep.subr.mxu0 %v1851
    %2077 = vmatpush1.msra.mxu0 %v1850
    %2078 = vmatprep.subr.mxu0 %v1853
    %2079 = vmatpush1.msra.mxu0 %v1852
    %2080 = vmatprep.subr.mxu0 %v1855
    %2081 = vmatpush1.msra.mxu0 %v1854
    %2082 = vmatprep.subr.mxu0 %v1857
    %2083 = vmatpush1.msra.mxu0 %v1856
    %2084 = vmatprep.subr.mxu0 %v1859
    %2085 = vmatpush1.msra.mxu0 %v1858
    %2086 = vmatprep.subr.mxu0 %v1861
    %2087 = vmatpush1.msra.mxu0 %v1860
    %2088 = vmatprep.subr.mxu0 %v1863
    %2089 = vmatpush1.msra.mxu0 %v1862
    %2090 = vmatprep.subr.mxu0 %v1865
    %2091 = vmatpush1.msra.mxu0 %v1864
    %2092 = vmatprep.subr.mxu0 %v1867
    %2093 = vmatpush1.msra.mxu0 %v1866
    %2094 = vmatprep.subr.mxu0 %v1869
    %2095 = vmatpush1.msra.mxu0 %v1868
    %2096 = vmatprep.subr.mxu0 %v1871
    %2097 = vmatpush1.msra.mxu0 %v1870
    %2098 = vmatprep.subr.mxu0 %v1873
    %2099 = vmatpush1.msra.mxu0 %v1872
    %2100 = vmatprep.subr.mxu0 %v2050
    %2101 = vmatpush1.msra.mxu0 %v2047
    %2102 = vmatprep.subr.mxu0 0.0
    %2103 = vmatpush1.msra.mxu0 0.0
    %2104 = vmatprep.subr.mxu0 0.0
    %2105 = vmatpush1.msra.mxu0 0.0
    %2106 = vmatprep.subr.mxu0 0.0
    %2107 = vmatpush1.msra.mxu0 0.0
    %2108 = vmatprep.subr.mxu0 0.0
    %2109 = vmatpush1.msra.mxu0 0.0
    %2110 = vmatprep.subr.mxu0 0.0
    %2111 = vmatpush1.msra.mxu0 0.0
    %2112 = vmatprep.subr.mxu0 0.0
    %2113 = vmatpush1.msra.mxu0 0.0
    %2114 = vmatprep.subr.mxu0 0.0
    %2115 = vmatpush1.msra.mxu0 0.0
    %2116 = vmatprep.mubr.f32.mxu0 %v2023
    %2117 = vmatmul.mubr.f32.gmra.mrb[0].mxu0 %v1976
    %v2118 = vpop.f32.mrb[0].mxu0
    %v2119 = vadd.f32 0.0, %v2118
    %v2120 = vpop.f32.mrb[0].mxu0
    %v2121 = vadd.f32 0.0, %v2120
    %2122 = vmatprep.mubr.f32.mxu0 %v2026
    %2123 = vmatmul.mubr.f32.gmra.mrb[0].mxu0 %v1982
    %v2124 = vpop.f32.mrb[0].mxu0
    %v2125 = vadd.f32 0.0, %v2124
    %v2126 = vpop.f32.mrb[0].mxu0
    %v2127 = vadd.f32 0.0, %v2126
    %2128 = vmatprep.mubr.f32.mxu0 %v2029
    %2129 = vmatmul.mubr.f32.gmra.mrb[0].mxu0 %v1988
    %v2130 = vpop.f32.mrb[0].mxu0
    %v2131 = vadd.f32 0.0, %v2130
    %v2132 = vpop.f32.mrb[0].mxu0
    %v2133 = vadd.f32 0.0, %v2132
    %2134 = vmatprep.mubr.f32.mxu0 %v2032
    %2135 = vmatmul.mubr.f32.gmra.mrb[0].mxu0 %v1994
    %v2136 = vpop.f32.mrb[0].mxu0
    %v2137 = vadd.f32 0.0, %v2136
    %v2138 = vpop.f32.mrb[0].mxu0
    %v2139 = vadd.f32 0.0, %v2138
    %2140 = vmatprep.mubr.f32.mxu0 %v2035
    %2141 = vmatmul.mubr.f32.gmra.mrb[0].mxu0 %v2000
    %v2142 = vpop.f32.mrb[0].mxu0
    %v2143 = vadd.f32 0.0, %v2142
    %v2144 = vpop.f32.mrb[0].mxu0
    %v2145 = vadd.f32 0.0, %v2144
    %2146 = vmatprep.mubr.f32.mxu0 %v2038
    %2147 = vmatmul.mubr.f32.gmra.mrb[0].mxu0 %v2006
    %v2148 = vpop.f32.mrb[0].mxu0
    %v2149 = vadd.f32 0.0, %v2148
    %v2150 = vpop.f32.mrb[0].mxu0
    %v2151 = vadd.f32 0.0, %v2150
    %2152 = vmatprep.mubr.f32.mxu0 %v2041
    %2153 = vmatmul.mubr.f32.gmra.mrb[0].mxu0 %v2012
    %v2154 = vpop.f32.mrb[0].mxu0
    %v2155 = vadd.f32 0.0, %v2154
    %v2156 = vpop.f32.mrb[0].mxu0
    %v2157 = vadd.f32 0.0, %v2156
    %2158 = vmatprep.mubr.f32.mxu0 %v2044
    %2159 = vmatmul.mubr.f32.gmra.mrb[0].mxu0 %v2018
    %v2160 = vpop.f32.mrb[0].mxu0
    %v2161 = vadd.f32 0.0, %v2160
    %v2162 = vpop.f32.mrb[0].mxu0
    %v2163 = vadd.f32 0.0, %v2162
    %2164 = vdwg.mxu0
    %v2165 = vadd.f32 %v1665, %v2119
    %v2166 = vadd.f32 %v1667, %v2121
    %v2167 = vadd.f32 %v1671, %v2125
    %v2168 = vadd.f32 %v1673, %v2127
    %v2169 = vadd.f32 %v1677, %v2131
    %v2170 = vadd.f32 %v1679, %v2133
    %v2171 = vadd.f32 %v1683, %v2137
    %v2172 = vadd.f32 %v1685, %v2139
    %v2173 = vadd.f32 %v1689, %v2143
    %v2174 = vadd.f32 %v1691, %v2145
    %v2175 = vadd.f32 %v1695, %v2149
    %v2176 = vadd.f32 %v1697, %v2151
    %v2177 = vadd.f32 %v1701, %v2155
    %v2178 = vadd.f32 %v1703, %v2157
    %v2179 = vadd.f32 %v1707, %v2161
    %v2180 = vadd.f32 %v1709, %v2163
    %v2181 = vadd.s32 %v800, 4294967295
    %v2182 = vadd.s32 %v801, 4294967295
    %vm2183 = vcmp.eq.s32.totalorder %v774, %v2181
    %vm2184 = vcmp.eq.s32.totalorder %v774, %v2182
    %vm2185 = vcmp.eq.s32.totalorder %v775, %v2181
    %vm2186 = vcmp.eq.s32.totalorder %v775, %v2182
    %vm2187 = vcmp.eq.s32.totalorder %v776, %v2181
    %vm2188 = vcmp.eq.s32.totalorder %v776, %v2182
    %vm2189 = vcmp.eq.s32.totalorder %v777, %v2181
    %vm2190 = vcmp.eq.s32.totalorder %v777, %v2182
    %vm2191 = vcmp.eq.s32.totalorder %v778, %v2181
    %vm2192 = vcmp.eq.s32.totalorder %v778, %v2182
    %vm2193 = vcmp.eq.s32.totalorder %v779, %v2181
    %vm2194 = vcmp.eq.s32.totalorder %v779, %v2182
    %vm2195 = vcmp.eq.s32.totalorder %v780, %v2181
    %vm2196 = vcmp.eq.s32.totalorder %v780, %v2182
    %vm2197 = vcmp.eq.s32.totalorder %v781, %v2181
    %vm2198 = vcmp.eq.s32.totalorder %v781, %v2182
    %vm2199 = vcmp.eq.s32.totalorder %v782, %v2181
    %vm2200 = vcmp.eq.s32.totalorder %v782, %v2182
    %vm2201 = vcmp.eq.s32.totalorder %v783, %v2181
    %vm2202 = vcmp.eq.s32.totalorder %v783, %v2182
    %vm2203 = vcmp.eq.s32.totalorder %v784, %v2181
    %vm2204 = vcmp.eq.s32.totalorder %v784, %v2182
    %vm2205 = vcmp.eq.s32.totalorder %v785, %v2181
    %vm2206 = vcmp.eq.s32.totalorder %v785, %v2182
    %vm2207 = vcmp.eq.s32.totalorder %v786, %v2181
    %vm2208 = vcmp.eq.s32.totalorder %v786, %v2182
    %vm2209 = vcmp.eq.s32.totalorder %v787, %v2181
    %vm2210 = vcmp.eq.s32.totalorder %v787, %v2182
    %vm2211 = vcmp.eq.s32.totalorder %v788, %v2181
    %vm2212 = vcmp.eq.s32.totalorder %v788, %v2182
    %vm2213 = vcmp.eq.s32.totalorder %v789, %v2181
    %vm2214 = vcmp.eq.s32.totalorder %v789, %v2182
    %vm2215 = vcmp.eq.s32.totalorder %v790, %v2181
    %vm2216 = vcmp.eq.s32.totalorder %v790, %v2182
    %vm2217 = vcmp.eq.s32.totalorder %v791, %v2181
    %vm2218 = vcmp.eq.s32.totalorder %v791, %v2182
    %vm2219 = vcmp.eq.s32.totalorder %v792, %v2181
    %vm2220 = vcmp.eq.s32.totalorder %v792, %v2182
    %vm2221 = vcmp.eq.s32.totalorder %v793, %v2181
    %vm2222 = vcmp.eq.s32.totalorder %v793, %v2182
    %vm2223 = vcmp.eq.s32.totalorder %v794, %v2181
    %vm2224 = vcmp.eq.s32.totalorder %v794, %v2182
    %vm2225 = vcmp.eq.s32.totalorder %v795, %v2181
    %vm2226 = vcmp.eq.s32.totalorder %v795, %v2182
    %vm2227 = vcmp.eq.s32.totalorder %v796, %v2181
    %vm2228 = vcmp.eq.s32.totalorder %v796, %v2182
    %vm2229 = vcmp.eq.s32.totalorder %v797, %v2181
    %vm2230 = vcmp.eq.s32.totalorder %v797, %v2182
    %vm2231 = vcmp.eq.s32.totalorder %v798, %v2181
    %vm2232 = vcmp.eq.s32.totalorder %v798, %v2182
    %v2233 = vsel %vm2183, 1.0, 0.0
    %v2234 = vsel %vm2184, 1.0, 0.0
    %v2235 = vsel %vm2185, 1.0, 0.0
    %v2236 = vsel %vm2186, 1.0, 0.0
    %v2237 = vsel %vm2187, 1.0, 0.0
    %v2238 = vsel %vm2188, 1.0, 0.0
    %v2239 = vsel %vm2189, 1.0, 0.0
    %v2240 = vsel %vm2190, 1.0, 0.0
    %v2241 = vsel %vm2191, 1.0, 0.0
    %v2242 = vsel %vm2192, 1.0, 0.0
    %v2243 = vsel %vm2193, 1.0, 0.0
    %v2244 = vsel %vm2194, 1.0, 0.0
    %v2245 = vsel %vm2195, 1.0, 0.0
    %v2246 = vsel %vm2196, 1.0, 0.0
    %v2247 = vsel %vm2197, 1.0, 0.0
    %v2248 = vsel %vm2198, 1.0, 0.0
    %v2249 = vsel %vm2199, 1.0, 0.0
    %v2250 = vsel %vm2200, 1.0, 0.0
    %v2251 = vsel %vm2201, 1.0, 0.0
    %v2252 = vsel %vm2202, 1.0, 0.0
    %v2253 = vsel %vm2203, 1.0, 0.0
    %v2254 = vsel %vm2204, 1.0, 0.0
    %v2255 = vsel %vm2205, 1.0, 0.0
    %v2256 = vsel %vm2206, 1.0, 0.0
    %v2257 = vsel %vm2207, 1.0, 0.0
    %v2258 = vsel %vm2208, 1.0, 0.0
    %v2259 = vsel %vm2209, 1.0, 0.0
    %v2260 = vsel %vm2210, 1.0, 0.0
    %v2261 = vsel %vm2211, 1.0, 0.0
    %v2262 = vsel %vm2212, 1.0, 0.0
    %v2263 = vsel %vm2213, 1.0, 0.0
    %v2264 = vsel %vm2214, 1.0, 0.0
    %v2265 = vsel %vm2215, 1.0, 0.0
    %v2266 = vsel %vm2216, 1.0, 0.0
    %v2267 = vsel %vm2217, 1.0, 0.0
    %v2268 = vsel %vm2218, 1.0, 0.0
    %v2269 = vsel %vm2219, 1.0, 0.0
    %v2270 = vsel %vm2220, 1.0, 0.0
    %v2271 = vsel %vm2221, 1.0, 0.0
    %v2272 = vsel %vm2222, 1.0, 0.0
    %v2273 = vsel %vm2223, 1.0, 0.0
    %v2274 = vsel %vm2224, 1.0, 0.0
    %v2275 = vsel %vm2225, 1.0, 0.0
    %v2276 = vsel %vm2226, 1.0, 0.0
    %v2277 = vsel %vm2227, 1.0, 0.0
    %v2278 = vsel %vm2228, 1.0, 0.0
    %v2279 = vsel %vm2229, 1.0, 0.0
    %v2280 = vsel %vm2230, 1.0, 0.0
    %v2281 = vsel %vm2231, 1.0, 0.0
    %v2282 = vsel %vm2232, 1.0, 0.0
    %s2283 = scalar_lea.vmem [#allocation2], 6
    %v2284 = vld [vmem:[%s2283] sm:$0x3]
    %v2286 = vlaneseq
    %v2287 = vshrl.u32 %v2286, 7
    %v2288 = vsub.s32 0, %v2287
    %v2289 = vrot.slane %v2284, %v2288
    %v2290 = vlaneseq
    %v2291 = vshrl.u32 %v2290, 7
    %v2292 = vsub.s32 1, %v2291
    %v2293 = vrot.slane %v2284, %v2292
    %v2296 = vmul.f32 %v2233, %v2289
    %v2297 = vmul.f32 %v2234, %v2293
    %v2298 = vmul.f32 %v2235, %v2289
    %v2299 = vmul.f32 %v2236, %v2293
    %v2300 = vmul.f32 %v2237, %v2289
    %v2301 = vmul.f32 %v2238, %v2293
    %v2302 = vmul.f32 %v2239, %v2289
    %v2303 = vmul.f32 %v2240, %v2293
    %v2304 = vmul.f32 %v2241, %v2289
    %v2305 = vmul.f32 %v2242, %v2293
    %v2306 = vmul.f32 %v2243, %v2289
    %v2307 = vmul.f32 %v2244, %v2293
    %v2308 = vmul.f32 %v2245, %v2289
    %v2309 = vmul.f32 %v2246, %v2293
    %v2310 = vmul.f32 %v2247, %v2289
    %v2311 = vmul.f32 %v2248, %v2293
    %v2312 = vmul.f32 %v2249, %v2289
    %v2313 = vmul.f32 %v2250, %v2293
    %v2314 = vmul.f32 %v2251, %v2289
    %v2315 = vmul.f32 %v2252, %v2293
    %v2316 = vmul.f32 %v2253, %v2289
    %v2317 = vmul.f32 %v2254, %v2293
    %v2318 = vmul.f32 %v2255, %v2289
    %v2319 = vmul.f32 %v2256, %v2293
    %v2320 = vmul.f32 %v2257, %v2289
    %v2321 = vmul.f32 %v2258, %v2293
    %v2322 = vmul.f32 %v2259, %v2289
    %v2323 = vmul.f32 %v2260, %v2293
    %v2324 = vmul.f32 %v2261, %v2289
    %v2325 = vmul.f32 %v2262, %v2293
    %v2326 = vmul.f32 %v2263, %v2289
    %v2327 = vmul.f32 %v2264, %v2293
    %v2328 = vmul.f32 %v2265, %v2289
    %v2329 = vmul.f32 %v2266, %v2293
    %v2330 = vmul.f32 %v2267, %v2289
    %v2331 = vmul.f32 %v2268, %v2293
    %v2332 = vmul.f32 %v2269, %v2289
    %v2333 = vmul.f32 %v2270, %v2293
    %v2334 = vmul.f32 %v2271, %v2289
    %v2335 = vmul.f32 %v2272, %v2293
    %v2336 = vmul.f32 %v2273, %v2289
    %v2337 = vmul.f32 %v2274, %v2293
    %v2338 = vmul.f32 %v2275, %v2289
    %v2339 = vmul.f32 %v2276, %v2293
    %v2340 = vmul.f32 %v2277, %v2289
    %v2341 = vmul.f32 %v2278, %v2293
    %v2342 = vmul.f32 %v2279, %v2289
    %v2343 = vmul.f32 %v2280, %v2293
    %v2344 = vmul.f32 %v2281, %v2289
    %v2345 = vmul.f32 %v2282, %v2293
    %s2346 = scalar_lea.vmem [#allocation7], 192
    %v2347 = vld [vmem:[%s2346] sm:$0xff]
    %v2348 = vld [vmem:[%s2346 + $0x8] sm:$0xff]
    %v2349 = vld [vmem:[%s2346 + $0x10] sm:$0xff]
    %v2350 = vld [vmem:[%s2346 + $0x18] sm:$0xff]
    %v2351 = vld [vmem:[%s2346 + $0x20] sm:$0xff]
    %v2352 = vld [vmem:[%s2346 + $0x28] sm:$0xff]
    %v2353 = vld [vmem:[%s2346 + $0x30] sm:$0xff]
    %v2354 = vld [vmem:[%s2346 + $0x38] sm:$0xff]
    %v2356 = vsel %vm974, %v2347, 0
    %v2359 = vsel %vm974, %v2348, 0
    %v2362 = vsel %vm974, %v2349, 0
    %v2365 = vsel %vm974, %v2350, 0
    %v2368 = vsel %vm974, %v2351, 0
    %v2371 = vsel %vm974, %v2352, 0
    %v2374 = vsel %vm974, %v2353, 0
    %v2377 = vsel %vm974, %v2354, 0
    %2379 = vmatprep.subr.mxu0 %v758
    %2380 = vmatpush1.msra.mxu0 %v757
    %2381 = vmatprep.subr.mxu0 %v760
    %2382 = vmatpush1.msra.mxu0 %v759
    %2383 = vmatprep.subr.mxu0 %v762
    %2384 = vmatpush1.msra.mxu0 %v761
    %2385 = vmatprep.subr.mxu0 %v764
    %2386 = vmatpush1.msra.mxu0 %v763
    %2387 = vmatprep.subr.mxu0 %v766
    %2388 = vmatpush1.msra.mxu0 %v765
    %2389 = vmatprep.subr.mxu0 %v768
    %2390 = vmatpush1.msra.mxu0 %v767
    %2391 = vmatprep.subr.mxu0 %v770
    %2392 = vmatpush1.msra.mxu0 %v769
    %2393 = vmatprep.subr.mxu0 %v772
    %2394 = vmatpush1.msra.mxu0 %v771
    %2395 = vmatprep.subr.mxu0 0.0
    %2396 = vmatpush1.msra.mxu0 0.0
    %2397 = vmatprep.subr.mxu0 0.0
    %2398 = vmatpush1.msra.mxu0 0.0
    %2399 = vmatprep.subr.mxu0 0.0
    %2400 = vmatpush1.msra.mxu0 0.0
    %2401 = vmatprep.subr.mxu0 0.0
    %2402 = vmatpush1.msra.mxu0 0.0
    %2403 = vmatprep.subr.mxu0 0.0
    %2404 = vmatpush1.msra.mxu0 0.0
    %2405 = vmatprep.subr.mxu0 0.0
    %2406 = vmatpush1.msra.mxu0 0.0
    %2407 = vmatprep.subr.mxu0 0.0
    %2408 = vmatpush1.msra.mxu0 0.0
    %2409 = vmatprep.subr.mxu0 0.0
    %2410 = vmatpush1.msra.mxu0 0.0
    %2411 = vmatprep.subr.mxu0 0.0
    %2412 = vmatpush1.msra.mxu0 0.0
    %2413 = vmatprep.subr.mxu0 0.0
    %2414 = vmatpush1.msra.mxu0 0.0
    %2415 = vmatprep.subr.mxu0 0.0
    %2416 = vmatpush1.msra.mxu0 0.0
    %2417 = vmatprep.subr.mxu0 0.0
    %2418 = vmatpush1.msra.mxu0 0.0
    %2419 = vmatprep.subr.mxu0 0.0
    %2420 = vmatpush1.msra.mxu0 0.0
    %2421 = vmatprep.subr.mxu0 0.0
    %2422 = vmatpush1.msra.mxu0 0.0
    %2423 = vmatprep.subr.mxu0 0.0
    %2424 = vmatpush1.msra.mxu0 0.0
    %2425 = vmatprep.subr.mxu0 0.0
    %2426 = vmatpush1.msra.mxu0 0.0
    %2427 = vmatprep.subr.mxu0 0.0
    %2428 = vmatpush1.msra.mxu0 0.0
    %2429 = vmatprep.subr.mxu0 0.0
    %2430 = vmatpush1.msra.mxu0 0.0
    %2431 = vmatprep.subr.mxu0 0.0
    %2432 = vmatpush1.msra.mxu0 0.0
    %2433 = vmatprep.subr.mxu0 0.0
    %2434 = vmatpush1.msra.mxu0 0.0
    %2435 = vmatprep.subr.mxu0 0.0
    %2436 = vmatpush1.msra.mxu0 0.0
    %2437 = vmatprep.subr.mxu0 0.0
    %2438 = vmatpush1.msra.mxu0 0.0
    %2439 = vmatprep.subr.mxu0 0.0
    %2440 = vmatpush1.msra.mxu0 0.0
    %2441 = vmatprep.subr.mxu0 0.0
    %2442 = vmatpush1.msra.mxu0 0.0
    %2443 = vmatprep.mubr.f32.mxu0 0.0
    %2444 = vmatmul.mubr.f32.gmra.mrb[0].mxu0 %v2356
    %v2445 = vpop.f32.mrb[0].mxu0
    %v2446 = vadd.f32 0.0, %v2445
    %v2447 = vpop.f32.mrb[0].mxu0
    %v2448 = vadd.f32 0.0, %v2447
    %2449 = vmatprep.mubr.f32.mxu0 0.0
    %2450 = vmatmul.mubr.f32.gmra.mrb[0].mxu0 %v2359
    %v2451 = vpop.f32.mrb[0].mxu0
    %v2452 = vadd.f32 0.0, %v2451
    %v2453 = vpop.f32.mrb[0].mxu0
    %v2454 = vadd.f32 0.0, %v2453
    %2455 = vmatprep.mubr.f32.mxu0 0.0
    %2456 = vmatmul.mubr.f32.gmra.mrb[0].mxu0 %v2362
    %v2457 = vpop.f32.mrb[0].mxu0
    %v2458 = vadd.f32 0.0, %v2457
    %v2459 = vpop.f32.mrb[0].mxu0
    %v2460 = vadd.f32 0.0, %v2459
    %2461 = vmatprep.mubr.f32.mxu0 0.0
    %2462 = vmatmul.mubr.f32.gmra.mrb[0].mxu0 %v2365
    %v2463 = vpop.f32.mrb[0].mxu0
    %v2464 = vadd.f32 0.0, %v2463
    %v2465 = vpop.f32.mrb[0].mxu0
    %v2466 = vadd.f32 0.0, %v2465
    %2467 = vmatprep.mubr.f32.mxu0 0.0
    %2468 = vmatmul.mubr.f32.gmra.mrb[0].mxu0 %v2368
    %v2469 = vpop.f32.mrb[0].mxu0
    %v2470 = vadd.f32 0.0, %v2469
    %v2471 = vpop.f32.mrb[0].mxu0
    %v2472 = vadd.f32 0.0, %v2471
    %2473 = vmatprep.mubr.f32.mxu0 0.0
    %2474 = vmatmul.mubr.f32.gmra.mrb[0].mxu0 %v2371
    %v2475 = vpop.f32.mrb[0].mxu0
    %v2476 = vadd.f32 0.0, %v2475
    %v2477 = vpop.f32.mrb[0].mxu0
    %v2478 = vadd.f32 0.0, %v2477
    %2479 = vmatprep.mubr.f32.mxu0 0.0
    %2480 = vmatmul.mubr.f32.gmra.mrb[0].mxu0 %v2374
    %v2481 = vpop.f32.mrb[0].mxu0
    %v2482 = vadd.f32 0.0, %v2481
    %v2483 = vpop.f32.mrb[0].mxu0
    %v2484 = vadd.f32 0.0, %v2483
    %2485 = vmatprep.mubr.f32.mxu0 0.0
    %2486 = vmatmul.mubr.f32.gmra.mrb[0].mxu0 %v2377
    %v2487 = vpop.f32.mrb[0].mxu0
    %v2488 = vadd.f32 0.0, %v2487
    %v2489 = vpop.f32.mrb[0].mxu0
    %v2490 = vadd.f32 0.0, %v2489
    %2491 = vdwg.mxu0
    %v2493 = vsel %vm1423, %v2448, 0
    %v2496 = vsel %vm1423, %v2454, 0
    %v2499 = vsel %vm1423, %v2460, 0
    %v2502 = vsel %vm1423, %v2466, 0
    %v2505 = vsel %vm1423, %v2472, 0
    %v2508 = vsel %vm1423, %v2478, 0
    %v2511 = vsel %vm1423, %v2484, 0
    %v2514 = vsel %vm1423, %v2490, 0
    %v2517 = vsel %vm1448, %v2344, 0
    %v2520 = vsel %vm1448, %v2345, 0
    %2522 = vmatprep.subr.mxu0 %v2297
    %2523 = vmatpush1.msra.mxu0 %v2296
    %2524 = vmatprep.subr.mxu0 %v2299
    %2525 = vmatpush1.msra.mxu0 %v2298
    %2526 = vmatprep.subr.mxu0 %v2301
    %2527 = vmatpush1.msra.mxu0 %v2300
    %2528 = vmatprep.subr.mxu0 %v2303
    %2529 = vmatpush1.msra.mxu0 %v2302
    %2530 = vmatprep.subr.mxu0 %v2305
    %2531 = vmatpush1.msra.mxu0 %v2304
    %2532 = vmatprep.subr.mxu0 %v2307
    %2533 = vmatpush1.msra.mxu0 %v2306
    %2534 = vmatprep.subr.mxu0 %v2309
    %2535 = vmatpush1.msra.mxu0 %v2308
    %2536 = vmatprep.subr.mxu0 %v2311
    %2537 = vmatpush1.msra.mxu0 %v2310
    %2538 = vmatprep.subr.mxu0 %v2313
    %2539 = vmatpush1.msra.mxu0 %v2312
    %2540 = vmatprep.subr.mxu0 %v2315
    %2541 = vmatpush1.msra.mxu0 %v2314
    %2542 = vmatprep.subr.mxu0 %v2317
    %2543 = vmatpush1.msra.mxu0 %v2316
    %2544 = vmatprep.subr.mxu0 %v2319
    %2545 = vmatpush1.msra.mxu0 %v2318
    %2546 = vmatprep.subr.mxu0 %v2321
    %2547 = vmatpush1.msra.mxu0 %v2320
    %2548 = vmatprep.subr.mxu0 %v2323
    %2549 = vmatpush1.msra.mxu0 %v2322
    %2550 = vmatprep.subr.mxu0 %v2325
    %2551 = vmatpush1.msra.mxu0 %v2324
    %2552 = vmatprep.subr.mxu0 %v2327
    %2553 = vmatpush1.msra.mxu0 %v2326
    %2554 = vmatprep.subr.mxu0 %v2329
    %2555 = vmatpush1.msra.mxu0 %v2328
    %2556 = vmatprep.subr.mxu0 %v2331
    %2557 = vmatpush1.msra.mxu0 %v2330
    %2558 = vmatprep.subr.mxu0 %v2333
    %2559 = vmatpush1.msra.mxu0 %v2332
    %2560 = vmatprep.subr.mxu0 %v2335
    %2561 = vmatpush1.msra.mxu0 %v2334
    %2562 = vmatprep.subr.mxu0 %v2337
    %2563 = vmatpush1.msra.mxu0 %v2336
    %2564 = vmatprep.subr.mxu0 %v2339
    %2565 = vmatpush1.msra.mxu0 %v2338
    %2566 = vmatprep.subr.mxu0 %v2341
    %2567 = vmatpush1.msra.mxu0 %v2340
    %2568 = vmatprep.subr.mxu0 %v2343
    %2569 = vmatpush1.msra.mxu0 %v2342
    %2570 = vmatprep.subr.mxu0 %v2520
    %2571 = vmatpush1.msra.mxu0 %v2517
    %2572 = vmatprep.subr.mxu0 0.0
    %2573 = vmatpush1.msra.mxu0 0.0
    %2574 = vmatprep.subr.mxu0 0.0
    %2575 = vmatpush1.msra.mxu0 0.0
    %2576 = vmatprep.subr.mxu0 0.0
    %2577 = vmatpush1.msra.mxu0 0.0
    %2578 = vmatprep.subr.mxu0 0.0
    %2579 = vmatpush1.msra.mxu0 0.0
    %2580 = vmatprep.subr.mxu0 0.0
    %2581 = vmatpush1.msra.mxu0 0.0
    %2582 = vmatprep.subr.mxu0 0.0
    %2583 = vmatpush1.msra.mxu0 0.0
    %2584 = vmatprep.subr.mxu0 0.0
    %2585 = vmatpush1.msra.mxu0 0.0
    %2586 = vmatprep.mubr.f32.mxu0 %v2493
    %2587 = vmatmul.mubr.f32.gmra.mrb[0].mxu0 %v2446
    %v2588 = vpop.f32.mrb[0].mxu0
    %v2589 = vadd.f32 0.0, %v2588
    %v2590 = vpop.f32.mrb[0].mxu0
    %v2591 = vadd.f32 0.0, %v2590
    %2592 = vmatprep.mubr.f32.mxu0 %v2496
    %2593 = vmatmul.mubr.f32.gmra.mrb[0].mxu0 %v2452
    %v2594 = vpop.f32.mrb[0].mxu0
    %v2595 = vadd.f32 0.0, %v2594
    %v2596 = vpop.f32.mrb[0].mxu0
    %v2597 = vadd.f32 0.0, %v2596
    %2598 = vmatprep.mubr.f32.mxu0 %v2499
    %2599 = vmatmul.mubr.f32.gmra.mrb[0].mxu0 %v2458
    %v2600 = vpop.f32.mrb[0].mxu0
    %v2601 = vadd.f32 0.0, %v2600
    %v2602 = vpop.f32.mrb[0].mxu0
    %v2603 = vadd.f32 0.0, %v2602
    %2604 = vmatprep.mubr.f32.mxu0 %v2502
    %2605 = vmatmul.mubr.f32.gmra.mrb[0].mxu0 %v2464
    %v2606 = vpop.f32.mrb[0].mxu0
    %v2607 = vadd.f32 0.0, %v2606
    %v2608 = vpop.f32.mrb[0].mxu0
    %v2609 = vadd.f32 0.0, %v2608
    %2610 = vmatprep.mubr.f32.mxu0 %v2505
    %2611 = vmatmul.mubr.f32.gmra.mrb[0].mxu0 %v2470
    %v2612 = vpop.f32.mrb[0].mxu0
    %v2613 = vadd.f32 0.0, %v2612
    %v2614 = vpop.f32.mrb[0].mxu0
    %v2615 = vadd.f32 0.0, %v2614
    %2616 = vmatprep.mubr.f32.mxu0 %v2508
    %2617 = vmatmul.mubr.f32.gmra.mrb[0].mxu0 %v2476
    %v2618 = vpop.f32.mrb[0].mxu0
    %v2619 = vadd.f32 0.0, %v2618
    %v2620 = vpop.f32.mrb[0].mxu0
    %v2621 = vadd.f32 0.0, %v2620
    %2622 = vmatprep.mubr.f32.mxu0 %v2511
    %2623 = vmatmul.mubr.f32.gmra.mrb[0].mxu0 %v2482
    %v2624 = vpop.f32.mrb[0].mxu0
    %v2625 = vadd.f32 0.0, %v2624
    %v2626 = vpop.f32.mrb[0].mxu0
    %v2627 = vadd.f32 0.0, %v2626
    %2628 = vmatprep.mubr.f32.mxu0 %v2514
    %2629 = vmatmul.mubr.f32.gmra.mrb[0].mxu0 %v2488
    %v2630 = vpop.f32.mrb[0].mxu0
    %v2631 = vadd.f32 0.0, %v2630
    %v2632 = vpop.f32.mrb[0].mxu0
    %v2633 = vadd.f32 0.0, %v2632
    %2634 = vdwg.mxu0
    %v2635 = vadd.f32 %v2165, %v2589
    %v2636 = vadd.f32 %v2166, %v2591
    %v2637 = vadd.f32 %v2167, %v2595
    %v2638 = vadd.f32 %v2168, %v2597
    %v2639 = vadd.f32 %v2169, %v2601
    %v2640 = vadd.f32 %v2170, %v2603
    %v2641 = vadd.f32 %v2171, %v2607
    %v2642 = vadd.f32 %v2172, %v2609
    %v2643 = vadd.f32 %v2173, %v2613
    %v2644 = vadd.f32 %v2174, %v2615
    %v2645 = vadd.f32 %v2175, %v2619
    %v2646 = vadd.f32 %v2176, %v2621
    %v2647 = vadd.f32 %v2177, %v2625
    %v2648 = vadd.f32 %v2178, %v2627
    %v2649 = vadd.f32 %v2179, %v2631
    %v2650 = vadd.f32 %v2180, %v2633
    %vm2651 = vcmp.eq.s32.totalorder %v774, %v800
    %vm2652 = vcmp.eq.s32.totalorder %v774, %v801
    %vm2653 = vcmp.eq.s32.totalorder %v775, %v800
    %vm2654 = vcmp.eq.s32.totalorder %v775, %v801
    %vm2655 = vcmp.eq.s32.totalorder %v776, %v800
    %vm2656 = vcmp.eq.s32.totalorder %v776, %v801
    %vm2657 = vcmp.eq.s32.totalorder %v777, %v800
    %vm2658 = vcmp.eq.s32.totalorder %v777, %v801
    %vm2659 = vcmp.eq.s32.totalorder %v778, %v800
    %vm2660 = vcmp.eq.s32.totalorder %v778, %v801
    %vm2661 = vcmp.eq.s32.totalorder %v779, %v800
    %vm2662 = vcmp.eq.s32.totalorder %v779, %v801
    %vm2663 = vcmp.eq.s32.totalorder %v780, %v800
    %vm2664 = vcmp.eq.s32.totalorder %v780, %v801
    %vm2665 = vcmp.eq.s32.totalorder %v781, %v800
    %vm2666 = vcmp.eq.s32.totalorder %v781, %v801
    %vm2667 = vcmp.eq.s32.totalorder %v782, %v800
    %vm2668 = vcmp.eq.s32.totalorder %v782, %v801
    %vm2669 = vcmp.eq.s32.totalorder %v783, %v800
    %vm2670 = vcmp.eq.s32.totalorder %v783, %v801
    %vm2671 = vcmp.eq.s32.totalorder %v784, %v800
    %vm2672 = vcmp.eq.s32.totalorder %v784, %v801
    %vm2673 = vcmp.eq.s32.totalorder %v785, %v800
    %vm2674 = vcmp.eq.s32.totalorder %v785, %v801
    %vm2675 = vcmp.eq.s32.totalorder %v786, %v800
    %vm2676 = vcmp.eq.s32.totalorder %v786, %v801
    %vm2677 = vcmp.eq.s32.totalorder %v787, %v800
    %vm2678 = vcmp.eq.s32.totalorder %v787, %v801
    %vm2679 = vcmp.eq.s32.totalorder %v788, %v800
    %vm2680 = vcmp.eq.s32.totalorder %v788, %v801
    %vm2681 = vcmp.eq.s32.totalorder %v789, %v800
    %vm2682 = vcmp.eq.s32.totalorder %v789, %v801
    %vm2683 = vcmp.eq.s32.totalorder %v790, %v800
    %vm2684 = vcmp.eq.s32.totalorder %v790, %v801
    %vm2685 = vcmp.eq.s32.totalorder %v791, %v800
    %vm2686 = vcmp.eq.s32.totalorder %v791, %v801
    %vm2687 = vcmp.eq.s32.totalorder %v792, %v800
    %vm2688 = vcmp.eq.s32.totalorder %v792, %v801
    %vm2689 = vcmp.eq.s32.totalorder %v793, %v800
    %vm2690 = vcmp.eq.s32.totalorder %v793, %v801
    %vm2691 = vcmp.eq.s32.totalorder %v794, %v800
    %vm2692 = vcmp.eq.s32.totalorder %v794, %v801
    %vm2693 = vcmp.eq.s32.totalorder %v795, %v800
    %vm2694 = vcmp.eq.s32.totalorder %v795, %v801
    %vm2695 = vcmp.eq.s32.totalorder %v796, %v800
    %vm2696 = vcmp.eq.s32.totalorder %v796, %v801
    %vm2697 = vcmp.eq.s32.totalorder %v797, %v800
    %vm2698 = vcmp.eq.s32.totalorder %v797, %v801
    %vm2699 = vcmp.eq.s32.totalorder %v798, %v800
    %vm2700 = vcmp.eq.s32.totalorder %v798, %v801
    %v2701 = vsel %vm2651, 1.0, 0.0
    %v2702 = vsel %vm2652, 1.0, 0.0
    %v2703 = vsel %vm2653, 1.0, 0.0
    %v2704 = vsel %vm2654, 1.0, 0.0
    %v2705 = vsel %vm2655, 1.0, 0.0
    %v2706 = vsel %vm2656, 1.0, 0.0
    %v2707 = vsel %vm2657, 1.0, 0.0
    %v2708 = vsel %vm2658, 1.0, 0.0
    %v2709 = vsel %vm2659, 1.0, 0.0
    %v2710 = vsel %vm2660, 1.0, 0.0
    %v2711 = vsel %vm2661, 1.0, 0.0
    %v2712 = vsel %vm2662, 1.0, 0.0
    %v2713 = vsel %vm2663, 1.0, 0.0
    %v2714 = vsel %vm2664, 1.0, 0.0
    %v2715 = vsel %vm2665, 1.0, 0.0
    %v2716 = vsel %vm2666, 1.0, 0.0
    %v2717 = vsel %vm2667, 1.0, 0.0
    %v2718 = vsel %vm2668, 1.0, 0.0
    %v2719 = vsel %vm2669, 1.0, 0.0
    %v2720 = vsel %vm2670, 1.0, 0.0
    %v2721 = vsel %vm2671, 1.0, 0.0
    %v2722 = vsel %vm2672, 1.0, 0.0
    %v2723 = vsel %vm2673, 1.0, 0.0
    %v2724 = vsel %vm2674, 1.0, 0.0
    %v2725 = vsel %vm2675, 1.0, 0.0
    %v2726 = vsel %vm2676, 1.0, 0.0
    %v2727 = vsel %vm2677, 1.0, 0.0
    %v2728 = vsel %vm2678, 1.0, 0.0
    %v2729 = vsel %vm2679, 1.0, 0.0
    %v2730 = vsel %vm2680, 1.0, 0.0
    %v2731 = vsel %vm2681, 1.0, 0.0
    %v2732 = vsel %vm2682, 1.0, 0.0
    %v2733 = vsel %vm2683, 1.0, 0.0
    %v2734 = vsel %vm2684, 1.0, 0.0
    %v2735 = vsel %vm2685, 1.0, 0.0
    %v2736 = vsel %vm2686, 1.0, 0.0
    %v2737 = vsel %vm2687, 1.0, 0.0
    %v2738 = vsel %vm2688, 1.0, 0.0
    %v2739 = vsel %vm2689, 1.0, 0.0
    %v2740 = vsel %vm2690, 1.0, 0.0
    %v2741 = vsel %vm2691, 1.0, 0.0
    %v2742 = vsel %vm2692, 1.0, 0.0
    %v2743 = vsel %vm2693, 1.0, 0.0
    %v2744 = vsel %vm2694, 1.0, 0.0
    %v2745 = vsel %vm2695, 1.0, 0.0
    %v2746 = vsel %vm2696, 1.0, 0.0
    %v2747 = vsel %vm2697, 1.0, 0.0
    %v2748 = vsel %vm2698, 1.0, 0.0
    %v2749 = vsel %vm2699, 1.0, 0.0
    %v2750 = vsel %vm2700, 1.0, 0.0
    %s2751 = scalar_lea.vmem [#allocation2], 8
    %v2752 = vld [vmem:[%s2751] sm:$0x3]
    %v2754 = vlaneseq
    %v2755 = vshrl.u32 %v2754, 7
    %v2756 = vsub.s32 0, %v2755
    %v2757 = vrot.slane %v2752, %v2756
    %v2758 = vlaneseq
    %v2759 = vshrl.u32 %v2758, 7
    %v2760 = vsub.s32 1, %v2759
    %v2761 = vrot.slane %v2752, %v2760
    %v2764 = vmul.f32 %v2701, %v2757
    %v2765 = vmul.f32 %v2702, %v2761
    %v2766 = vmul.f32 %v2703, %v2757
    %v2767 = vmul.f32 %v2704, %v2761
    %v2768 = vmul.f32 %v2705, %v2757
    %v2769 = vmul.f32 %v2706, %v2761
    %v2770 = vmul.f32 %v2707, %v2757
    %v2771 = vmul.f32 %v2708, %v2761
    %v2772 = vmul.f32 %v2709, %v2757
    %v2773 = vmul.f32 %v2710, %v2761
    %v2774 = vmul.f32 %v2711, %v2757
    %v2775 = vmul.f32 %v2712, %v2761
    %v2776 = vmul.f32 %v2713, %v2757
    %v2777 = vmul.f32 %v2714, %v2761
    %v2778 = vmul.f32 %v2715, %v2757
    %v2779 = vmul.f32 %v2716, %v2761
    %v2780 = vmul.f32 %v2717, %v2757
    %v2781 = vmul.f32 %v2718, %v2761
    %v2782 = vmul.f32 %v2719, %v2757
    %v2783 = vmul.f32 %v2720, %v2761
    %v2784 = vmul.f32 %v2721, %v2757
    %v2785 = vmul.f32 %v2722, %v2761
    %v2786 = vmul.f32 %v2723, %v2757
    %v2787 = vmul.f32 %v2724, %v2761
    %v2788 = vmul.f32 %v2725, %v2757
    %v2789 = vmul.f32 %v2726, %v2761
    %v2790 = vmul.f32 %v2727, %v2757
    %v2791 = vmul.f32 %v2728, %v2761
    %v2792 = vmul.f32 %v2729, %v2757
    %v2793 = vmul.f32 %v2730, %v2761
    %v2794 = vmul.f32 %v2731, %v2757
    %v2795 = vmul.f32 %v2732, %v2761
    %v2796 = vmul.f32 %v2733, %v2757
    %v2797 = vmul.f32 %v2734, %v2761
    %v2798 = vmul.f32 %v2735, %v2757
    %v2799 = vmul.f32 %v2736, %v2761
    %v2800 = vmul.f32 %v2737, %v2757
    %v2801 = vmul.f32 %v2738, %v2761
    %v2802 = vmul.f32 %v2739, %v2757
    %v2803 = vmul.f32 %v2740, %v2761
    %v2804 = vmul.f32 %v2741, %v2757
    %v2805 = vmul.f32 %v2742, %v2761
    %v2806 = vmul.f32 %v2743, %v2757
    %v2807 = vmul.f32 %v2744, %v2761
    %v2808 = vmul.f32 %v2745, %v2757
    %v2809 = vmul.f32 %v2746, %v2761
    %v2810 = vmul.f32 %v2747, %v2757
    %v2811 = vmul.f32 %v2748, %v2761
    %v2812 = vmul.f32 %v2749, %v2757
    %v2813 = vmul.f32 %v2750, %v2761
    %s2814 = scalar_lea.vmem [#allocation7], 256
    %v2815 = vld [vmem:[%s2814] sm:$0xff]
    %v2816 = vld [vmem:[%s2814 + $0x8] sm:$0xff]
    %v2817 = vld [vmem:[%s2814 + $0x10] sm:$0xff]
    %v2818 = vld [vmem:[%s2814 + $0x18] sm:$0xff]
    %v2819 = vld [vmem:[%s2814 + $0x20] sm:$0xff]
    %v2820 = vld [vmem:[%s2814 + $0x28] sm:$0xff]
    %v2821 = vld [vmem:[%s2814 + $0x30] sm:$0xff]
    %v2822 = vld [vmem:[%s2814 + $0x38] sm:$0xff]
    %v2824 = vsel %vm974, %v2815, 0
    %v2827 = vsel %vm974, %v2816, 0
    %v2830 = vsel %vm974, %v2817, 0
    %v2833 = vsel %vm974, %v2818, 0
    %v2836 = vsel %vm974, %v2819, 0
    %v2839 = vsel %vm974, %v2820, 0
    %v2842 = vsel %vm974, %v2821, 0
    %v2845 = vsel %vm974, %v2822, 0
    %2847 = vmatprep.subr.mxu0 %v758
    %2848 = vmatpush1.msra.mxu0 %v757
    %2849 = vmatprep.subr.mxu0 %v760
    %2850 = vmatpush1.msra.mxu0 %v759
    %2851 = vmatprep.subr.mxu0 %v762
    %2852 = vmatpush1.msra.mxu0 %v761
    %2853 = vmatprep.subr.mxu0 %v764
    %2854 = vmatpush1.msra.mxu0 %v763
    %2855 = vmatprep.subr.mxu0 %v766
    %2856 = vmatpush1.msra.mxu0 %v765
    %2857 = vmatprep.subr.mxu0 %v768
    %2858 = vmatpush1.msra.mxu0 %v767
    %2859 = vmatprep.subr.mxu0 %v770
    %2860 = vmatpush1.msra.mxu0 %v769
    %2861 = vmatprep.subr.mxu0 %v772
    %2862 = vmatpush1.msra.mxu0 %v771
    %2863 = vmatprep.subr.mxu0 0.0
    %2864 = vmatpush1.msra.mxu0 0.0
    %2865 = vmatprep.subr.mxu0 0.0
    %2866 = vmatpush1.msra.mxu0 0.0
    %2867 = vmatprep.subr.mxu0 0.0
    %2868 = vmatpush1.msra.mxu0 0.0
    %2869 = vmatprep.subr.mxu0 0.0
    %2870 = vmatpush1.msra.mxu0 0.0
    %2871 = vmatprep.subr.mxu0 0.0
    %2872 = vmatpush1.msra.mxu0 0.0
    %2873 = vmatprep.subr.mxu0 0.0
    %2874 = vmatpush1.msra.mxu0 0.0
    %2875 = vmatprep.subr.mxu0 0.0
    %2876 = vmatpush1.msra.mxu0 0.0
    %2877 = vmatprep.subr.mxu0 0.0
    %2878 = vmatpush1.msra.mxu0 0.0
    %2879 = vmatprep.subr.mxu0 0.0
    %2880 = vmatpush1.msra.mxu0 0.0
    %2881 = vmatprep.subr.mxu0 0.0
    %2882 = vmatpush1.msra.mxu0 0.0
    %2883 = vmatprep.subr.mxu0 0.0
    %2884 = vmatpush1.msra.mxu0 0.0
    %2885 = vmatprep.subr.mxu0 0.0
    %2886 = vmatpush1.msra.mxu0 0.0
    %2887 = vmatprep.subr.mxu0 0.0
    %2888 = vmatpush1.msra.mxu0 0.0
    %2889 = vmatprep.subr.mxu0 0.0
    %2890 = vmatpush1.msra.mxu0 0.0
    %2891 = vmatprep.subr.mxu0 0.0
    %2892 = vmatpush1.msra.mxu0 0.0
    %2893 = vmatprep.subr.mxu0 0.0
    %2894 = vmatpush1.msra.mxu0 0.0
    %2895 = vmatprep.subr.mxu0 0.0
    %2896 = vmatpush1.msra.mxu0 0.0
    %2897 = vmatprep.subr.mxu0 0.0
    %2898 = vmatpush1.msra.mxu0 0.0
    %2899 = vmatprep.subr.mxu0 0.0
    %2900 = vmatpush1.msra.mxu0 0.0
    %2901 = vmatprep.subr.mxu0 0.0
    %2902 = vmatpush1.msra.mxu0 0.0
    %2903 = vmatprep.subr.mxu0 0.0
    %2904 = vmatpush1.msra.mxu0 0.0
    %2905 = vmatprep.subr.mxu0 0.0
    %2906 = vmatpush1.msra.mxu0 0.0
    %2907 = vmatprep.subr.mxu0 0.0
    %2908 = vmatpush1.msra.mxu0 0.0
    %2909 = vmatprep.subr.mxu0 0.0
    %2910 = vmatpush1.msra.mxu0 0.0
    %2911 = vmatprep.mubr.f32.mxu0 0.0
    %2912 = vmatmul.mubr.f32.gmra.mrb[0].mxu0 %v2824
    %v2913 = vpop.f32.mrb[0].mxu0
    %v2914 = vadd.f32 0.0, %v2913
    %v2915 = vpop.f32.mrb[0].mxu0
    %v2916 = vadd.f32 0.0, %v2915
    %2917 = vmatprep.mubr.f32.mxu0 0.0
    %2918 = vmatmul.mubr.f32.gmra.mrb[0].mxu0 %v2827
    %v2919 = vpop.f32.mrb[0].mxu0
    %v2920 = vadd.f32 0.0, %v2919
    %v2921 = vpop.f32.mrb[0].mxu0
    %v2922 = vadd.f32 0.0, %v2921
    %2923 = vmatprep.mubr.f32.mxu0 0.0
    %2924 = vmatmul.mubr.f32.gmra.mrb[0].mxu0 %v2830
    %v2925 = vpop.f32.mrb[0].mxu0
    %v2926 = vadd.f32 0.0, %v2925
    %v2927 = vpop.f32.mrb[0].mxu0
    %v2928 = vadd.f32 0.0, %v2927
    %2929 = vmatprep.mubr.f32.mxu0 0.0
    %2930 = vmatmul.mubr.f32.gmra.mrb[0].mxu0 %v2833
    %v2931 = vpop.f32.mrb[0].mxu0
    %v2932 = vadd.f32 0.0, %v2931
    %v2933 = vpop.f32.mrb[0].mxu0
    %v2934 = vadd.f32 0.0, %v2933
    %2935 = vmatprep.mubr.f32.mxu0 0.0
    %2936 = vmatmul.mubr.f32.gmra.mrb[0].mxu0 %v2836
    %v2937 = vpop.f32.mrb[0].mxu0
    %v2938 = vadd.f32 0.0, %v2937
    %v2939 = vpop.f32.mrb[0].mxu0
    %v2940 = vadd.f32 0.0, %v2939
    %2941 = vmatprep.mubr.f32.mxu0 0.0
    %2942 = vmatmul.mubr.f32.gmra.mrb[0].mxu0 %v2839
    %v2943 = vpop.f32.mrb[0].mxu0
    %v2944 = vadd.f32 0.0, %v2943
    %v2945 = vpop.f32.mrb[0].mxu0
    %v2946 = vadd.f32 0.0, %v2945
    %2947 = vmatprep.mubr.f32.mxu0 0.0
    %2948 = vmatmul.mubr.f32.gmra.mrb[0].mxu0 %v2842
    %v2949 = vpop.f32.mrb[0].mxu0
    %v2950 = vadd.f32 0.0, %v2949
    %v2951 = vpop.f32.mrb[0].mxu0
    %v2952 = vadd.f32 0.0, %v2951
    %2953 = vmatprep.mubr.f32.mxu0 0.0
    %2954 = vmatmul.mubr.f32.gmra.mrb[0].mxu0 %v2845
    %v2955 = vpop.f32.mrb[0].mxu0
    %v2956 = vadd.f32 0.0, %v2955
    %v2957 = vpop.f32.mrb[0].mxu0
    %v2958 = vadd.f32 0.0, %v2957
    %2959 = vdwg.mxu0
    %v2961 = vsel %vm1423, %v2916, 0
    %v2964 = vsel %vm1423, %v2922, 0
    %v2967 = vsel %vm1423, %v2928, 0
    %v2970 = vsel %vm1423, %v2934, 0
    %v2973 = vsel %vm1423, %v2940, 0
    %v2976 = vsel %vm1423, %v2946, 0
    %v2979 = vsel %vm1423, %v2952, 0
    %v2982 = vsel %vm1423, %v2958, 0
    %v2985 = vsel %vm1448, %v2812, 0
    %v2988 = vsel %vm1448, %v2813, 0
    %2990 = vmatprep.subr.mxu0 %v2765
    %2991 = vmatpush1.msra.mxu0 %v2764
    %2992 = vmatprep.subr.mxu0 %v2767
    %2993 = vmatpush1.msra.mxu0 %v2766
    %2994 = vmatprep.subr.mxu0 %v2769
    %2995 = vmatpush1.msra.mxu0 %v2768
    %2996 = vmatprep.subr.mxu0 %v2771
    %2997 = vmatpush1.msra.mxu0 %v2770
    %2998 = vmatprep.subr.mxu0 %v2773
    %2999 = vmatpush1.msra.mxu0 %v2772
    %3000 = vmatprep.subr.mxu0 %v2775
    %3001 = vmatpush1.msra.mxu0 %v2774
    %3002 = vmatprep.subr.mxu0 %v2777
    %3003 = vmatpush1.msra.mxu0 %v2776
    %3004 = vmatprep.subr.mxu0 %v2779
    %3005 = vmatpush1.msra.mxu0 %v2778
    %3006 = vmatprep.subr.mxu0 %v2781
    %3007 = vmatpush1.msra.mxu0 %v2780
    %3008 = vmatprep.subr.mxu0 %v2783
    %3009 = vmatpush1.msra.mxu0 %v2782
    %3010 = vmatprep.subr.mxu0 %v2785
    %3011 = vmatpush1.msra.mxu0 %v2784
    %3012 = vmatprep.subr.mxu0 %v2787
    %3013 = vmatpush1.msra.mxu0 %v2786
    %3014 = vmatprep.subr.mxu0 %v2789
    %3015 = vmatpush1.msra.mxu0 %v2788
    %3016 = vmatprep.subr.mxu0 %v2791
    %3017 = vmatpush1.msra.mxu0 %v2790
    %3018 = vmatprep.subr.mxu0 %v2793
    %3019 = vmatpush1.msra.mxu0 %v2792
    %3020 = vmatprep.subr.mxu0 %v2795
    %3021 = vmatpush1.msra.mxu0 %v2794
    %3022 = vmatprep.subr.mxu0 %v2797
    %3023 = vmatpush1.msra.mxu0 %v2796
    %3024 = vmatprep.subr.mxu0 %v2799
    %3025 = vmatpush1.msra.mxu0 %v2798
    %3026 = vmatprep.subr.mxu0 %v2801
    %3027 = vmatpush1.msra.mxu0 %v2800
    %3028 = vmatprep.subr.mxu0 %v2803
    %3029 = vmatpush1.msra.mxu0 %v2802
    %3030 = vmatprep.subr.mxu0 %v2805
    %3031 = vmatpush1.msra.mxu0 %v2804
    %3032 = vmatprep.subr.mxu0 %v2807
    %3033 = vmatpush1.msra.mxu0 %v2806
    %3034 = vmatprep.subr.mxu0 %v2809
    %3035 = vmatpush1.msra.mxu0 %v2808
    %3036 = vmatprep.subr.mxu0 %v2811
    %3037 = vmatpush1.msra.mxu0 %v2810
    %3038 = vmatprep.subr.mxu0 %v2988
    %3039 = vmatpush1.msra.mxu0 %v2985
    %3040 = vmatprep.subr.mxu0 0.0
    %3041 = vmatpush1.msra.mxu0 0.0
    %3042 = vmatprep.subr.mxu0 0.0
    %3043 = vmatpush1.msra.mxu0 0.0
    %3044 = vmatprep.subr.mxu0 0.0
    %3045 = vmatpush1.msra.mxu0 0.0
    %3046 = vmatprep.subr.mxu0 0.0
    %3047 = vmatpush1.msra.mxu0 0.0
    %3048 = vmatprep.subr.mxu0 0.0
    %3049 = vmatpush1.msra.mxu0 0.0
    %3050 = vmatprep.subr.mxu0 0.0
    %3051 = vmatpush1.msra.mxu0 0.0
    %3052 = vmatprep.subr.mxu0 0.0
    %3053 = vmatpush1.msra.mxu0 0.0
    %3054 = vmatprep.mubr.f32.mxu0 %v2961
    %3055 = vmatmul.mubr.f32.gmra.mrb[0].mxu0 %v2914
    %v3056 = vpop.f32.mrb[0].mxu0
    %v3057 = vadd.f32 0.0, %v3056
    %v3058 = vpop.f32.mrb[0].mxu0
    %v3059 = vadd.f32 0.0, %v3058
    %3060 = vmatprep.mubr.f32.mxu0 %v2964
    %3061 = vmatmul.mubr.f32.gmra.mrb[0].mxu0 %v2920
    %v3062 = vpop.f32.mrb[0].mxu0
    %v3063 = vadd.f32 0.0, %v3062
    %v3064 = vpop.f32.mrb[0].mxu0
    %v3065 = vadd.f32 0.0, %v3064
    %3066 = vmatprep.mubr.f32.mxu0 %v2967
    %3067 = vmatmul.mubr.f32.gmra.mrb[0].mxu0 %v2926
    %v3068 = vpop.f32.mrb[0].mxu0
    %v3069 = vadd.f32 0.0, %v3068
    %v3070 = vpop.f32.mrb[0].mxu0
    %v3071 = vadd.f32 0.0, %v3070
    %3072 = vmatprep.mubr.f32.mxu0 %v2970
    %3073 = vmatmul.mubr.f32.gmra.mrb[0].mxu0 %v2932
    %v3074 = vpop.f32.mrb[0].mxu0
    %v3075 = vadd.f32 0.0, %v3074
    %v3076 = vpop.f32.mrb[0].mxu0
    %v3077 = vadd.f32 0.0, %v3076
    %3078 = vmatprep.mubr.f32.mxu0 %v2973
    %3079 = vmatmul.mubr.f32.gmra.mrb[0].mxu0 %v2938
    %v3080 = vpop.f32.mrb[0].mxu0
    %v3081 = vadd.f32 0.0, %v3080
    %v3082 = vpop.f32.mrb[0].mxu0
    %v3083 = vadd.f32 0.0, %v3082
    %3084 = vmatprep.mubr.f32.mxu0 %v2976
    %3085 = vmatmul.mubr.f32.gmra.mrb[0].mxu0 %v2944
    %v3086 = vpop.f32.mrb[0].mxu0
    %v3087 = vadd.f32 0.0, %v3086
    %v3088 = vpop.f32.mrb[0].mxu0
    %v3089 = vadd.f32 0.0, %v3088
    %3090 = vmatprep.mubr.f32.mxu0 %v2979
    %3091 = vmatmul.mubr.f32.gmra.mrb[0].mxu0 %v2950
    %v3092 = vpop.f32.mrb[0].mxu0
    %v3093 = vadd.f32 0.0, %v3092
    %v3094 = vpop.f32.mrb[0].mxu0
    %v3095 = vadd.f32 0.0, %v3094
    %3096 = vmatprep.mubr.f32.mxu0 %v2982
    %3097 = vmatmul.mubr.f32.gmra.mrb[0].mxu0 %v2956
    %v3098 = vpop.f32.mrb[0].mxu0
    %v3099 = vadd.f32 0.0, %v3098
    %v3100 = vpop.f32.mrb[0].mxu0
    %v3101 = vadd.f32 0.0, %v3100
    %3102 = vdwg.mxu0
    %v3103 = vadd.f32 %v2635, %v3057
    %v3104 = vadd.f32 %v2636, %v3059
    %v3105 = vadd.f32 %v2637, %v3063
    %v3106 = vadd.f32 %v2638, %v3065
    %v3107 = vadd.f32 %v2639, %v3069
    %v3108 = vadd.f32 %v2640, %v3071
    %v3109 = vadd.f32 %v2641, %v3075
    %v3110 = vadd.f32 %v2642, %v3077
    %v3111 = vadd.f32 %v2643, %v3081
    %v3112 = vadd.f32 %v2644, %v3083
    %v3113 = vadd.f32 %v2645, %v3087
    %v3114 = vadd.f32 %v2646, %v3089
    %v3115 = vadd.f32 %v2647, %v3093
    %v3116 = vadd.f32 %v2648, %v3095
    %v3117 = vadd.f32 %v2649, %v3099
    %v3118 = vadd.f32 %v2650, %v3101
    %v3119 = vadd.s32 %v800, 1
    %v3120 = vadd.s32 %v801, 1
    %vm3121 = vcmp.eq.s32.totalorder %v774, %v3119
    %vm3122 = vcmp.eq.s32.totalorder %v774, %v3120
    %vm3123 = vcmp.eq.s32.totalorder %v775, %v3119
    %vm3124 = vcmp.eq.s32.totalorder %v775, %v3120
    %vm3125 = vcmp.eq.s32.totalorder %v776, %v3119
    %vm3126 = vcmp.eq.s32.totalorder %v776, %v3120
    %vm3127 = vcmp.eq.s32.totalorder %v777, %v3119
    %vm3128 = vcmp.eq.s32.totalorder %v777, %v3120
    %vm3129 = vcmp.eq.s32.totalorder %v778, %v3119
    %vm3130 = vcmp.eq.s32.totalorder %v778, %v3120
    %vm3131 = vcmp.eq.s32.totalorder %v779, %v3119
    %vm3132 = vcmp.eq.s32.totalorder %v779, %v3120
    %vm3133 = vcmp.eq.s32.totalorder %v780, %v3119
    %vm3134 = vcmp.eq.s32.totalorder %v780, %v3120
    %vm3135 = vcmp.eq.s32.totalorder %v781, %v3119
    %vm3136 = vcmp.eq.s32.totalorder %v781, %v3120
    %vm3137 = vcmp.eq.s32.totalorder %v782, %v3119
    %vm3138 = vcmp.eq.s32.totalorder %v782, %v3120
    %vm3139 = vcmp.eq.s32.totalorder %v783, %v3119
    %vm3140 = vcmp.eq.s32.totalorder %v783, %v3120
    %vm3141 = vcmp.eq.s32.totalorder %v784, %v3119
    %vm3142 = vcmp.eq.s32.totalorder %v784, %v3120
    %vm3143 = vcmp.eq.s32.totalorder %v785, %v3119
    %vm3144 = vcmp.eq.s32.totalorder %v785, %v3120
    %vm3145 = vcmp.eq.s32.totalorder %v786, %v3119
    %vm3146 = vcmp.eq.s32.totalorder %v786, %v3120
    %vm3147 = vcmp.eq.s32.totalorder %v787, %v3119
    %vm3148 = vcmp.eq.s32.totalorder %v787, %v3120
    %vm3149 = vcmp.eq.s32.totalorder %v788, %v3119
    %vm3150 = vcmp.eq.s32.totalorder %v788, %v3120
    %vm3151 = vcmp.eq.s32.totalorder %v789, %v3119
    %vm3152 = vcmp.eq.s32.totalorder %v789, %v3120
    %vm3153 = vcmp.eq.s32.totalorder %v790, %v3119
    %vm3154 = vcmp.eq.s32.totalorder %v790, %v3120
    %vm3155 = vcmp.eq.s32.totalorder %v791, %v3119
    %vm3156 = vcmp.eq.s32.totalorder %v791, %v3120
    %vm3157 = vcmp.eq.s32.totalorder %v792, %v3119
    %vm3158 = vcmp.eq.s32.totalorder %v792, %v3120
    %vm3159 = vcmp.eq.s32.totalorder %v793, %v3119
    %vm3160 = vcmp.eq.s32.totalorder %v793, %v3120
    %vm3161 = vcmp.eq.s32.totalorder %v794, %v3119
    %vm3162 = vcmp.eq.s32.totalorder %v794, %v3120
    %vm3163 = vcmp.eq.s32.totalorder %v795, %v3119
    %vm3164 = vcmp.eq.s32.totalorder %v795, %v3120
    %vm3165 = vcmp.eq.s32.totalorder %v796, %v3119
    %vm3166 = vcmp.eq.s32.totalorder %v796, %v3120
    %vm3167 = vcmp.eq.s32.totalorder %v797, %v3119
    %vm3168 = vcmp.eq.s32.totalorder %v797, %v3120
    %vm3169 = vcmp.eq.s32.totalorder %v798, %v3119
    %vm3170 = vcmp.eq.s32.totalorder %v798, %v3120
    %v3171 = vsel %vm3121, 1.0, 0.0
    %v3172 = vsel %vm3122, 1.0, 0.0
    %v3173 = vsel %vm3123, 1.0, 0.0
    %v3174 = vsel %vm3124, 1.0, 0.0
    %v3175 = vsel %vm3125, 1.0, 0.0
    %v3176 = vsel %vm3126, 1.0, 0.0
    %v3177 = vsel %vm3127, 1.0, 0.0
    %v3178 = vsel %vm3128, 1.0, 0.0
    %v3179 = vsel %vm3129, 1.0, 0.0
    %v3180 = vsel %vm3130, 1.0, 0.0
    %v3181 = vsel %vm3131, 1.0, 0.0
    %v3182 = vsel %vm3132, 1.0, 0.0
    %v3183 = vsel %vm3133, 1.0, 0.0
    %v3184 = vsel %vm3134, 1.0, 0.0
    %v3185 = vsel %vm3135, 1.0, 0.0
    %v3186 = vsel %vm3136, 1.0, 0.0
    %v3187 = vsel %vm3137, 1.0, 0.0
    %v3188 = vsel %vm3138, 1.0, 0.0
    %v3189 = vsel %vm3139, 1.0, 0.0
    %v3190 = vsel %vm3140, 1.0, 0.0
    %v3191 = vsel %vm3141, 1.0, 0.0
    %v3192 = vsel %vm3142, 1.0, 0.0
    %v3193 = vsel %vm3143, 1.0, 0.0
    %v3194 = vsel %vm3144, 1.0, 0.0
    %v3195 = vsel %vm3145, 1.0, 0.0
    %v3196 = vsel %vm3146, 1.0, 0.0
    %v3197 = vsel %vm3147, 1.0, 0.0
    %v3198 = vsel %vm3148, 1.0, 0.0
    %v3199 = vsel %vm3149, 1.0, 0.0
    %v3200 = vsel %vm3150, 1.0, 0.0
    %v3201 = vsel %vm3151, 1.0, 0.0
    %v3202 = vsel %vm3152, 1.0, 0.0
    %v3203 = vsel %vm3153, 1.0, 0.0
    %v3204 = vsel %vm3154, 1.0, 0.0
    %v3205 = vsel %vm3155, 1.0, 0.0
    %v3206 = vsel %vm3156, 1.0, 0.0
    %v3207 = vsel %vm3157, 1.0, 0.0
    %v3208 = vsel %vm3158, 1.0, 0.0
    %v3209 = vsel %vm3159, 1.0, 0.0
    %v3210 = vsel %vm3160, 1.0, 0.0
    %v3211 = vsel %vm3161, 1.0, 0.0
    %v3212 = vsel %vm3162, 1.0, 0.0
    %v3213 = vsel %vm3163, 1.0, 0.0
    %v3214 = vsel %vm3164, 1.0, 0.0
    %v3215 = vsel %vm3165, 1.0, 0.0
    %v3216 = vsel %vm3166, 1.0, 0.0
    %v3217 = vsel %vm3167, 1.0, 0.0
    %v3218 = vsel %vm3168, 1.0, 0.0
    %v3219 = vsel %vm3169, 1.0, 0.0
    %v3220 = vsel %vm3170, 1.0, 0.0
    %s3221 = scalar_lea.vmem [#allocation2], 10
    %v3222 = vld [vmem:[%s3221] sm:$0x3]
    %v3224 = vlaneseq
    %v3225 = vshrl.u32 %v3224, 7
    %v3226 = vsub.s32 0, %v3225
    %v3227 = vrot.slane %v3222, %v3226
    %v3228 = vlaneseq
    %v3229 = vshrl.u32 %v3228, 7
    %v3230 = vsub.s32 1, %v3229
    %v3231 = vrot.slane %v3222, %v3230
    %v3234 = vmul.f32 %v3171, %v3227
    %v3235 = vmul.f32 %v3172, %v3231
    %v3236 = vmul.f32 %v3173, %v3227
    %v3237 = vmul.f32 %v3174, %v3231
    %v3238 = vmul.f32 %v3175, %v3227
    %v3239 = vmul.f32 %v3176, %v3231
    %v3240 = vmul.f32 %v3177, %v3227
    %v3241 = vmul.f32 %v3178, %v3231
    %v3242 = vmul.f32 %v3179, %v3227
    %v3243 = vmul.f32 %v3180, %v3231
    %v3244 = vmul.f32 %v3181, %v3227
    %v3245 = vmul.f32 %v3182, %v3231
    %v3246 = vmul.f32 %v3183, %v3227
    %v3247 = vmul.f32 %v3184, %v3231
    %v3248 = vmul.f32 %v3185, %v3227
    %v3249 = vmul.f32 %v3186, %v3231
    %v3250 = vmul.f32 %v3187, %v3227
    %v3251 = vmul.f32 %v3188, %v3231
    %v3252 = vmul.f32 %v3189, %v3227
    %v3253 = vmul.f32 %v3190, %v3231
    %v3254 = vmul.f32 %v3191, %v3227
    %v3255 = vmul.f32 %v3192, %v3231
    %v3256 = vmul.f32 %v3193, %v3227
    %v3257 = vmul.f32 %v3194, %v3231
    %v3258 = vmul.f32 %v3195, %v3227
    %v3259 = vmul.f32 %v3196, %v3231
    %v3260 = vmul.f32 %v3197, %v3227
    %v3261 = vmul.f32 %v3198, %v3231
    %v3262 = vmul.f32 %v3199, %v3227
    %v3263 = vmul.f32 %v3200, %v3231
    %v3264 = vmul.f32 %v3201, %v3227
    %v3265 = vmul.f32 %v3202, %v3231
    %v3266 = vmul.f32 %v3203, %v3227
    %v3267 = vmul.f32 %v3204, %v3231
    %v3268 = vmul.f32 %v3205, %v3227
    %v3269 = vmul.f32 %v3206, %v3231
    %v3270 = vmul.f32 %v3207, %v3227
    %v3271 = vmul.f32 %v3208, %v3231
    %v3272 = vmul.f32 %v3209, %v3227
    %v3273 = vmul.f32 %v3210, %v3231
    %v3274 = vmul.f32 %v3211, %v3227
    %v3275 = vmul.f32 %v3212, %v3231
    %v3276 = vmul.f32 %v3213, %v3227
    %v3277 = vmul.f32 %v3214, %v3231
    %v3278 = vmul.f32 %v3215, %v3227
    %v3279 = vmul.f32 %v3216, %v3231
    %v3280 = vmul.f32 %v3217, %v3227
    %v3281 = vmul.f32 %v3218, %v3231
    %v3282 = vmul.f32 %v3219, %v3227
    %v3283 = vmul.f32 %v3220, %v3231
    %s3284 = scalar_lea.vmem [#allocation7], 320
    %v3285 = vld [vmem:[%s3284] sm:$0xff]
    %v3286 = vld [vmem:[%s3284 + $0x8] sm:$0xff]
    %v3287 = vld [vmem:[%s3284 + $0x10] sm:$0xff]
    %v3288 = vld [vmem:[%s3284 + $0x18] sm:$0xff]
    %v3289 = vld [vmem:[%s3284 + $0x20] sm:$0xff]
    %v3290 = vld [vmem:[%s3284 + $0x28] sm:$0xff]
    %v3291 = vld [vmem:[%s3284 + $0x30] sm:$0xff]
    %v3292 = vld [vmem:[%s3284 + $0x38] sm:$0xff]
    %v3294 = vsel %vm974, %v3285, 0
    %v3297 = vsel %vm974, %v3286, 0
    %v3300 = vsel %vm974, %v3287, 0
    %v3303 = vsel %vm974, %v3288, 0
    %v3306 = vsel %vm974, %v3289, 0
    %v3309 = vsel %vm974, %v3290, 0
    %v3312 = vsel %vm974, %v3291, 0
    %v3315 = vsel %vm974, %v3292, 0
    %3317 = vmatprep.subr.mxu0 %v758
    %3318 = vmatpush1.msra.mxu0 %v757
    %3319 = vmatprep.subr.mxu0 %v760
    %3320 = vmatpush1.msra.mxu0 %v759
    %3321 = vmatprep.subr.mxu0 %v762
    %3322 = vmatpush1.msra.mxu0 %v761
    %3323 = vmatprep.subr.mxu0 %v764
    %3324 = vmatpush1.msra.mxu0 %v763
    %3325 = vmatprep.subr.mxu0 %v766
    %3326 = vmatpush1.msra.mxu0 %v765
    %3327 = vmatprep.subr.mxu0 %v768
    %3328 = vmatpush1.msra.mxu0 %v767
    %3329 = vmatprep.subr.mxu0 %v770
    %3330 = vmatpush1.msra.mxu0 %v769
    %3331 = vmatprep.subr.mxu0 %v772
    %3332 = vmatpush1.msra.mxu0 %v771
    %3333 = vmatprep.subr.mxu0 0.0
    %3334 = vmatpush1.msra.mxu0 0.0
    %3335 = vmatprep.subr.mxu0 0.0
    %3336 = vmatpush1.msra.mxu0 0.0
    %3337 = vmatprep.subr.mxu0 0.0
    %3338 = vmatpush1.msra.mxu0 0.0
    %3339 = vmatprep.subr.mxu0 0.0
    %3340 = vmatpush1.msra.mxu0 0.0
    %3341 = vmatprep.subr.mxu0 0.0
    %3342 = vmatpush1.msra.mxu0 0.0
    %3343 = vmatprep.subr.mxu0 0.0
    %3344 = vmatpush1.msra.mxu0 0.0
    %3345 = vmatprep.subr.mxu0 0.0
    %3346 = vmatpush1.msra.mxu0 0.0
    %3347 = vmatprep.subr.mxu0 0.0
    %3348 = vmatpush1.msra.mxu0 0.0
    %3349 = vmatprep.subr.mxu0 0.0
    %3350 = vmatpush1.msra.mxu0 0.0
    %3351 = vmatprep.subr.mxu0 0.0
    %3352 = vmatpush1.msra.mxu0 0.0
    %3353 = vmatprep.subr.mxu0 0.0
    %3354 = vmatpush1.msra.mxu0 0.0
    %3355 = vmatprep.subr.mxu0 0.0
    %3356 = vmatpush1.msra.mxu0 0.0
    %3357 = vmatprep.subr.mxu0 0.0
    %3358 = vmatpush1.msra.mxu0 0.0
    %3359 = vmatprep.subr.mxu0 0.0
    %3360 = vmatpush1.msra.mxu0 0.0
    %3361 = vmatprep.subr.mxu0 0.0
    %3362 = vmatpush1.msra.mxu0 0.0
    %3363 = vmatprep.subr.mxu0 0.0
    %3364 = vmatpush1.msra.mxu0 0.0
    %3365 = vmatprep.subr.mxu0 0.0
    %3366 = vmatpush1.msra.mxu0 0.0
    %3367 = vmatprep.subr.mxu0 0.0
    %3368 = vmatpush1.msra.mxu0 0.0
    %3369 = vmatprep.subr.mxu0 0.0
    %3370 = vmatpush1.msra.mxu0 0.0
    %3371 = vmatprep.subr.mxu0 0.0
    %3372 = vmatpush1.msra.mxu0 0.0
    %3373 = vmatprep.subr.mxu0 0.0
    %3374 = vmatpush1.msra.mxu0 0.0
    %3375 = vmatprep.subr.mxu0 0.0
    %3376 = vmatpush1.msra.mxu0 0.0
    %3377 = vmatprep.subr.mxu0 0.0
    %3378 = vmatpush1.msra.mxu0 0.0
    %3379 = vmatprep.subr.mxu0 0.0
    %3380 = vmatpush1.msra.mxu0 0.0
    %3381 = vmatprep.mubr.f32.mxu0 0.0
    %3382 = vmatmul.mubr.f32.gmra.mrb[0].mxu0 %v3294
    %v3383 = vpop.f32.mrb[0].mxu0
    %v3384 = vadd.f32 0.0, %v3383
    %v3385 = vpop.f32.mrb[0].mxu0
    %v3386 = vadd.f32 0.0, %v3385
    %3387 = vmatprep.mubr.f32.mxu0 0.0
    %3388 = vmatmul.mubr.f32.gmra.mrb[0].mxu0 %v3297
    %v3389 = vpop.f32.mrb[0].mxu0
    %v3390 = vadd.f32 0.0, %v3389
    %v3391 = vpop.f32.mrb[0].mxu0
    %v3392 = vadd.f32 0.0, %v3391
    %3393 = vmatprep.mubr.f32.mxu0 0.0
    %3394 = vmatmul.mubr.f32.gmra.mrb[0].mxu0 %v3300
    %v3395 = vpop.f32.mrb[0].mxu0
    %v3396 = vadd.f32 0.0, %v3395
    %v3397 = vpop.f32.mrb[0].mxu0
    %v3398 = vadd.f32 0.0, %v3397
    %3399 = vmatprep.mubr.f32.mxu0 0.0
    %3400 = vmatmul.mubr.f32.gmra.mrb[0].mxu0 %v3303
    %v3401 = vpop.f32.mrb[0].mxu0
    %v3402 = vadd.f32 0.0, %v3401
    %v3403 = vpop.f32.mrb[0].mxu0
    %v3404 = vadd.f32 0.0, %v3403
    %3405 = vmatprep.mubr.f32.mxu0 0.0
    %3406 = vmatmul.mubr.f32.gmra.mrb[0].mxu0 %v3306
    %v3407 = vpop.f32.mrb[0].mxu0
    %v3408 = vadd.f32 0.0, %v3407
    %v3409 = vpop.f32.mrb[0].mxu0
    %v3410 = vadd.f32 0.0, %v3409
    %3411 = vmatprep.mubr.f32.mxu0 0.0
    %3412 = vmatmul.mubr.f32.gmra.mrb[0].mxu0 %v3309
    %v3413 = vpop.f32.mrb[0].mxu0
    %v3414 = vadd.f32 0.0, %v3413
    %v3415 = vpop.f32.mrb[0].mxu0
    %v3416 = vadd.f32 0.0, %v3415
    %3417 = vmatprep.mubr.f32.mxu0 0.0
    %3418 = vmatmul.mubr.f32.gmra.mrb[0].mxu0 %v3312
    %v3419 = vpop.f32.mrb[0].mxu0
    %v3420 = vadd.f32 0.0, %v3419
    %v3421 = vpop.f32.mrb[0].mxu0
    %v3422 = vadd.f32 0.0, %v3421
    %3423 = vmatprep.mubr.f32.mxu0 0.0
    %3424 = vmatmul.mubr.f32.gmra.mrb[0].mxu0 %v3315
    %v3425 = vpop.f32.mrb[0].mxu0
    %v3426 = vadd.f32 0.0, %v3425
    %v3427 = vpop.f32.mrb[0].mxu0
    %v3428 = vadd.f32 0.0, %v3427
    %3429 = vdwg.mxu0
    %v3431 = vsel %vm1423, %v3386, 0
    %v3434 = vsel %vm1423, %v3392, 0
    %v3437 = vsel %vm1423, %v3398, 0
    %v3440 = vsel %vm1423, %v3404, 0
    %v3443 = vsel %vm1423, %v3410, 0
    %v3446 = vsel %vm1423, %v3416, 0
    %v3449 = vsel %vm1423, %v3422, 0
    %v3452 = vsel %vm1423, %v3428, 0
    %v3455 = vsel %vm1448, %v3282, 0
    %v3458 = vsel %vm1448, %v3283, 0
    %3460 = vmatprep.subr.mxu0 %v3235
    %3461 = vmatpush1.msra.mxu0 %v3234
    %3462 = vmatprep.subr.mxu0 %v3237
    %3463 = vmatpush1.msra.mxu0 %v3236
    %3464 = vmatprep.subr.mxu0 %v3239
    %3465 = vmatpush1.msra.mxu0 %v3238
    %3466 = vmatprep.subr.mxu0 %v3241
    %3467 = vmatpush1.msra.mxu0 %v3240
    %3468 = vmatprep.subr.mxu0 %v3243
    %3469 = vmatpush1.msra.mxu0 %v3242
    %3470 = vmatprep.subr.mxu0 %v3245
    %3471 = vmatpush1.msra.mxu0 %v3244
    %3472 = vmatprep.subr.mxu0 %v3247
    %3473 = vmatpush1.msra.mxu0 %v3246
    %3474 = vmatprep.subr.mxu0 %v3249
    %3475 = vmatpush1.msra.mxu0 %v3248
    %3476 = vmatprep.subr.mxu0 %v3251
    %3477 = vmatpush1.msra.mxu0 %v3250
    %3478 = vmatprep.subr.mxu0 %v3253
    %3479 = vmatpush1.msra.mxu0 %v3252
    %3480 = vmatprep.subr.mxu0 %v3255
    %3481 = vmatpush1.msra.mxu0 %v3254
    %3482 = vmatprep.subr.mxu0 %v3257
    %3483 = vmatpush1.msra.mxu0 %v3256
    %3484 = vmatprep.subr.mxu0 %v3259
    %3485 = vmatpush1.msra.mxu0 %v3258
    %3486 = vmatprep.subr.mxu0 %v3261
    %3487 = vmatpush1.msra.mxu0 %v3260
    %3488 = vmatprep.subr.mxu0 %v3263
    %3489 = vmatpush1.msra.mxu0 %v3262
    %3490 = vmatprep.subr.mxu0 %v3265
    %3491 = vmatpush1.msra.mxu0 %v3264
    %3492 = vmatprep.subr.mxu0 %v3267
    %3493 = vmatpush1.msra.mxu0 %v3266
    %3494 = vmatprep.subr.mxu0 %v3269
    %3495 = vmatpush1.msra.mxu0 %v3268
    %3496 = vmatprep.subr.mxu0 %v3271
    %3497 = vmatpush1.msra.mxu0 %v3270
    %3498 = vmatprep.subr.mxu0 %v3273
    %3499 = vmatpush1.msra.mxu0 %v3272
    %3500 = vmatprep.subr.mxu0 %v3275
    %3501 = vmatpush1.msra.mxu0 %v3274
    %3502 = vmatprep.subr.mxu0 %v3277
    %3503 = vmatpush1.msra.mxu0 %v3276
    %3504 = vmatprep.subr.mxu0 %v3279
    %3505 = vmatpush1.msra.mxu0 %v3278
    %3506 = vmatprep.subr.mxu0 %v3281
    %3507 = vmatpush1.msra.mxu0 %v3280
    %3508 = vmatprep.subr.mxu0 %v3458
    %3509 = vmatpush1.msra.mxu0 %v3455
    %3510 = vmatprep.subr.mxu0 0.0
    %3511 = vmatpush1.msra.mxu0 0.0
    %3512 = vmatprep.subr.mxu0 0.0
    %3513 = vmatpush1.msra.mxu0 0.0
    %3514 = vmatprep.subr.mxu0 0.0
    %3515 = vmatpush1.msra.mxu0 0.0
    %3516 = vmatprep.subr.mxu0 0.0
    %3517 = vmatpush1.msra.mxu0 0.0
    %3518 = vmatprep.subr.mxu0 0.0
    %3519 = vmatpush1.msra.mxu0 0.0
    %3520 = vmatprep.subr.mxu0 0.0
    %3521 = vmatpush1.msra.mxu0 0.0
    %3522 = vmatprep.subr.mxu0 0.0
    %3523 = vmatpush1.msra.mxu0 0.0
    %3524 = vmatprep.mubr.f32.mxu0 %v3431
    %3525 = vmatmul.mubr.f32.gmra.mrb[0].mxu0 %v3384
    %v3526 = vpop.f32.mrb[0].mxu0
    %v3527 = vadd.f32 0.0, %v3526
    %v3528 = vpop.f32.mrb[0].mxu0
    %v3529 = vadd.f32 0.0, %v3528
    %3530 = vmatprep.mubr.f32.mxu0 %v3434
    %3531 = vmatmul.mubr.f32.gmra.mrb[0].mxu0 %v3390
    %v3532 = vpop.f32.mrb[0].mxu0
    %v3533 = vadd.f32 0.0, %v3532
    %v3534 = vpop.f32.mrb[0].mxu0
    %v3535 = vadd.f32 0.0, %v3534
    %3536 = vmatprep.mubr.f32.mxu0 %v3437
    %3537 = vmatmul.mubr.f32.gmra.mrb[0].mxu0 %v3396
    %v3538 = vpop.f32.mrb[0].mxu0
    %v3539 = vadd.f32 0.0, %v3538
    %v3540 = vpop.f32.mrb[0].mxu0
    %v3541 = vadd.f32 0.0, %v3540
    %3542 = vmatprep.mubr.f32.mxu0 %v3440
    %3543 = vmatmul.mubr.f32.gmra.mrb[0].mxu0 %v3402
    %v3544 = vpop.f32.mrb[0].mxu0
    %v3545 = vadd.f32 0.0, %v3544
    %v3546 = vpop.f32.mrb[0].mxu0
    %v3547 = vadd.f32 0.0, %v3546
    %3548 = vmatprep.mubr.f32.mxu0 %v3443
    %3549 = vmatmul.mubr.f32.gmra.mrb[0].mxu0 %v3408
    %v3550 = vpop.f32.mrb[0].mxu0
    %v3551 = vadd.f32 0.0, %v3550
    %v3552 = vpop.f32.mrb[0].mxu0
    %v3553 = vadd.f32 0.0, %v3552
    %3554 = vmatprep.mubr.f32.mxu0 %v3446
    %3555 = vmatmul.mubr.f32.gmra.mrb[0].mxu0 %v3414
    %v3556 = vpop.f32.mrb[0].mxu0
    %v3557 = vadd.f32 0.0, %v3556
    %v3558 = vpop.f32.mrb[0].mxu0
    %v3559 = vadd.f32 0.0, %v3558
    %3560 = vmatprep.mubr.f32.mxu0 %v3449
    %3561 = vmatmul.mubr.f32.gmra.mrb[0].mxu0 %v3420
    %v3562 = vpop.f32.mrb[0].mxu0
    %v3563 = vadd.f32 0.0, %v3562
    %v3564 = vpop.f32.mrb[0].mxu0
    %v3565 = vadd.f32 0.0, %v3564
    %3566 = vmatprep.mubr.f32.mxu0 %v3452
    %3567 = vmatmul.mubr.f32.gmra.mrb[0].mxu0 %v3426
    %v3568 = vpop.f32.mrb[0].mxu0
    %v3569 = vadd.f32 0.0, %v3568
    %v3570 = vpop.f32.mrb[0].mxu0
    %v3571 = vadd.f32 0.0, %v3570
    %3572 = vdwg.mxu0
    %v3573 = vadd.f32 %v3103, %v3527
    %v3574 = vadd.f32 %v3104, %v3529
    %v3575 = vadd.f32 %v3105, %v3533
    %v3576 = vadd.f32 %v3106, %v3535
    %v3577 = vadd.f32 %v3107, %v3539
    %v3578 = vadd.f32 %v3108, %v3541
    %v3579 = vadd.f32 %v3109, %v3545
    %v3580 = vadd.f32 %v3110, %v3547
    %v3581 = vadd.f32 %v3111, %v3551
    %v3582 = vadd.f32 %v3112, %v3553
    %v3583 = vadd.f32 %v3113, %v3557
    %v3584 = vadd.f32 %v3114, %v3559
    %v3585 = vadd.f32 %v3115, %v3563
    %v3586 = vadd.f32 %v3116, %v3565
    %v3587 = vadd.f32 %v3117, %v3569
    %v3588 = vadd.f32 %v3118, %v3571
    %v3589 = vadd.s32 %v800, 13
    %v3590 = vadd.s32 %v801, 13
    %vm3591 = vcmp.eq.s32.totalorder %v774, %v3589
    %vm3592 = vcmp.eq.s32.totalorder %v774, %v3590
    %vm3593 = vcmp.eq.s32.totalorder %v775, %v3589
    %vm3594 = vcmp.eq.s32.totalorder %v775, %v3590
    %vm3595 = vcmp.eq.s32.totalorder %v776, %v3589
    %vm3596 = vcmp.eq.s32.totalorder %v776, %v3590
    %vm3597 = vcmp.eq.s32.totalorder %v777, %v3589
    %vm3598 = vcmp.eq.s32.totalorder %v777, %v3590
    %vm3599 = vcmp.eq.s32.totalorder %v778, %v3589
    %vm3600 = vcmp.eq.s32.totalorder %v778, %v3590
    %vm3601 = vcmp.eq.s32.totalorder %v779, %v3589
    %vm3602 = vcmp.eq.s32.totalorder %v779, %v3590
    %vm3603 = vcmp.eq.s32.totalorder %v780, %v3589
    %vm3604 = vcmp.eq.s32.totalorder %v780, %v3590
    %vm3605 = vcmp.eq.s32.totalorder %v781, %v3589
    %vm3606 = vcmp.eq.s32.totalorder %v781, %v3590
    %vm3607 = vcmp.eq.s32.totalorder %v782, %v3589
    %vm3608 = vcmp.eq.s32.totalorder %v782, %v3590
    %vm3609 = vcmp.eq.s32.totalorder %v783, %v3589
    %vm3610 = vcmp.eq.s32.totalorder %v783, %v3590
    %vm3611 = vcmp.eq.s32.totalorder %v784, %v3589
    %vm3612 = vcmp.eq.s32.totalorder %v784, %v3590
    %vm3613 = vcmp.eq.s32.totalorder %v785, %v3589
    %vm3614 = vcmp.eq.s32.totalorder %v785, %v3590
    %vm3615 = vcmp.eq.s32.totalorder %v786, %v3589
    %vm3616 = vcmp.eq.s32.totalorder %v786, %v3590
    %vm3617 = vcmp.eq.s32.totalorder %v787, %v3589
    %vm3618 = vcmp.eq.s32.totalorder %v787, %v3590
    %vm3619 = vcmp.eq.s32.totalorder %v788, %v3589
    %vm3620 = vcmp.eq.s32.totalorder %v788, %v3590
    %vm3621 = vcmp.eq.s32.totalorder %v789, %v3589
    %vm3622 = vcmp.eq.s32.totalorder %v789, %v3590
    %vm3623 = vcmp.eq.s32.totalorder %v790, %v3589
    %vm3624 = vcmp.eq.s32.totalorder %v790, %v3590
    %vm3625 = vcmp.eq.s32.totalorder %v791, %v3589
    %vm3626 = vcmp.eq.s32.totalorder %v791, %v3590
    %vm3627 = vcmp.eq.s32.totalorder %v792, %v3589
    %vm3628 = vcmp.eq.s32.totalorder %v792, %v3590
    %vm3629 = vcmp.eq.s32.totalorder %v793, %v3589
    %vm3630 = vcmp.eq.s32.totalorder %v793, %v3590
    %vm3631 = vcmp.eq.s32.totalorder %v794, %v3589
    %vm3632 = vcmp.eq.s32.totalorder %v794, %v3590
    %vm3633 = vcmp.eq.s32.totalorder %v795, %v3589
    %vm3634 = vcmp.eq.s32.totalorder %v795, %v3590
    %vm3635 = vcmp.eq.s32.totalorder %v796, %v3589
    %vm3636 = vcmp.eq.s32.totalorder %v796, %v3590
    %vm3637 = vcmp.eq.s32.totalorder %v797, %v3589
    %vm3638 = vcmp.eq.s32.totalorder %v797, %v3590
    %vm3639 = vcmp.eq.s32.totalorder %v798, %v3589
    %vm3640 = vcmp.eq.s32.totalorder %v798, %v3590
    %v3641 = vsel %vm3591, 1.0, 0.0
    %v3642 = vsel %vm3592, 1.0, 0.0
    %v3643 = vsel %vm3593, 1.0, 0.0
    %v3644 = vsel %vm3594, 1.0, 0.0
    %v3645 = vsel %vm3595, 1.0, 0.0
    %v3646 = vsel %vm3596, 1.0, 0.0
    %v3647 = vsel %vm3597, 1.0, 0.0
    %v3648 = vsel %vm3598, 1.0, 0.0
    %v3649 = vsel %vm3599, 1.0, 0.0
    %v3650 = vsel %vm3600, 1.0, 0.0
    %v3651 = vsel %vm3601, 1.0, 0.0
    %v3652 = vsel %vm3602, 1.0, 0.0
    %v3653 = vsel %vm3603, 1.0, 0.0
    %v3654 = vsel %vm3604, 1.0, 0.0
    %v3655 = vsel %vm3605, 1.0, 0.0
    %v3656 = vsel %vm3606, 1.0, 0.0
    %v3657 = vsel %vm3607, 1.0, 0.0
    %v3658 = vsel %vm3608, 1.0, 0.0
    %v3659 = vsel %vm3609, 1.0, 0.0
    %v3660 = vsel %vm3610, 1.0, 0.0
    %v3661 = vsel %vm3611, 1.0, 0.0
    %v3662 = vsel %vm3612, 1.0, 0.0
    %v3663 = vsel %vm3613, 1.0, 0.0
    %v3664 = vsel %vm3614, 1.0, 0.0
    %v3665 = vsel %vm3615, 1.0, 0.0
    %v3666 = vsel %vm3616, 1.0, 0.0
    %v3667 = vsel %vm3617, 1.0, 0.0
    %v3668 = vsel %vm3618, 1.0, 0.0
    %v3669 = vsel %vm3619, 1.0, 0.0
    %v3670 = vsel %vm3620, 1.0, 0.0
    %v3671 = vsel %vm3621, 1.0, 0.0
    %v3672 = vsel %vm3622, 1.0, 0.0
    %v3673 = vsel %vm3623, 1.0, 0.0
    %v3674 = vsel %vm3624, 1.0, 0.0
    %v3675 = vsel %vm3625, 1.0, 0.0
    %v3676 = vsel %vm3626, 1.0, 0.0
    %v3677 = vsel %vm3627, 1.0, 0.0
    %v3678 = vsel %vm3628, 1.0, 0.0
    %v3679 = vsel %vm3629, 1.0, 0.0
    %v3680 = vsel %vm3630, 1.0, 0.0
    %v3681 = vsel %vm3631, 1.0, 0.0
    %v3682 = vsel %vm3632, 1.0, 0.0
    %v3683 = vsel %vm3633, 1.0, 0.0
    %v3684 = vsel %vm3634, 1.0, 0.0
    %v3685 = vsel %vm3635, 1.0, 0.0
    %v3686 = vsel %vm3636, 1.0, 0.0
    %v3687 = vsel %vm3637, 1.0, 0.0
    %v3688 = vsel %vm3638, 1.0, 0.0
    %v3689 = vsel %vm3639, 1.0, 0.0
    %v3690 = vsel %vm3640, 1.0, 0.0
    %s3691 = scalar_lea.vmem [#allocation2], 12
    %v3692 = vld [vmem:[%s3691] sm:$0x3]
    %v3694 = vlaneseq
    %v3695 = vshrl.u32 %v3694, 7
    %v3696 = vsub.s32 0, %v3695
    %v3697 = vrot.slane %v3692, %v3696
    %v3698 = vlaneseq
    %v3699 = vshrl.u32 %v3698, 7
    %v3700 = vsub.s32 1, %v3699
    %v3701 = vrot.slane %v3692, %v3700
    %v3704 = vmul.f32 %v3641, %v3697
    %v3705 = vmul.f32 %v3642, %v3701
    %v3706 = vmul.f32 %v3643, %v3697
    %v3707 = vmul.f32 %v3644, %v3701
    %v3708 = vmul.f32 %v3645, %v3697
    %v3709 = vmul.f32 %v3646, %v3701
    %v3710 = vmul.f32 %v3647, %v3697
    %v3711 = vmul.f32 %v3648, %v3701
    %v3712 = vmul.f32 %v3649, %v3697
    %v3713 = vmul.f32 %v3650, %v3701
    %v3714 = vmul.f32 %v3651, %v3697
    %v3715 = vmul.f32 %v3652, %v3701
    %v3716 = vmul.f32 %v3653, %v3697
    %v3717 = vmul.f32 %v3654, %v3701
    %v3718 = vmul.f32 %v3655, %v3697
    %v3719 = vmul.f32 %v3656, %v3701
    %v3720 = vmul.f32 %v3657, %v3697
    %v3721 = vmul.f32 %v3658, %v3701
    %v3722 = vmul.f32 %v3659, %v3697
    %v3723 = vmul.f32 %v3660, %v3701
    %v3724 = vmul.f32 %v3661, %v3697
    %v3725 = vmul.f32 %v3662, %v3701
    %v3726 = vmul.f32 %v3663, %v3697
    %v3727 = vmul.f32 %v3664, %v3701
    %v3728 = vmul.f32 %v3665, %v3697
    %v3729 = vmul.f32 %v3666, %v3701
    %v3730 = vmul.f32 %v3667, %v3697
    %v3731 = vmul.f32 %v3668, %v3701
    %v3732 = vmul.f32 %v3669, %v3697
    %v3733 = vmul.f32 %v3670, %v3701
    %v3734 = vmul.f32 %v3671, %v3697
    %v3735 = vmul.f32 %v3672, %v3701
    %v3736 = vmul.f32 %v3673, %v3697
    %v3737 = vmul.f32 %v3674, %v3701
    %v3738 = vmul.f32 %v3675, %v3697
    %v3739 = vmul.f32 %v3676, %v3701
    %v3740 = vmul.f32 %v3677, %v3697
    %v3741 = vmul.f32 %v3678, %v3701
    %v3742 = vmul.f32 %v3679, %v3697
    %v3743 = vmul.f32 %v3680, %v3701
    %v3744 = vmul.f32 %v3681, %v3697
    %v3745 = vmul.f32 %v3682, %v3701
    %v3746 = vmul.f32 %v3683, %v3697
    %v3747 = vmul.f32 %v3684, %v3701
    %v3748 = vmul.f32 %v3685, %v3697
    %v3749 = vmul.f32 %v3686, %v3701
    %v3750 = vmul.f32 %v3687, %v3697
    %v3751 = vmul.f32 %v3688, %v3701
    %v3752 = vmul.f32 %v3689, %v3697
    %v3753 = vmul.f32 %v3690, %v3701
    %s3754 = scalar_lea.vmem [#allocation7], 384
    %v3755 = vld [vmem:[%s3754] sm:$0xff]
    %v3756 = vld [vmem:[%s3754 + $0x8] sm:$0xff]
    %v3757 = vld [vmem:[%s3754 + $0x10] sm:$0xff]
    %v3758 = vld [vmem:[%s3754 + $0x18] sm:$0xff]
    %v3759 = vld [vmem:[%s3754 + $0x20] sm:$0xff]
    %v3760 = vld [vmem:[%s3754 + $0x28] sm:$0xff]
    %v3761 = vld [vmem:[%s3754 + $0x30] sm:$0xff]
    %v3762 = vld [vmem:[%s3754 + $0x38] sm:$0xff]
    %v3764 = vsel %vm974, %v3755, 0
    %v3767 = vsel %vm974, %v3756, 0
    %v3770 = vsel %vm974, %v3757, 0
    %v3773 = vsel %vm974, %v3758, 0
    %v3776 = vsel %vm974, %v3759, 0
    %v3779 = vsel %vm974, %v3760, 0
    %v3782 = vsel %vm974, %v3761, 0
    %v3785 = vsel %vm974, %v3762, 0
    %3787 = vmatprep.subr.mxu0 %v758
    %3788 = vmatpush1.msra.mxu0 %v757
    %3789 = vmatprep.subr.mxu0 %v760
    %3790 = vmatpush1.msra.mxu0 %v759
    %3791 = vmatprep.subr.mxu0 %v762
    %3792 = vmatpush1.msra.mxu0 %v761
    %3793 = vmatprep.subr.mxu0 %v764
    %3794 = vmatpush1.msra.mxu0 %v763
    %3795 = vmatprep.subr.mxu0 %v766
    %3796 = vmatpush1.msra.mxu0 %v765
    %3797 = vmatprep.subr.mxu0 %v768
    %3798 = vmatpush1.msra.mxu0 %v767
    %3799 = vmatprep.subr.mxu0 %v770
    %3800 = vmatpush1.msra.mxu0 %v769
    %3801 = vmatprep.subr.mxu0 %v772
    %3802 = vmatpush1.msra.mxu0 %v771
    %3803 = vmatprep.subr.mxu0 0.0
    %3804 = vmatpush1.msra.mxu0 0.0
    %3805 = vmatprep.subr.mxu0 0.0
    %3806 = vmatpush1.msra.mxu0 0.0
    %3807 = vmatprep.subr.mxu0 0.0
    %3808 = vmatpush1.msra.mxu0 0.0
    %3809 = vmatprep.subr.mxu0 0.0
    %3810 = vmatpush1.msra.mxu0 0.0
    %3811 = vmatprep.subr.mxu0 0.0
    %3812 = vmatpush1.msra.mxu0 0.0
    %3813 = vmatprep.subr.mxu0 0.0
    %3814 = vmatpush1.msra.mxu0 0.0
    %3815 = vmatprep.subr.mxu0 0.0
    %3816 = vmatpush1.msra.mxu0 0.0
    %3817 = vmatprep.subr.mxu0 0.0
    %3818 = vmatpush1.msra.mxu0 0.0
    %3819 = vmatprep.subr.mxu0 0.0
    %3820 = vmatpush1.msra.mxu0 0.0
    %3821 = vmatprep.subr.mxu0 0.0
    %3822 = vmatpush1.msra.mxu0 0.0
    %3823 = vmatprep.subr.mxu0 0.0
    %3824 = vmatpush1.msra.mxu0 0.0
    %3825 = vmatprep.subr.mxu0 0.0
    %3826 = vmatpush1.msra.mxu0 0.0
    %3827 = vmatprep.subr.mxu0 0.0
    %3828 = vmatpush1.msra.mxu0 0.0
    %3829 = vmatprep.subr.mxu0 0.0
    %3830 = vmatpush1.msra.mxu0 0.0
    %3831 = vmatprep.subr.mxu0 0.0
    %3832 = vmatpush1.msra.mxu0 0.0
    %3833 = vmatprep.subr.mxu0 0.0
    %3834 = vmatpush1.msra.mxu0 0.0
    %3835 = vmatprep.subr.mxu0 0.0
    %3836 = vmatpush1.msra.mxu0 0.0
    %3837 = vmatprep.subr.mxu0 0.0
    %3838 = vmatpush1.msra.mxu0 0.0
    %3839 = vmatprep.subr.mxu0 0.0
    %3840 = vmatpush1.msra.mxu0 0.0
    %3841 = vmatprep.subr.mxu0 0.0
    %3842 = vmatpush1.msra.mxu0 0.0
    %3843 = vmatprep.subr.mxu0 0.0
    %3844 = vmatpush1.msra.mxu0 0.0
    %3845 = vmatprep.subr.mxu0 0.0
    %3846 = vmatpush1.msra.mxu0 0.0
    %3847 = vmatprep.subr.mxu0 0.0
    %3848 = vmatpush1.msra.mxu0 0.0
    %3849 = vmatprep.subr.mxu0 0.0
    %3850 = vmatpush1.msra.mxu0 0.0
    %3851 = vmatprep.mubr.f32.mxu0 0.0
    %3852 = vmatmul.mubr.f32.gmra.mrb[0].mxu0 %v3764
    %v3853 = vpop.f32.mrb[0].mxu0
    %v3854 = vadd.f32 0.0, %v3853
    %v3855 = vpop.f32.mrb[0].mxu0
    %v3856 = vadd.f32 0.0, %v3855
    %3857 = vmatprep.mubr.f32.mxu0 0.0
    %3858 = vmatmul.mubr.f32.gmra.mrb[0].mxu0 %v3767
    %v3859 = vpop.f32.mrb[0].mxu0
    %v3860 = vadd.f32 0.0, %v3859
    %v3861 = vpop.f32.mrb[0].mxu0
    %v3862 = vadd.f32 0.0, %v3861
    %3863 = vmatprep.mubr.f32.mxu0 0.0
    %3864 = vmatmul.mubr.f32.gmra.mrb[0].mxu0 %v3770
    %v3865 = vpop.f32.mrb[0].mxu0
    %v3866 = vadd.f32 0.0, %v3865
    %v3867 = vpop.f32.mrb[0].mxu0
    %v3868 = vadd.f32 0.0, %v3867
    %3869 = vmatprep.mubr.f32.mxu0 0.0
    %3870 = vmatmul.mubr.f32.gmra.mrb[0].mxu0 %v3773
    %v3871 = vpop.f32.mrb[0].mxu0
    %v3872 = vadd.f32 0.0, %v3871
    %v3873 = vpop.f32.mrb[0].mxu0
    %v3874 = vadd.f32 0.0, %v3873
    %3875 = vmatprep.mubr.f32.mxu0 0.0
    %3876 = vmatmul.mubr.f32.gmra.mrb[0].mxu0 %v3776
    %v3877 = vpop.f32.mrb[0].mxu0
    %v3878 = vadd.f32 0.0, %v3877
    %v3879 = vpop.f32.mrb[0].mxu0
    %v3880 = vadd.f32 0.0, %v3879
    %3881 = vmatprep.mubr.f32.mxu0 0.0
    %3882 = vmatmul.mubr.f32.gmra.mrb[0].mxu0 %v3779
    %v3883 = vpop.f32.mrb[0].mxu0
    %v3884 = vadd.f32 0.0, %v3883
    %v3885 = vpop.f32.mrb[0].mxu0
    %v3886 = vadd.f32 0.0, %v3885
    %3887 = vmatprep.mubr.f32.mxu0 0.0
    %3888 = vmatmul.mubr.f32.gmra.mrb[0].mxu0 %v3782
    %v3889 = vpop.f32.mrb[0].mxu0
    %v3890 = vadd.f32 0.0, %v3889
    %v3891 = vpop.f32.mrb[0].mxu0
    %v3892 = vadd.f32 0.0, %v3891
    %3893 = vmatprep.mubr.f32.mxu0 0.0
    %3894 = vmatmul.mubr.f32.gmra.mrb[0].mxu0 %v3785
    %v3895 = vpop.f32.mrb[0].mxu0
    %v3896 = vadd.f32 0.0, %v3895
    %v3897 = vpop.f32.mrb[0].mxu0
    %v3898 = vadd.f32 0.0, %v3897
    %3899 = vdwg.mxu0
    %v3901 = vsel %vm1423, %v3856, 0
    %v3904 = vsel %vm1423, %v3862, 0
    %v3907 = vsel %vm1423, %v3868, 0
    %v3910 = vsel %vm1423, %v3874, 0
    %v3913 = vsel %vm1423, %v3880, 0
    %v3916 = vsel %vm1423, %v3886, 0
    %v3919 = vsel %vm1423, %v3892, 0
    %v3922 = vsel %vm1423, %v3898, 0
    %v3925 = vsel %vm1448, %v3752, 0
    %v3928 = vsel %vm1448, %v3753, 0
    %3930 = vmatprep.subr.mxu0 %v3705
    %3931 = vmatpush1.msra.mxu0 %v3704
    %3932 = vmatprep.subr.mxu0 %v3707
    %3933 = vmatpush1.msra.mxu0 %v3706
    %3934 = vmatprep.subr.mxu0 %v3709
    %3935 = vmatpush1.msra.mxu0 %v3708
    %3936 = vmatprep.subr.mxu0 %v3711
    %3937 = vmatpush1.msra.mxu0 %v3710
    %3938 = vmatprep.subr.mxu0 %v3713
    %3939 = vmatpush1.msra.mxu0 %v3712
    %3940 = vmatprep.subr.mxu0 %v3715
    %3941 = vmatpush1.msra.mxu0 %v3714
    %3942 = vmatprep.subr.mxu0 %v3717
    %3943 = vmatpush1.msra.mxu0 %v3716
    %3944 = vmatprep.subr.mxu0 %v3719
    %3945 = vmatpush1.msra.mxu0 %v3718
    %3946 = vmatprep.subr.mxu0 %v3721
    %3947 = vmatpush1.msra.mxu0 %v3720
    %3948 = vmatprep.subr.mxu0 %v3723
    %3949 = vmatpush1.msra.mxu0 %v3722
    %3950 = vmatprep.subr.mxu0 %v3725
    %3951 = vmatpush1.msra.mxu0 %v3724
    %3952 = vmatprep.subr.mxu0 %v3727
    %3953 = vmatpush1.msra.mxu0 %v3726
    %3954 = vmatprep.subr.mxu0 %v3729
    %3955 = vmatpush1.msra.mxu0 %v3728
    %3956 = vmatprep.subr.mxu0 %v3731
    %3957 = vmatpush1.msra.mxu0 %v3730
    %3958 = vmatprep.subr.mxu0 %v3733
    %3959 = vmatpush1.msra.mxu0 %v3732
    %3960 = vmatprep.subr.mxu0 %v3735
    %3961 = vmatpush1.msra.mxu0 %v3734
    %3962 = vmatprep.subr.mxu0 %v3737
    %3963 = vmatpush1.msra.mxu0 %v3736
    %3964 = vmatprep.subr.mxu0 %v3739
    %3965 = vmatpush1.msra.mxu0 %v3738
    %3966 = vmatprep.subr.mxu0 %v3741
    %3967 = vmatpush1.msra.mxu0 %v3740
    %3968 = vmatprep.subr.mxu0 %v3743
    %3969 = vmatpush1.msra.mxu0 %v3742
    %3970 = vmatprep.subr.mxu0 %v3745
    %3971 = vmatpush1.msra.mxu0 %v3744
    %3972 = vmatprep.subr.mxu0 %v3747
    %3973 = vmatpush1.msra.mxu0 %v3746
    %3974 = vmatprep.subr.mxu0 %v3749
    %3975 = vmatpush1.msra.mxu0 %v3748
    %3976 = vmatprep.subr.mxu0 %v3751
    %3977 = vmatpush1.msra.mxu0 %v3750
    %3978 = vmatprep.subr.mxu0 %v3928
    %3979 = vmatpush1.msra.mxu0 %v3925
    %3980 = vmatprep.subr.mxu0 0.0
    %3981 = vmatpush1.msra.mxu0 0.0
    %3982 = vmatprep.subr.mxu0 0.0
    %3983 = vmatpush1.msra.mxu0 0.0
    %3984 = vmatprep.subr.mxu0 0.0
    %3985 = vmatpush1.msra.mxu0 0.0
    %3986 = vmatprep.subr.mxu0 0.0
    %3987 = vmatpush1.msra.mxu0 0.0
    %3988 = vmatprep.subr.mxu0 0.0
    %3989 = vmatpush1.msra.mxu0 0.0
    %3990 = vmatprep.subr.mxu0 0.0
    %3991 = vmatpush1.msra.mxu0 0.0
    %3992 = vmatprep.subr.mxu0 0.0
    %3993 = vmatpush1.msra.mxu0 0.0
    %3994 = vmatprep.mubr.f32.mxu0 %v3901
    %3995 = vmatmul.mubr.f32.gmra.mrb[0].mxu0 %v3854
    %v3996 = vpop.f32.mrb[0].mxu0
    %v3997 = vadd.f32 0.0, %v3996
    %v3998 = vpop.f32.mrb[0].mxu0
    %v3999 = vadd.f32 0.0, %v3998
    %4000 = vmatprep.mubr.f32.mxu0 %v3904
    %4001 = vmatmul.mubr.f32.gmra.mrb[0].mxu0 %v3860
    %v4002 = vpop.f32.mrb[0].mxu0
    %v4003 = vadd.f32 0.0, %v4002
    %v4004 = vpop.f32.mrb[0].mxu0
    %v4005 = vadd.f32 0.0, %v4004
    %4006 = vmatprep.mubr.f32.mxu0 %v3907
    %4007 = vmatmul.mubr.f32.gmra.mrb[0].mxu0 %v3866
    %v4008 = vpop.f32.mrb[0].mxu0
    %v4009 = vadd.f32 0.0, %v4008
    %v4010 = vpop.f32.mrb[0].mxu0
    %v4011 = vadd.f32 0.0, %v4010
    %4012 = vmatprep.mubr.f32.mxu0 %v3910
    %4013 = vmatmul.mubr.f32.gmra.mrb[0].mxu0 %v3872
    %v4014 = vpop.f32.mrb[0].mxu0
    %v4015 = vadd.f32 0.0, %v4014
    %v4016 = vpop.f32.mrb[0].mxu0
    %v4017 = vadd.f32 0.0, %v4016
    %4018 = vmatprep.mubr.f32.mxu0 %v3913
    %4019 = vmatmul.mubr.f32.gmra.mrb[0].mxu0 %v3878
    %v4020 = vpop.f32.mrb[0].mxu0
    %v4021 = vadd.f32 0.0, %v4020
    %v4022 = vpop.f32.mrb[0].mxu0
    %v4023 = vadd.f32 0.0, %v4022
    %4024 = vmatprep.mubr.f32.mxu0 %v3916
    %4025 = vmatmul.mubr.f32.gmra.mrb[0].mxu0 %v3884
    %v4026 = vpop.f32.mrb[0].mxu0
    %v4027 = vadd.f32 0.0, %v4026
    %v4028 = vpop.f32.mrb[0].mxu0
    %v4029 = vadd.f32 0.0, %v4028
    %4030 = vmatprep.mubr.f32.mxu0 %v3919
    %4031 = vmatmul.mubr.f32.gmra.mrb[0].mxu0 %v3890
    %v4032 = vpop.f32.mrb[0].mxu0
    %v4033 = vadd.f32 0.0, %v4032
    %v4034 = vpop.f32.mrb[0].mxu0
    %v4035 = vadd.f32 0.0, %v4034
    %4036 = vmatprep.mubr.f32.mxu0 %v3922
    %4037 = vmatmul.mubr.f32.gmra.mrb[0].mxu0 %v3896
    %v4038 = vpop.f32.mrb[0].mxu0
    %v4039 = vadd.f32 0.0, %v4038
    %v4040 = vpop.f32.mrb[0].mxu0
    %v4041 = vadd.f32 0.0, %v4040
    %4042 = vdwg.mxu0
    %v4043 = vadd.f32 %v3573, %v3997
    %v4044 = vadd.f32 %v3574, %v3999
    %v4045 = vadd.f32 %v3575, %v4003
    %v4046 = vadd.f32 %v3576, %v4005
    %v4047 = vadd.f32 %v3577, %v4009
    %v4048 = vadd.f32 %v3578, %v4011
    %v4049 = vadd.f32 %v3579, %v4015
    %v4050 = vadd.f32 %v3580, %v4017
    %v4051 = vadd.f32 %v3581, %v4021
    %v4052 = vadd.f32 %v3582, %v4023
    %v4053 = vadd.f32 %v3583, %v4027
    %v4054 = vadd.f32 %v3584, %v4029
    %v4055 = vadd.f32 %v3585, %v4033
    %v4056 = vadd.f32 %v3586, %v4035
    %v4057 = vadd.f32 %v3587, %v4039
    %v4058 = vadd.f32 %v3588, %v4041
    %v4059 = vadd.s32 %v800, 14
    %v4060 = vadd.s32 %v801, 14
    %vm4061 = vcmp.eq.s32.totalorder %v774, %v4059
    %vm4062 = vcmp.eq.s32.totalorder %v774, %v4060
    %vm4063 = vcmp.eq.s32.totalorder %v775, %v4059
    %vm4064 = vcmp.eq.s32.totalorder %v775, %v4060
    %vm4065 = vcmp.eq.s32.totalorder %v776, %v4059
    %vm4066 = vcmp.eq.s32.totalorder %v776, %v4060
    %vm4067 = vcmp.eq.s32.totalorder %v777, %v4059
    %vm4068 = vcmp.eq.s32.totalorder %v777, %v4060
    %vm4069 = vcmp.eq.s32.totalorder %v778, %v4059
    %vm4070 = vcmp.eq.s32.totalorder %v778, %v4060
    %vm4071 = vcmp.eq.s32.totalorder %v779, %v4059
    %vm4072 = vcmp.eq.s32.totalorder %v779, %v4060
    %vm4073 = vcmp.eq.s32.totalorder %v780, %v4059
    %vm4074 = vcmp.eq.s32.totalorder %v780, %v4060
    %vm4075 = vcmp.eq.s32.totalorder %v781, %v4059
    %vm4076 = vcmp.eq.s32.totalorder %v781, %v4060
    %vm4077 = vcmp.eq.s32.totalorder %v782, %v4059
    %vm4078 = vcmp.eq.s32.totalorder %v782, %v4060
    %vm4079 = vcmp.eq.s32.totalorder %v783, %v4059
    %vm4080 = vcmp.eq.s32.totalorder %v783, %v4060
    %vm4081 = vcmp.eq.s32.totalorder %v784, %v4059
    %vm4082 = vcmp.eq.s32.totalorder %v784, %v4060
    %vm4083 = vcmp.eq.s32.totalorder %v785, %v4059
    %vm4084 = vcmp.eq.s32.totalorder %v785, %v4060
    %vm4085 = vcmp.eq.s32.totalorder %v786, %v4059
    %vm4086 = vcmp.eq.s32.totalorder %v786, %v4060
    %vm4087 = vcmp.eq.s32.totalorder %v787, %v4059
    %vm4088 = vcmp.eq.s32.totalorder %v787, %v4060
    %vm4089 = vcmp.eq.s32.totalorder %v788, %v4059
    %vm4090 = vcmp.eq.s32.totalorder %v788, %v4060
    %vm4091 = vcmp.eq.s32.totalorder %v789, %v4059
    %vm4092 = vcmp.eq.s32.totalorder %v789, %v4060
    %vm4093 = vcmp.eq.s32.totalorder %v790, %v4059
    %vm4094 = vcmp.eq.s32.totalorder %v790, %v4060
    %vm4095 = vcmp.eq.s32.totalorder %v791, %v4059
    %vm4096 = vcmp.eq.s32.totalorder %v791, %v4060
    %vm4097 = vcmp.eq.s32.totalorder %v792, %v4059
    %vm4098 = vcmp.eq.s32.totalorder %v792, %v4060
    %vm4099 = vcmp.eq.s32.totalorder %v793, %v4059
    %vm4100 = vcmp.eq.s32.totalorder %v793, %v4060
    %vm4101 = vcmp.eq.s32.totalorder %v794, %v4059
    %vm4102 = vcmp.eq.s32.totalorder %v794, %v4060
    %vm4103 = vcmp.eq.s32.totalorder %v795, %v4059
    %vm4104 = vcmp.eq.s32.totalorder %v795, %v4060
    %vm4105 = vcmp.eq.s32.totalorder %v796, %v4059
    %vm4106 = vcmp.eq.s32.totalorder %v796, %v4060
    %vm4107 = vcmp.eq.s32.totalorder %v797, %v4059
    %vm4108 = vcmp.eq.s32.totalorder %v797, %v4060
    %vm4109 = vcmp.eq.s32.totalorder %v798, %v4059
    %vm4110 = vcmp.eq.s32.totalorder %v798, %v4060
    %v4111 = vsel %vm4061, 1.0, 0.0
    %v4112 = vsel %vm4062, 1.0, 0.0
    %v4113 = vsel %vm4063, 1.0, 0.0
    %v4114 = vsel %vm4064, 1.0, 0.0
    %v4115 = vsel %vm4065, 1.0, 0.0
    %v4116 = vsel %vm4066, 1.0, 0.0
    %v4117 = vsel %vm4067, 1.0, 0.0
    %v4118 = vsel %vm4068, 1.0, 0.0
    %v4119 = vsel %vm4069, 1.0, 0.0
    %v4120 = vsel %vm4070, 1.0, 0.0
    %v4121 = vsel %vm4071, 1.0, 0.0
    %v4122 = vsel %vm4072, 1.0, 0.0
    %v4123 = vsel %vm4073, 1.0, 0.0
    %v4124 = vsel %vm4074, 1.0, 0.0
    %v4125 = vsel %vm4075, 1.0, 0.0
    %v4126 = vsel %vm4076, 1.0, 0.0
    %v4127 = vsel %vm4077, 1.0, 0.0
    %v4128 = vsel %vm4078, 1.0, 0.0
    %v4129 = vsel %vm4079, 1.0, 0.0
    %v4130 = vsel %vm4080, 1.0, 0.0
    %v4131 = vsel %vm4081, 1.0, 0.0
    %v4132 = vsel %vm4082, 1.0, 0.0
    %v4133 = vsel %vm4083, 1.0, 0.0
    %v4134 = vsel %vm4084, 1.0, 0.0
    %v4135 = vsel %vm4085, 1.0, 0.0
    %v4136 = vsel %vm4086, 1.0, 0.0
    %v4137 = vsel %vm4087, 1.0, 0.0
    %v4138 = vsel %vm4088, 1.0, 0.0
    %v4139 = vsel %vm4089, 1.0, 0.0
    %v4140 = vsel %vm4090, 1.0, 0.0
    %v4141 = vsel %vm4091, 1.0, 0.0
    %v4142 = vsel %vm4092, 1.0, 0.0
    %v4143 = vsel %vm4093, 1.0, 0.0
    %v4144 = vsel %vm4094, 1.0, 0.0
    %v4145 = vsel %vm4095, 1.0, 0.0
    %v4146 = vsel %vm4096, 1.0, 0.0
    %v4147 = vsel %vm4097, 1.0, 0.0
    %v4148 = vsel %vm4098, 1.0, 0.0
    %v4149 = vsel %vm4099, 1.0, 0.0
    %v4150 = vsel %vm4100, 1.0, 0.0
    %v4151 = vsel %vm4101, 1.0, 0.0
    %v4152 = vsel %vm4102, 1.0, 0.0
    %v4153 = vsel %vm4103, 1.0, 0.0
    %v4154 = vsel %vm4104, 1.0, 0.0
    %v4155 = vsel %vm4105, 1.0, 0.0
    %v4156 = vsel %vm4106, 1.0, 0.0
    %v4157 = vsel %vm4107, 1.0, 0.0
    %v4158 = vsel %vm4108, 1.0, 0.0
    %v4159 = vsel %vm4109, 1.0, 0.0
    %v4160 = vsel %vm4110, 1.0, 0.0
    %s4161 = scalar_lea.vmem [#allocation2], 14
    %v4162 = vld [vmem:[%s4161] sm:$0x3]
    %v4164 = vlaneseq
    %v4165 = vshrl.u32 %v4164, 7
    %v4166 = vsub.s32 0, %v4165
    %v4167 = vrot.slane %v4162, %v4166
    %v4168 = vlaneseq
    %v4169 = vshrl.u32 %v4168, 7
    %v4170 = vsub.s32 1, %v4169
    %v4171 = vrot.slane %v4162, %v4170
    %v4174 = vmul.f32 %v4111, %v4167
    %v4175 = vmul.f32 %v4112, %v4171
    %v4176 = vmul.f32 %v4113, %v4167
    %v4177 = vmul.f32 %v4114, %v4171
    %v4178 = vmul.f32 %v4115, %v4167
    %v4179 = vmul.f32 %v4116, %v4171
    %v4180 = vmul.f32 %v4117, %v4167
    %v4181 = vmul.f32 %v4118, %v4171
    %v4182 = vmul.f32 %v4119, %v4167
    %v4183 = vmul.f32 %v4120, %v4171
    %v4184 = vmul.f32 %v4121, %v4167
    %v4185 = vmul.f32 %v4122, %v4171
    %v4186 = vmul.f32 %v4123, %v4167
    %v4187 = vmul.f32 %v4124, %v4171
    %v4188 = vmul.f32 %v4125, %v4167
    %v4189 = vmul.f32 %v4126, %v4171
    %v4190 = vmul.f32 %v4127, %v4167
    %v4191 = vmul.f32 %v4128, %v4171
    %v4192 = vmul.f32 %v4129, %v4167
    %v4193 = vmul.f32 %v4130, %v4171
    %v4194 = vmul.f32 %v4131, %v4167
    %v4195 = vmul.f32 %v4132, %v4171
    %v4196 = vmul.f32 %v4133, %v4167
    %v4197 = vmul.f32 %v4134, %v4171
    %v4198 = vmul.f32 %v4135, %v4167
    %v4199 = vmul.f32 %v4136, %v4171
    %v4200 = vmul.f32 %v4137, %v4167
    %v4201 = vmul.f32 %v4138, %v4171
    %v4202 = vmul.f32 %v4139, %v4167
    %v4203 = vmul.f32 %v4140, %v4171
    %v4204 = vmul.f32 %v4141, %v4167
    %v4205 = vmul.f32 %v4142, %v4171
    %v4206 = vmul.f32 %v4143, %v4167
    %v4207 = vmul.f32 %v4144, %v4171
    %v4208 = vmul.f32 %v4145, %v4167
    %v4209 = vmul.f32 %v4146, %v4171
    %v4210 = vmul.f32 %v4147, %v4167
    %v4211 = vmul.f32 %v4148, %v4171
    %v4212 = vmul.f32 %v4149, %v4167
    %v4213 = vmul.f32 %v4150, %v4171
    %v4214 = vmul.f32 %v4151, %v4167
    %v4215 = vmul.f32 %v4152, %v4171
    %v4216 = vmul.f32 %v4153, %v4167
    %v4217 = vmul.f32 %v4154, %v4171
    %v4218 = vmul.f32 %v4155, %v4167
    %v4219 = vmul.f32 %v4156, %v4171
    %v4220 = vmul.f32 %v4157, %v4167
    %v4221 = vmul.f32 %v4158, %v4171
    %v4222 = vmul.f32 %v4159, %v4167
    %v4223 = vmul.f32 %v4160, %v4171
    %s4224 = scalar_lea.vmem [#allocation7], 448
    %v4225 = vld [vmem:[%s4224] sm:$0xff]
    %v4226 = vld [vmem:[%s4224 + $0x8] sm:$0xff]
    %v4227 = vld [vmem:[%s4224 + $0x10] sm:$0xff]
    %v4228 = vld [vmem:[%s4224 + $0x18] sm:$0xff]
    %v4229 = vld [vmem:[%s4224 + $0x20] sm:$0xff]
    %v4230 = vld [vmem:[%s4224 + $0x28] sm:$0xff]
    %v4231 = vld [vmem:[%s4224 + $0x30] sm:$0xff]
    %v4232 = vld [vmem:[%s4224 + $0x38] sm:$0xff]
    %v4234 = vsel %vm974, %v4225, 0
    %v4237 = vsel %vm974, %v4226, 0
    %v4240 = vsel %vm974, %v4227, 0
    %v4243 = vsel %vm974, %v4228, 0
    %v4246 = vsel %vm974, %v4229, 0
    %v4249 = vsel %vm974, %v4230, 0
    %v4252 = vsel %vm974, %v4231, 0
    %v4255 = vsel %vm974, %v4232, 0
    %4257 = vmatprep.subr.mxu0 %v758
    %4258 = vmatpush1.msra.mxu0 %v757
    %4259 = vmatprep.subr.mxu0 %v760
    %4260 = vmatpush1.msra.mxu0 %v759
    %4261 = vmatprep.subr.mxu0 %v762
    %4262 = vmatpush1.msra.mxu0 %v761
    %4263 = vmatprep.subr.mxu0 %v764
    %4264 = vmatpush1.msra.mxu0 %v763
    %4265 = vmatprep.subr.mxu0 %v766
    %4266 = vmatpush1.msra.mxu0 %v765
    %4267 = vmatprep.subr.mxu0 %v768
    %4268 = vmatpush1.msra.mxu0 %v767
    %4269 = vmatprep.subr.mxu0 %v770
    %4270 = vmatpush1.msra.mxu0 %v769
    %4271 = vmatprep.subr.mxu0 %v772
    %4272 = vmatpush1.msra.mxu0 %v771
    %4273 = vmatprep.subr.mxu0 0.0
    %4274 = vmatpush1.msra.mxu0 0.0
    %4275 = vmatprep.subr.mxu0 0.0
    %4276 = vmatpush1.msra.mxu0 0.0
    %4277 = vmatprep.subr.mxu0 0.0
    %4278 = vmatpush1.msra.mxu0 0.0
    %4279 = vmatprep.subr.mxu0 0.0
    %4280 = vmatpush1.msra.mxu0 0.0
    %4281 = vmatprep.subr.mxu0 0.0
    %4282 = vmatpush1.msra.mxu0 0.0
    %4283 = vmatprep.subr.mxu0 0.0
    %4284 = vmatpush1.msra.mxu0 0.0
    %4285 = vmatprep.subr.mxu0 0.0
    %4286 = vmatpush1.msra.mxu0 0.0
    %4287 = vmatprep.subr.mxu0 0.0
    %4288 = vmatpush1.msra.mxu0 0.0
    %4289 = vmatprep.subr.mxu0 0.0
    %4290 = vmatpush1.msra.mxu0 0.0
    %4291 = vmatprep.subr.mxu0 0.0
    %4292 = vmatpush1.msra.mxu0 0.0
    %4293 = vmatprep.subr.mxu0 0.0
    %4294 = vmatpush1.msra.mxu0 0.0
    %4295 = vmatprep.subr.mxu0 0.0
    %4296 = vmatpush1.msra.mxu0 0.0
    %4297 = vmatprep.subr.mxu0 0.0
    %4298 = vmatpush1.msra.mxu0 0.0
    %4299 = vmatprep.subr.mxu0 0.0
    %4300 = vmatpush1.msra.mxu0 0.0
    %4301 = vmatprep.subr.mxu0 0.0
    %4302 = vmatpush1.msra.mxu0 0.0
    %4303 = vmatprep.subr.mxu0 0.0
    %4304 = vmatpush1.msra.mxu0 0.0
    %4305 = vmatprep.subr.mxu0 0.0
    %4306 = vmatpush1.msra.mxu0 0.0
    %4307 = vmatprep.subr.mxu0 0.0
    %4308 = vmatpush1.msra.mxu0 0.0
    %4309 = vmatprep.subr.mxu0 0.0
    %4310 = vmatpush1.msra.mxu0 0.0
    %4311 = vmatprep.subr.mxu0 0.0
    %4312 = vmatpush1.msra.mxu0 0.0
    %4313 = vmatprep.subr.mxu0 0.0
    %4314 = vmatpush1.msra.mxu0 0.0
    %4315 = vmatprep.subr.mxu0 0.0
    %4316 = vmatpush1.msra.mxu0 0.0
    %4317 = vmatprep.subr.mxu0 0.0
    %4318 = vmatpush1.msra.mxu0 0.0
    %4319 = vmatprep.subr.mxu0 0.0
    %4320 = vmatpush1.msra.mxu0 0.0
    %4321 = vmatprep.mubr.f32.mxu0 0.0
    %4322 = vmatmul.mubr.f32.gmra.mrb[0].mxu0 %v4234
    %v4323 = vpop.f32.mrb[0].mxu0
    %v4324 = vadd.f32 0.0, %v4323
    %v4325 = vpop.f32.mrb[0].mxu0
    %v4326 = vadd.f32 0.0, %v4325
    %4327 = vmatprep.mubr.f32.mxu0 0.0
    %4328 = vmatmul.mubr.f32.gmra.mrb[0].mxu0 %v4237
    %v4329 = vpop.f32.mrb[0].mxu0
    %v4330 = vadd.f32 0.0, %v4329
    %v4331 = vpop.f32.mrb[0].mxu0
    %v4332 = vadd.f32 0.0, %v4331
    %4333 = vmatprep.mubr.f32.mxu0 0.0
    %4334 = vmatmul.mubr.f32.gmra.mrb[0].mxu0 %v4240
    %v4335 = vpop.f32.mrb[0].mxu0
    %v4336 = vadd.f32 0.0, %v4335
    %v4337 = vpop.f32.mrb[0].mxu0
    %v4338 = vadd.f32 0.0, %v4337
    %4339 = vmatprep.mubr.f32.mxu0 0.0
    %4340 = vmatmul.mubr.f32.gmra.mrb[0].mxu0 %v4243
    %v4341 = vpop.f32.mrb[0].mxu0
    %v4342 = vadd.f32 0.0, %v4341
    %v4343 = vpop.f32.mrb[0].mxu0
    %v4344 = vadd.f32 0.0, %v4343
    %4345 = vmatprep.mubr.f32.mxu0 0.0
    %4346 = vmatmul.mubr.f32.gmra.mrb[0].mxu0 %v4246
    %v4347 = vpop.f32.mrb[0].mxu0
    %v4348 = vadd.f32 0.0, %v4347
    %v4349 = vpop.f32.mrb[0].mxu0
    %v4350 = vadd.f32 0.0, %v4349
    %4351 = vmatprep.mubr.f32.mxu0 0.0
    %4352 = vmatmul.mubr.f32.gmra.mrb[0].mxu0 %v4249
    %v4353 = vpop.f32.mrb[0].mxu0
    %v4354 = vadd.f32 0.0, %v4353
    %v4355 = vpop.f32.mrb[0].mxu0
    %v4356 = vadd.f32 0.0, %v4355
    %4357 = vmatprep.mubr.f32.mxu0 0.0
    %4358 = vmatmul.mubr.f32.gmra.mrb[0].mxu0 %v4252
    %v4359 = vpop.f32.mrb[0].mxu0
    %v4360 = vadd.f32 0.0, %v4359
    %v4361 = vpop.f32.mrb[0].mxu0
    %v4362 = vadd.f32 0.0, %v4361
    %4363 = vmatprep.mubr.f32.mxu0 0.0
    %4364 = vmatmul.mubr.f32.gmra.mrb[0].mxu0 %v4255
    %v4365 = vpop.f32.mrb[0].mxu0
    %v4366 = vadd.f32 0.0, %v4365
    %v4367 = vpop.f32.mrb[0].mxu0
    %v4368 = vadd.f32 0.0, %v4367
    %4369 = vdwg.mxu0
    %v4371 = vsel %vm1423, %v4326, 0
    %v4374 = vsel %vm1423, %v4332, 0
    %v4377 = vsel %vm1423, %v4338, 0
    %v4380 = vsel %vm1423, %v4344, 0
    %v4383 = vsel %vm1423, %v4350, 0
    %v4386 = vsel %vm1423, %v4356, 0
    %v4389 = vsel %vm1423, %v4362, 0
    %v4392 = vsel %vm1423, %v4368, 0
    %v4395 = vsel %vm1448, %v4222, 0
    %v4398 = vsel %vm1448, %v4223, 0
    %4400 = vmatprep.subr.mxu0 %v4175
    %4401 = vmatpush1.msra.mxu0 %v4174
    %4402 = vmatprep.subr.mxu0 %v4177
    %4403 = vmatpush1.msra.mxu0 %v4176
    %4404 = vmatprep.subr.mxu0 %v4179
    %4405 = vmatpush1.msra.mxu0 %v4178
    %4406 = vmatprep.subr.mxu0 %v4181
    %4407 = vmatpush1.msra.mxu0 %v4180
    %4408 = vmatprep.subr.mxu0 %v4183
    %4409 = vmatpush1.msra.mxu0 %v4182
    %4410 = vmatprep.subr.mxu0 %v4185
    %4411 = vmatpush1.msra.mxu0 %v4184
    %4412 = vmatprep.subr.mxu0 %v4187
    %4413 = vmatpush1.msra.mxu0 %v4186
    %4414 = vmatprep.subr.mxu0 %v4189
    %4415 = vmatpush1.msra.mxu0 %v4188
    %4416 = vmatprep.subr.mxu0 %v4191
    %4417 = vmatpush1.msra.mxu0 %v4190
    %4418 = vmatprep.subr.mxu0 %v4193
    %4419 = vmatpush1.msra.mxu0 %v4192
    %4420 = vmatprep.subr.mxu0 %v4195
    %4421 = vmatpush1.msra.mxu0 %v4194
    %4422 = vmatprep.subr.mxu0 %v4197
    %4423 = vmatpush1.msra.mxu0 %v4196
    %4424 = vmatprep.subr.mxu0 %v4199
    %4425 = vmatpush1.msra.mxu0 %v4198
    %4426 = vmatprep.subr.mxu0 %v4201
    %4427 = vmatpush1.msra.mxu0 %v4200
    %4428 = vmatprep.subr.mxu0 %v4203
    %4429 = vmatpush1.msra.mxu0 %v4202
    %4430 = vmatprep.subr.mxu0 %v4205
    %4431 = vmatpush1.msra.mxu0 %v4204
    %4432 = vmatprep.subr.mxu0 %v4207
    %4433 = vmatpush1.msra.mxu0 %v4206
    %4434 = vmatprep.subr.mxu0 %v4209
    %4435 = vmatpush1.msra.mxu0 %v4208
    %4436 = vmatprep.subr.mxu0 %v4211
    %4437 = vmatpush1.msra.mxu0 %v4210
    %4438 = vmatprep.subr.mxu0 %v4213
    %4439 = vmatpush1.msra.mxu0 %v4212
    %4440 = vmatprep.subr.mxu0 %v4215
    %4441 = vmatpush1.msra.mxu0 %v4214
    %4442 = vmatprep.subr.mxu0 %v4217
    %4443 = vmatpush1.msra.mxu0 %v4216
    %4444 = vmatprep.subr.mxu0 %v4219
    %4445 = vmatpush1.msra.mxu0 %v4218
    %4446 = vmatprep.subr.mxu0 %v4221
    %4447 = vmatpush1.msra.mxu0 %v4220
    %4448 = vmatprep.subr.mxu0 %v4398
    %4449 = vmatpush1.msra.mxu0 %v4395
    %4450 = vmatprep.subr.mxu0 0.0
    %4451 = vmatpush1.msra.mxu0 0.0
    %4452 = vmatprep.subr.mxu0 0.0
    %4453 = vmatpush1.msra.mxu0 0.0
    %4454 = vmatprep.subr.mxu0 0.0
    %4455 = vmatpush1.msra.mxu0 0.0
    %4456 = vmatprep.subr.mxu0 0.0
    %4457 = vmatpush1.msra.mxu0 0.0
    %4458 = vmatprep.subr.mxu0 0.0
    %4459 = vmatpush1.msra.mxu0 0.0
    %4460 = vmatprep.subr.mxu0 0.0
    %4461 = vmatpush1.msra.mxu0 0.0
    %4462 = vmatprep.subr.mxu0 0.0
    %4463 = vmatpush1.msra.mxu0 0.0
    %4464 = vmatprep.mubr.f32.mxu0 %v4371
    %4465 = vmatmul.mubr.f32.gmra.mrb[0].mxu0 %v4324
    %v4466 = vpop.f32.mrb[0].mxu0
    %v4467 = vadd.f32 0.0, %v4466
    %v4468 = vpop.f32.mrb[0].mxu0
    %v4469 = vadd.f32 0.0, %v4468
    %4470 = vmatprep.mubr.f32.mxu0 %v4374
    %4471 = vmatmul.mubr.f32.gmra.mrb[0].mxu0 %v4330
    %v4472 = vpop.f32.mrb[0].mxu0
    %v4473 = vadd.f32 0.0, %v4472
    %v4474 = vpop.f32.mrb[0].mxu0
    %v4475 = vadd.f32 0.0, %v4474
    %4476 = vmatprep.mubr.f32.mxu0 %v4377
    %4477 = vmatmul.mubr.f32.gmra.mrb[0].mxu0 %v4336
    %v4478 = vpop.f32.mrb[0].mxu0
    %v4479 = vadd.f32 0.0, %v4478
    %v4480 = vpop.f32.mrb[0].mxu0
    %v4481 = vadd.f32 0.0, %v4480
    %4482 = vmatprep.mubr.f32.mxu0 %v4380
    %4483 = vmatmul.mubr.f32.gmra.mrb[0].mxu0 %v4342
    %v4484 = vpop.f32.mrb[0].mxu0
    %v4485 = vadd.f32 0.0, %v4484
    %v4486 = vpop.f32.mrb[0].mxu0
    %v4487 = vadd.f32 0.0, %v4486
    %4488 = vmatprep.mubr.f32.mxu0 %v4383
    %4489 = vmatmul.mubr.f32.gmra.mrb[0].mxu0 %v4348
    %v4490 = vpop.f32.mrb[0].mxu0
    %v4491 = vadd.f32 0.0, %v4490
    %v4492 = vpop.f32.mrb[0].mxu0
    %v4493 = vadd.f32 0.0, %v4492
    %4494 = vmatprep.mubr.f32.mxu0 %v4386
    %4495 = vmatmul.mubr.f32.gmra.mrb[0].mxu0 %v4354
    %v4496 = vpop.f32.mrb[0].mxu0
    %v4497 = vadd.f32 0.0, %v4496
    %v4498 = vpop.f32.mrb[0].mxu0
    %v4499 = vadd.f32 0.0, %v4498
    %4500 = vmatprep.mubr.f32.mxu0 %v4389
    %4501 = vmatmul.mubr.f32.gmra.mrb[0].mxu0 %v4360
    %v4502 = vpop.f32.mrb[0].mxu0
    %v4503 = vadd.f32 0.0, %v4502
    %v4504 = vpop.f32.mrb[0].mxu0
    %v4505 = vadd.f32 0.0, %v4504
    %4506 = vmatprep.mubr.f32.mxu0 %v4392
    %4507 = vmatmul.mubr.f32.gmra.mrb[0].mxu0 %v4366
    %v4508 = vpop.f32.mrb[0].mxu0
    %v4509 = vadd.f32 0.0, %v4508
    %v4510 = vpop.f32.mrb[0].mxu0
    %v4511 = vadd.f32 0.0, %v4510
    %4512 = vdwg.mxu0
    %v4513 = vadd.f32 %v4043, %v4467
    %v4514 = vadd.f32 %v4044, %v4469
    %v4515 = vadd.f32 %v4045, %v4473
    %v4516 = vadd.f32 %v4046, %v4475
    %v4517 = vadd.f32 %v4047, %v4479
    %v4518 = vadd.f32 %v4048, %v4481
    %v4519 = vadd.f32 %v4049, %v4485
    %v4520 = vadd.f32 %v4050, %v4487
    %v4521 = vadd.f32 %v4051, %v4491
    %v4522 = vadd.f32 %v4052, %v4493
    %v4523 = vadd.f32 %v4053, %v4497
    %v4524 = vadd.f32 %v4054, %v4499
    %v4525 = vadd.f32 %v4055, %v4503
    %v4526 = vadd.f32 %v4056, %v4505
    %v4527 = vadd.f32 %v4057, %v4509
    %v4528 = vadd.f32 %v4058, %v4511
    %v4529 = vadd.s32 %v800, 15
    %v4530 = vadd.s32 %v801, 15
    %vm4531 = vcmp.eq.s32.totalorder %v774, %v4529
    %vm4532 = vcmp.eq.s32.totalorder %v774, %v4530
    %vm4533 = vcmp.eq.s32.totalorder %v775, %v4529
    %vm4534 = vcmp.eq.s32.totalorder %v775, %v4530
    %vm4535 = vcmp.eq.s32.totalorder %v776, %v4529
    %vm4536 = vcmp.eq.s32.totalorder %v776, %v4530
    %vm4537 = vcmp.eq.s32.totalorder %v777, %v4529
    %vm4538 = vcmp.eq.s32.totalorder %v777, %v4530
    %vm4539 = vcmp.eq.s32.totalorder %v778, %v4529
    %vm4540 = vcmp.eq.s32.totalorder %v778, %v4530
    %vm4541 = vcmp.eq.s32.totalorder %v779, %v4529
    %vm4542 = vcmp.eq.s32.totalorder %v779, %v4530
    %vm4543 = vcmp.eq.s32.totalorder %v780, %v4529
    %vm4544 = vcmp.eq.s32.totalorder %v780, %v4530
    %vm4545 = vcmp.eq.s32.totalorder %v781, %v4529
    %vm4546 = vcmp.eq.s32.totalorder %v781, %v4530
    %vm4547 = vcmp.eq.s32.totalorder %v782, %v4529
    %vm4548 = vcmp.eq.s32.totalorder %v782, %v4530
    %vm4549 = vcmp.eq.s32.totalorder %v783, %v4529
    %vm4550 = vcmp.eq.s32.totalorder %v783, %v4530
    %vm4551 = vcmp.eq.s32.totalorder %v784, %v4529
    %vm4552 = vcmp.eq.s32.totalorder %v784, %v4530
    %vm4553 = vcmp.eq.s32.totalorder %v785, %v4529
    %vm4554 = vcmp.eq.s32.totalorder %v785, %v4530
    %vm4555 = vcmp.eq.s32.totalorder %v786, %v4529
    %vm4556 = vcmp.eq.s32.totalorder %v786, %v4530
    %vm4557 = vcmp.eq.s32.totalorder %v787, %v4529
    %vm4558 = vcmp.eq.s32.totalorder %v787, %v4530
    %vm4559 = vcmp.eq.s32.totalorder %v788, %v4529
    %vm4560 = vcmp.eq.s32.totalorder %v788, %v4530
    %vm4561 = vcmp.eq.s32.totalorder %v789, %v4529
    %vm4562 = vcmp.eq.s32.totalorder %v789, %v4530
    %vm4563 = vcmp.eq.s32.totalorder %v790, %v4529
    %vm4564 = vcmp.eq.s32.totalorder %v790, %v4530
    %vm4565 = vcmp.eq.s32.totalorder %v791, %v4529
    %vm4566 = vcmp.eq.s32.totalorder %v791, %v4530
    %vm4567 = vcmp.eq.s32.totalorder %v792, %v4529
    %vm4568 = vcmp.eq.s32.totalorder %v792, %v4530
    %vm4569 = vcmp.eq.s32.totalorder %v793, %v4529
    %vm4570 = vcmp.eq.s32.totalorder %v793, %v4530
    %vm4571 = vcmp.eq.s32.totalorder %v794, %v4529
    %vm4572 = vcmp.eq.s32.totalorder %v794, %v4530
    %vm4573 = vcmp.eq.s32.totalorder %v795, %v4529
    %vm4574 = vcmp.eq.s32.totalorder %v795, %v4530
    %vm4575 = vcmp.eq.s32.totalorder %v796, %v4529
    %vm4576 = vcmp.eq.s32.totalorder %v796, %v4530
    %vm4577 = vcmp.eq.s32.totalorder %v797, %v4529
    %vm4578 = vcmp.eq.s32.totalorder %v797, %v4530
    %vm4579 = vcmp.eq.s32.totalorder %v798, %v4529
    %vm4580 = vcmp.eq.s32.totalorder %v798, %v4530
    %v4581 = vsel %vm4531, 1.0, 0.0
    %v4582 = vsel %vm4532, 1.0, 0.0
    %v4583 = vsel %vm4533, 1.0, 0.0
    %v4584 = vsel %vm4534, 1.0, 0.0
    %v4585 = vsel %vm4535, 1.0, 0.0
    %v4586 = vsel %vm4536, 1.0, 0.0
    %v4587 = vsel %vm4537, 1.0, 0.0
    %v4588 = vsel %vm4538, 1.0, 0.0
    %v4589 = vsel %vm4539, 1.0, 0.0
    %v4590 = vsel %vm4540, 1.0, 0.0
    %v4591 = vsel %vm4541, 1.0, 0.0
    %v4592 = vsel %vm4542, 1.0, 0.0
    %v4593 = vsel %vm4543, 1.0, 0.0
    %v4594 = vsel %vm4544, 1.0, 0.0
    %v4595 = vsel %vm4545, 1.0, 0.0
    %v4596 = vsel %vm4546, 1.0, 0.0
    %v4597 = vsel %vm4547, 1.0, 0.0
    %v4598 = vsel %vm4548, 1.0, 0.0
    %v4599 = vsel %vm4549, 1.0, 0.0
    %v4600 = vsel %vm4550, 1.0, 0.0
    %v4601 = vsel %vm4551, 1.0, 0.0
    %v4602 = vsel %vm4552, 1.0, 0.0
    %v4603 = vsel %vm4553, 1.0, 0.0
    %v4604 = vsel %vm4554, 1.0, 0.0
    %v4605 = vsel %vm4555, 1.0, 0.0
    %v4606 = vsel %vm4556, 1.0, 0.0
    %v4607 = vsel %vm4557, 1.0, 0.0
    %v4608 = vsel %vm4558, 1.0, 0.0
    %v4609 = vsel %vm4559, 1.0, 0.0
    %v4610 = vsel %vm4560, 1.0, 0.0
    %v4611 = vsel %vm4561, 1.0, 0.0
    %v4612 = vsel %vm4562, 1.0, 0.0
    %v4613 = vsel %vm4563, 1.0, 0.0
    %v4614 = vsel %vm4564, 1.0, 0.0
    %v4615 = vsel %vm4565, 1.0, 0.0
    %v4616 = vsel %vm4566, 1.0, 0.0
    %v4617 = vsel %vm4567, 1.0, 0.0
    %v4618 = vsel %vm4568, 1.0, 0.0
    %v4619 = vsel %vm4569, 1.0, 0.0
    %v4620 = vsel %vm4570, 1.0, 0.0
    %v4621 = vsel %vm4571, 1.0, 0.0
    %v4622 = vsel %vm4572, 1.0, 0.0
    %v4623 = vsel %vm4573, 1.0, 0.0
    %v4624 = vsel %vm4574, 1.0, 0.0
    %v4625 = vsel %vm4575, 1.0, 0.0
    %v4626 = vsel %vm4576, 1.0, 0.0
    %v4627 = vsel %vm4577, 1.0, 0.0
    %v4628 = vsel %vm4578, 1.0, 0.0
    %v4629 = vsel %vm4579, 1.0, 0.0
    %v4630 = vsel %vm4580, 1.0, 0.0
    %s4631 = scalar_lea.vmem [#allocation2], 16
    %v4632 = vld [vmem:[%s4631] sm:$0x3]
    %v4634 = vlaneseq
    %v4635 = vshrl.u32 %v4634, 7
    %v4636 = vsub.s32 0, %v4635
    %v4637 = vrot.slane %v4632, %v4636
    %v4638 = vlaneseq
    %v4639 = vshrl.u32 %v4638, 7
    %v4640 = vsub.s32 1, %v4639
    %v4641 = vrot.slane %v4632, %v4640
    %v4644 = vmul.f32 %v4581, %v4637
    %v4645 = vmul.f32 %v4582, %v4641
    %v4646 = vmul.f32 %v4583, %v4637
    %v4647 = vmul.f32 %v4584, %v4641
    %v4648 = vmul.f32 %v4585, %v4637
    %v4649 = vmul.f32 %v4586, %v4641
    %v4650 = vmul.f32 %v4587, %v4637
    %v4651 = vmul.f32 %v4588, %v4641
    %v4652 = vmul.f32 %v4589, %v4637
    %v4653 = vmul.f32 %v4590, %v4641
    %v4654 = vmul.f32 %v4591, %v4637
    %v4655 = vmul.f32 %v4592, %v4641
    %v4656 = vmul.f32 %v4593, %v4637
    %v4657 = vmul.f32 %v4594, %v4641
    %v4658 = vmul.f32 %v4595, %v4637
    %v4659 = vmul.f32 %v4596, %v4641
    %v4660 = vmul.f32 %v4597, %v4637
    %v4661 = vmul.f32 %v4598, %v4641
    %v4662 = vmul.f32 %v4599, %v4637
    %v4663 = vmul.f32 %v4600, %v4641
    %v4664 = vmul.f32 %v4601, %v4637
    %v4665 = vmul.f32 %v4602, %v4641
    %v4666 = vmul.f32 %v4603, %v4637
    %v4667 = vmul.f32 %v4604, %v4641
    %v4668 = vmul.f32 %v4605, %v4637
    %v4669 = vmul.f32 %v4606, %v4641
    %v4670 = vmul.f32 %v4607, %v4637
    %v4671 = vmul.f32 %v4608, %v4641
    %v4672 = vmul.f32 %v4609, %v4637
    %v4673 = vmul.f32 %v4610, %v4641
    %v4674 = vmul.f32 %v4611, %v4637
    %v4675 = vmul.f32 %v4612, %v4641
    %v4676 = vmul.f32 %v4613, %v4637
    %v4677 = vmul.f32 %v4614, %v4641
    %v4678 = vmul.f32 %v4615, %v4637
    %v4679 = vmul.f32 %v4616, %v4641
    %v4680 = vmul.f32 %v4617, %v4637
    %v4681 = vmul.f32 %v4618, %v4641
    %v4682 = vmul.f32 %v4619, %v4637
    %v4683 = vmul.f32 %v4620, %v4641
    %v4684 = vmul.f32 %v4621, %v4637
    %v4685 = vmul.f32 %v4622, %v4641
    %v4686 = vmul.f32 %v4623, %v4637
    %v4687 = vmul.f32 %v4624, %v4641
    %v4688 = vmul.f32 %v4625, %v4637
    %v4689 = vmul.f32 %v4626, %v4641
    %v4690 = vmul.f32 %v4627, %v4637
    %v4691 = vmul.f32 %v4628, %v4641
    %v4692 = vmul.f32 %v4629, %v4637
    %v4693 = vmul.f32 %v4630, %v4641
    %s4694 = scalar_lea.vmem [#allocation7], 512
    %v4695 = vld [vmem:[%s4694] sm:$0xff]
    %v4696 = vld [vmem:[%s4694 + $0x8] sm:$0xff]
    %v4697 = vld [vmem:[%s4694 + $0x10] sm:$0xff]
    %v4698 = vld [vmem:[%s4694 + $0x18] sm:$0xff]
    %v4699 = vld [vmem:[%s4694 + $0x20] sm:$0xff]
    %v4700 = vld [vmem:[%s4694 + $0x28] sm:$0xff]
    %v4701 = vld [vmem:[%s4694 + $0x30] sm:$0xff]
    %v4702 = vld [vmem:[%s4694 + $0x38] sm:$0xff]
    %v4704 = vsel %vm974, %v4695, 0
    %v4707 = vsel %vm974, %v4696, 0
    %v4710 = vsel %vm974, %v4697, 0
    %v4713 = vsel %vm974, %v4698, 0
    %v4716 = vsel %vm974, %v4699, 0
    %v4719 = vsel %vm974, %v4700, 0
    %v4722 = vsel %vm974, %v4701, 0
    %v4725 = vsel %vm974, %v4702, 0
    %4727 = vmatprep.subr.mxu0 %v758
    %4728 = vmatpush1.msra.mxu0 %v757
    %4729 = vmatprep.subr.mxu0 %v760
    %4730 = vmatpush1.msra.mxu0 %v759
    %4731 = vmatprep.subr.mxu0 %v762
    %4732 = vmatpush1.msra.mxu0 %v761
    %4733 = vmatprep.subr.mxu0 %v764
    %4734 = vmatpush1.msra.mxu0 %v763
    %4735 = vmatprep.subr.mxu0 %v766
    %4736 = vmatpush1.msra.mxu0 %v765
    %4737 = vmatprep.subr.mxu0 %v768
    %4738 = vmatpush1.msra.mxu0 %v767
    %4739 = vmatprep.subr.mxu0 %v770
    %4740 = vmatpush1.msra.mxu0 %v769
    %4741 = vmatprep.subr.mxu0 %v772
    %4742 = vmatpush1.msra.mxu0 %v771
    %4743 = vmatprep.subr.mxu0 0.0
    %4744 = vmatpush1.msra.mxu0 0.0
    %4745 = vmatprep.subr.mxu0 0.0
    %4746 = vmatpush1.msra.mxu0 0.0
    %4747 = vmatprep.subr.mxu0 0.0
    %4748 = vmatpush1.msra.mxu0 0.0
    %4749 = vmatprep.subr.mxu0 0.0
    %4750 = vmatpush1.msra.mxu0 0.0
    %4751 = vmatprep.subr.mxu0 0.0
    %4752 = vmatpush1.msra.mxu0 0.0
    %4753 = vmatprep.subr.mxu0 0.0
    %4754 = vmatpush1.msra.mxu0 0.0
    %4755 = vmatprep.subr.mxu0 0.0
    %4756 = vmatpush1.msra.mxu0 0.0
    %4757 = vmatprep.subr.mxu0 0.0
    %4758 = vmatpush1.msra.mxu0 0.0
    %4759 = vmatprep.subr.mxu0 0.0
    %4760 = vmatpush1.msra.mxu0 0.0
    %4761 = vmatprep.subr.mxu0 0.0
    %4762 = vmatpush1.msra.mxu0 0.0
    %4763 = vmatprep.subr.mxu0 0.0
    %4764 = vmatpush1.msra.mxu0 0.0
    %4765 = vmatprep.subr.mxu0 0.0
    %4766 = vmatpush1.msra.mxu0 0.0
    %4767 = vmatprep.subr.mxu0 0.0
    %4768 = vmatpush1.msra.mxu0 0.0
    %4769 = vmatprep.subr.mxu0 0.0
    %4770 = vmatpush1.msra.mxu0 0.0
    %4771 = vmatprep.subr.mxu0 0.0
    %4772 = vmatpush1.msra.mxu0 0.0
    %4773 = vmatprep.subr.mxu0 0.0
    %4774 = vmatpush1.msra.mxu0 0.0
    %4775 = vmatprep.subr.mxu0 0.0
    %4776 = vmatpush1.msra.mxu0 0.0
    %4777 = vmatprep.subr.mxu0 0.0
    %4778 = vmatpush1.msra.mxu0 0.0
    %4779 = vmatprep.subr.mxu0 0.0
    %4780 = vmatpush1.msra.mxu0 0.0
    %4781 = vmatprep.subr.mxu0 0.0
    %4782 = vmatpush1.msra.mxu0 0.0
    %4783 = vmatprep.subr.mxu0 0.0
    %4784 = vmatpush1.msra.mxu0 0.0
    %4785 = vmatprep.subr.mxu0 0.0
    %4786 = vmatpush1.msra.mxu0 0.0
    %4787 = vmatprep.subr.mxu0 0.0
    %4788 = vmatpush1.msra.mxu0 0.0
    %4789 = vmatprep.subr.mxu0 0.0
    %4790 = vmatpush1.msra.mxu0 0.0
    %4791 = vmatprep.mubr.f32.mxu0 0.0
    %4792 = vmatmul.mubr.f32.gmra.mrb[0].mxu0 %v4704
    %v4793 = vpop.f32.mrb[0].mxu0
    %v4794 = vadd.f32 0.0, %v4793
    %v4795 = vpop.f32.mrb[0].mxu0
    %v4796 = vadd.f32 0.0, %v4795
    %4797 = vmatprep.mubr.f32.mxu0 0.0
    %4798 = vmatmul.mubr.f32.gmra.mrb[0].mxu0 %v4707
    %v4799 = vpop.f32.mrb[0].mxu0
    %v4800 = vadd.f32 0.0, %v4799
    %v4801 = vpop.f32.mrb[0].mxu0
    %v4802 = vadd.f32 0.0, %v4801
    %4803 = vmatprep.mubr.f32.mxu0 0.0
    %4804 = vmatmul.mubr.f32.gmra.mrb[0].mxu0 %v4710
    %v4805 = vpop.f32.mrb[0].mxu0
    %v4806 = vadd.f32 0.0, %v4805
    %v4807 = vpop.f32.mrb[0].mxu0
    %v4808 = vadd.f32 0.0, %v4807
    %4809 = vmatprep.mubr.f32.mxu0 0.0
    %4810 = vmatmul.mubr.f32.gmra.mrb[0].mxu0 %v4713
    %v4811 = vpop.f32.mrb[0].mxu0
    %v4812 = vadd.f32 0.0, %v4811
    %v4813 = vpop.f32.mrb[0].mxu0
    %v4814 = vadd.f32 0.0, %v4813
    %4815 = vmatprep.mubr.f32.mxu0 0.0
    %4816 = vmatmul.mubr.f32.gmra.mrb[0].mxu0 %v4716
    %v4817 = vpop.f32.mrb[0].mxu0
    %v4818 = vadd.f32 0.0, %v4817
    %v4819 = vpop.f32.mrb[0].mxu0
    %v4820 = vadd.f32 0.0, %v4819
    %4821 = vmatprep.mubr.f32.mxu0 0.0
    %4822 = vmatmul.mubr.f32.gmra.mrb[0].mxu0 %v4719
    %v4823 = vpop.f32.mrb[0].mxu0
    %v4824 = vadd.f32 0.0, %v4823
    %v4825 = vpop.f32.mrb[0].mxu0
    %v4826 = vadd.f32 0.0, %v4825
    %4827 = vmatprep.mubr.f32.mxu0 0.0
    %4828 = vmatmul.mubr.f32.gmra.mrb[0].mxu0 %v4722
    %v4829 = vpop.f32.mrb[0].mxu0
    %v4830 = vadd.f32 0.0, %v4829
    %v4831 = vpop.f32.mrb[0].mxu0
    %v4832 = vadd.f32 0.0, %v4831
    %4833 = vmatprep.mubr.f32.mxu0 0.0
    %4834 = vmatmul.mubr.f32.gmra.mrb[0].mxu0 %v4725
    %v4835 = vpop.f32.mrb[0].mxu0
    %v4836 = vadd.f32 0.0, %v4835
    %v4837 = vpop.f32.mrb[0].mxu0
    %v4838 = vadd.f32 0.0, %v4837
    %4839 = vdwg.mxu0
    %v4841 = vsel %vm1423, %v4796, 0
    %v4844 = vsel %vm1423, %v4802, 0
    %v4847 = vsel %vm1423, %v4808, 0
    %v4850 = vsel %vm1423, %v4814, 0
    %v4853 = vsel %vm1423, %v4820, 0
    %v4856 = vsel %vm1423, %v4826, 0
    %v4859 = vsel %vm1423, %v4832, 0
    %v4862 = vsel %vm1423, %v4838, 0
    %v4865 = vsel %vm1448, %v4692, 0
    %v4868 = vsel %vm1448, %v4693, 0
    %4870 = vmatprep.subr.mxu0 %v4645
    %4871 = vmatpush1.msra.mxu0 %v4644
    %4872 = vmatprep.subr.mxu0 %v4647
    %4873 = vmatpush1.msra.mxu0 %v4646
    %4874 = vmatprep.subr.mxu0 %v4649
    %4875 = vmatpush1.msra.mxu0 %v4648
    %4876 = vmatprep.subr.mxu0 %v4651
    %4877 = vmatpush1.msra.mxu0 %v4650
    %4878 = vmatprep.subr.mxu0 %v4653
    %4879 = vmatpush1.msra.mxu0 %v4652
    %4880 = vmatprep.subr.mxu0 %v4655
    %4881 = vmatpush1.msra.mxu0 %v4654
    %4882 = vmatprep.subr.mxu0 %v4657
    %4883 = vmatpush1.msra.mxu0 %v4656
    %4884 = vmatprep.subr.mxu0 %v4659
    %4885 = vmatpush1.msra.mxu0 %v4658
    %4886 = vmatprep.subr.mxu0 %v4661
    %4887 = vmatpush1.msra.mxu0 %v4660
    %4888 = vmatprep.subr.mxu0 %v4663
    %4889 = vmatpush1.msra.mxu0 %v4662
    %4890 = vmatprep.subr.mxu0 %v4665
    %4891 = vmatpush1.msra.mxu0 %v4664
    %4892 = vmatprep.subr.mxu0 %v4667
    %4893 = vmatpush1.msra.mxu0 %v4666
    %4894 = vmatprep.subr.mxu0 %v4669
    %4895 = vmatpush1.msra.mxu0 %v4668
    %4896 = vmatprep.subr.mxu0 %v4671
    %4897 = vmatpush1.msra.mxu0 %v4670
    %4898 = vmatprep.subr.mxu0 %v4673
    %4899 = vmatpush1.msra.mxu0 %v4672
    %4900 = vmatprep.subr.mxu0 %v4675
    %4901 = vmatpush1.msra.mxu0 %v4674
    %4902 = vmatprep.subr.mxu0 %v4677
    %4903 = vmatpush1.msra.mxu0 %v4676
    %4904 = vmatprep.subr.mxu0 %v4679
    %4905 = vmatpush1.msra.mxu0 %v4678
    %4906 = vmatprep.subr.mxu0 %v4681
    %4907 = vmatpush1.msra.mxu0 %v4680
    %4908 = vmatprep.subr.mxu0 %v4683
    %4909 = vmatpush1.msra.mxu0 %v4682
    %4910 = vmatprep.subr.mxu0 %v4685
    %4911 = vmatpush1.msra.mxu0 %v4684
    %4912 = vmatprep.subr.mxu0 %v4687
    %4913 = vmatpush1.msra.mxu0 %v4686
    %4914 = vmatprep.subr.mxu0 %v4689
    %4915 = vmatpush1.msra.mxu0 %v4688
    %4916 = vmatprep.subr.mxu0 %v4691
    %4917 = vmatpush1.msra.mxu0 %v4690
    %4918 = vmatprep.subr.mxu0 %v4868
    %4919 = vmatpush1.msra.mxu0 %v4865
    %4920 = vmatprep.subr.mxu0 0.0
    %4921 = vmatpush1.msra.mxu0 0.0
    %4922 = vmatprep.subr.mxu0 0.0
    %4923 = vmatpush1.msra.mxu0 0.0
    %4924 = vmatprep.subr.mxu0 0.0
    %4925 = vmatpush1.msra.mxu0 0.0
    %4926 = vmatprep.subr.mxu0 0.0
    %4927 = vmatpush1.msra.mxu0 0.0
    %4928 = vmatprep.subr.mxu0 0.0
    %4929 = vmatpush1.msra.mxu0 0.0
    %4930 = vmatprep.subr.mxu0 0.0
    %4931 = vmatpush1.msra.mxu0 0.0
    %4932 = vmatprep.subr.mxu0 0.0
    %4933 = vmatpush1.msra.mxu0 0.0
    %4934 = vmatprep.mubr.f32.mxu0 %v4841
    %4935 = vmatmul.mubr.f32.gmra.mrb[0].mxu0 %v4794
    %v4936 = vpop.f32.mrb[0].mxu0
    %v4937 = vadd.f32 0.0, %v4936
    %v4938 = vpop.f32.mrb[0].mxu0
    %v4939 = vadd.f32 0.0, %v4938
    %4940 = vmatprep.mubr.f32.mxu0 %v4844
    %4941 = vmatmul.mubr.f32.gmra.mrb[0].mxu0 %v4800
    %v4942 = vpop.f32.mrb[0].mxu0
    %v4943 = vadd.f32 0.0, %v4942
    %v4944 = vpop.f32.mrb[0].mxu0
    %v4945 = vadd.f32 0.0, %v4944
    %4946 = vmatprep.mubr.f32.mxu0 %v4847
    %4947 = vmatmul.mubr.f32.gmra.mrb[0].mxu0 %v4806
    %v4948 = vpop.f32.mrb[0].mxu0
    %v4949 = vadd.f32 0.0, %v4948
    %v4950 = vpop.f32.mrb[0].mxu0
    %v4951 = vadd.f32 0.0, %v4950
    %4952 = vmatprep.mubr.f32.mxu0 %v4850
    %4953 = vmatmul.mubr.f32.gmra.mrb[0].mxu0 %v4812
    %v4954 = vpop.f32.mrb[0].mxu0
    %v4955 = vadd.f32 0.0, %v4954
    %v4956 = vpop.f32.mrb[0].mxu0
    %v4957 = vadd.f32 0.0, %v4956
    %4958 = vmatprep.mubr.f32.mxu0 %v4853
    %4959 = vmatmul.mubr.f32.gmra.mrb[0].mxu0 %v4818
    %v4960 = vpop.f32.mrb[0].mxu0
    %v4961 = vadd.f32 0.0, %v4960
    %v4962 = vpop.f32.mrb[0].mxu0
    %v4963 = vadd.f32 0.0, %v4962
    %4964 = vmatprep.mubr.f32.mxu0 %v4856
    %4965 = vmatmul.mubr.f32.gmra.mrb[0].mxu0 %v4824
    %v4966 = vpop.f32.mrb[0].mxu0
    %v4967 = vadd.f32 0.0, %v4966
    %v4968 = vpop.f32.mrb[0].mxu0
    %v4969 = vadd.f32 0.0, %v4968
    %4970 = vmatprep.mubr.f32.mxu0 %v4859
    %4971 = vmatmul.mubr.f32.gmra.mrb[0].mxu0 %v4830
    %v4972 = vpop.f32.mrb[0].mxu0
    %v4973 = vadd.f32 0.0, %v4972
    %v4974 = vpop.f32.mrb[0].mxu0
    %v4975 = vadd.f32 0.0, %v4974
    %4976 = vmatprep.mubr.f32.mxu0 %v4862
    %4977 = vmatmul.mubr.f32.gmra.mrb[0].mxu0 %v4836
    %v4978 = vpop.f32.mrb[0].mxu0
    %v4979 = vadd.f32 0.0, %v4978
    %v4980 = vpop.f32.mrb[0].mxu0
    %v4981 = vadd.f32 0.0, %v4980
    %4982 = vdwg.mxu0
    %v4983 = vadd.f32 %v4513, %v4937
    %v4984 = vadd.f32 %v4514, %v4939
    %v4985 = vadd.f32 %v4515, %v4943
    %v4986 = vadd.f32 %v4516, %v4945
    %v4987 = vadd.f32 %v4517, %v4949
    %v4988 = vadd.f32 %v4518, %v4951
    %v4989 = vadd.f32 %v4519, %v4955
    %v4990 = vadd.f32 %v4520, %v4957
    %v4991 = vadd.f32 %v4521, %v4961
    %v4992 = vadd.f32 %v4522, %v4963
    %v4993 = vadd.f32 %v4523, %v4967
    %v4994 = vadd.f32 %v4524, %v4969
    %v4995 = vadd.f32 %v4525, %v4973
    %v4996 = vadd.f32 %v4526, %v4975
    %v4997 = vadd.f32 %v4527, %v4979
    %v4998 = vadd.f32 %v4528, %v4981
    %v4999 = vld [vmem:[%s9] sm:$0xff]
    %v5000 = vld [vmem:[%s9 + $0x8] sm:$0xff]
    %v5001 = vld [vmem:[%s9 + $0x10] sm:$0xff]
    %v5002 = vld [vmem:[%s9 + $0x18] sm:$0xff]
    %v5003 = vld [vmem:[%s9 + $0x20] sm:$0xff]
    %v5004 = vld [vmem:[%s9 + $0x28] sm:$0xff]
    %v5005 = vld [vmem:[%s9 + $0x30] sm:$0xff]
    %v5006 = vld [vmem:[%s9 + $0x38] sm:$0xff]
    %5008 = vset.pattern.permute.xlu0 0
    %5009 = vperm.xlu0 %5008, %v4999
    %v5010 = vpop.permute.xlu0 %5009
    %5013 = vset.pattern.permute.xlu0 0
    %5014 = vperm.xlu0 %5013, %v5000
    %v5015 = vpop.permute.xlu0 %5014
    %5018 = vset.pattern.permute.xlu0 0
    %5019 = vperm.xlu0 %5018, %v5001
    %v5020 = vpop.permute.xlu0 %5019
    %5023 = vset.pattern.permute.xlu0 0
    %5024 = vperm.xlu0 %5023, %v5002
    %v5025 = vpop.permute.xlu0 %5024
    %5028 = vset.pattern.permute.xlu0 0
    %5029 = vperm.xlu0 %5028, %v5003
    %v5030 = vpop.permute.xlu0 %5029
    %5033 = vset.pattern.permute.xlu0 0
    %5034 = vperm.xlu0 %5033, %v5004
    %v5035 = vpop.permute.xlu0 %5034
    %5038 = vset.pattern.permute.xlu0 0
    %5039 = vperm.xlu0 %5038, %v5005
    %v5040 = vpop.permute.xlu0 %5039
    %5043 = vset.pattern.permute.xlu0 0
    %5044 = vperm.xlu0 %5043, %v5006
    %v5045 = vpop.permute.xlu0 %5044
    %v5047 = vmul.f32 %v4983, %v5010
    %v5048 = vmul.f32 %v4984, %v5010
    %v5049 = vmul.f32 %v4985, %v5015
    %v5050 = vmul.f32 %v4986, %v5015
    %v5051 = vmul.f32 %v4987, %v5020
    %v5052 = vmul.f32 %v4988, %v5020
    %v5053 = vmul.f32 %v4989, %v5025
    %v5054 = vmul.f32 %v4990, %v5025
    %v5055 = vmul.f32 %v4991, %v5030
    %v5056 = vmul.f32 %v4992, %v5030
    %v5057 = vmul.f32 %v4993, %v5035
    %v5058 = vmul.f32 %v4994, %v5035
    %v5059 = vmul.f32 %v4995, %v5040
    %v5060 = vmul.f32 %v4996, %v5040
    %v5061 = vmul.f32 %v4997, %v5045
    %v5062 = vmul.f32 %v4998, %v5045
    %v5063 = vld [vmem:[%s10] sm:$0xff]
    %v5064 = vld [vmem:[%s10 + $0x8] sm:$0xff]
    %v5065 = vld [vmem:[%s10 + $0x10] sm:$0xff]
    %v5066 = vld [vmem:[%s10 + $0x18] sm:$0xff]
    %v5067 = vld [vmem:[%s10 + $0x20] sm:$0xff]
    %v5068 = vld [vmem:[%s10 + $0x28] sm:$0xff]
    %v5069 = vld [vmem:[%s10 + $0x30] sm:$0xff]
    %v5070 = vld [vmem:[%s10 + $0x38] sm:$0xff]
    %5072 = vset.pattern.permute.xlu0 0
    %5073 = vperm.xlu0 %5072, %v5063
    %v5074 = vpop.permute.xlu0 %5073
    %5077 = vset.pattern.permute.xlu0 0
    %5078 = vperm.xlu0 %5077, %v5064
    %v5079 = vpop.permute.xlu0 %5078
    %5082 = vset.pattern.permute.xlu0 0
    %5083 = vperm.xlu0 %5082, %v5065
    %v5084 = vpop.permute.xlu0 %5083
    %5087 = vset.pattern.permute.xlu0 0
    %5088 = vperm.xlu0 %5087, %v5066
    %v5089 = vpop.permute.xlu0 %5088
    %5092 = vset.pattern.permute.xlu0 0
    %5093 = vperm.xlu0 %5092, %v5067
    %v5094 = vpop.permute.xlu0 %5093
    %5097 = vset.pattern.permute.xlu0 0
    %5098 = vperm.xlu0 %5097, %v5068
    %v5099 = vpop.permute.xlu0 %5098
    %5102 = vset.pattern.permute.xlu0 0
    %5103 = vperm.xlu0 %5102, %v5069
    %v5104 = vpop.permute.xlu0 %5103
    %5107 = vset.pattern.permute.xlu0 0
    %5108 = vperm.xlu0 %5107, %v5070
    %v5109 = vpop.permute.xlu0 %5108
    %v5111 = vadd.f32 %v5047, %v5074
    %v5112 = vadd.f32 %v5048, %v5074
    %v5113 = vadd.f32 %v5049, %v5079
    %v5114 = vadd.f32 %v5050, %v5079
    %v5115 = vadd.f32 %v5051, %v5084
    %v5116 = vadd.f32 %v5052, %v5084
    %v5117 = vadd.f32 %v5053, %v5089
    %v5118 = vadd.f32 %v5054, %v5089
    %v5119 = vadd.f32 %v5055, %v5094
    %v5120 = vadd.f32 %v5056, %v5094
    %v5121 = vadd.f32 %v5057, %v5099
    %v5122 = vadd.f32 %v5058, %v5099
    %v5123 = vadd.f32 %v5059, %v5104
    %v5124 = vadd.f32 %v5060, %v5104
    %v5125 = vadd.f32 %v5061, %v5109
    %v5126 = vadd.f32 %v5062, %v5109
    %v5127 = vmax.f32 %v5111, 0.0
    %v5128 = vmax.f32 %v5112, 0.0
    %v5129 = vmax.f32 %v5113, 0.0
    %v5130 = vmax.f32 %v5114, 0.0
    %v5131 = vmax.f32 %v5115, 0.0
    %v5132 = vmax.f32 %v5116, 0.0
    %v5133 = vmax.f32 %v5117, 0.0
    %v5134 = vmax.f32 %v5118, 0.0
    %v5135 = vmax.f32 %v5119, 0.0
    %v5136 = vmax.f32 %v5120, 0.0
    %v5137 = vmax.f32 %v5121, 0.0
    %v5138 = vmax.f32 %v5122, 0.0
    %v5139 = vmax.f32 %v5123, 0.0
    %v5140 = vmax.f32 %v5124, 0.0
    %v5141 = vmax.f32 %v5125, 0.0
    %v5142 = vmax.f32 %v5126, 0.0
    %v5143 = vld [vmem:[#allocation9] sm:$0xff]
    %v5144 = vld [vmem:[#allocation9 + $0x8] sm:$0xf]
    %v5146 = vsel %vm974, %v5143, 0
    %v5149 = vsel %vm974, %v5144, 0
    %5151 = vmatprep.subr.mxu0 %v5128
    %5152 = vmatpush1.msra.mxu0 %v5127
    %5153 = vmatprep.subr.mxu0 %v5130
    %5154 = vmatpush1.msra.mxu0 %v5129
    %5155 = vmatprep.subr.mxu0 %v5132
    %5156 = vmatpush1.msra.mxu0 %v5131
    %5157 = vmatprep.subr.mxu0 %v5134
    %5158 = vmatpush1.msra.mxu0 %v5133
    %5159 = vmatprep.subr.mxu0 %v5136
    %5160 = vmatpush1.msra.mxu0 %v5135
    %5161 = vmatprep.subr.mxu0 %v5138
    %5162 = vmatpush1.msra.mxu0 %v5137
    %5163 = vmatprep.subr.mxu0 %v5140
    %5164 = vmatpush1.msra.mxu0 %v5139
    %5165 = vmatprep.subr.mxu0 %v5142
    %5166 = vmatpush1.msra.mxu0 %v5141
    %5167 = vmatprep.subr.mxu0 0.0
    %5168 = vmatpush1.msra.mxu0 0.0
    %5169 = vmatprep.subr.mxu0 0.0
    %5170 = vmatpush1.msra.mxu0 0.0
    %5171 = vmatprep.subr.mxu0 0.0
    %5172 = vmatpush1.msra.mxu0 0.0
    %5173 = vmatprep.subr.mxu0 0.0
    %5174 = vmatpush1.msra.mxu0 0.0
    %5175 = vmatprep.subr.mxu0 0.0
    %5176 = vmatpush1.msra.mxu0 0.0
    %5177 = vmatprep.subr.mxu0 0.0
    %5178 = vmatpush1.msra.mxu0 0.0
    %5179 = vmatprep.subr.mxu0 0.0
    %5180 = vmatpush1.msra.mxu0 0.0
    %5181 = vmatprep.subr.mxu0 0.0
    %5182 = vmatpush1.msra.mxu0 0.0
    %5183 = vmatprep.subr.mxu0 0.0
    %5184 = vmatpush1.msra.mxu0 0.0
    %5185 = vmatprep.subr.mxu0 0.0
    %5186 = vmatpush1.msra.mxu0 0.0
    %5187 = vmatprep.subr.mxu0 0.0
    %5188 = vmatpush1.msra.mxu0 0.0
    %5189 = vmatprep.subr.mxu0 0.0
    %5190 = vmatpush1.msra.mxu0 0.0
    %5191 = vmatprep.subr.mxu0 0.0
    %5192 = vmatpush1.msra.mxu0 0.0
    %5193 = vmatprep.subr.mxu0 0.0
    %5194 = vmatpush1.msra.mxu0 0.0
    %5195 = vmatprep.subr.mxu0 0.0
    %5196 = vmatpush1.msra.mxu0 0.0
    %5197 = vmatprep.subr.mxu0 0.0
    %5198 = vmatpush1.msra.mxu0 0.0
    %5199 = vmatprep.subr.mxu0 0.0
    %5200 = vmatpush1.msra.mxu0 0.0
    %5201 = vmatprep.subr.mxu0 0.0
    %5202 = vmatpush1.msra.mxu0 0.0
    %5203 = vmatprep.subr.mxu0 0.0
    %5204 = vmatpush1.msra.mxu0 0.0
    %5205 = vmatprep.subr.mxu0 0.0
    %5206 = vmatpush1.msra.mxu0 0.0
    %5207 = vmatprep.subr.mxu0 0.0
    %5208 = vmatpush1.msra.mxu0 0.0
    %5209 = vmatprep.subr.mxu0 0.0
    %5210 = vmatpush1.msra.mxu0 0.0
    %5211 = vmatprep.subr.mxu0 0.0
    %5212 = vmatpush1.msra.mxu0 0.0
    %5213 = vmatprep.subr.mxu0 0.0
    %5214 = vmatpush1.msra.mxu0 0.0
    %5215 = vmatprep.mubr.f32.mxu0 0.0
    %5216 = vmatmul.mubr.f32.gmra.mrb[0].mxu0 %v5146
    %v5217 = vpop.f32.mrb[0].mxu0
    %v5218 = vadd.f32 0.0, %v5217
    %v5219 = vpop.f32.mrb[0].mxu0
    %v5220 = vadd.f32 0.0, %v5219
    %5221 = vmatprep.mubr.f32.mxu0 0.0
    %5222 = vmatmul.mubr.f32.gmra.mrb[0].mxu0 %v5149
    %v5223 = vpop.f32.mrb[0].mxu0
    %v5224 = vadd.f32 0.0, %v5223
    %v5225 = vpop.f32.mrb[0].mxu0
    %v5226 = vadd.f32 0.0, %v5225
    %5227 = vdwg.mxu0
    %v5228 = vld [vmem:[%s12] sm:$0xff]
    %v5229 = vld [vmem:[%s12 + $0x8] sm:$0xff]
    %v5230 = vld [vmem:[%s12 + $0x10] sm:$0xff]
    %v5231 = vld [vmem:[%s12 + $0x18] sm:$0xff]
    %v5232 = vld [vmem:[%s12 + $0x20] sm:$0xff]
    %v5233 = vld [vmem:[%s12 + $0x28] sm:$0xff]
    %v5234 = vld [vmem:[%s12 + $0x30] sm:$0xff]
    %v5235 = vld [vmem:[%s12 + $0x38] sm:$0xff]
    %v5236 = vld [vmem:[%s12 + $0x40] sm:$0xff]
    %v5237 = vld [vmem:[%s12 + $0x48] sm:$0xff]
    %v5238 = vld [vmem:[%s12 + $0x50] sm:$0xff]
    %v5239 = vld [vmem:[%s12 + $0x58] sm:$0xff]
    %v5240 = vld [vmem:[%s12 + $0x60] sm:$0xff]
    %v5241 = vld [vmem:[%s12 + $0x68] sm:$0xff]
    %v5242 = vld [vmem:[%s12 + $0x70] sm:$0xff]
    %v5243 = vld [vmem:[%s12 + $0x78] sm:$0xff]
    %5245 = vset.pattern.permute.xlu0 0
    %5246 = vperm.xlu0 %5245, %v5228
    %v5247 = vpop.permute.xlu0 %5246
    %5250 = vset.pattern.permute.xlu0 0
    %5251 = vperm.xlu0 %5250, %v5229
    %v5252 = vpop.permute.xlu0 %5251
    %5255 = vset.pattern.permute.xlu0 0
    %5256 = vperm.xlu0 %5255, %v5230
    %v5257 = vpop.permute.xlu0 %5256
    %5260 = vset.pattern.permute.xlu0 0
    %5261 = vperm.xlu0 %5260, %v5231
    %v5262 = vpop.permute.xlu0 %5261
    %5265 = vset.pattern.permute.xlu0 0
    %5266 = vperm.xlu0 %5265, %v5232
    %v5267 = vpop.permute.xlu0 %5266
    %5270 = vset.pattern.permute.xlu0 0
    %5271 = vperm.xlu0 %5270, %v5233
    %v5272 = vpop.permute.xlu0 %5271
    %5275 = vset.pattern.permute.xlu0 0
    %5276 = vperm.xlu0 %5275, %v5234
    %v5277 = vpop.permute.xlu0 %5276
    %5280 = vset.pattern.permute.xlu0 0
    %5281 = vperm.xlu0 %5280, %v5235
    %v5282 = vpop.permute.xlu0 %5281
    %5285 = vset.pattern.permute.xlu0 0
    %5286 = vperm.xlu0 %5285, %v5236
    %v5287 = vpop.permute.xlu0 %5286
    %5290 = vset.pattern.permute.xlu0 0
    %5291 = vperm.xlu0 %5290, %v5237
    %v5292 = vpop.permute.xlu0 %5291
    %5295 = vset.pattern.permute.xlu0 0
    %5296 = vperm.xlu0 %5295, %v5238
    %v5297 = vpop.permute.xlu0 %5296
    %5300 = vset.pattern.permute.xlu0 0
    %5301 = vperm.xlu0 %5300, %v5239
    %v5302 = vpop.permute.xlu0 %5301
    %5305 = vset.pattern.permute.xlu0 0
    %5306 = vperm.xlu0 %5305, %v5240
    %v5307 = vpop.permute.xlu0 %5306
    %5310 = vset.pattern.permute.xlu0 0
    %5311 = vperm.xlu0 %5310, %v5241
    %v5312 = vpop.permute.xlu0 %5311
    %5315 = vset.pattern.permute.xlu0 0
    %5316 = vperm.xlu0 %5315, %v5242
    %v5317 = vpop.permute.xlu0 %5316
    %5320 = vset.pattern.permute.xlu0 0
    %5321 = vperm.xlu0 %5320, %v5243
    %v5322 = vpop.permute.xlu0 %5321
    %v5324 = vmul.f32 %v188, %v5247
    %v5325 = vmul.f32 %v189, %v5247
    %v5326 = vmul.f32 %v190, %v5252
    %v5327 = vmul.f32 %v191, %v5252
    %v5328 = vmul.f32 %v192, %v5257
    %v5329 = vmul.f32 %v193, %v5257
    %v5330 = vmul.f32 %v194, %v5262
    %v5331 = vmul.f32 %v195, %v5262
    %v5332 = vmul.f32 %v196, %v5267
    %v5333 = vmul.f32 %v197, %v5267
    %v5334 = vmul.f32 %v198, %v5272
    %v5335 = vmul.f32 %v199, %v5272
    %v5336 = vmul.f32 %v200, %v5277
    %v5337 = vmul.f32 %v201, %v5277
    %v5338 = vmul.f32 %v202, %v5282
    %v5339 = vmul.f32 %v203, %v5282
    %v5340 = vmul.f32 %v204, %v5287
    %v5341 = vmul.f32 %v205, %v5287
    %v5342 = vmul.f32 %v206, %v5292
    %v5343 = vmul.f32 %v207, %v5292
    %v5344 = vmul.f32 %v208, %v5297
    %v5345 = vmul.f32 %v209, %v5297
    %v5346 = vmul.f32 %v210, %v5302
    %v5347 = vmul.f32 %v211, %v5302
    %v5348 = vmul.f32 %v212, %v5307
    %v5349 = vmul.f32 %v213, %v5307
    %v5350 = vmul.f32 %v214, %v5312
    %v5351 = vmul.f32 %v215, %v5312
    %v5352 = vmul.f32 %v216, %v5317
    %v5353 = vmul.f32 %v217, %v5317
    %v5354 = vmul.f32 %v218, %v5322
    %v5355 = vmul.f32 %v219, %v5322
    %v5356 = vld [vmem:[%s13] sm:$0xff]
    %v5357 = vld [vmem:[%s13 + $0x8] sm:$0xff]
    %v5358 = vld [vmem:[%s13 + $0x10] sm:$0xff]
    %v5359 = vld [vmem:[%s13 + $0x18] sm:$0xff]
    %v5360 = vld [vmem:[%s13 + $0x20] sm:$0xff]
    %v5361 = vld [vmem:[%s13 + $0x28] sm:$0xff]
    %v5362 = vld [vmem:[%s13 + $0x30] sm:$0xff]
    %v5363 = vld [vmem:[%s13 + $0x38] sm:$0xff]
    %v5364 = vld [vmem:[%s13 + $0x40] sm:$0xff]
    %v5365 = vld [vmem:[%s13 + $0x48] sm:$0xff]
    %v5366 = vld [vmem:[%s13 + $0x50] sm:$0xff]
    %v5367 = vld [vmem:[%s13 + $0x58] sm:$0xff]
    %v5368 = vld [vmem:[%s13 + $0x60] sm:$0xff]
    %v5369 = vld [vmem:[%s13 + $0x68] sm:$0xff]
    %v5370 = vld [vmem:[%s13 + $0x70] sm:$0xff]
    %v5371 = vld [vmem:[%s13 + $0x78] sm:$0xff]
    %5373 = vset.pattern.permute.xlu0 0
    %5374 = vperm.xlu0 %5373, %v5356
    %v5375 = vpop.permute.xlu0 %5374
    %5378 = vset.pattern.permute.xlu0 0
    %5379 = vperm.xlu0 %5378, %v5357
    %v5380 = vpop.permute.xlu0 %5379
    %5383 = vset.pattern.permute.xlu0 0
    %5384 = vperm.xlu0 %5383, %v5358
    %v5385 = vpop.permute.xlu0 %5384
    %5388 = vset.pattern.permute.xlu0 0
    %5389 = vperm.xlu0 %5388, %v5359
    %v5390 = vpop.permute.xlu0 %5389
    %5393 = vset.pattern.permute.xlu0 0
    %5394 = vperm.xlu0 %5393, %v5360
    %v5395 = vpop.permute.xlu0 %5394
    %5398 = vset.pattern.permute.xlu0 0
    %5399 = vperm.xlu0 %5398, %v5361
    %v5400 = vpop.permute.xlu0 %5399
    %5403 = vset.pattern.permute.xlu0 0
    %5404 = vperm.xlu0 %5403, %v5362
    %v5405 = vpop.permute.xlu0 %5404
    %5408 = vset.pattern.permute.xlu0 0
    %5409 = vperm.xlu0 %5408, %v5363
    %v5410 = vpop.permute.xlu0 %5409
    %5413 = vset.pattern.permute.xlu0 0
    %5414 = vperm.xlu0 %5413, %v5364
    %v5415 = vpop.permute.xlu0 %5414
    %5418 = vset.pattern.permute.xlu0 0
    %5419 = vperm.xlu0 %5418, %v5365
    %v5420 = vpop.permute.xlu0 %5419
    %5423 = vset.pattern.permute.xlu0 0
    %5424 = vperm.xlu0 %5423, %v5366
    %v5425 = vpop.permute.xlu0 %5424
    %5428 = vset.pattern.permute.xlu0 0
    %5429 = vperm.xlu0 %5428, %v5367
    %v5430 = vpop.permute.xlu0 %5429
    %5433 = vset.pattern.permute.xlu0 0
    %5434 = vperm.xlu0 %5433, %v5368
    %v5435 = vpop.permute.xlu0 %5434
    %5438 = vset.pattern.permute.xlu0 0
    %5439 = vperm.xlu0 %5438, %v5369
    %v5440 = vpop.permute.xlu0 %5439
    %5443 = vset.pattern.permute.xlu0 0
    %5444 = vperm.xlu0 %5443, %v5370
    %v5445 = vpop.permute.xlu0 %5444
    %5448 = vset.pattern.permute.xlu0 0
    %5449 = vperm.xlu0 %5448, %v5371
    %v5450 = vpop.permute.xlu0 %5449
    %v5452 = vadd.f32 %v5324, %v5375
    %v5453 = vadd.f32 %v5325, %v5375
    %v5454 = vadd.f32 %v5326, %v5380
    %v5455 = vadd.f32 %v5327, %v5380
    %v5456 = vadd.f32 %v5328, %v5385
    %v5457 = vadd.f32 %v5329, %v5385
    %v5458 = vadd.f32 %v5330, %v5390
    %v5459 = vadd.f32 %v5331, %v5390
    %v5460 = vadd.f32 %v5332, %v5395
    %v5461 = vadd.f32 %v5333, %v5395
    %v5462 = vadd.f32 %v5334, %v5400
    %v5463 = vadd.f32 %v5335, %v5400
    %v5464 = vadd.f32 %v5336, %v5405
    %v5465 = vadd.f32 %v5337, %v5405
    %v5466 = vadd.f32 %v5338, %v5410
    %v5467 = vadd.f32 %v5339, %v5410
    %v5468 = vadd.f32 %v5340, %v5415
    %v5469 = vadd.f32 %v5341, %v5415
    %v5470 = vadd.f32 %v5342, %v5420
    %v5471 = vadd.f32 %v5343, %v5420
    %v5472 = vadd.f32 %v5344, %v5425
    %v5473 = vadd.f32 %v5345, %v5425
    %v5474 = vadd.f32 %v5346, %v5430
    %v5475 = vadd.f32 %v5347, %v5430
    %v5476 = vadd.f32 %v5348, %v5435
    %v5477 = vadd.f32 %v5349, %v5435
    %v5478 = vadd.f32 %v5350, %v5440
    %v5479 = vadd.f32 %v5351, %v5440
    %v5480 = vadd.f32 %v5352, %v5445
    %v5481 = vadd.f32 %v5353, %v5445
    %v5482 = vadd.f32 %v5354, %v5450
    %v5483 = vadd.f32 %v5355, %v5450
    %v5484 = vmax.f32 %v5452, 0.0
    %v5485 = vmax.f32 %v5453, 0.0
    %v5486 = vmax.f32 %v5454, 0.0
    %v5487 = vmax.f32 %v5455, 0.0
    %v5488 = vmax.f32 %v5456, 0.0
    %v5489 = vmax.f32 %v5457, 0.0
    %v5490 = vmax.f32 %v5458, 0.0
    %v5491 = vmax.f32 %v5459, 0.0
    %v5492 = vmax.f32 %v5460, 0.0
    %v5493 = vmax.f32 %v5461, 0.0
    %v5494 = vmax.f32 %v5462, 0.0
    %v5495 = vmax.f32 %v5463, 0.0
    %v5496 = vmax.f32 %v5464, 0.0
    %v5497 = vmax.f32 %v5465, 0.0
    %v5498 = vmax.f32 %v5466, 0.0
    %v5499 = vmax.f32 %v5467, 0.0
    %v5500 = vmax.f32 %v5468, 0.0
    %v5501 = vmax.f32 %v5469, 0.0
    %v5502 = vmax.f32 %v5470, 0.0
    %v5503 = vmax.f32 %v5471, 0.0
    %v5504 = vmax.f32 %v5472, 0.0
    %v5505 = vmax.f32 %v5473, 0.0
    %v5506 = vmax.f32 %v5474, 0.0
    %v5507 = vmax.f32 %v5475, 0.0
    %v5508 = vmax.f32 %v5476, 0.0
    %v5509 = vmax.f32 %v5477, 0.0
    %v5510 = vmax.f32 %v5478, 0.0
    %v5511 = vmax.f32 %v5479, 0.0
    %v5512 = vmax.f32 %v5480, 0.0
    %v5513 = vmax.f32 %v5481, 0.0
    %v5514 = vmax.f32 %v5482, 0.0
    %v5515 = vmax.f32 %v5483, 0.0
    %v5516 = vld [vmem:[#allocation10] sm:$0xff]
    %v5517 = vld [vmem:[#allocation10 + $0x8] sm:$0xff]
    %v5518 = vld [vmem:[#allocation10 + $0x10] sm:$0xff]
    %v5519 = vld [vmem:[#allocation10 + $0x18] sm:$0xff]
    %v5520 = vld [vmem:[#allocation10 + $0x20] sm:$0xff]
    %v5521 = vld [vmem:[#allocation10 + $0x28] sm:$0xff]
    %v5522 = vld [vmem:[#allocation10 + $0x30] sm:$0xff]
    %v5523 = vld [vmem:[#allocation10 + $0x38] sm:$0xff]
    %v5524 = vld [vmem:[#allocation10 + $0x40] sm:$0xff]
    %v5525 = vld [vmem:[#allocation10 + $0x48] sm:$0xff]
    %v5526 = vld [vmem:[#allocation10 + $0x50] sm:$0xff]
    %v5527 = vld [vmem:[#allocation10 + $0x58] sm:$0xff]
    %5528 = vmatprep.subr.mxu0 %v5485
    %5529 = vmatpush1.msra.mxu0 %v5484
    %5530 = vmatprep.subr.mxu0 %v5487
    %5531 = vmatpush1.msra.mxu0 %v5486
    %5532 = vmatprep.subr.mxu0 %v5489
    %5533 = vmatpush1.msra.mxu0 %v5488
    %5534 = vmatprep.subr.mxu0 %v5491
    %5535 = vmatpush1.msra.mxu0 %v5490
    %5536 = vmatprep.subr.mxu0 %v5493
    %5537 = vmatpush1.msra.mxu0 %v5492
    %5538 = vmatprep.subr.mxu0 %v5495
    %5539 = vmatpush1.msra.mxu0 %v5494
    %5540 = vmatprep.subr.mxu0 %v5497
    %5541 = vmatpush1.msra.mxu0 %v5496
    %5542 = vmatprep.subr.mxu0 %v5499
    %5543 = vmatpush1.msra.mxu0 %v5498
    %5544 = vmatprep.subr.mxu0 %v5501
    %5545 = vmatpush1.msra.mxu0 %v5500
    %5546 = vmatprep.subr.mxu0 %v5503
    %5547 = vmatpush1.msra.mxu0 %v5502
    %5548 = vmatprep.subr.mxu0 %v5505
    %5549 = vmatpush1.msra.mxu0 %v5504
    %5550 = vmatprep.subr.mxu0 %v5507
    %5551 = vmatpush1.msra.mxu0 %v5506
    %5552 = vmatprep.subr.mxu0 %v5509
    %5553 = vmatpush1.msra.mxu0 %v5508
    %5554 = vmatprep.subr.mxu0 %v5511
    %5555 = vmatpush1.msra.mxu0 %v5510
    %5556 = vmatprep.subr.mxu0 %v5513
    %5557 = vmatpush1.msra.mxu0 %v5512
    %5558 = vmatprep.subr.mxu0 %v5515
    %5559 = vmatpush1.msra.mxu0 %v5514
    %5560 = vmatprep.subr.mxu0 0.0
    %5561 = vmatpush1.msra.mxu0 0.0
    %5562 = vmatprep.subr.mxu0 0.0
    %5563 = vmatpush1.msra.mxu0 0.0
    %5564 = vmatprep.subr.mxu0 0.0
    %5565 = vmatpush1.msra.mxu0 0.0
    %5566 = vmatprep.subr.mxu0 0.0
    %5567 = vmatpush1.msra.mxu0 0.0
    %5568 = vmatprep.subr.mxu0 0.0
    %5569 = vmatpush1.msra.mxu0 0.0
    %5570 = vmatprep.subr.mxu0 0.0
    %5571 = vmatpush1.msra.mxu0 0.0
    %5572 = vmatprep.subr.mxu0 0.0
    %5573 = vmatpush1.msra.mxu0 0.0
    %5574 = vmatprep.subr.mxu0 0.0
    %5575 = vmatpush1.msra.mxu0 0.0
    %5576 = vmatprep.subr.mxu0 0.0
    %5577 = vmatpush1.msra.mxu0 0.0
    %5578 = vmatprep.subr.mxu0 0.0
    %5579 = vmatpush1.msra.mxu0 0.0
    %5580 = vmatprep.subr.mxu0 0.0
    %5581 = vmatpush1.msra.mxu0 0.0
    %5582 = vmatprep.subr.mxu0 0.0
    %5583 = vmatpush1.msra.mxu0 0.0
    %5584 = vmatprep.subr.mxu0 0.0
    %5585 = vmatpush1.msra.mxu0 0.0
    %5586 = vmatprep.subr.mxu0 0.0
    %5587 = vmatpush1.msra.mxu0 0.0
    %5588 = vmatprep.subr.mxu0 0.0
    %5589 = vmatpush1.msra.mxu0 0.0
    %5590 = vmatprep.subr.mxu0 0.0
    %5591 = vmatpush1.msra.mxu0 0.0
    %5592 = vmatprep.mubr.f32.mxu0 0.0
    %5593 = vmatmul.mubr.f32.gmra.mrb[0].mxu0 %v5516
    %v5594 = vpop.f32.mrb[0].mxu0
    %v5595 = vadd.f32 0.0, %v5594
    %v5596 = vpop.f32.mrb[0].mxu0
    %v5597 = vadd.f32 0.0, %v5596
    %5598 = vmatprep.mubr.f32.mxu0 0.0
    %5599 = vmatmul.mubr.f32.gmra.mrb[0].mxu0 %v5517
    %v5600 = vpop.f32.mrb[0].mxu0
    %v5601 = vadd.f32 0.0, %v5600
    %v5602 = vpop.f32.mrb[0].mxu0
    %v5603 = vadd.f32 0.0, %v5602
    %5604 = vmatprep.mubr.f32.mxu0 0.0
    %5605 = vmatmul.mubr.f32.gmra.mrb[0].mxu0 %v5518
    %v5606 = vpop.f32.mrb[0].mxu0
    %v5607 = vadd.f32 0.0, %v5606
    %v5608 = vpop.f32.mrb[0].mxu0
    %v5609 = vadd.f32 0.0, %v5608
    %5610 = vmatprep.mubr.f32.mxu0 0.0
    %5611 = vmatmul.mubr.f32.gmra.mrb[0].mxu0 %v5519
    %v5612 = vpop.f32.mrb[0].mxu0
    %v5613 = vadd.f32 0.0, %v5612
    %v5614 = vpop.f32.mrb[0].mxu0
    %v5615 = vadd.f32 0.0, %v5614
    %5616 = vmatprep.mubr.f32.mxu0 0.0
    %5617 = vmatmul.mubr.f32.gmra.mrb[0].mxu0 %v5520
    %v5618 = vpop.f32.mrb[0].mxu0
    %v5619 = vadd.f32 0.0, %v5618
    %v5620 = vpop.f32.mrb[0].mxu0
    %v5621 = vadd.f32 0.0, %v5620
    %5622 = vmatprep.mubr.f32.mxu0 0.0
    %5623 = vmatmul.mubr.f32.gmra.mrb[0].mxu0 %v5521
    %v5624 = vpop.f32.mrb[0].mxu0
    %v5625 = vadd.f32 0.0, %v5624
    %v5626 = vpop.f32.mrb[0].mxu0
    %v5627 = vadd.f32 0.0, %v5626
    %5628 = vmatprep.mubr.f32.mxu0 0.0
    %5629 = vmatmul.mubr.f32.gmra.mrb[0].mxu0 %v5522
    %v5630 = vpop.f32.mrb[0].mxu0
    %v5631 = vadd.f32 0.0, %v5630
    %v5632 = vpop.f32.mrb[0].mxu0
    %v5633 = vadd.f32 0.0, %v5632
    %5634 = vmatprep.mubr.f32.mxu0 0.0
    %5635 = vmatmul.mubr.f32.gmra.mrb[0].mxu0 %v5523
    %v5636 = vpop.f32.mrb[0].mxu0
    %v5637 = vadd.f32 0.0, %v5636
    %v5638 = vpop.f32.mrb[0].mxu0
    %v5639 = vadd.f32 0.0, %v5638
    %5640 = vmatprep.mubr.f32.mxu0 0.0
    %5641 = vmatmul.mubr.f32.gmra.mrb[0].mxu0 %v5524
    %v5642 = vpop.f32.mrb[0].mxu0
    %v5643 = vadd.f32 0.0, %v5642
    %v5644 = vpop.f32.mrb[0].mxu0
    %v5645 = vadd.f32 0.0, %v5644
    %5646 = vmatprep.mubr.f32.mxu0 0.0
    %5647 = vmatmul.mubr.f32.gmra.mrb[0].mxu0 %v5525
    %v5648 = vpop.f32.mrb[0].mxu0
    %v5649 = vadd.f32 0.0, %v5648
    %v5650 = vpop.f32.mrb[0].mxu0
    %v5651 = vadd.f32 0.0, %v5650
    %5652 = vmatprep.mubr.f32.mxu0 0.0
    %5653 = vmatmul.mubr.f32.gmra.mrb[0].mxu0 %v5526
    %v5654 = vpop.f32.mrb[0].mxu0
    %v5655 = vadd.f32 0.0, %v5654
    %v5656 = vpop.f32.mrb[0].mxu0
    %v5657 = vadd.f32 0.0, %v5656
    %5658 = vmatprep.mubr.f32.mxu0 0.0
    %5659 = vmatmul.mubr.f32.gmra.mrb[0].mxu0 %v5527
    %v5660 = vpop.f32.mrb[0].mxu0
    %v5661 = vadd.f32 0.0, %v5660
    %v5662 = vpop.f32.mrb[0].mxu0
    %v5663 = vadd.f32 0.0, %v5662
    %5664 = vdwg.mxu0
    %v5665 = vld [vmem:[%s15] sm:$0xff]
    %v5666 = vld [vmem:[%s15 + $0x8] sm:$0xff]
    %v5667 = vld [vmem:[%s15 + $0x10] sm:$0xff]
    %v5668 = vld [vmem:[%s15 + $0x18] sm:$0xff]
    %v5669 = vld [vmem:[%s15 + $0x20] sm:$0xff]
    %v5670 = vld [vmem:[%s15 + $0x28] sm:$0xff]
    %v5671 = vld [vmem:[%s15 + $0x30] sm:$0xff]
    %v5672 = vld [vmem:[%s15 + $0x38] sm:$0xff]
    %v5673 = vld [vmem:[%s15 + $0x40] sm:$0xff]
    %v5674 = vld [vmem:[%s15 + $0x48] sm:$0xff]
    %v5675 = vld [vmem:[%s15 + $0x50] sm:$0xff]
    %v5676 = vld [vmem:[%s15 + $0x58] sm:$0xff]
    %5678 = vset.pattern.permute.xlu0 0
    %5679 = vperm.xlu0 %5678, %v5665
    %v5680 = vpop.permute.xlu0 %5679
    %5683 = vset.pattern.permute.xlu0 0
    %5684 = vperm.xlu0 %5683, %v5666
    %v5685 = vpop.permute.xlu0 %5684
    %5688 = vset.pattern.permute.xlu0 0
    %5689 = vperm.xlu0 %5688, %v5667
    %v5690 = vpop.permute.xlu0 %5689
    %5693 = vset.pattern.permute.xlu0 0
    %5694 = vperm.xlu0 %5693, %v5668
    %v5695 = vpop.permute.xlu0 %5694
    %5698 = vset.pattern.permute.xlu0 0
    %5699 = vperm.xlu0 %5698, %v5669
    %v5700 = vpop.permute.xlu0 %5699
    %5703 = vset.pattern.permute.xlu0 0
    %5704 = vperm.xlu0 %5703, %v5670
    %v5705 = vpop.permute.xlu0 %5704
    %5708 = vset.pattern.permute.xlu0 0
    %5709 = vperm.xlu0 %5708, %v5671
    %v5710 = vpop.permute.xlu0 %5709
    %5713 = vset.pattern.permute.xlu0 0
    %5714 = vperm.xlu0 %5713, %v5672
    %v5715 = vpop.permute.xlu0 %5714
    %5718 = vset.pattern.permute.xlu0 0
    %5719 = vperm.xlu0 %5718, %v5673
    %v5720 = vpop.permute.xlu0 %5719
    %5723 = vset.pattern.permute.xlu0 0
    %5724 = vperm.xlu0 %5723, %v5674
    %v5725 = vpop.permute.xlu0 %5724
    %5728 = vset.pattern.permute.xlu0 0
    %5729 = vperm.xlu0 %5728, %v5675
    %v5730 = vpop.permute.xlu0 %5729
    %5733 = vset.pattern.permute.xlu0 0
    %5734 = vperm.xlu0 %5733, %v5676
    %v5735 = vpop.permute.xlu0 %5734
    %v5737 = vmul.f32 %v5595, %v5680
    %v5738 = vmul.f32 %v5597, %v5680
    %v5739 = vmul.f32 %v5601, %v5685
    %v5740 = vmul.f32 %v5603, %v5685
    %v5741 = vmul.f32 %v5607, %v5690
    %v5742 = vmul.f32 %v5609, %v5690
    %v5743 = vmul.f32 %v5613, %v5695
    %v5744 = vmul.f32 %v5615, %v5695
    %v5745 = vmul.f32 %v5619, %v5700
    %v5746 = vmul.f32 %v5621, %v5700
    %v5747 = vmul.f32 %v5625, %v5705
    %v5748 = vmul.f32 %v5627, %v5705
    %v5749 = vmul.f32 %v5631, %v5710
    %v5750 = vmul.f32 %v5633, %v5710
    %v5751 = vmul.f32 %v5637, %v5715
    %v5752 = vmul.f32 %v5639, %v5715
    %v5753 = vmul.f32 %v5643, %v5720
    %v5754 = vmul.f32 %v5645, %v5720
    %v5755 = vmul.f32 %v5649, %v5725
    %v5756 = vmul.f32 %v5651, %v5725
    %v5757 = vmul.f32 %v5655, %v5730
    %v5758 = vmul.f32 %v5657, %v5730
    %v5759 = vmul.f32 %v5661, %v5735
    %v5760 = vmul.f32 %v5663, %v5735
    %v5761 = vld [vmem:[%s16] sm:$0xff]
    %v5762 = vld [vmem:[%s16 + $0x8] sm:$0xff]
    %v5763 = vld [vmem:[%s16 + $0x10] sm:$0xff]
    %v5764 = vld [vmem:[%s16 + $0x18] sm:$0xff]
    %v5765 = vld [vmem:[%s16 + $0x20] sm:$0xff]
    %v5766 = vld [vmem:[%s16 + $0x28] sm:$0xff]
    %v5767 = vld [vmem:[%s16 + $0x30] sm:$0xff]
    %v5768 = vld [vmem:[%s16 + $0x38] sm:$0xff]
    %v5769 = vld [vmem:[%s16 + $0x40] sm:$0xff]
    %v5770 = vld [vmem:[%s16 + $0x48] sm:$0xff]
    %v5771 = vld [vmem:[%s16 + $0x50] sm:$0xff]
    %v5772 = vld [vmem:[%s16 + $0x58] sm:$0xff]
    %5774 = vset.pattern.permute.xlu0 0
    %5775 = vperm.xlu0 %5774, %v5761
    %v5776 = vpop.permute.xlu0 %5775
    %5779 = vset.pattern.permute.xlu0 0
    %5780 = vperm.xlu0 %5779, %v5762
    %v5781 = vpop.permute.xlu0 %5780
    %5784 = vset.pattern.permute.xlu0 0
    %5785 = vperm.xlu0 %5784, %v5763
    %v5786 = vpop.permute.xlu0 %5785
    %5789 = vset.pattern.permute.xlu0 0
    %5790 = vperm.xlu0 %5789, %v5764
    %v5791 = vpop.permute.xlu0 %5790
    %5794 = vset.pattern.permute.xlu0 0
    %5795 = vperm.xlu0 %5794, %v5765
    %v5796 = vpop.permute.xlu0 %5795
    %5799 = vset.pattern.permute.xlu0 0
    %5800 = vperm.xlu0 %5799, %v5766
    %v5801 = vpop.permute.xlu0 %5800
    %5804 = vset.pattern.permute.xlu0 0
    %5805 = vperm.xlu0 %5804, %v5767
    %v5806 = vpop.permute.xlu0 %5805
    %5809 = vset.pattern.permute.xlu0 0
    %5810 = vperm.xlu0 %5809, %v5768
    %v5811 = vpop.permute.xlu0 %5810
    %5814 = vset.pattern.permute.xlu0 0
    %5815 = vperm.xlu0 %5814, %v5769
    %v5816 = vpop.permute.xlu0 %5815
    %5819 = vset.pattern.permute.xlu0 0
    %5820 = vperm.xlu0 %5819, %v5770
    %v5821 = vpop.permute.xlu0 %5820
    %5824 = vset.pattern.permute.xlu0 0
    %5825 = vperm.xlu0 %5824, %v5771
    %v5826 = vpop.permute.xlu0 %5825
    %5829 = vset.pattern.permute.xlu0 0
    %5830 = vperm.xlu0 %5829, %v5772
    %v5831 = vpop.permute.xlu0 %5830
    %v5833 = vadd.f32 %v5737, %v5776
    %v5834 = vadd.f32 %v5738, %v5776
    %v5835 = vadd.f32 %v5739, %v5781
    %v5836 = vadd.f32 %v5740, %v5781
    %v5837 = vadd.f32 %v5741, %v5786
    %v5838 = vadd.f32 %v5742, %v5786
    %v5839 = vadd.f32 %v5743, %v5791
    %v5840 = vadd.f32 %v5744, %v5791
    %v5841 = vadd.f32 %v5745, %v5796
    %v5842 = vadd.f32 %v5746, %v5796
    %v5843 = vadd.f32 %v5747, %v5801
    %v5844 = vadd.f32 %v5748, %v5801
    %v5845 = vadd.f32 %v5749, %v5806
    %v5846 = vadd.f32 %v5750, %v5806
    %v5847 = vadd.f32 %v5751, %v5811
    %v5848 = vadd.f32 %v5752, %v5811
    %v5849 = vadd.f32 %v5753, %v5816
    %v5850 = vadd.f32 %v5754, %v5816
    %v5851 = vadd.f32 %v5755, %v5821
    %v5852 = vadd.f32 %v5756, %v5821
    %v5853 = vadd.f32 %v5757, %v5826
    %v5854 = vadd.f32 %v5758, %v5826
    %v5855 = vadd.f32 %v5759, %v5831
    %v5856 = vadd.f32 %v5760, %v5831
    %v5857 = vmax.f32 %v5833, 0.0
    %v5858 = vmax.f32 %v5834, 0.0
    %v5859 = vmax.f32 %v5835, 0.0
    %v5860 = vmax.f32 %v5836, 0.0
    %v5861 = vmax.f32 %v5837, 0.0
    %v5862 = vmax.f32 %v5838, 0.0
    %v5863 = vmax.f32 %v5839, 0.0
    %v5864 = vmax.f32 %v5840, 0.0
    %v5865 = vmax.f32 %v5841, 0.0
    %v5866 = vmax.f32 %v5842, 0.0
    %v5867 = vmax.f32 %v5843, 0.0
    %v5868 = vmax.f32 %v5844, 0.0
    %v5869 = vmax.f32 %v5845, 0.0
    %v5870 = vmax.f32 %v5846, 0.0
    %v5871 = vmax.f32 %v5847, 0.0
    %v5872 = vmax.f32 %v5848, 0.0
    %v5873 = vmax.f32 %v5849, 0.0
    %v5874 = vmax.f32 %v5850, 0.0
    %v5875 = vmax.f32 %v5851, 0.0
    %v5876 = vmax.f32 %v5852, 0.0
    %v5877 = vmax.f32 %v5853, 0.0
    %v5878 = vmax.f32 %v5854, 0.0
    %v5879 = vmax.f32 %v5855, 0.0
    %v5880 = vmax.f32 %v5856, 0.0
    %v5881 = vld [vmem:[#allocation12] sm:$0xff]
    %v5882 = vld [vmem:[#allocation12 + $0x8] sm:$0xf]
    %vm5883 = vcmask 785408
    %v5885 = vsel %vm5883, %v5881, 0
    %v5888 = vsel %vm5883, %v5882, 0
    %5890 = vmatprep.subr.mxu0 %v5858
    %5891 = vmatpush1.msra.mxu0 %v5857
    %5892 = vmatprep.subr.mxu0 %v5860
    %5893 = vmatpush1.msra.mxu0 %v5859
    %5894 = vmatprep.subr.mxu0 %v5862
    %5895 = vmatpush1.msra.mxu0 %v5861
    %5896 = vmatprep.subr.mxu0 %v5864
    %5897 = vmatpush1.msra.mxu0 %v5863
    %5898 = vmatprep.subr.mxu0 %v5866
    %5899 = vmatpush1.msra.mxu0 %v5865
    %5900 = vmatprep.subr.mxu0 %v5868
    %5901 = vmatpush1.msra.mxu0 %v5867
    %5902 = vmatprep.subr.mxu0 %v5870
    %5903 = vmatpush1.msra.mxu0 %v5869
    %5904 = vmatprep.subr.mxu0 %v5872
    %5905 = vmatpush1.msra.mxu0 %v5871
    %5906 = vmatprep.subr.mxu0 %v5874
    %5907 = vmatpush1.msra.mxu0 %v5873
    %5908 = vmatprep.subr.mxu0 %v5876
    %5909 = vmatpush1.msra.mxu0 %v5875
    %5910 = vmatprep.subr.mxu0 %v5878
    %5911 = vmatpush1.msra.mxu0 %v5877
    %5912 = vmatprep.subr.mxu0 %v5880
    %5913 = vmatpush1.msra.mxu0 %v5879
    %5914 = vmatprep.subr.mxu0 0.0
    %5915 = vmatpush1.msra.mxu0 0.0
    %5916 = vmatprep.subr.mxu0 0.0
    %5917 = vmatpush1.msra.mxu0 0.0
    %5918 = vmatprep.subr.mxu0 0.0
    %5919 = vmatpush1.msra.mxu0 0.0
    %5920 = vmatprep.subr.mxu0 0.0
    %5921 = vmatpush1.msra.mxu0 0.0
    %5922 = vmatprep.subr.mxu0 0.0
    %5923 = vmatpush1.msra.mxu0 0.0
    %5924 = vmatprep.subr.mxu0 0.0
    %5925 = vmatpush1.msra.mxu0 0.0
    %5926 = vmatprep.subr.mxu0 0.0
    %5927 = vmatpush1.msra.mxu0 0.0
    %5928 = vmatprep.subr.mxu0 0.0
    %5929 = vmatpush1.msra.mxu0 0.0
    %5930 = vmatprep.subr.mxu0 0.0
    %5931 = vmatpush1.msra.mxu0 0.0
    %5932 = vmatprep.subr.mxu0 0.0
    %5933 = vmatpush1.msra.mxu0 0.0
    %5934 = vmatprep.subr.mxu0 0.0
    %5935 = vmatpush1.msra.mxu0 0.0
    %5936 = vmatprep.subr.mxu0 0.0
    %5937 = vmatpush1.msra.mxu0 0.0
    %5938 = vmatprep.subr.mxu0 0.0
    %5939 = vmatpush1.msra.mxu0 0.0
    %5940 = vmatprep.subr.mxu0 0.0
    %5941 = vmatpush1.msra.mxu0 0.0
    %5942 = vmatprep.subr.mxu0 0.0
    %5943 = vmatpush1.msra.mxu0 0.0
    %5944 = vmatprep.subr.mxu0 0.0
    %5945 = vmatpush1.msra.mxu0 0.0
    %5946 = vmatprep.subr.mxu0 0.0
    %5947 = vmatpush1.msra.mxu0 0.0
    %5948 = vmatprep.subr.mxu0 0.0
    %5949 = vmatpush1.msra.mxu0 0.0
    %5950 = vmatprep.subr.mxu0 0.0
    %5951 = vmatpush1.msra.mxu0 0.0
    %5952 = vmatprep.subr.mxu0 0.0
    %5953 = vmatpush1.msra.mxu0 0.0
    %5954 = vmatprep.mubr.f32.mxu0 0.0
    %5955 = vmatmul.mubr.f32.gmra.mrb[0].mxu0 %v5885
    %v5956 = vpop.f32.mrb[0].mxu0
    %v5957 = vadd.f32 0.0, %v5956
    %v5958 = vpop.f32.mrb[0].mxu0
    %v5959 = vadd.f32 0.0, %v5958
    %5960 = vmatprep.mubr.f32.mxu0 0.0
    %5961 = vmatmul.mubr.f32.gmra.mrb[0].mxu0 %v5888
    %v5962 = vpop.f32.mrb[0].mxu0
    %v5963 = vadd.f32 0.0, %v5962
    %v5964 = vpop.f32.mrb[0].mxu0
    %v5965 = vadd.f32 0.0, %v5964
    %5966 = vdwg.mxu0
    %v5967 = vsel %vm1423, %v5220, -inf
    %v5968 = vmax.f32 %v5218, %v5967
    %5969 = vmax.xlane.f32.xlu0 %v5968
    %v5970 = vpop.xlane.xlu0 %5969
    %v5971 = vsel %vm1448, %v5224, -inf
    %vm5972 = vcmask 551936
    %v5973 = vsel %vm5972, %v5226, -inf
    %v5974 = vmax.f32 %v5971, %v5973
    %5975 = vmax.xlane.f32.xlu0 %v5974
    %v5976 = vpop.xlane.xlu0 %5975
    %v5977 = vsel %vm1448, %v5976, -inf
    %v5978 = vmax.f32 %v5970, %v5977
    %v5979 = vrot.slane %v5978, 4
    %v5980 = vmax.f32 %v5978, %v5979
    %v5981 = vrot.slane %v5980, 2
    %v5982 = vmax.f32 %v5980, %v5981
    %v5983 = vrot.slane %v5982, 1
    %v5984 = vmax.f32 %v5982, %v5983
    %v5985 = vsub.f32 %v5218, %v5984
    %v5986 = vsub.f32 %v5220, %v5984
    %v5987 = vsub.f32 %v5224, %v5984
    %v5988 = vsub.f32 %v5226, %v5984
    %v5989 = vmul.f32 %v5985, 1.442695
    %v5990 = vpow.pop %v5989
    %v5991 = vmul.f32 %v5986, 1.442695
    %v5992 = vpow.pop %v5991
    %v5993 = vmul.f32 %v5987, 1.442695
    %v5994 = vpow.pop %v5993
    %v5995 = vmul.f32 %v5988, 1.442695
    %v5996 = vpow.pop %v5995
    %v5997 = vld [vmem:[#allocation4] sm:$0xff]
    %v5998 = vld [vmem:[#allocation4 + $0x8] sm:$0xf]
    %vm5999 = vcmask 97280
    %v6001 = vsel %vm5999, %v5997, 0
    %v6004 = vsel %vm5999, %v5998, 0
    %v6007 = vsel %vm1448, %v5994, 0
    %v6010 = vsel %vm1448, %v5996, 0
    %6012 = vmatprep.subr.mxu0 %v5992
    %6013 = vmatpush1.msra.mxu0 %v5990
    %6014 = vmatprep.subr.mxu0 %v6010
    %6015 = vmatpush1.msra.mxu0 %v6007
    %6016 = vmatprep.subr.mxu0 0.0
    %6017 = vmatpush1.msra.mxu0 0.0
    %6018 = vmatprep.subr.mxu0 0.0
    %6019 = vmatpush1.msra.mxu0 0.0
    %6020 = vmatprep.subr.mxu0 0.0
    %6021 = vmatpush1.msra.mxu0 0.0
    %6022 = vmatprep.subr.mxu0 0.0
    %6023 = vmatpush1.msra.mxu0 0.0
    %6024 = vmatprep.subr.mxu0 0.0
    %6025 = vmatpush1.msra.mxu0 0.0
    %6026 = vmatprep.subr.mxu0 0.0
    %6027 = vmatpush1.msra.mxu0 0.0
    %6028 = vmatprep.subr.mxu0 0.0
    %6029 = vmatpush1.msra.mxu0 0.0
    %6030 = vmatprep.subr.mxu0 0.0
    %6031 = vmatpush1.msra.mxu0 0.0
    %6032 = vmatprep.subr.mxu0 0.0
    %6033 = vmatpush1.msra.mxu0 0.0
    %6034 = vmatprep.subr.mxu0 0.0
    %6035 = vmatpush1.msra.mxu0 0.0
    %6036 = vmatprep.subr.mxu0 0.0
    %6037 = vmatpush1.msra.mxu0 0.0
    %6038 = vmatprep.subr.mxu0 0.0
    %6039 = vmatpush1.msra.mxu0 0.0
    %6040 = vmatprep.subr.mxu0 0.0
    %6041 = vmatpush1.msra.mxu0 0.0
    %6042 = vmatprep.subr.mxu0 0.0
    %6043 = vmatpush1.msra.mxu0 0.0
    %6044 = vmatprep.subr.mxu0 0.0
    %6045 = vmatpush1.msra.mxu0 0.0
    %6046 = vmatprep.subr.mxu0 0.0
    %6047 = vmatpush1.msra.mxu0 0.0
    %6048 = vmatprep.subr.mxu0 0.0
    %6049 = vmatpush1.msra.mxu0 0.0
    %6050 = vmatprep.subr.mxu0 0.0
    %6051 = vmatpush1.msra.mxu0 0.0
    %6052 = vmatprep.subr.mxu0 0.0
    %6053 = vmatpush1.msra.mxu0 0.0
    %6054 = vmatprep.subr.mxu0 0.0
    %6055 = vmatpush1.msra.mxu0 0.0
    %6056 = vmatprep.subr.mxu0 0.0
    %6057 = vmatpush1.msra.mxu0 0.0
    %6058 = vmatprep.subr.mxu0 0.0
    %6059 = vmatpush1.msra.mxu0 0.0
    %6060 = vmatprep.subr.mxu0 0.0
    %6061 = vmatpush1.msra.mxu0 0.0
    %6062 = vmatprep.subr.mxu0 0.0
    %6063 = vmatpush1.msra.mxu0 0.0
    %6064 = vmatprep.subr.mxu0 0.0
    %6065 = vmatpush1.msra.mxu0 0.0
    %6066 = vmatprep.subr.mxu0 0.0
    %6067 = vmatpush1.msra.mxu0 0.0
    %6068 = vmatprep.subr.mxu0 0.0
    %6069 = vmatpush1.msra.mxu0 0.0
    %6070 = vmatprep.subr.mxu0 0.0
    %6071 = vmatpush1.msra.mxu0 0.0
    %6072 = vmatprep.subr.mxu0 0.0
    %6073 = vmatpush1.msra.mxu0 0.0
    %6074 = vmatprep.subr.mxu0 0.0
    %6075 = vmatpush1.msra.mxu0 0.0
    %6076 = vmatprep.mubr.f32.mxu0 0.0
    %6077 = vmatmul.mubr.f32.gmra.mrb[0].mxu0 %v6001
    %v6078 = vpop.f32.mrb[0].mxu0
    %v6079 = vadd.f32 0.0, %v6078
    %v6080 = vpop.f32.mrb[0].mxu0
    %v6081 = vadd.f32 0.0, %v6080
    %6082 = vmatprep.mubr.f32.mxu0 0.0
    %6083 = vmatmul.mubr.f32.gmra.mrb[0].mxu0 %v6004
    %v6084 = vpop.f32.mrb[0].mxu0
    %v6085 = vadd.f32 0.0, %v6084
    %v6086 = vpop.f32.mrb[0].mxu0
    %v6087 = vadd.f32 0.0, %v6086
    %6088 = vdwg.mxu0
    %v6089 = vsel %vm1423, %v6081, 0.0
    %v6090 = vadd.f32 %v6079, %v6089
    %6091 = vadd.xlane.f32.xlu0 %v6090
    %v6092 = vpop.xlane.xlu0 %6091
    %v6093 = vsel %vm1448, %v6085, 0.0
    %v6094 = vsel %vm5972, %v6087, 0.0
    %v6095 = vadd.f32 %v6093, %v6094
    %6096 = vadd.xlane.f32.xlu0 %v6095
    %v6097 = vpop.xlane.xlu0 %6096
    %v6098 = vrcp.pop %v6092
    %v6099 = vrcp.pop %v6097
    %v6100 = vmul.f32 %v5990, %v6098
    %v6101 = vmul.f32 %v5992, %v6098
    %v6102 = vmul.f32 %v5994, %v6099
    %v6103 = vmul.f32 %v5996, %v6099
    %v6104 = vsub.f32 0.0, %v5957
    %v6105 = vsub.f32 0.0, %v5959
    %v6106 = vsub.f32 0.0, %v5963
    %v6107 = vsub.f32 0.0, %v5965
    %v6108 = vmul.f32 %v6104, 1.442695
    %v6109 = vpow.pop %v6108
    %v6110 = vmul.f32 %v6105, 1.442695
    %v6111 = vpow.pop %v6110
    %v6112 = vmul.f32 %v6106, 1.442695
    %v6113 = vpow.pop %v6112
    %v6114 = vmul.f32 %v6107, 1.442695
    %v6115 = vpow.pop %v6114
    %v6116 = vadd.f32 %v6109, 1.0
    %v6117 = vadd.f32 %v6111, 1.0
    %v6118 = vadd.f32 %v6113, 1.0
    %v6119 = vadd.f32 %v6115, 1.0
    %v6120 = vrcp.pop %v6116
    %v6121 = vrcp.pop %v6117
    %v6122 = vrcp.pop %v6118
    %v6123 = vrcp.pop %v6119
    %v6124 = vmul.f32 %v6100, %v6120
    %v6125 = vmul.f32 %v6101, %v6121
    %v6126 = vmul.f32 %v6102, %v6122
    %v6127 = vmul.f32 %v6103, %v6123
    %v6128 = vmul.f32 %v6100, %v5957
    %v6129 = vmul.f32 %v6101, %v5959
    %v6130 = vmul.f32 %v6102, %v5963
    %v6131 = vmul.f32 %v6103, %v5965
    %v6132 = vsel %vm1423, %v6129, 0.0
    %v6133 = vadd.f32 %v6128, %v6132
    %6134 = vadd.xlane.f32.xlu0 %v6133
    %v6135 = vpop.xlane.xlu0 %6134
    %v6136 = vsel %vm1448, %v6130, 0.0
    %v6137 = vsel %vm5972, %v6131, 0.0
    %v6138 = vadd.f32 %v6136, %v6137
    %6139 = vadd.xlane.f32.xlu0 %v6138
    %v6140 = vpop.xlane.xlu0 %6139
    %vm6141 = vcmask 7168
    %6142 = vst.msk [vmem:[%s25] sm:$0xff] %vm6141, %v6135
    %vm6143 = vcmask 3072
    %6144 = vst.msk [vmem:[%s25 + $0x8] sm:$0xf] %vm6143, %v6140
    %v6145 = vld [vmem:[%s18] sm:$0xff]
    %v6146 = vld [vmem:[%s18 + $0x8] sm:$0xff]
    %v6147 = vld [vmem:[%s18 + $0x10] sm:$0xff]
    %v6148 = vld [vmem:[%s18 + $0x18] sm:$0xff]
    %v6149 = vld [vmem:[%s18 + $0x20] sm:$0xff]
    %v6150 = vld [vmem:[%s18 + $0x28] sm:$0xff]
    %v6151 = vld [vmem:[%s18 + $0x30] sm:$0xff]
    %v6152 = vld [vmem:[%s18 + $0x38] sm:$0xff]
    %v6154 = vsel %vm5999, %v6145, 0
    %v6157 = vsel %vm5999, %v6146, 0
    %v6160 = vsel %vm5999, %v6147, 0
    %v6163 = vsel %vm5999, %v6148, 0
    %v6166 = vsel %vm5999, %v6149, 0
    %v6169 = vsel %vm5999, %v6150, 0
    %v6172 = vsel %vm5999, %v6151, 0
    %v6175 = vsel %vm5999, %v6152, 0
    %v6178 = vsel %vm1448, %v6126, 0
    %v6181 = vsel %vm1448, %v6127, 0
    %6183 = vmatprep.subr.mxu0 %v6125
    %6184 = vmatpush1.msra.mxu0 %v6124
    %6185 = vmatprep.subr.mxu0 %v6181
    %6186 = vmatpush1.msra.mxu0 %v6178
    %6187 = vmatprep.subr.mxu0 0.0
    %6188 = vmatpush1.msra.mxu0 0.0
    %6189 = vmatprep.subr.mxu0 0.0
    %6190 = vmatpush1.msra.mxu0 0.0
    %6191 = vmatprep.subr.mxu0 0.0
    %6192 = vmatpush1.msra.mxu0 0.0
    %6193 = vmatprep.subr.mxu0 0.0
    %6194 = vmatpush1.msra.mxu0 0.0
    %6195 = vmatprep.subr.mxu0 0.0
    %6196 = vmatpush1.msra.mxu0 0.0
    %6197 = vmatprep.subr.mxu0 0.0
    %6198 = vmatpush1.msra.mxu0 0.0
    %6199 = vmatprep.subr.mxu0 0.0
    %6200 = vmatpush1.msra.mxu0 0.0
    %6201 = vmatprep.subr.mxu0 0.0
    %6202 = vmatpush1.msra.mxu0 0.0
    %6203 = vmatprep.subr.mxu0 0.0
    %6204 = vmatpush1.msra.mxu0 0.0
    %6205 = vmatprep.subr.mxu0 0.0
    %6206 = vmatpush1.msra.mxu0 0.0
    %6207 = vmatprep.subr.mxu0 0.0
    %6208 = vmatpush1.msra.mxu0 0.0
    %6209 = vmatprep.subr.mxu0 0.0
    %6210 = vmatpush1.msra.mxu0 0.0
    %6211 = vmatprep.subr.mxu0 0.0
    %6212 = vmatpush1.msra.mxu0 0.0
    %6213 = vmatprep.subr.mxu0 0.0
    %6214 = vmatpush1.msra.mxu0 0.0
    %6215 = vmatprep.subr.mxu0 0.0
    %6216 = vmatpush1.msra.mxu0 0.0
    %6217 = vmatprep.subr.mxu0 0.0
    %6218 = vmatpush1.msra.mxu0 0.0
    %6219 = vmatprep.subr.mxu0 0.0
    %6220 = vmatpush1.msra.mxu0 0.0
    %6221 = vmatprep.subr.mxu0 0.0
    %6222 = vmatpush1.msra.mxu0 0.0
    %6223 = vmatprep.subr.mxu0 0.0
    %6224 = vmatpush1.msra.mxu0 0.0
    %6225 = vmatprep.subr.mxu0 0.0
    %6226 = vmatpush1.msra.mxu0 0.0
    %6227 = vmatprep.subr.mxu0 0.0
    %6228 = vmatpush1.msra.mxu0 0.0
    %6229 = vmatprep.subr.mxu0 0.0
    %6230 = vmatpush1.msra.mxu0 0.0
    %6231 = vmatprep.subr.mxu0 0.0
    %6232 = vmatpush1.msra.mxu0 0.0
    %6233 = vmatprep.subr.mxu0 0.0
    %6234 = vmatpush1.msra.mxu0 0.0
    %6235 = vmatprep.subr.mxu0 0.0
    %6236 = vmatpush1.msra.mxu0 0.0
    %6237 = vmatprep.subr.mxu0 0.0
    %6238 = vmatpush1.msra.mxu0 0.0
    %6239 = vmatprep.subr.mxu0 0.0
    %6240 = vmatpush1.msra.mxu0 0.0
    %6241 = vmatprep.subr.mxu0 0.0
    %6242 = vmatpush1.msra.mxu0 0.0
    %6243 = vmatprep.subr.mxu0 0.0
    %6244 = vmatpush1.msra.mxu0 0.0
    %6245 = vmatprep.subr.mxu0 0.0
    %6246 = vmatpush1.msra.mxu0 0.0
    %6247 = vmatprep.mubr.f32.mxu0 0.0
    %6248 = vmatmul.mubr.f32.gmra.mrb[0].mxu0 %v6154
    %v6249 = vpop.f32.mrb[0].mxu0
    %v6250 = vadd.f32 0.0, %v6249
    %v6251 = vpop.f32.mrb[0].mxu0
    %v6252 = vadd.f32 0.0, %v6251
    %6253 = vmatprep.mubr.f32.mxu0 0.0
    %6254 = vmatmul.mubr.f32.gmra.mrb[0].mxu0 %v6157
    %v6255 = vpop.f32.mrb[0].mxu0
    %v6256 = vadd.f32 0.0, %v6255
    %v6257 = vpop.f32.mrb[0].mxu0
    %v6258 = vadd.f32 0.0, %v6257
    %6259 = vmatprep.mubr.f32.mxu0 0.0
    %6260 = vmatmul.mubr.f32.gmra.mrb[0].mxu0 %v6160
    %v6261 = vpop.f32.mrb[0].mxu0
    %v6262 = vadd.f32 0.0, %v6261
    %v6263 = vpop.f32.mrb[0].mxu0
    %v6264 = vadd.f32 0.0, %v6263
    %6265 = vmatprep.mubr.f32.mxu0 0.0
    %6266 = vmatmul.mubr.f32.gmra.mrb[0].mxu0 %v6163
    %v6267 = vpop.f32.mrb[0].mxu0
    %v6268 = vadd.f32 0.0, %v6267
    %v6269 = vpop.f32.mrb[0].mxu0
    %v6270 = vadd.f32 0.0, %v6269
    %6271 = vmatprep.mubr.f32.mxu0 0.0
    %6272 = vmatmul.mubr.f32.gmra.mrb[0].mxu0 %v6166
    %v6273 = vpop.f32.mrb[0].mxu0
    %v6274 = vadd.f32 0.0, %v6273
    %v6275 = vpop.f32.mrb[0].mxu0
    %v6276 = vadd.f32 0.0, %v6275
    %6277 = vmatprep.mubr.f32.mxu0 0.0
    %6278 = vmatmul.mubr.f32.gmra.mrb[0].mxu0 %v6169
    %v6279 = vpop.f32.mrb[0].mxu0
    %v6280 = vadd.f32 0.0, %v6279
    %v6281 = vpop.f32.mrb[0].mxu0
    %v6282 = vadd.f32 0.0, %v6281
    %6283 = vmatprep.mubr.f32.mxu0 0.0
    %6284 = vmatmul.mubr.f32.gmra.mrb[0].mxu0 %v6172
    %v6285 = vpop.f32.mrb[0].mxu0
    %v6286 = vadd.f32 0.0, %v6285
    %v6287 = vpop.f32.mrb[0].mxu0
    %v6288 = vadd.f32 0.0, %v6287
    %6289 = vmatprep.mubr.f32.mxu0 0.0
    %6290 = vmatmul.mubr.f32.gmra.mrb[0].mxu0 %v6175
    %v6291 = vpop.f32.mrb[0].mxu0
    %v6292 = vadd.f32 0.0, %v6291
    %v6293 = vpop.f32.mrb[0].mxu0
    %v6294 = vadd.f32 0.0, %v6293
    %6295 = vdwg.mxu0
    %v6296 = vld [vmem:[%s19] sm:$0xff]
    %v6297 = vld [vmem:[%s19 + $0x8] sm:$0xff]
    %v6298 = vld [vmem:[%s19 + $0x10] sm:$0xff]
    %v6299 = vld [vmem:[%s19 + $0x18] sm:$0xff]
    %v6300 = vld [vmem:[%s19 + $0x20] sm:$0xff]
    %v6301 = vld [vmem:[%s19 + $0x28] sm:$0xff]
    %v6302 = vld [vmem:[%s19 + $0x30] sm:$0xff]
    %v6303 = vld [vmem:[%s19 + $0x38] sm:$0xff]
    %6305 = vset.pattern.permute.xlu0 0
    %6306 = vperm.xlu0 %6305, %v6296
    %v6307 = vpop.permute.xlu0 %6306
    %6310 = vset.pattern.permute.xlu0 0
    %6311 = vperm.xlu0 %6310, %v6297
    %v6312 = vpop.permute.xlu0 %6311
    %6315 = vset.pattern.permute.xlu0 0
    %6316 = vperm.xlu0 %6315, %v6298
    %v6317 = vpop.permute.xlu0 %6316
    %6320 = vset.pattern.permute.xlu0 0
    %6321 = vperm.xlu0 %6320, %v6299
    %v6322 = vpop.permute.xlu0 %6321
    %6325 = vset.pattern.permute.xlu0 0
    %6326 = vperm.xlu0 %6325, %v6300
    %v6327 = vpop.permute.xlu0 %6326
    %6330 = vset.pattern.permute.xlu0 0
    %6331 = vperm.xlu0 %6330, %v6301
    %v6332 = vpop.permute.xlu0 %6331
    %6335 = vset.pattern.permute.xlu0 0
    %6336 = vperm.xlu0 %6335, %v6302
    %v6337 = vpop.permute.xlu0 %6336
    %6340 = vset.pattern.permute.xlu0 0
    %6341 = vperm.xlu0 %6340, %v6303
    %v6342 = vpop.permute.xlu0 %6341
    %v6344 = vmul.f32 %v6250, %v6307
    %v6345 = vmul.f32 %v6252, %v6307
    %v6346 = vmul.f32 %v6256, %v6312
    %v6347 = vmul.f32 %v6258, %v6312
    %v6348 = vmul.f32 %v6262, %v6317
    %v6349 = vmul.f32 %v6264, %v6317
    %v6350 = vmul.f32 %v6268, %v6322
    %v6351 = vmul.f32 %v6270, %v6322
    %v6352 = vmul.f32 %v6274, %v6327
    %v6353 = vmul.f32 %v6276, %v6327
    %v6354 = vmul.f32 %v6280, %v6332
    %v6355 = vmul.f32 %v6282, %v6332
    %v6356 = vmul.f32 %v6286, %v6337
    %v6357 = vmul.f32 %v6288, %v6337
    %v6358 = vmul.f32 %v6292, %v6342
    %v6359 = vmul.f32 %v6294, %v6342
    %v6360 = vld [vmem:[%s20] sm:$0xff]
    %v6361 = vld [vmem:[%s20 + $0x8] sm:$0xff]
    %v6362 = vld [vmem:[%s20 + $0x10] sm:$0xff]
    %v6363 = vld [vmem:[%s20 + $0x18] sm:$0xff]
    %v6364 = vld [vmem:[%s20 + $0x20] sm:$0xff]
    %v6365 = vld [vmem:[%s20 + $0x28] sm:$0xff]
    %v6366 = vld [vmem:[%s20 + $0x30] sm:$0xff]
    %v6367 = vld [vmem:[%s20 + $0x38] sm:$0xff]
    %6369 = vset.pattern.permute.xlu0 0
    %6370 = vperm.xlu0 %6369, %v6360
    %v6371 = vpop.permute.xlu0 %6370
    %6374 = vset.pattern.permute.xlu0 0
    %6375 = vperm.xlu0 %6374, %v6361
    %v6376 = vpop.permute.xlu0 %6375
    %6379 = vset.pattern.permute.xlu0 0
    %6380 = vperm.xlu0 %6379, %v6362
    %v6381 = vpop.permute.xlu0 %6380
    %6384 = vset.pattern.permute.xlu0 0
    %6385 = vperm.xlu0 %6384, %v6363
    %v6386 = vpop.permute.xlu0 %6385
    %6389 = vset.pattern.permute.xlu0 0
    %6390 = vperm.xlu0 %6389, %v6364
    %v6391 = vpop.permute.xlu0 %6390
    %6394 = vset.pattern.permute.xlu0 0
    %6395 = vperm.xlu0 %6394, %v6365
    %v6396 = vpop.permute.xlu0 %6395
    %6399 = vset.pattern.permute.xlu0 0
    %6400 = vperm.xlu0 %6399, %v6366
    %v6401 = vpop.permute.xlu0 %6400
    %6404 = vset.pattern.permute.xlu0 0
    %6405 = vperm.xlu0 %6404, %v6367
    %v6406 = vpop.permute.xlu0 %6405
    %v6408 = vadd.f32 %v6344, %v6371
    %v6409 = vadd.f32 %v6345, %v6371
    %v6410 = vadd.f32 %v6346, %v6376
    %v6411 = vadd.f32 %v6347, %v6376
    %v6412 = vadd.f32 %v6348, %v6381
    %v6413 = vadd.f32 %v6349, %v6381
    %v6414 = vadd.f32 %v6350, %v6386
    %v6415 = vadd.f32 %v6351, %v6386
    %v6416 = vadd.f32 %v6352, %v6391
    %v6417 = vadd.f32 %v6353, %v6391
    %v6418 = vadd.f32 %v6354, %v6396
    %v6419 = vadd.f32 %v6355, %v6396
    %v6420 = vadd.f32 %v6356, %v6401
    %v6421 = vadd.f32 %v6357, %v6401
    %v6422 = vadd.f32 %v6358, %v6406
    %v6423 = vadd.f32 %v6359, %v6406
    %v6424 = vmax.f32 %v6408, 0.0
    %v6425 = vmax.f32 %v6409, 0.0
    %v6426 = vmax.f32 %v6410, 0.0
    %v6427 = vmax.f32 %v6411, 0.0
    %v6428 = vmax.f32 %v6412, 0.0
    %v6429 = vmax.f32 %v6413, 0.0
    %v6430 = vmax.f32 %v6414, 0.0
    %v6431 = vmax.f32 %v6415, 0.0
    %v6432 = vmax.f32 %v6416, 0.0
    %v6433 = vmax.f32 %v6417, 0.0
    %v6434 = vmax.f32 %v6418, 0.0
    %v6435 = vmax.f32 %v6419, 0.0
    %v6436 = vmax.f32 %v6420, 0.0
    %v6437 = vmax.f32 %v6421, 0.0
    %v6438 = vmax.f32 %v6422, 0.0
    %v6439 = vmax.f32 %v6423, 0.0
    %v6440 = vld [vmem:[#allocation13] sm:$0xff]
    %v6441 = vld [vmem:[#allocation13 + $0x8] sm:$0xff]
    %v6442 = vld [vmem:[#allocation13 + $0x10] sm:$0xff]
    %v6443 = vld [vmem:[#allocation13 + $0x18] sm:$0xff]
    %v6444 = vld [vmem:[#allocation13 + $0x20] sm:$0xff]
    %v6445 = vld [vmem:[#allocation13 + $0x28] sm:$0xff]
    %v6446 = vld [vmem:[#allocation13 + $0x30] sm:$0xff]
    %v6447 = vld [vmem:[#allocation13 + $0x38] sm:$0xff]
    %v6449 = vsel %vm974, %v6440, 0
    %v6452 = vsel %vm974, %v6441, 0
    %v6455 = vsel %vm974, %v6442, 0
    %v6458 = vsel %vm974, %v6443, 0
    %v6461 = vsel %vm974, %v6444, 0
    %v6464 = vsel %vm974, %v6445, 0
    %v6467 = vsel %vm974, %v6446, 0
    %v6470 = vsel %vm974, %v6447, 0
    %6472 = vmatprep.subr.mxu0 %v6425
    %6473 = vmatpush1.msra.mxu0 %v6424
    %6474 = vmatprep.subr.mxu0 %v6427
    %6475 = vmatpush1.msra.mxu0 %v6426
    %6476 = vmatprep.subr.mxu0 %v6429
    %6477 = vmatpush1.msra.mxu0 %v6428
    %6478 = vmatprep.subr.mxu0 %v6431
    %6479 = vmatpush1.msra.mxu0 %v6430
    %6480 = vmatprep.subr.mxu0 %v6433
    %6481 = vmatpush1.msra.mxu0 %v6432
    %6482 = vmatprep.subr.mxu0 %v6435
    %6483 = vmatpush1.msra.mxu0 %v6434
    %6484 = vmatprep.subr.mxu0 %v6437
    %6485 = vmatpush1.msra.mxu0 %v6436
    %6486 = vmatprep.subr.mxu0 %v6439
    %6487 = vmatpush1.msra.mxu0 %v6438
    %6488 = vmatprep.subr.mxu0 0.0
    %6489 = vmatpush1.msra.mxu0 0.0
    %6490 = vmatprep.subr.mxu0 0.0
    %6491 = vmatpush1.msra.mxu0 0.0
    %6492 = vmatprep.subr.mxu0 0.0
    %6493 = vmatpush1.msra.mxu0 0.0
    %6494 = vmatprep.subr.mxu0 0.0
    %6495 = vmatpush1.msra.mxu0 0.0
    %6496 = vmatprep.subr.mxu0 0.0
    %6497 = vmatpush1.msra.mxu0 0.0
    %6498 = vmatprep.subr.mxu0 0.0
    %6499 = vmatpush1.msra.mxu0 0.0
    %6500 = vmatprep.subr.mxu0 0.0
    %6501 = vmatpush1.msra.mxu0 0.0
    %6502 = vmatprep.subr.mxu0 0.0
    %6503 = vmatpush1.msra.mxu0 0.0
    %6504 = vmatprep.subr.mxu0 0.0
    %6505 = vmatpush1.msra.mxu0 0.0
    %6506 = vmatprep.subr.mxu0 0.0
    %6507 = vmatpush1.msra.mxu0 0.0
    %6508 = vmatprep.subr.mxu0 0.0
    %6509 = vmatpush1.msra.mxu0 0.0
    %6510 = vmatprep.subr.mxu0 0.0
    %6511 = vmatpush1.msra.mxu0 0.0
    %6512 = vmatprep.subr.mxu0 0.0
    %6513 = vmatpush1.msra.mxu0 0.0
    %6514 = vmatprep.subr.mxu0 0.0
    %6515 = vmatpush1.msra.mxu0 0.0
    %6516 = vmatprep.subr.mxu0 0.0
    %6517 = vmatpush1.msra.mxu0 0.0
    %6518 = vmatprep.subr.mxu0 0.0
    %6519 = vmatpush1.msra.mxu0 0.0
    %6520 = vmatprep.subr.mxu0 0.0
    %6521 = vmatpush1.msra.mxu0 0.0
    %6522 = vmatprep.subr.mxu0 0.0
    %6523 = vmatpush1.msra.mxu0 0.0
    %6524 = vmatprep.subr.mxu0 0.0
    %6525 = vmatpush1.msra.mxu0 0.0
    %6526 = vmatprep.subr.mxu0 0.0
    %6527 = vmatpush1.msra.mxu0 0.0
    %6528 = vmatprep.subr.mxu0 0.0
    %6529 = vmatpush1.msra.mxu0 0.0
    %6530 = vmatprep.subr.mxu0 0.0
    %6531 = vmatpush1.msra.mxu0 0.0
    %6532 = vmatprep.subr.mxu0 0.0
    %6533 = vmatpush1.msra.mxu0 0.0
    %6534 = vmatprep.subr.mxu0 0.0
    %6535 = vmatpush1.msra.mxu0 0.0
    %6536 = vmatprep.mubr.f32.mxu0 0.0
    %6537 = vmatmul.mubr.f32.gmra.mrb[0].mxu0 %v6449
    %v6538 = vpop.f32.mrb[0].mxu0
    %v6539 = vadd.f32 0.0, %v6538
    %v6540 = vpop.f32.mrb[0].mxu0
    %v6541 = vadd.f32 0.0, %v6540
    %6542 = vmatprep.mubr.f32.mxu0 0.0
    %6543 = vmatmul.mubr.f32.gmra.mrb[0].mxu0 %v6452
    %v6544 = vpop.f32.mrb[0].mxu0
    %v6545 = vadd.f32 0.0, %v6544
    %v6546 = vpop.f32.mrb[0].mxu0
    %v6547 = vadd.f32 0.0, %v6546
    %6548 = vmatprep.mubr.f32.mxu0 0.0
    %6549 = vmatmul.mubr.f32.gmra.mrb[0].mxu0 %v6455
    %v6550 = vpop.f32.mrb[0].mxu0
    %v6551 = vadd.f32 0.0, %v6550
    %v6552 = vpop.f32.mrb[0].mxu0
    %v6553 = vadd.f32 0.0, %v6552
    %6554 = vmatprep.mubr.f32.mxu0 0.0
    %6555 = vmatmul.mubr.f32.gmra.mrb[0].mxu0 %v6458
    %v6556 = vpop.f32.mrb[0].mxu0
    %v6557 = vadd.f32 0.0, %v6556
    %v6558 = vpop.f32.mrb[0].mxu0
    %v6559 = vadd.f32 0.0, %v6558
    %6560 = vmatprep.mubr.f32.mxu0 0.0
    %6561 = vmatmul.mubr.f32.gmra.mrb[0].mxu0 %v6461
    %v6562 = vpop.f32.mrb[0].mxu0
    %v6563 = vadd.f32 0.0, %v6562
    %v6564 = vpop.f32.mrb[0].mxu0
    %v6565 = vadd.f32 0.0, %v6564
    %6566 = vmatprep.mubr.f32.mxu0 0.0
    %6567 = vmatmul.mubr.f32.gmra.mrb[0].mxu0 %v6464
    %v6568 = vpop.f32.mrb[0].mxu0
    %v6569 = vadd.f32 0.0, %v6568
    %v6570 = vpop.f32.mrb[0].mxu0
    %v6571 = vadd.f32 0.0, %v6570
    %6572 = vmatprep.mubr.f32.mxu0 0.0
    %6573 = vmatmul.mubr.f32.gmra.mrb[0].mxu0 %v6467
    %v6574 = vpop.f32.mrb[0].mxu0
    %v6575 = vadd.f32 0.0, %v6574
    %v6576 = vpop.f32.mrb[0].mxu0
    %v6577 = vadd.f32 0.0, %v6576
    %6578 = vmatprep.mubr.f32.mxu0 0.0
    %6579 = vmatmul.mubr.f32.gmra.mrb[0].mxu0 %v6470
    %v6580 = vpop.f32.mrb[0].mxu0
    %v6581 = vadd.f32 0.0, %v6580
    %v6582 = vpop.f32.mrb[0].mxu0
    %v6583 = vadd.f32 0.0, %v6582
    %6584 = vdwg.mxu0
    %v6585 = vld [vmem:[%s22] sm:$0xff]
    %v6586 = vld [vmem:[%s22 + $0x8] sm:$0xff]
    %v6587 = vld [vmem:[%s22 + $0x10] sm:$0xff]
    %v6588 = vld [vmem:[%s22 + $0x18] sm:$0xff]
    %v6589 = vld [vmem:[%s22 + $0x20] sm:$0xff]
    %v6590 = vld [vmem:[%s22 + $0x28] sm:$0xff]
    %v6591 = vld [vmem:[%s22 + $0x30] sm:$0xff]
    %v6592 = vld [vmem:[%s22 + $0x38] sm:$0xff]
    %6594 = vset.pattern.permute.xlu0 0
    %6595 = vperm.xlu0 %6594, %v6585
    %v6596 = vpop.permute.xlu0 %6595
    %6599 = vset.pattern.permute.xlu0 0
    %6600 = vperm.xlu0 %6599, %v6586
    %v6601 = vpop.permute.xlu0 %6600
    %6604 = vset.pattern.permute.xlu0 0
    %6605 = vperm.xlu0 %6604, %v6587
    %v6606 = vpop.permute.xlu0 %6605
    %6609 = vset.pattern.permute.xlu0 0
    %6610 = vperm.xlu0 %6609, %v6588
    %v6611 = vpop.permute.xlu0 %6610
    %6614 = vset.pattern.permute.xlu0 0
    %6615 = vperm.xlu0 %6614, %v6589
    %v6616 = vpop.permute.xlu0 %6615
    %6619 = vset.pattern.permute.xlu0 0
    %6620 = vperm.xlu0 %6619, %v6590
    %v6621 = vpop.permute.xlu0 %6620
    %6624 = vset.pattern.permute.xlu0 0
    %6625 = vperm.xlu0 %6624, %v6591
    %v6626 = vpop.permute.xlu0 %6625
    %6629 = vset.pattern.permute.xlu0 0
    %6630 = vperm.xlu0 %6629, %v6592
    %v6631 = vpop.permute.xlu0 %6630
    %v6633 = vmul.f32 %v6539, %v6596
    %v6634 = vmul.f32 %v6541, %v6596
    %v6635 = vmul.f32 %v6545, %v6601
    %v6636 = vmul.f32 %v6547, %v6601
    %v6637 = vmul.f32 %v6551, %v6606
    %v6638 = vmul.f32 %v6553, %v6606
    %v6639 = vmul.f32 %v6557, %v6611
    %v6640 = vmul.f32 %v6559, %v6611
    %v6641 = vmul.f32 %v6563, %v6616
    %v6642 = vmul.f32 %v6565, %v6616
    %v6643 = vmul.f32 %v6569, %v6621
    %v6644 = vmul.f32 %v6571, %v6621
    %v6645 = vmul.f32 %v6575, %v6626
    %v6646 = vmul.f32 %v6577, %v6626
    %v6647 = vmul.f32 %v6581, %v6631
    %v6648 = vmul.f32 %v6583, %v6631
    %v6649 = vld [vmem:[%s23] sm:$0xff]
    %v6650 = vld [vmem:[%s23 + $0x8] sm:$0xff]
    %v6651 = vld [vmem:[%s23 + $0x10] sm:$0xff]
    %v6652 = vld [vmem:[%s23 + $0x18] sm:$0xff]
    %v6653 = vld [vmem:[%s23 + $0x20] sm:$0xff]
    %v6654 = vld [vmem:[%s23 + $0x28] sm:$0xff]
    %v6655 = vld [vmem:[%s23 + $0x30] sm:$0xff]
    %v6656 = vld [vmem:[%s23 + $0x38] sm:$0xff]
    %6658 = vset.pattern.permute.xlu0 0
    %6659 = vperm.xlu0 %6658, %v6649
    %v6660 = vpop.permute.xlu0 %6659
    %6663 = vset.pattern.permute.xlu0 0
    %6664 = vperm.xlu0 %6663, %v6650
    %v6665 = vpop.permute.xlu0 %6664
    %6668 = vset.pattern.permute.xlu0 0
    %6669 = vperm.xlu0 %6668, %v6651
    %v6670 = vpop.permute.xlu0 %6669
    %6673 = vset.pattern.permute.xlu0 0
    %6674 = vperm.xlu0 %6673, %v6652
    %v6675 = vpop.permute.xlu0 %6674
    %6678 = vset.pattern.permute.xlu0 0
    %6679 = vperm.xlu0 %6678, %v6653
    %v6680 = vpop.permute.xlu0 %6679
    %6683 = vset.pattern.permute.xlu0 0
    %6684 = vperm.xlu0 %6683, %v6654
    %v6685 = vpop.permute.xlu0 %6684
    %6688 = vset.pattern.permute.xlu0 0
    %6689 = vperm.xlu0 %6688, %v6655
    %v6690 = vpop.permute.xlu0 %6689
    %6693 = vset.pattern.permute.xlu0 0
    %6694 = vperm.xlu0 %6693, %v6656
    %v6695 = vpop.permute.xlu0 %6694
    %v6697 = vadd.f32 %v6633, %v6660
    %v6698 = vadd.f32 %v6634, %v6660
    %v6699 = vadd.f32 %v6635, %v6665
    %v6700 = vadd.f32 %v6636, %v6665
    %v6701 = vadd.f32 %v6637, %v6670
    %v6702 = vadd.f32 %v6638, %v6670
    %v6703 = vadd.f32 %v6639, %v6675
    %v6704 = vadd.f32 %v6640, %v6675
    %v6705 = vadd.f32 %v6641, %v6680
    %v6706 = vadd.f32 %v6642, %v6680
    %v6707 = vadd.f32 %v6643, %v6685
    %v6708 = vadd.f32 %v6644, %v6685
    %v6709 = vadd.f32 %v6645, %v6690
    %v6710 = vadd.f32 %v6646, %v6690
    %v6711 = vadd.f32 %v6647, %v6695
    %v6712 = vadd.f32 %v6648, %v6695
    %v6713 = vmax.f32 %v6697, 0.0
    %v6714 = vmax.f32 %v6698, 0.0
    %v6715 = vmax.f32 %v6699, 0.0
    %v6716 = vmax.f32 %v6700, 0.0
    %v6717 = vmax.f32 %v6701, 0.0
    %v6718 = vmax.f32 %v6702, 0.0
    %v6719 = vmax.f32 %v6703, 0.0
    %v6720 = vmax.f32 %v6704, 0.0
    %v6721 = vmax.f32 %v6705, 0.0
    %v6722 = vmax.f32 %v6706, 0.0
    %v6723 = vmax.f32 %v6707, 0.0
    %v6724 = vmax.f32 %v6708, 0.0
    %v6725 = vmax.f32 %v6709, 0.0
    %v6726 = vmax.f32 %v6710, 0.0
    %v6727 = vmax.f32 %v6711, 0.0
    %v6728 = vmax.f32 %v6712, 0.0
    %6729 = vst [vmem:[%s24] sm:$0xff] %v6713
    %6730 = vst.msk [vmem:[%s24 + $0x8] sm:$0xff] %vm1423, %v6714
    %6731 = vst [vmem:[%s24 + $0x10] sm:$0xff] %v6715
    %6732 = vst.msk [vmem:[%s24 + $0x18] sm:$0xff] %vm1423, %v6716
    %6733 = vst [vmem:[%s24 + $0x20] sm:$0xff] %v6717
    %6734 = vst.msk [vmem:[%s24 + $0x28] sm:$0xff] %vm1423, %v6718
    %6735 = vst [vmem:[%s24 + $0x30] sm:$0xff] %v6719
    %6736 = vst.msk [vmem:[%s24 + $0x38] sm:$0xff] %vm1423, %v6720
    %6737 = vst [vmem:[%s24 + $0x40] sm:$0xff] %v6721
    %6738 = vst.msk [vmem:[%s24 + $0x48] sm:$0xff] %vm1423, %v6722
    %6739 = vst [vmem:[%s24 + $0x50] sm:$0xff] %v6723
    %6740 = vst.msk [vmem:[%s24 + $0x58] sm:$0xff] %vm1423, %v6724
    %6741 = vst [vmem:[%s24 + $0x60] sm:$0xff] %v6725
    %6742 = vst.msk [vmem:[%s24 + $0x68] sm:$0xff] %vm1423, %v6726
    %6743 = vst [vmem:[%s24 + $0x70] sm:$0xff] %v6727
    %6744 = vst.msk [vmem:[%s24 + $0x78] sm:$0xff] %vm1423, %v6728
    // Predicated region
    $region130: #{srn_forward.2} parent=1 // pred_check
      _
    $region131: #{srn_forward.2} parent=1 // pred_check_branch
      %6746 = sbr.rel (0) target = $region133
    $region132: #{srn_forward.2} parent=1 // pred_region
      _
    $region133: #{srn_forward.2} parent=1 // pred_fallthru
      _
    // Predicated region
    $region134: #{srn_forward.2} parent=1 // pred_check
      _
    $region135: #{srn_forward.2} parent=1 // pred_check_branch
      %6748 = sbr.rel (0) target = $region137
    $region136: #{srn_forward.2} parent=1 // pred_region
      _
    $region137: #{srn_forward.2} parent=1 // pred_fallthru
      _
    // Predicated region
    $region138: #{srn_forward.2} parent=1 // pred_check
      _
    $region139: #{srn_forward.2} parent=1 // pred_check_branch
      %6750 = sbr.rel (0) target = $region141
    $region140: #{srn_forward.2} parent=1 // pred_region
      _
    $region141: #{srn_forward.2} parent=1 // pred_fallthru
      _
    // Predicated region
    $region142: #{srn_forward.2} parent=1 // pred_check
      _
    $region143: #{srn_forward.2} parent=1 // pred_check_branch
      %6752 = sbr.rel (0) target = $region145
    $region144: #{srn_forward.2} parent=1 // pred_region
      _
    $region145: #{srn_forward.2} parent=1 // pred_fallthru
      _
    %6753 = vsyncpa [#allocation3], 1
    %6754 = vsyncpa [#allocation5], 1
    %6755 = vsyncpa [#allocation8], 1
    %6756 = vsyncpa [#allocation11], 1
    %6757 = vsyncpa [#allocation14], 1

</llo_original>
